<compile_context>
chip_gen: v7x
topology: tpu7x:2x2x1
jax: 0.10.0
libtpu: 0.0.40
codegen_flags: <defaults>
</compile_context>

<pallas_src>
import functools
import math

import jax
import jax.numpy as jnp
from jax.experimental import pallas as pl
from jax.experimental.pallas import tpu as pltpu


# ----------------------------------------------------------------------------
# helpers
# ----------------------------------------------------------------------------
_BLOCK_KEYS = (
    "f1_g", "f1_b", "f1_w1", "f1_b1", "f1_w2", "f1_b2",
    "a_g", "a_b", "a_wqkv", "a_bqkv", "a_wo", "a_bo",
    "c_g", "c_b", "c_w1", "c_b1", "c_dw", "c_db", "c_bns", "c_bnh",
    "c_w2", "c_b2",
    "f2_g", "f2_b", "f2_w1", "f2_b1", "f2_w2", "f2_b2",
    "ln_g", "ln_b",
)
_N_BLOCK = len(_BLOCK_KEYS)          # 30 stacked per-block params
_N_HEAD = 5                          # w1, b1, w2_row, b2, alpha(SMEM)


def _layernorm(x, g, b, eps=1e-5):
    mu = jnp.mean(x, axis=-1, keepdims=True)
    var = jnp.mean((x - mu) ** 2, axis=-1, keepdims=True)
    return (x - mu) * jax.lax.rsqrt(var + eps) * g + b


def _mm(a, w):
    """bf16 MXU matmul, f32 accumulation."""
    return jnp.dot(a.astype(jnp.bfloat16), w.astype(jnp.bfloat16),
                   preferred_element_type=jnp.float32)


# ----------------------------------------------------------------------------
# Fused kernel: all Conformer blocks + head, grid = (B//Bb, L)
# ----------------------------------------------------------------------------
def _fused_kernel(num_heads, ck, *refs):
    x_ref = refs[0]
    bp = refs[1:1 + _N_BLOCK]
    hw1, hb1, hw2, hb2, halpha = refs[1 + _N_BLOCK:1 + _N_BLOCK + _N_HEAD]
    o_ref = refs[-2]                 # (Bb, 1) head output
    st = refs[-1]                    # (Bb, T, D) resident activation state

    (f1g, f1b, f1w1, f1b1, f1w2, f1b2,
     ag, ab, wqkv, bqkv, wo, bo,
     cg, cb, cw1, cb1, cdw, cdb, cbns, cbnh, cw2, cb2,
     f2g, f2b, f2w1, f2b1, f2w2, f2b2,
     lng, lnb) = bp

    l = pl.program_id(1)
    Bb, T, D = st.shape
    dh = D // num_heads
    scale = 1.0 / math.sqrt(dh)

    @pl.when(l == 0)
    def _():                          # load encoder output into the state once
        st[...] = x_ref[...]

    x = st[...].reshape(Bb * T, D)    # (Bb*T, D) f32, all row-wise ops fused

    # ---- 0.5 * FFN (pre-LN, SiLU) + residual (dropout = identity) ----------
    def half_ffn(xin, g, b, w1, b1, w2, b2):
        h = _layernorm(xin, g[0], b[0])
        h = _mm(h, w1[0]) + b1[0]
        h = h * jax.nn.sigmoid(h)                     # SiLU
        h = _mm(h, w2[0]) + b2[0]
        return xin + 0.5 * h

    x = half_ffn(x, f1g, f1b, f1w1, f1b1, f1w2, f1b2)

    # ---- MHSA (pre-LN) + residual -------------------------------------------
    xn = _layernorm(x, ag[0], ab[0])
    qkv = _mm(xn, wqkv[0]) + bqkv[0]                  # one dense (D,3D) matmul
    q = qkv[:, :D].reshape(Bb, T, D)
    k = qkv[:, D:2 * D].reshape(Bb, T, D)
    v = qkv[:, 2 * D:].reshape(Bb, T, D)
    ctx_heads = []
    for h in range(num_heads):                        # static unroll over heads
        lo = h * dh
        qh = q[:, :, lo:lo + dh].astype(jnp.bfloat16)
        kh = k[:, :, lo:lo + dh].astype(jnp.bfloat16)
        vh = v[:, :, lo:lo + dh].astype(jnp.bfloat16)
        s = jnp.einsum("btd,bsd->bts", qh, kh,
                       preferred_element_type=jnp.float32) * scale
        s = s - jnp.max(s, axis=-1, keepdims=True)
        p = jnp.exp(s)
        p = p * pl.reciprocal(jnp.sum(p, axis=-1, keepdims=True), approx=True)
        ctx_heads.append(jnp.einsum("bts,bsd->btd", p.astype(jnp.bfloat16), vh,
                                    preferred_element_type=jnp.float32))
    ctx = jnp.concatenate(ctx_heads, axis=-1).reshape(Bb * T, D)
    x = x + _mm(ctx, wo[0]) + bo[0]                   # dense O-proj (head sum in K)

    # ---- Conformer conv module + residual -----------------------------------
    xn = _layernorm(x, cg[0], cb[0])
    pw = _mm(xn, cw1[0]) + cb1[0]                     # pointwise conv D -> 2D
    hgl = pw[:, :D] * jax.nn.sigmoid(pw[:, D:])       # GLU
    # depthwise conv over time ("same" padding) via XLU roll + per-row masks
    pad = (ck - 1) // 2
    t2 = jax.lax.broadcasted_iota(jnp.int32, (T, D), 0)
    t_idx = jnp.broadcast_to(t2[None], (Bb, T, D)).reshape(Bb * T, D)
    dw = cdw[0]                                       # (ck, D)
    acc = jnp.zeros((Bb * T, D), jnp.float32)
    for kk in range(ck):
        off = kk - pad                                # tap reads h[t + off]
        wk = dw[kk:kk + 1, :]                         # (1, D)
        if off == 0:
            acc = acc + hgl * wk
        else:
            rolled = pltpu.roll(hgl, shift=(-off) % (Bb * T), axis=0)
            valid = t_idx < (T - off) if off > 0 else t_idx >= (-off)
            acc = acc + jnp.where(valid, rolled * wk, 0.0)
    y = acc + cdb[0]
    # BatchNorm1d (eval) folded into per-channel scale/shift
    y = y * cbns[0] + cbnh[0]
    y = y * jax.nn.sigmoid(y)                         # SiLU
    x = x + _mm(y, cw2[0]) + cb2[0]

    # ---- second 0.5 * FFN + residual, final LayerNorm -----------------------
    x = half_ffn(x, f2g, f2b, f2w1, f2b1, f2w2, f2b2)
    x = _layernorm(x, lng[0], lnb[0])

    st[...] = x.reshape(Bb, T, D)                     # stays resident in VMEM

    # ---- head folded into the last block iteration --------------------------
    @pl.when(l == pl.num_programs(1) - 1)
    def _():
        xm = jnp.mean(x.reshape(Bb, T, D), axis=1)    # mean over time  (Bb, D)
        yh = _mm(xm, hw1[...]) + hb1[...]             # Linear(D, D)
        alpha = halpha[0, 0]                          # PReLU alpha from SMEM
        yh = jnp.where(yh >= 0.0, yh, alpha * yh)
        # Linear(D -> 1) as a lane reduction (avoids an N=1 matmul)
        o_ref[...] = jnp.sum(yh * hw2[...], axis=-1, keepdims=True) + hb2[...]


def _pick_bb(batch):
    """Batch rows per grid step (keeps (8,128) layout rules for the output)."""
    if batch <= 8:
        return batch
    if batch % 8 == 0:
        return 8
    return batch


def pallas_conformer_and_head(h, blocks, head, num_heads, conv_kernel_size):
    B, T, D = h.shape
    L = blocks["f1_g"].shape[0]
    Bb = _pick_bb(B)
    block_vals = [blocks[k] for k in _BLOCK_KEYS]     # each (L, ...)
    head_vmem = [head["w1"], head["b1"], head["w2_row"], head["b2"]]

    in_specs = (
        [pl.BlockSpec((Bb, T, D), lambda b, l: (b, 0, 0))]
        + [pl.BlockSpec((1,) + a.shape[1:], lambda b, l: (l, 0, 0))
           for a in block_vals]
        + [pl.BlockSpec(a.shape, lambda b, l: (0, 0)) for a in head_vmem]
        + [pl.BlockSpec(memory_space=pltpu.MemorySpace.SMEM)]   # PReLU alpha
    )
    kernel = functools.partial(_fused_kernel, num_heads, conv_kernel_size)
    return pl.pallas_call(
        kernel,
        out_shape=jax.ShapeDtypeStruct((B, 1), jnp.float32),
        grid=(B // Bb, L),
        in_specs=in_specs,
        out_specs=pl.BlockSpec((Bb, 1), lambda b, l: (b, 0)),
        scratch_shapes=[pltpu.VMEM((Bb, T, D), jnp.float32)],
        compiler_params=pltpu.CompilerParams(
            dimension_semantics=("parallel", "arbitrary")),
    )(h, *block_vals, *head_vmem, head["alpha"])


# ----------------------------------------------------------------------------
# Full forward (encoder im2col + tiny K=4 matmul left to XLA per perf review)
# ----------------------------------------------------------------------------
def conformer_detector_forward(x, params, *, kernel_size, stride, num_heads,
                               conv_kernel_size):
    B, T = x.shape
    Tp = (T - kernel_size) // stride + 1
    starts = jnp.arange(Tp) * stride
    idx = starts[:, None] + jnp.arange(kernel_size)[None, :]      # (Tp, K)
    patches = x[:, idx]                                           # (B, Tp, K)
    h = jnp.einsum("btk,kd->btd", patches, params["enc_w"]) + params["enc_b"]
    out = pallas_conformer_and_head(h, params["blocks"], params["head"],
                                    num_heads, conv_kernel_size)  # (B, 1)
    return out[:, 0]                                              # (B,)


# ----------------------------------------------------------------------------
# Deterministic synthetic parameters (shapes match the module; weights stacked
# with a leading L axis for the fused-blocks kernel)
# ----------------------------------------------------------------------------
def init_params(key, *, size, conf_blocks_num, conv_kernel_size, in_channels,
                kernel_size, num_heads, expansion_factor):
    assert in_channels == 1, "forward() unsqueezes a single channel"
    assert conv_kernel_size % 2 == 1, "depthwise conv expects odd kernel"
    assert size % num_heads == 0
    D, L = size, conf_blocks_num
    Hff = size * expansion_factor

    keys = iter(jax.random.split(key, 64))

    def w(shape, scale=0.05, dtype=jnp.bfloat16):
        return (scale * jax.random.normal(next(keys), shape,
                                          dtype=jnp.float32)).astype(dtype)

    def zeros(shape):
        return jnp.zeros(shape, jnp.float32)

    def ones(shape):
        return jnp.ones(shape, jnp.float32)

    # TODO(synk): for a trained model, fold BatchNorm1d running stats + affine
    # into c_bns / c_bnh; defaults below = eval-mode identity stats.
    bn_scale = 1.0 / math.sqrt(1.0 + 1e-5)
    blocks = {
        "f1_g": ones((L, 1, D)), "f1_b": zeros((L, 1, D)),
        "f1_w1": w((L, D, Hff)), "f1_b1": zeros((L, 1, Hff)),
        "f1_w2": w((L, Hff, D)), "f1_b2": zeros((L, 1, D)),
        "a_g": ones((L, 1, D)), "a_b": zeros((L, 1, D)),
        # fused QKV: (D, 3D) with q|k|v column blocks, heads contiguous within
        "a_wqkv": w((L, D, 3 * D)), "a_bqkv": zeros((L, 1, 3 * D)),
        "a_wo": w((L, D, D)), "a_bo": zeros((L, 1, D)),
        "c_g": ones((L, 1, D)), "c_b": zeros((L, 1, D)),
        "c_w1": w((L, D, 2 * D)), "c_b1": zeros((L, 1, 2 * D)),
        "c_dw": w((L, conv_kernel_size, D), dtype=jnp.float32),
        "c_db": zeros((L, 1, D)),
        "c_bns": jnp.full((L, 1, D), bn_scale, jnp.float32),
        "c_bnh": zeros((L, 1, D)),
        "c_w2": w((L, D, D)), "c_b2": zeros((L, 1, D)),
        "f2_g": ones((L, 1, D)), "f2_b": zeros((L, 1, D)),
        "f2_w1": w((L, D, Hff)), "f2_b1": zeros((L, 1, Hff)),
        "f2_w2": w((L, Hff, D)), "f2_b2": zeros((L, 1, D)),
        "ln_g": ones((L, 1, D)), "ln_b": zeros((L, 1, D)),
    }
    head = dict(w1=w((D, D)), b1=zeros((1, D)),
                w2_row=w((1, D), dtype=jnp.float32),   # nn.Linear(D,1).weight
                b2=zeros((1, 1)),
                alpha=jnp.full((1, 1), 0.25, jnp.float32))
    return dict(
        enc_w=w((kernel_size * in_channels, D), dtype=jnp.float32),
        enc_b=zeros((1, D)),
        blocks=blocks,
        head=head,
    )


# ----------------------------------------------------------------------------
if __name__ == "__main__":
    # small, module-consistent, lane-friendly config
    B, T = 2, 66                 # encoder frames: (66-4)//2+1 = 32
    size = 128
    conf_blocks_num = 2
    conv_kernel_size = 3
    in_channels = 1
    kernel_size = 4
    stride = 2
    num_heads = 4
    expansion_factor = 4

    key = jax.random.PRNGKey(0)
    pkey, xkey = jax.random.split(key)
    params = init_params(pkey, size=size, conf_blocks_num=conf_blocks_num,
                         conv_kernel_size=conv_kernel_size,
                         in_channels=in_channels, kernel_size=kernel_size,
                         num_heads=num_heads,
                         expansion_factor=expansion_factor)
    x = jax.random.normal(xkey, (B, T), dtype=jnp.float32)     # (b, T) input

    fwd = jax.jit(functools.partial(
        conformer_detector_forward, kernel_size=kernel_size, stride=stride,
        num_heads=num_heads, conv_kernel_size=conv_kernel_size))
    out = jax.block_until_ready(fwd(x, params))
    assert out.shape == (B,), out.shape
    assert bool(jnp.all(jnp.isfinite(out)))
    print("KERNEL_OK")
</pallas_src>

<mosaic_0001>
module attributes {stable_mosaic.version = 11 : i64} {
  func.func @_fused_kernel(%arg0: i32, %arg1: i32, %arg2: memref<2x32x128xf32, #tpu.memory_space<vmem>>, %arg3: memref<1x1x128xf32, #tpu.memory_space<vmem>>, %arg4: memref<1x1x128xf32, #tpu.memory_space<vmem>>, %arg5: memref<1x128x512xbf16, #tpu.memory_space<vmem>>, %arg6: memref<1x1x512xf32, #tpu.memory_space<vmem>>, %arg7: memref<1x512x128xbf16, #tpu.memory_space<vmem>>, %arg8: memref<1x1x128xf32, #tpu.memory_space<vmem>>, %arg9: memref<1x1x128xf32, #tpu.memory_space<vmem>>, %arg10: memref<1x1x128xf32, #tpu.memory_space<vmem>>, %arg11: memref<1x128x384xbf16, #tpu.memory_space<vmem>>, %arg12: memref<1x1x384xf32, #tpu.memory_space<vmem>>, %arg13: memref<1x128x128xbf16, #tpu.memory_space<vmem>>, %arg14: memref<1x1x128xf32, #tpu.memory_space<vmem>>, %arg15: memref<1x1x128xf32, #tpu.memory_space<vmem>>, %arg16: memref<1x1x128xf32, #tpu.memory_space<vmem>>, %arg17: memref<1x128x256xbf16, #tpu.memory_space<vmem>>, %arg18: memref<1x1x256xf32, #tpu.memory_space<vmem>>, %arg19: memref<1x3x128xf32, #tpu.memory_space<vmem>>, %arg20: memref<1x1x128xf32, #tpu.memory_space<vmem>>, %arg21: memref<1x1x128xf32, #tpu.memory_space<vmem>>, %arg22: memref<1x1x128xf32, #tpu.memory_space<vmem>>, %arg23: memref<1x128x128xbf16, #tpu.memory_space<vmem>>, %arg24: memref<1x1x128xf32, #tpu.memory_space<vmem>>, %arg25: memref<1x1x128xf32, #tpu.memory_space<vmem>>, %arg26: memref<1x1x128xf32, #tpu.memory_space<vmem>>, %arg27: memref<1x128x512xbf16, #tpu.memory_space<vmem>>, %arg28: memref<1x1x512xf32, #tpu.memory_space<vmem>>, %arg29: memref<1x512x128xbf16, #tpu.memory_space<vmem>>, %arg30: memref<1x1x128xf32, #tpu.memory_space<vmem>>, %arg31: memref<1x1x128xf32, #tpu.memory_space<vmem>>, %arg32: memref<1x1x128xf32, #tpu.memory_space<vmem>>, %arg33: memref<128x128xbf16, #tpu.memory_space<vmem>>, %arg34: memref<1x128xf32, #tpu.memory_space<vmem>>, %arg35: memref<1x128xf32, #tpu.memory_space<vmem>>, %arg36: memref<1x1xf32, #tpu.memory_space<vmem>>, %arg37: memref<1x1xf32, #tpu.memory_space<smem>>, %arg38: memref<2x1xf32, #tpu.memory_space<vmem>>, %arg39: memref<2x32x128xf32, #tpu.memory_space<vmem>>) attributes {dimension_semantics = [#tpu.dimension_semantics<parallel>, #tpu.dimension_semantics<arbitrary>], iteration_bounds = array<i64: 1, 2>, scalar_prefetch = 0 : i64, scratch_operands = 1 : i64, tpu.core_type = #tpu.core_type<tc>, window_params = [{transform_indices = @transform_0, window_bounds = array<i64: 2, 32, 128>}, {transform_indices = @transform_1, window_bounds = array<i64: 1, 1, 128>}, {transform_indices = @transform_2, window_bounds = array<i64: 1, 1, 128>}, {transform_indices = @transform_3, window_bounds = array<i64: 1, 128, 512>}, {transform_indices = @transform_4, window_bounds = array<i64: 1, 1, 512>}, {transform_indices = @transform_5, window_bounds = array<i64: 1, 512, 128>}, {transform_indices = @transform_6, window_bounds = array<i64: 1, 1, 128>}, {transform_indices = @transform_7, window_bounds = array<i64: 1, 1, 128>}, {transform_indices = @transform_8, window_bounds = array<i64: 1, 1, 128>}, {transform_indices = @transform_9, window_bounds = array<i64: 1, 128, 384>}, {transform_indices = @transform_10, window_bounds = array<i64: 1, 1, 384>}, {transform_indices = @transform_11, window_bounds = array<i64: 1, 128, 128>}, {transform_indices = @transform_12, window_bounds = array<i64: 1, 1, 128>}, {transform_indices = @transform_13, window_bounds = array<i64: 1, 1, 128>}, {transform_indices = @transform_14, window_bounds = array<i64: 1, 1, 128>}, {transform_indices = @transform_15, window_bounds = array<i64: 1, 128, 256>}, {transform_indices = @transform_16, window_bounds = array<i64: 1, 1, 256>}, {transform_indices = @transform_17, window_bounds = array<i64: 1, 3, 128>}, {transform_indices = @transform_18, window_bounds = array<i64: 1, 1, 128>}, {transform_indices = @transform_19, window_bounds = array<i64: 1, 1, 128>}, {transform_indices = @transform_20, window_bounds = array<i64: 1, 1, 128>}, {transform_indices = @transform_21, window_bounds = array<i64: 1, 128, 128>}, {transform_indices = @transform_22, window_bounds = array<i64: 1, 1, 128>}, {transform_indices = @transform_23, window_bounds = array<i64: 1, 1, 128>}, {transform_indices = @transform_24, window_bounds = array<i64: 1, 1, 128>}, {transform_indices = @transform_25, window_bounds = array<i64: 1, 128, 512>}, {transform_indices = @transform_26, window_bounds = array<i64: 1, 1, 512>}, {transform_indices = @transform_27, window_bounds = array<i64: 1, 512, 128>}, {transform_indices = @transform_28, window_bounds = array<i64: 1, 1, 128>}, {transform_indices = @transform_29, window_bounds = array<i64: 1, 1, 128>}, {transform_indices = @transform_30, window_bounds = array<i64: 1, 1, 128>}, {pipeline_mode = #tpu.pipeline_mode<synchronous>, transform_indices = @transform_31, window_bounds = array<i64: 128, 128>}, {pipeline_mode = #tpu.pipeline_mode<synchronous>, transform_indices = @transform_32, window_bounds = array<i64: 1, 128>}, {pipeline_mode = #tpu.pipeline_mode<synchronous>, transform_indices = @transform_33, window_bounds = array<i64: 1, 128>}, {pipeline_mode = #tpu.pipeline_mode<synchronous>, transform_indices = @transform_34, window_bounds = array<i64: 1, 1>}, {transform_indices = @transform_35, window_bounds = array<i64: 1, 1>}, {transform_indices = @transform_36, window_bounds = array<i64: 2, 1>}]} {
    %c0_i32 = arith.constant 0 : i32
    %0 = arith.cmpi eq, %arg1, %c0_i32 : i32
    %1 = arith.extui %0 : i1 to i32
    %c0_i32_0 = arith.constant 0 : i32
    %2 = arith.cmpi ne, %1, %c0_i32_0 : i32
    scf.if %2 {
      %c0_160 = arith.constant 0 : index
      %c0_161 = arith.constant 0 : index
      %c0_162 = arith.constant 0 : index
      %372 = vector.load %arg2[%c0_160, %c0_161, %c0_162] : memref<2x32x128xf32, #tpu.memory_space<vmem>>, vector<2x32x128xf32>
      %c0_163 = arith.constant 0 : index
      %c0_164 = arith.constant 0 : index
      %c0_165 = arith.constant 0 : index
      %373 = vector.load %arg39[%c0_163, %c0_164, %c0_165] : memref<2x32x128xf32, #tpu.memory_space<vmem>>, vector<2x32x128xf32>
      tpu.vector_store %arg39[%c0_163, %c0_164, %c0_165], %372 {strides = array<i32>} : memref<2x32x128xf32, #tpu.memory_space<vmem>>, vector<2x32x128xf32>,
    } else {
    }
    %c0 = arith.constant 0 : index
    %c0_1 = arith.constant 0 : index
    %c0_2 = arith.constant 0 : index
    %3 = vector.load %arg39[%c0, %c0_1, %c0_2] : memref<2x32x128xf32, #tpu.memory_space<vmem>>, vector<2x32x128xf32>
    %4 = vector.shape_cast %3 : vector<2x32x128xf32> to vector<64x128xf32>
    %c0_3 = arith.constant 0 : index
    %c0_4 = arith.constant 0 : index
    %c0_5 = arith.constant 0 : index
    %5 = vector.load %arg3[%c0_3, %c0_4, %c0_5] : memref<1x1x128xf32, #tpu.memory_space<vmem>>, vector<1x1x128xf32>
    %6 = vector.shape_cast %5 : vector<1x1x128xf32> to vector<1x128xf32>
    %c0_6 = arith.constant 0 : index
    %c0_7 = arith.constant 0 : index
    %c0_8 = arith.constant 0 : index
    %7 = vector.load %arg4[%c0_6, %c0_7, %c0_8] : memref<1x1x128xf32, #tpu.memory_space<vmem>>, vector<1x1x128xf32>
    %8 = vector.shape_cast %7 : vector<1x1x128xf32> to vector<1x128xf32>
    %cst = arith.constant dense<0.000000e+00> : vector<64xf32>
    %9 = vector.multi_reduction <add>, %4, %cst [1] : vector<64x128xf32> to vector<64xf32>
    %10 = vector.shape_cast %9 : vector<64xf32> to vector<64x1xf32>
    %cst_9 = arith.constant 1.280000e+02 : f32
    %11 = vector.broadcast %cst_9 : f32 to vector<64x1xf32>
    %12 = arith.divf %10, %11 : vector<64x1xf32>
    %13 = vector.broadcast %12 : vector<64x1xf32> to vector<64x128xf32>
    %14 = arith.subf %4, %13 : vector<64x128xf32>
    %15 = arith.mulf %14, %14 : vector<64x128xf32>
    %cst_10 = arith.constant dense<0.000000e+00> : vector<64xf32>
    %16 = vector.multi_reduction <add>, %15, %cst_10 [1] : vector<64x128xf32> to vector<64xf32>
    %17 = vector.shape_cast %16 : vector<64xf32> to vector<64x1xf32>
    %cst_11 = arith.constant 1.280000e+02 : f32
    %18 = vector.broadcast %cst_11 : f32 to vector<64x1xf32>
    %19 = arith.divf %17, %18 : vector<64x1xf32>
    %20 = vector.broadcast %12 : vector<64x1xf32> to vector<64x128xf32>
    %21 = arith.subf %4, %20 : vector<64x128xf32>
    %cst_12 = arith.constant 9.99999974E-6 : f32
    %22 = vector.broadcast %cst_12 : f32 to vector<64x1xf32>
    %23 = arith.addf %19, %22 : vector<64x1xf32>
    %24 = math.rsqrt %23 : vector<64x1xf32>
    %25 = vector.broadcast %24 : vector<64x1xf32> to vector<64x128xf32>
    %26 = arith.mulf %21, %25 : vector<64x128xf32>
    %27 = vector.broadcast %6 : vector<1x128xf32> to vector<64x128xf32>
    %28 = arith.mulf %26, %27 : vector<64x128xf32>
    %29 = vector.broadcast %8 : vector<1x128xf32> to vector<64x128xf32>
    %30 = arith.addf %28, %29 : vector<64x128xf32>
    %c0_13 = arith.constant 0 : index
    %c0_14 = arith.constant 0 : index
    %c0_15 = arith.constant 0 : index
    %31 = vector.load %arg5[%c0_13, %c0_14, %c0_15] : memref<1x128x512xbf16, #tpu.memory_space<vmem>>, vector<1x128x512xbf16>
    %32 = vector.shape_cast %31 : vector<1x128x512xbf16> to vector<128x512xbf16>
    %33 = arith.truncf %30 : vector<64x128xf32> to vector<64x128xbf16>
    %cst_16 = arith.constant dense<0.000000e+00> : vector<64x512xf32>
    %34 = tpu.matmul %33, %32, %cst_16 {dimension_numbers = #tpu.dot_dimension_numbers<[1], [0], [0], [1], [0, 0, 1, 1], [], []>} : vector<64x128xbf16>, vector<128x512xbf16>, vector<64x512xf32> -> vector<64x512xf32>
    %c0_17 = arith.constant 0 : index
    %c0_18 = arith.constant 0 : index
    %c0_19 = arith.constant 0 : index
    %35 = vector.load %arg6[%c0_17, %c0_18, %c0_19] : memref<1x1x512xf32, #tpu.memory_space<vmem>>, vector<1x1x512xf32>
    %36 = vector.shape_cast %35 : vector<1x1x512xf32> to vector<1x512xf32>
    %37 = vector.broadcast %36 : vector<1x512xf32> to vector<64x512xf32>
    %38 = arith.addf %34, %37 : vector<64x512xf32>
    %39 = arith.negf %38 : vector<64x512xf32>
    %40 = math.exp %39 : vector<64x512xf32>
    %cst_20 = arith.constant 1.000000e+00 : f32
    %41 = vector.broadcast %cst_20 : f32 to vector<64x512xf32>
    %42 = arith.addf %41, %40 : vector<64x512xf32>
    %43 = arith.divf %41, %42 : vector<64x512xf32>
    %44 = arith.mulf %38, %43 : vector<64x512xf32>
    %c0_21 = arith.constant 0 : index
    %c0_22 = arith.constant 0 : index
    %c0_23 = arith.constant 0 : index
    %45 = vector.load %arg7[%c0_21, %c0_22, %c0_23] : memref<1x512x128xbf16, #tpu.memory_space<vmem>>, vector<1x512x128xbf16>
    %46 = vector.shape_cast %45 : vector<1x512x128xbf16> to vector<512x128xbf16>
    %47 = arith.truncf %44 : vector<64x512xf32> to vector<64x512xbf16>
    %cst_24 = arith.constant dense<0.000000e+00> : vector<64x128xf32>
    %48 = tpu.matmul %47, %46, %cst_24 {dimension_numbers = #tpu.dot_dimension_numbers<[1], [0], [0], [1], [0, 0, 1, 1], [], []>} : vector<64x512xbf16>, vector<512x128xbf16>, vector<64x128xf32> -> vector<64x128xf32>
    %c0_25 = arith.constant 0 : index
    %c0_26 = arith.constant 0 : index
    %c0_27 = arith.constant 0 : index
    %49 = vector.load %arg8[%c0_25, %c0_26, %c0_27] : memref<1x1x128xf32, #tpu.memory_space<vmem>>, vector<1x1x128xf32>
    %50 = vector.shape_cast %49 : vector<1x1x128xf32> to vector<1x128xf32>
    %51 = vector.broadcast %50 : vector<1x128xf32> to vector<64x128xf32>
    %52 = arith.addf %48, %51 : vector<64x128xf32>
    %cst_28 = arith.constant 5.000000e-01 : f32
    %53 = vector.broadcast %cst_28 : f32 to vector<64x128xf32>
    %54 = arith.mulf %53, %52 : vector<64x128xf32>
    %55 = arith.addf %4, %54 : vector<64x128xf32>
    %c0_29 = arith.constant 0 : index
    %c0_30 = arith.constant 0 : index
    %c0_31 = arith.constant 0 : index
    %56 = vector.load %arg9[%c0_29, %c0_30, %c0_31] : memref<1x1x128xf32, #tpu.memory_space<vmem>>, vector<1x1x128xf32>
    %57 = vector.shape_cast %56 : vector<1x1x128xf32> to vector<1x128xf32>
    %c0_32 = arith.constant 0 : index
    %c0_33 = arith.constant 0 : index
    %c0_34 = arith.constant 0 : index
    %58 = vector.load %arg10[%c0_32, %c0_33, %c0_34] : memref<1x1x128xf32, #tpu.memory_space<vmem>>, vector<1x1x128xf32>
    %59 = vector.shape_cast %58 : vector<1x1x128xf32> to vector<1x128xf32>
    %cst_35 = arith.constant dense<0.000000e+00> : vector<64xf32>
    %60 = vector.multi_reduction <add>, %55, %cst_35 [1] : vector<64x128xf32> to vector<64xf32>
    %61 = vector.shape_cast %60 : vector<64xf32> to vector<64x1xf32>
    %cst_36 = arith.constant 1.280000e+02 : f32
    %62 = vector.broadcast %cst_36 : f32 to vector<64x1xf32>
    %63 = arith.divf %61, %62 : vector<64x1xf32>
    %64 = vector.broadcast %63 : vector<64x1xf32> to vector<64x128xf32>
    %65 = arith.subf %55, %64 : vector<64x128xf32>
    %66 = arith.mulf %65, %65 : vector<64x128xf32>
    %cst_37 = arith.constant dense<0.000000e+00> : vector<64xf32>
    %67 = vector.multi_reduction <add>, %66, %cst_37 [1] : vector<64x128xf32> to vector<64xf32>
    %68 = vector.shape_cast %67 : vector<64xf32> to vector<64x1xf32>
    %cst_38 = arith.constant 1.280000e+02 : f32
    %69 = vector.broadcast %cst_38 : f32 to vector<64x1xf32>
    %70 = arith.divf %68, %69 : vector<64x1xf32>
    %71 = vector.broadcast %63 : vector<64x1xf32> to vector<64x128xf32>
    %72 = arith.subf %55, %71 : vector<64x128xf32>
    %cst_39 = arith.constant 9.99999974E-6 : f32
    %73 = vector.broadcast %cst_39 : f32 to vector<64x1xf32>
    %74 = arith.addf %70, %73 : vector<64x1xf32>
    %75 = math.rsqrt %74 : vector<64x1xf32>
    %76 = vector.broadcast %75 : vector<64x1xf32> to vector<64x128xf32>
    %77 = arith.mulf %72, %76 : vector<64x128xf32>
    %78 = vector.broadcast %57 : vector<1x128xf32> to vector<64x128xf32>
    %79 = arith.mulf %77, %78 : vector<64x128xf32>
    %80 = vector.broadcast %59 : vector<1x128xf32> to vector<64x128xf32>
    %81 = arith.addf %79, %80 : vector<64x128xf32>
    %c0_40 = arith.constant 0 : index
    %c0_41 = arith.constant 0 : index
    %c0_42 = arith.constant 0 : index
    %82 = vector.load %arg11[%c0_40, %c0_41, %c0_42] : memref<1x128x384xbf16, #tpu.memory_space<vmem>>, vector<1x128x384xbf16>
    %83 = vector.shape_cast %82 : vector<1x128x384xbf16> to vector<128x384xbf16>
    %84 = arith.truncf %81 : vector<64x128xf32> to vector<64x128xbf16>
    %cst_43 = arith.constant dense<0.000000e+00> : vector<64x384xf32>
    %85 = tpu.matmul %84, %83, %cst_43 {dimension_numbers = #tpu.dot_dimension_numbers<[1], [0], [0], [1], [0, 0, 1, 1], [], []>} : vector<64x128xbf16>, vector<128x384xbf16>, vector<64x384xf32> -> vector<64x384xf32>
    %c0_44 = arith.constant 0 : index
    %c0_45 = arith.constant 0 : index
    %c0_46 = arith.constant 0 : index
    %86 = vector.load %arg12[%c0_44, %c0_45, %c0_46] : memref<1x1x384xf32, #tpu.memory_space<vmem>>, vector<1x1x384xf32>
    %87 = vector.shape_cast %86 : vector<1x1x384xf32> to vector<1x384xf32>
    %88 = vector.broadcast %87 : vector<1x384xf32> to vector<64x384xf32>
    %89 = arith.addf %85, %88 : vector<64x384xf32>
    %90 = vector.extract_strided_slice %89 {offsets = [0, 0], sizes = [64, 128], strides = [1, 1]} : vector<64x384xf32> to vector<64x128xf32>
    %91 = vector.shape_cast %90 : vector<64x128xf32> to vector<2x32x128xf32>
    %92 = vector.extract_strided_slice %89 {offsets = [0, 128], sizes = [64, 128], strides = [1, 1]} : vector<64x384xf32> to vector<64x128xf32>
    %93 = vector.shape_cast %92 : vector<64x128xf32> to vector<2x32x128xf32>
    %94 = vector.extract_strided_slice %89 {offsets = [0, 256], sizes = [64, 128], strides = [1, 1]} : vector<64x384xf32> to vector<64x128xf32>
    %95 = vector.shape_cast %94 : vector<64x128xf32> to vector<2x32x128xf32>
    %96 = vector.extract_strided_slice %91 {offsets = [0, 0, 0], sizes = [2, 32, 32], strides = [1, 1, 1]} : vector<2x32x128xf32> to vector<2x32x32xf32>
    %97 = arith.truncf %96 : vector<2x32x32xf32> to vector<2x32x32xbf16>
    %98 = vector.extract_strided_slice %93 {offsets = [0, 0, 0], sizes = [2, 32, 32], strides = [1, 1, 1]} : vector<2x32x128xf32> to vector<2x32x32xf32>
    %99 = arith.truncf %98 : vector<2x32x32xf32> to vector<2x32x32xbf16>
    %100 = vector.extract_strided_slice %95 {offsets = [0, 0, 0], sizes = [2, 32, 32], strides = [1, 1, 1]} : vector<2x32x128xf32> to vector<2x32x32xf32>
    %101 = arith.truncf %100 : vector<2x32x32xf32> to vector<2x32x32xbf16>
    "tpu.trace_start"() <{level = 10 : i32, message = "btd,bsd->bts"}> : () -> ()
    %cst_47 = arith.constant dense<0.000000e+00> : vector<2x32x32xf32>
    %102 = tpu.matmul %97, %99, %cst_47 {dimension_numbers = #tpu.dot_dimension_numbers<[2], [2], [1], [1], [0, 0, 0, 1, 1, 1], [0], [0]>} : vector<2x32x32xbf16>, vector<2x32x32xbf16>, vector<2x32x32xf32> -> vector<2x32x32xf32>
    "tpu.trace_stop"() : () -> ()
    %cst_48 = arith.constant 0.176776692 : f32
    %103 = vector.broadcast %cst_48 : f32 to vector<2x32x32xf32>
    %104 = arith.mulf %102, %103 : vector<2x32x32xf32>
    %cst_49 = arith.constant dense<0xFF800000> : vector<2x32xf32>
    %105 = vector.multi_reduction <maximumf>, %104, %cst_49 [2] : vector<2x32x32xf32> to vector<2x32xf32>
    %106 = vector.shape_cast %105 : vector<2x32xf32> to vector<2x32x1xf32>
    %107 = vector.broadcast %106 : vector<2x32x1xf32> to vector<2x32x32xf32>
    %108 = arith.subf %104, %107 : vector<2x32x32xf32>
    %109 = math.exp %108 : vector<2x32x32xf32>
    %cst_50 = arith.constant dense<0.000000e+00> : vector<2x32xf32>
    %110 = vector.multi_reduction <add>, %109, %cst_50 [2] : vector<2x32x32xf32> to vector<2x32xf32>
    %111 = vector.shape_cast %110 : vector<2x32xf32> to vector<2x32x1xf32>
    %112 = tpu.reciprocal %111 {approx = true} : vector<2x32x1xf32> -> vector<2x32x1xf32>
    %113 = vector.broadcast %112 : vector<2x32x1xf32> to vector<2x32x32xf32>
    %114 = arith.mulf %109, %113 : vector<2x32x32xf32>
    %115 = arith.truncf %114 : vector<2x32x32xf32> to vector<2x32x32xbf16>
    "tpu.trace_start"() <{level = 10 : i32, message = "bts,bsd->btd"}> : () -> ()
    %cst_51 = arith.constant dense<0.000000e+00> : vector<2x32x32xf32>
    %116 = tpu.matmul %115, %101, %cst_51 {dimension_numbers = #tpu.dot_dimension_numbers<[2], [1], [1], [2], [0, 0, 0, 1, 1, 2], [0], [0]>} : vector<2x32x32xbf16>, vector<2x32x32xbf16>, vector<2x32x32xf32> -> vector<2x32x32xf32>
    "tpu.trace_stop"() : () -> ()
    %117 = vector.extract_strided_slice %91 {offsets = [0, 0, 32], sizes = [2, 32, 32], strides = [1, 1, 1]} : vector<2x32x128xf32> to vector<2x32x32xf32>
    %118 = arith.truncf %117 : vector<2x32x32xf32> to vector<2x32x32xbf16>
    %119 = vector.extract_strided_slice %93 {offsets = [0, 0, 32], sizes = [2, 32, 32], strides = [1, 1, 1]} : vector<2x32x128xf32> to vector<2x32x32xf32>
    %120 = arith.truncf %119 : vector<2x32x32xf32> to vector<2x32x32xbf16>
    %121 = vector.extract_strided_slice %95 {offsets = [0, 0, 32], sizes = [2, 32, 32], strides = [1, 1, 1]} : vector<2x32x128xf32> to vector<2x32x32xf32>
    %122 = arith.truncf %121 : vector<2x32x32xf32> to vector<2x32x32xbf16>
    "tpu.trace_start"() <{level = 10 : i32, message = "btd,bsd->bts"}> : () -> ()
    %cst_52 = arith.constant dense<0.000000e+00> : vector<2x32x32xf32>
    %123 = tpu.matmul %118, %120, %cst_52 {dimension_numbers = #tpu.dot_dimension_numbers<[2], [2], [1], [1], [0, 0, 0, 1, 1, 1], [0], [0]>} : vector<2x32x32xbf16>, vector<2x32x32xbf16>, vector<2x32x32xf32> -> vector<2x32x32xf32>
    "tpu.trace_stop"() : () -> ()
    %cst_53 = arith.constant 0.176776692 : f32
    %124 = vector.broadcast %cst_53 : f32 to vector<2x32x32xf32>
    %125 = arith.mulf %123, %124 : vector<2x32x32xf32>
    %cst_54 = arith.constant dense<0xFF800000> : vector<2x32xf32>
    %126 = vector.multi_reduction <maximumf>, %125, %cst_54 [2] : vector<2x32x32xf32> to vector<2x32xf32>
    %127 = vector.shape_cast %126 : vector<2x32xf32> to vector<2x32x1xf32>
    %128 = vector.broadcast %127 : vector<2x32x1xf32> to vector<2x32x32xf32>
    %129 = arith.subf %125, %128 : vector<2x32x32xf32>
    %130 = math.exp %129 : vector<2x32x32xf32>
    %cst_55 = arith.constant dense<0.000000e+00> : vector<2x32xf32>
    %131 = vector.multi_reduction <add>, %130, %cst_55 [2] : vector<2x32x32xf32> to vector<2x32xf32>
    %132 = vector.shape_cast %131 : vector<2x32xf32> to vector<2x32x1xf32>
    %133 = tpu.reciprocal %132 {approx = true} : vector<2x32x1xf32> -> vector<2x32x1xf32>
    %134 = vector.broadcast %133 : vector<2x32x1xf32> to vector<2x32x32xf32>
    %135 = arith.mulf %130, %134 : vector<2x32x32xf32>
    %136 = arith.truncf %135 : vector<2x32x32xf32> to vector<2x32x32xbf16>
    "tpu.trace_start"() <{level = 10 : i32, message = "bts,bsd->btd"}> : () -> ()
    %cst_56 = arith.constant dense<0.000000e+00> : vector<2x32x32xf32>
    %137 = tpu.matmul %136, %122, %cst_56 {dimension_numbers = #tpu.dot_dimension_numbers<[2], [1], [1], [2], [0, 0, 0, 1, 1, 2], [0], [0]>} : vector<2x32x32xbf16>, vector<2x32x32xbf16>, vector<2x32x32xf32> -> vector<2x32x32xf32>
    "tpu.trace_stop"() : () -> ()
    %138 = vector.extract_strided_slice %91 {offsets = [0, 0, 64], sizes = [2, 32, 32], strides = [1, 1, 1]} : vector<2x32x128xf32> to vector<2x32x32xf32>
    %139 = arith.truncf %138 : vector<2x32x32xf32> to vector<2x32x32xbf16>
    %140 = vector.extract_strided_slice %93 {offsets = [0, 0, 64], sizes = [2, 32, 32], strides = [1, 1, 1]} : vector<2x32x128xf32> to vector<2x32x32xf32>
    %141 = arith.truncf %140 : vector<2x32x32xf32> to vector<2x32x32xbf16>
    %142 = vector.extract_strided_slice %95 {offsets = [0, 0, 64], sizes = [2, 32, 32], strides = [1, 1, 1]} : vector<2x32x128xf32> to vector<2x32x32xf32>
    %143 = arith.truncf %142 : vector<2x32x32xf32> to vector<2x32x32xbf16>
    "tpu.trace_start"() <{level = 10 : i32, message = "btd,bsd->bts"}> : () -> ()
    %cst_57 = arith.constant dense<0.000000e+00> : vector<2x32x32xf32>
    %144 = tpu.matmul %139, %141, %cst_57 {dimension_numbers = #tpu.dot_dimension_numbers<[2], [2], [1], [1], [0, 0, 0, 1, 1, 1], [0], [0]>} : vector<2x32x32xbf16>, vector<2x32x32xbf16>, vector<2x32x32xf32> -> vector<2x32x32xf32>
    "tpu.trace_stop"() : () -> ()
    %cst_58 = arith.constant 0.176776692 : f32
    %145 = vector.broadcast %cst_58 : f32 to vector<2x32x32xf32>
    %146 = arith.mulf %144, %145 : vector<2x32x32xf32>
    %cst_59 = arith.constant dense<0xFF800000> : vector<2x32xf32>
    %147 = vector.multi_reduction <maximumf>, %146, %cst_59 [2] : vector<2x32x32xf32> to vector<2x32xf32>
    %148 = vector.shape_cast %147 : vector<2x32xf32> to vector<2x32x1xf32>
    %149 = vector.broadcast %148 : vector<2x32x1xf32> to vector<2x32x32xf32>
    %150 = arith.subf %146, %149 : vector<2x32x32xf32>
    %151 = math.exp %150 : vector<2x32x32xf32>
    %cst_60 = arith.constant dense<0.000000e+00> : vector<2x32xf32>
    %152 = vector.multi_reduction <add>, %151, %cst_60 [2] : vector<2x32x32xf32> to vector<2x32xf32>
    %153 = vector.shape_cast %152 : vector<2x32xf32> to vector<2x32x1xf32>
    %154 = tpu.reciprocal %153 {approx = true} : vector<2x32x1xf32> -> vector<2x32x1xf32>
    %155 = vector.broadcast %154 : vector<2x32x1xf32> to vector<2x32x32xf32>
    %156 = arith.mulf %151, %155 : vector<2x32x32xf32>
    %157 = arith.truncf %156 : vector<2x32x32xf32> to vector<2x32x32xbf16>
    "tpu.trace_start"() <{level = 10 : i32, message = "bts,bsd->btd"}> : () -> ()
    %cst_61 = arith.constant dense<0.000000e+00> : vector<2x32x32xf32>
    %158 = tpu.matmul %157, %143, %cst_61 {dimension_numbers = #tpu.dot_dimension_numbers<[2], [1], [1], [2], [0, 0, 0, 1, 1, 2], [0], [0]>} : vector<2x32x32xbf16>, vector<2x32x32xbf16>, vector<2x32x32xf32> -> vector<2x32x32xf32>
    "tpu.trace_stop"() : () -> ()
    %159 = vector.extract_strided_slice %91 {offsets = [0, 0, 96], sizes = [2, 32, 32], strides = [1, 1, 1]} : vector<2x32x128xf32> to vector<2x32x32xf32>
    %160 = arith.truncf %159 : vector<2x32x32xf32> to vector<2x32x32xbf16>
    %161 = vector.extract_strided_slice %93 {offsets = [0, 0, 96], sizes = [2, 32, 32], strides = [1, 1, 1]} : vector<2x32x128xf32> to vector<2x32x32xf32>
    %162 = arith.truncf %161 : vector<2x32x32xf32> to vector<2x32x32xbf16>
    %163 = vector.extract_strided_slice %95 {offsets = [0, 0, 96], sizes = [2, 32, 32], strides = [1, 1, 1]} : vector<2x32x128xf32> to vector<2x32x32xf32>
    %164 = arith.truncf %163 : vector<2x32x32xf32> to vector<2x32x32xbf16>
    "tpu.trace_start"() <{level = 10 : i32, message = "btd,bsd->bts"}> : () -> ()
    %cst_62 = arith.constant dense<0.000000e+00> : vector<2x32x32xf32>
    %165 = tpu.matmul %160, %162, %cst_62 {dimension_numbers = #tpu.dot_dimension_numbers<[2], [2], [1], [1], [0, 0, 0, 1, 1, 1], [0], [0]>} : vector<2x32x32xbf16>, vector<2x32x32xbf16>, vector<2x32x32xf32> -> vector<2x32x32xf32>
    "tpu.trace_stop"() : () -> ()
    %cst_63 = arith.constant 0.176776692 : f32
    %166 = vector.broadcast %cst_63 : f32 to vector<2x32x32xf32>
    %167 = arith.mulf %165, %166 : vector<2x32x32xf32>
    %cst_64 = arith.constant dense<0xFF800000> : vector<2x32xf32>
    %168 = vector.multi_reduction <maximumf>, %167, %cst_64 [2] : vector<2x32x32xf32> to vector<2x32xf32>
    %169 = vector.shape_cast %168 : vector<2x32xf32> to vector<2x32x1xf32>
    %170 = vector.broadcast %169 : vector<2x32x1xf32> to vector<2x32x32xf32>
    %171 = arith.subf %167, %170 : vector<2x32x32xf32>
    %172 = math.exp %171 : vector<2x32x32xf32>
    %cst_65 = arith.constant dense<0.000000e+00> : vector<2x32xf32>
    %173 = vector.multi_reduction <add>, %172, %cst_65 [2] : vector<2x32x32xf32> to vector<2x32xf32>
    %174 = vector.shape_cast %173 : vector<2x32xf32> to vector<2x32x1xf32>
    %175 = tpu.reciprocal %174 {approx = true} : vector<2x32x1xf32> -> vector<2x32x1xf32>
    %176 = vector.broadcast %175 : vector<2x32x1xf32> to vector<2x32x32xf32>
    %177 = arith.mulf %172, %176 : vector<2x32x32xf32>
    %178 = arith.truncf %177 : vector<2x32x32xf32> to vector<2x32x32xbf16>
    "tpu.trace_start"() <{level = 10 : i32, message = "bts,bsd->btd"}> : () -> ()
    %cst_66 = arith.constant dense<0.000000e+00> : vector<2x32x32xf32>
    %179 = tpu.matmul %178, %164, %cst_66 {dimension_numbers = #tpu.dot_dimension_numbers<[2], [1], [1], [2], [0, 0, 0, 1, 1, 2], [0], [0]>} : vector<2x32x32xbf16>, vector<2x32x32xbf16>, vector<2x32x32xf32> -> vector<2x32x32xf32>
    "tpu.trace_stop"() : () -> ()
    %180 = tpu.concatenate %116, %137, %158, %179 in 2 : vector<2x32x32xf32>, vector<2x32x32xf32>, vector<2x32x32xf32>, vector<2x32x32xf32> -> vector<2x32x128xf32>
    %181 = vector.shape_cast %180 : vector<2x32x128xf32> to vector<64x128xf32>
    %c0_67 = arith.constant 0 : index
    %c0_68 = arith.constant 0 : index
    %c0_69 = arith.constant 0 : index
    %182 = vector.load %arg13[%c0_67, %c0_68, %c0_69] : memref<1x128x128xbf16, #tpu.memory_space<vmem>>, vector<1x128x128xbf16>
    %183 = vector.shape_cast %182 : vector<1x128x128xbf16> to vector<128x128xbf16>
    %184 = arith.truncf %181 : vector<64x128xf32> to vector<64x128xbf16>
    %cst_70 = arith.constant dense<0.000000e+00> : vector<64x128xf32>
    %185 = tpu.matmul %184, %183, %cst_70 {dimension_numbers = #tpu.dot_dimension_numbers<[1], [0], [0], [1], [0, 0, 1, 1], [], []>} : vector<64x128xbf16>, vector<128x128xbf16>, vector<64x128xf32> -> vector<64x128xf32>
    %186 = arith.addf %55, %185 : vector<64x128xf32>
    %c0_71 = arith.constant 0 : index
    %c0_72 = arith.constant 0 : index
    %c0_73 = arith.constant 0 : index
    %187 = vector.load %arg14[%c0_71, %c0_72, %c0_73] : memref<1x1x128xf32, #tpu.memory_space<vmem>>, vector<1x1x128xf32>
    %188 = vector.shape_cast %187 : vector<1x1x128xf32> to vector<1x128xf32>
    %189 = vector.broadcast %188 : vector<1x128xf32> to vector<64x128xf32>
    %190 = arith.addf %186, %189 : vector<64x128xf32>
    %c0_74 = arith.constant 0 : index
    %c0_75 = arith.constant 0 : index
    %c0_76 = arith.constant 0 : index
    %191 = vector.load %arg15[%c0_74, %c0_75, %c0_76] : memref<1x1x128xf32, #tpu.memory_space<vmem>>, vector<1x1x128xf32>
    %192 = vector.shape_cast %191 : vector<1x1x128xf32> to vector<1x128xf32>
    %c0_77 = arith.constant 0 : index
    %c0_78 = arith.constant 0 : index
    %c0_79 = arith.constant 0 : index
    %193 = vector.load %arg16[%c0_77, %c0_78, %c0_79] : memref<1x1x128xf32, #tpu.memory_space<vmem>>, vector<1x1x128xf32>
    %194 = vector.shape_cast %193 : vector<1x1x128xf32> to vector<1x128xf32>
    %cst_80 = arith.constant dense<0.000000e+00> : vector<64xf32>
    %195 = vector.multi_reduction <add>, %190, %cst_80 [1] : vector<64x128xf32> to vector<64xf32>
    %196 = vector.shape_cast %195 : vector<64xf32> to vector<64x1xf32>
    %cst_81 = arith.constant 1.280000e+02 : f32
    %197 = vector.broadcast %cst_81 : f32 to vector<64x1xf32>
    %198 = arith.divf %196, %197 : vector<64x1xf32>
    %199 = vector.broadcast %198 : vector<64x1xf32> to vector<64x128xf32>
    %200 = arith.subf %190, %199 : vector<64x128xf32>
    %201 = arith.mulf %200, %200 : vector<64x128xf32>
    %cst_82 = arith.constant dense<0.000000e+00> : vector<64xf32>
    %202 = vector.multi_reduction <add>, %201, %cst_82 [1] : vector<64x128xf32> to vector<64xf32>
    %203 = vector.shape_cast %202 : vector<64xf32> to vector<64x1xf32>
    %cst_83 = arith.constant 1.280000e+02 : f32
    %204 = vector.broadcast %cst_83 : f32 to vector<64x1xf32>
    %205 = arith.divf %203, %204 : vector<64x1xf32>
    %206 = vector.broadcast %198 : vector<64x1xf32> to vector<64x128xf32>
    %207 = arith.subf %190, %206 : vector<64x128xf32>
    %cst_84 = arith.constant 9.99999974E-6 : f32
    %208 = vector.broadcast %cst_84 : f32 to vector<64x1xf32>
    %209 = arith.addf %205, %208 : vector<64x1xf32>
    %210 = math.rsqrt %209 : vector<64x1xf32>
    %211 = vector.broadcast %210 : vector<64x1xf32> to vector<64x128xf32>
    %212 = arith.mulf %207, %211 : vector<64x128xf32>
    %213 = vector.broadcast %192 : vector<1x128xf32> to vector<64x128xf32>
    %214 = arith.mulf %212, %213 : vector<64x128xf32>
    %215 = vector.broadcast %194 : vector<1x128xf32> to vector<64x128xf32>
    %216 = arith.addf %214, %215 : vector<64x128xf32>
    %c0_85 = arith.constant 0 : index
    %c0_86 = arith.constant 0 : index
    %c0_87 = arith.constant 0 : index
    %217 = vector.load %arg17[%c0_85, %c0_86, %c0_87] : memref<1x128x256xbf16, #tpu.memory_space<vmem>>, vector<1x128x256xbf16>
    %218 = vector.shape_cast %217 : vector<1x128x256xbf16> to vector<128x256xbf16>
    %219 = arith.truncf %216 : vector<64x128xf32> to vector<64x128xbf16>
    %cst_88 = arith.constant dense<0.000000e+00> : vector<64x256xf32>
    %220 = tpu.matmul %219, %218, %cst_88 {dimension_numbers = #tpu.dot_dimension_numbers<[1], [0], [0], [1], [0, 0, 1, 1], [], []>} : vector<64x128xbf16>, vector<128x256xbf16>, vector<64x256xf32> -> vector<64x256xf32>
    %c0_89 = arith.constant 0 : index
    %c0_90 = arith.constant 0 : index
    %c0_91 = arith.constant 0 : index
    %221 = vector.load %arg18[%c0_89, %c0_90, %c0_91] : memref<1x1x256xf32, #tpu.memory_space<vmem>>, vector<1x1x256xf32>
    %222 = vector.shape_cast %221 : vector<1x1x256xf32> to vector<1x256xf32>
    %223 = vector.broadcast %222 : vector<1x256xf32> to vector<64x256xf32>
    %224 = arith.addf %220, %223 : vector<64x256xf32>
    %225 = vector.extract_strided_slice %224 {offsets = [0, 0], sizes = [64, 128], strides = [1, 1]} : vector<64x256xf32> to vector<64x128xf32>
    %226 = vector.extract_strided_slice %224 {offsets = [0, 128], sizes = [64, 128], strides = [1, 1]} : vector<64x256xf32> to vector<64x128xf32>
    %227 = arith.negf %226 : vector<64x128xf32>
    %228 = math.exp %227 : vector<64x128xf32>
    %cst_92 = arith.constant 1.000000e+00 : f32
    %229 = vector.broadcast %cst_92 : f32 to vector<64x128xf32>
    %230 = arith.addf %229, %228 : vector<64x128xf32>
    %231 = arith.divf %229, %230 : vector<64x128xf32>
    %232 = arith.mulf %225, %231 : vector<64x128xf32>
    %233 = tpu.iota {dimensions = array<i32: 0>} : vector<32x128xi32>
    %234 = vector.shape_cast %233 : vector<32x128xi32> to vector<1x32x128xi32>
    %235 = vector.shape_cast %234 : vector<1x32x128xi32> to vector<1x32x128xi32>
    %236 = vector.broadcast %235 : vector<1x32x128xi32> to vector<2x32x128xi32>
    %237 = vector.shape_cast %236 : vector<2x32x128xi32> to vector<64x128xi32>
    %c0_93 = arith.constant 0 : index
    %c0_94 = arith.constant 0 : index
    %c0_95 = arith.constant 0 : index
    %238 = vector.load %arg19[%c0_93, %c0_94, %c0_95] : memref<1x3x128xf32, #tpu.memory_space<vmem>>, vector<1x3x128xf32>
    %239 = vector.shape_cast %238 : vector<1x3x128xf32> to vector<3x128xf32>
    %cst_96 = arith.constant 0.000000e+00 : f32
    %240 = vector.broadcast %cst_96 : f32 to vector<64x128xf32>
    %241 = vector.extract_strided_slice %239 {offsets = [0, 0], sizes = [1, 128], strides = [1, 1]} : vector<3x128xf32> to vector<1x128xf32>
    %c1_i32 = arith.constant 1 : i32
    %242 = tpu.dynamic_rotate %232 by %c1_i32 dim 0 : vector<64x128xf32>, i32 -> vector<64x128xf32>
    %c1_i32_97 = arith.constant 1 : i32
    %243 = vector.broadcast %c1_i32_97 : i32 to vector<64x128xi32>
    %244 = arith.cmpi sge, %237, %243 : vector<64x128xi32>
    %245 = vector.broadcast %241 : vector<1x128xf32> to vector<64x128xf32>
    %246 = arith.mulf %242, %245 : vector<64x128xf32>
    %cst_98 = arith.constant 0.000000e+00 : f32
    %247 = vector.broadcast %cst_98 : f32 to vector<64x128xf32>
    %248 = arith.select %244, %246, %247 : vector<64x128xi1>, vector<64x128xf32>
    %249 = arith.addf %240, %248 : vector<64x128xf32>
    %250 = vector.extract_strided_slice %239 {offsets = [1, 0], sizes = [1, 128], strides = [1, 1]} : vector<3x128xf32> to vector<1x128xf32>
    %251 = vector.broadcast %250 : vector<1x128xf32> to vector<64x128xf32>
    %252 = arith.mulf %232, %251 : vector<64x128xf32>
    %253 = arith.addf %249, %252 : vector<64x128xf32>
    %254 = vector.extract_strided_slice %239 {offsets = [2, 0], sizes = [1, 128], strides = [1, 1]} : vector<3x128xf32> to vector<1x128xf32>
    %c63_i32 = arith.constant 63 : i32
    %255 = tpu.dynamic_rotate %232 by %c63_i32 dim 0 : vector<64x128xf32>, i32 -> vector<64x128xf32>
    %c31_i32 = arith.constant 31 : i32
    %256 = vector.broadcast %c31_i32 : i32 to vector<64x128xi32>
    %257 = arith.cmpi slt, %237, %256 : vector<64x128xi32>
    %258 = vector.broadcast %254 : vector<1x128xf32> to vector<64x128xf32>
    %259 = arith.mulf %255, %258 : vector<64x128xf32>
    %cst_99 = arith.constant 0.000000e+00 : f32
    %260 = vector.broadcast %cst_99 : f32 to vector<64x128xf32>
    %261 = arith.select %257, %259, %260 : vector<64x128xi1>, vector<64x128xf32>
    %262 = arith.addf %253, %261 : vector<64x128xf32>
    %c0_100 = arith.constant 0 : index
    %c0_101 = arith.constant 0 : index
    %c0_102 = arith.constant 0 : index
    %263 = vector.load %arg20[%c0_100, %c0_101, %c0_102] : memref<1x1x128xf32, #tpu.memory_space<vmem>>, vector<1x1x128xf32>
    %264 = vector.shape_cast %263 : vector<1x1x128xf32> to vector<1x128xf32>
    %265 = vector.broadcast %264 : vector<1x128xf32> to vector<64x128xf32>
    %266 = arith.addf %262, %265 : vector<64x128xf32>
    %c0_103 = arith.constant 0 : index
    %c0_104 = arith.constant 0 : index
    %c0_105 = arith.constant 0 : index
    %267 = vector.load %arg21[%c0_103, %c0_104, %c0_105] : memref<1x1x128xf32, #tpu.memory_space<vmem>>, vector<1x1x128xf32>
    %268 = vector.shape_cast %267 : vector<1x1x128xf32> to vector<1x128xf32>
    %269 = vector.broadcast %268 : vector<1x128xf32> to vector<64x128xf32>
    %270 = arith.mulf %266, %269 : vector<64x128xf32>
    %c0_106 = arith.constant 0 : index
    %c0_107 = arith.constant 0 : index
    %c0_108 = arith.constant 0 : index
    %271 = vector.load %arg22[%c0_106, %c0_107, %c0_108] : memref<1x1x128xf32, #tpu.memory_space<vmem>>, vector<1x1x128xf32>
    %272 = vector.shape_cast %271 : vector<1x1x128xf32> to vector<1x128xf32>
    %273 = vector.broadcast %272 : vector<1x128xf32> to vector<64x128xf32>
    %274 = arith.addf %270, %273 : vector<64x128xf32>
    %275 = arith.negf %274 : vector<64x128xf32>
    %276 = math.exp %275 : vector<64x128xf32>
    %cst_109 = arith.constant 1.000000e+00 : f32
    %277 = vector.broadcast %cst_109 : f32 to vector<64x128xf32>
    %278 = arith.addf %277, %276 : vector<64x128xf32>
    %279 = arith.divf %277, %278 : vector<64x128xf32>
    %280 = arith.mulf %274, %279 : vector<64x128xf32>
    %c0_110 = arith.constant 0 : index
    %c0_111 = arith.constant 0 : index
    %c0_112 = arith.constant 0 : index
    %281 = vector.load %arg23[%c0_110, %c0_111, %c0_112] : memref<1x128x128xbf16, #tpu.memory_space<vmem>>, vector<1x128x128xbf16>
    %282 = vector.shape_cast %281 : vector<1x128x128xbf16> to vector<128x128xbf16>
    %283 = arith.truncf %280 : vector<64x128xf32> to vector<64x128xbf16>
    %cst_113 = arith.constant dense<0.000000e+00> : vector<64x128xf32>
    %284 = tpu.matmul %283, %282, %cst_113 {dimension_numbers = #tpu.dot_dimension_numbers<[1], [0], [0], [1], [0, 0, 1, 1], [], []>} : vector<64x128xbf16>, vector<128x128xbf16>, vector<64x128xf32> -> vector<64x128xf32>
    %285 = arith.addf %190, %284 : vector<64x128xf32>
    %c0_114 = arith.constant 0 : index
    %c0_115 = arith.constant 0 : index
    %c0_116 = arith.constant 0 : index
    %286 = vector.load %arg24[%c0_114, %c0_115, %c0_116] : memref<1x1x128xf32, #tpu.memory_space<vmem>>, vector<1x1x128xf32>
    %287 = vector.shape_cast %286 : vector<1x1x128xf32> to vector<1x128xf32>
    %288 = vector.broadcast %287 : vector<1x128xf32> to vector<64x128xf32>
    %289 = arith.addf %285, %288 : vector<64x128xf32>
    %c0_117 = arith.constant 0 : index
    %c0_118 = arith.constant 0 : index
    %c0_119 = arith.constant 0 : index
    %290 = vector.load %arg25[%c0_117, %c0_118, %c0_119] : memref<1x1x128xf32, #tpu.memory_space<vmem>>, vector<1x1x128xf32>
    %291 = vector.shape_cast %290 : vector<1x1x128xf32> to vector<1x128xf32>
    %c0_120 = arith.constant 0 : index
    %c0_121 = arith.constant 0 : index
    %c0_122 = arith.constant 0 : index
    %292 = vector.load %arg26[%c0_120, %c0_121, %c0_122] : memref<1x1x128xf32, #tpu.memory_space<vmem>>, vector<1x1x128xf32>
    %293 = vector.shape_cast %292 : vector<1x1x128xf32> to vector<1x128xf32>
    %cst_123 = arith.constant dense<0.000000e+00> : vector<64xf32>
    %294 = vector.multi_reduction <add>, %289, %cst_123 [1] : vector<64x128xf32> to vector<64xf32>
    %295 = vector.shape_cast %294 : vector<64xf32> to vector<64x1xf32>
    %cst_124 = arith.constant 1.280000e+02 : f32
    %296 = vector.broadcast %cst_124 : f32 to vector<64x1xf32>
    %297 = arith.divf %295, %296 : vector<64x1xf32>
    %298 = vector.broadcast %297 : vector<64x1xf32> to vector<64x128xf32>
    %299 = arith.subf %289, %298 : vector<64x128xf32>
    %300 = arith.mulf %299, %299 : vector<64x128xf32>
    %cst_125 = arith.constant dense<0.000000e+00> : vector<64xf32>
    %301 = vector.multi_reduction <add>, %300, %cst_125 [1] : vector<64x128xf32> to vector<64xf32>
    %302 = vector.shape_cast %301 : vector<64xf32> to vector<64x1xf32>
    %cst_126 = arith.constant 1.280000e+02 : f32
    %303 = vector.broadcast %cst_126 : f32 to vector<64x1xf32>
    %304 = arith.divf %302, %303 : vector<64x1xf32>
    %305 = vector.broadcast %297 : vector<64x1xf32> to vector<64x128xf32>
    %306 = arith.subf %289, %305 : vector<64x128xf32>
    %cst_127 = arith.constant 9.99999974E-6 : f32
    %307 = vector.broadcast %cst_127 : f32 to vector<64x1xf32>
    %308 = arith.addf %304, %307 : vector<64x1xf32>
    %309 = math.rsqrt %308 : vector<64x1xf32>
    %310 = vector.broadcast %309 : vector<64x1xf32> to vector<64x128xf32>
    %311 = arith.mulf %306, %310 : vector<64x128xf32>
    %312 = vector.broadcast %291 : vector<1x128xf32> to vector<64x128xf32>
    %313 = arith.mulf %311, %312 : vector<64x128xf32>
    %314 = vector.broadcast %293 : vector<1x128xf32> to vector<64x128xf32>
    %315 = arith.addf %313, %314 : vector<64x128xf32>
    %c0_128 = arith.constant 0 : index
    %c0_129 = arith.constant 0 : index
    %c0_130 = arith.constant 0 : index
    %316 = vector.load %arg27[%c0_128, %c0_129, %c0_130] : memref<1x128x512xbf16, #tpu.memory_space<vmem>>, vector<1x128x512xbf16>
    %317 = vector.shape_cast %316 : vector<1x128x512xbf16> to vector<128x512xbf16>
    %318 = arith.truncf %315 : vector<64x128xf32> to vector<64x128xbf16>
    %cst_131 = arith.constant dense<0.000000e+00> : vector<64x512xf32>
    %319 = tpu.matmul %318, %317, %cst_131 {dimension_numbers = #tpu.dot_dimension_numbers<[1], [0], [0], [1], [0, 0, 1, 1], [], []>} : vector<64x128xbf16>, vector<128x512xbf16>, vector<64x512xf32> -> vector<64x512xf32>
    %c0_132 = arith.constant 0 : index
    %c0_133 = arith.constant 0 : index
    %c0_134 = arith.constant 0 : index
    %320 = vector.load %arg28[%c0_132, %c0_133, %c0_134] : memref<1x1x512xf32, #tpu.memory_space<vmem>>, vector<1x1x512xf32>
    %321 = vector.shape_cast %320 : vector<1x1x512xf32> to vector<1x512xf32>
    %322 = vector.broadcast %321 : vector<1x512xf32> to vector<64x512xf32>
    %323 = arith.addf %319, %322 : vector<64x512xf32>
    %324 = arith.negf %323 : vector<64x512xf32>
    %325 = math.exp %324 : vector<64x512xf32>
    %cst_135 = arith.constant 1.000000e+00 : f32
    %326 = vector.broadcast %cst_135 : f32 to vector<64x512xf32>
    %327 = arith.addf %326, %325 : vector<64x512xf32>
    %328 = arith.divf %326, %327 : vector<64x512xf32>
    %329 = arith.mulf %323, %328 : vector<64x512xf32>
    %c0_136 = arith.constant 0 : index
    %c0_137 = arith.constant 0 : index
    %c0_138 = arith.constant 0 : index
    %330 = vector.load %arg29[%c0_136, %c0_137, %c0_138] : memref<1x512x128xbf16, #tpu.memory_space<vmem>>, vector<1x512x128xbf16>
    %331 = vector.shape_cast %330 : vector<1x512x128xbf16> to vector<512x128xbf16>
    %332 = arith.truncf %329 : vector<64x512xf32> to vector<64x512xbf16>
    %cst_139 = arith.constant dense<0.000000e+00> : vector<64x128xf32>
    %333 = tpu.matmul %332, %331, %cst_139 {dimension_numbers = #tpu.dot_dimension_numbers<[1], [0], [0], [1], [0, 0, 1, 1], [], []>} : vector<64x512xbf16>, vector<512x128xbf16>, vector<64x128xf32> -> vector<64x128xf32>
    %c0_140 = arith.constant 0 : index
    %c0_141 = arith.constant 0 : index
    %c0_142 = arith.constant 0 : index
    %334 = vector.load %arg30[%c0_140, %c0_141, %c0_142] : memref<1x1x128xf32, #tpu.memory_space<vmem>>, vector<1x1x128xf32>
    %335 = vector.shape_cast %334 : vector<1x1x128xf32> to vector<1x128xf32>
    %336 = vector.broadcast %335 : vector<1x128xf32> to vector<64x128xf32>
    %337 = arith.addf %333, %336 : vector<64x128xf32>
    %cst_143 = arith.constant 5.000000e-01 : f32
    %338 = vector.broadcast %cst_143 : f32 to vector<64x128xf32>
    %339 = arith.mulf %338, %337 : vector<64x128xf32>
    %340 = arith.addf %289, %339 : vector<64x128xf32>
    %c0_144 = arith.constant 0 : index
    %c0_145 = arith.constant 0 : index
    %c0_146 = arith.constant 0 : index
    %341 = vector.load %arg31[%c0_144, %c0_145, %c0_146] : memref<1x1x128xf32, #tpu.memory_space<vmem>>, vector<1x1x128xf32>
    %342 = vector.shape_cast %341 : vector<1x1x128xf32> to vector<1x128xf32>
    %c0_147 = arith.constant 0 : index
    %c0_148 = arith.constant 0 : index
    %c0_149 = arith.constant 0 : index
    %343 = vector.load %arg32[%c0_147, %c0_148, %c0_149] : memref<1x1x128xf32, #tpu.memory_space<vmem>>, vector<1x1x128xf32>
    %344 = vector.shape_cast %343 : vector<1x1x128xf32> to vector<1x128xf32>
    %cst_150 = arith.constant dense<0.000000e+00> : vector<64xf32>
    %345 = vector.multi_reduction <add>, %340, %cst_150 [1] : vector<64x128xf32> to vector<64xf32>
    %346 = vector.shape_cast %345 : vector<64xf32> to vector<64x1xf32>
    %cst_151 = arith.constant 1.280000e+02 : f32
    %347 = vector.broadcast %cst_151 : f32 to vector<64x1xf32>
    %348 = arith.divf %346, %347 : vector<64x1xf32>
    %349 = vector.broadcast %348 : vector<64x1xf32> to vector<64x128xf32>
    %350 = arith.subf %340, %349 : vector<64x128xf32>
    %351 = arith.mulf %350, %350 : vector<64x128xf32>
    %cst_152 = arith.constant dense<0.000000e+00> : vector<64xf32>
    %352 = vector.multi_reduction <add>, %351, %cst_152 [1] : vector<64x128xf32> to vector<64xf32>
    %353 = vector.shape_cast %352 : vector<64xf32> to vector<64x1xf32>
    %cst_153 = arith.constant 1.280000e+02 : f32
    %354 = vector.broadcast %cst_153 : f32 to vector<64x1xf32>
    %355 = arith.divf %353, %354 : vector<64x1xf32>
    %356 = vector.broadcast %348 : vector<64x1xf32> to vector<64x128xf32>
    %357 = arith.subf %340, %356 : vector<64x128xf32>
    %cst_154 = arith.constant 9.99999974E-6 : f32
    %358 = vector.broadcast %cst_154 : f32 to vector<64x1xf32>
    %359 = arith.addf %355, %358 : vector<64x1xf32>
    %360 = math.rsqrt %359 : vector<64x1xf32>
    %361 = vector.broadcast %360 : vector<64x1xf32> to vector<64x128xf32>
    %362 = arith.mulf %357, %361 : vector<64x128xf32>
    %363 = vector.broadcast %342 : vector<1x128xf32> to vector<64x128xf32>
    %364 = arith.mulf %362, %363 : vector<64x128xf32>
    %365 = vector.broadcast %344 : vector<1x128xf32> to vector<64x128xf32>
    %366 = arith.addf %364, %365 : vector<64x128xf32>
    %367 = vector.shape_cast %366 : vector<64x128xf32> to vector<2x32x128xf32>
    %c0_155 = arith.constant 0 : index
    %c0_156 = arith.constant 0 : index
    %c0_157 = arith.constant 0 : index
    %368 = vector.load %arg39[%c0_155, %c0_156, %c0_157] : memref<2x32x128xf32, #tpu.memory_space<vmem>>, vector<2x32x128xf32>
    tpu.vector_store %arg39[%c0_155, %c0_156, %c0_157], %367 {strides = array<i32>} : memref<2x32x128xf32, #tpu.memory_space<vmem>>, vector<2x32x128xf32>,
    %c1_i32_158 = arith.constant 1 : i32
    %369 = arith.cmpi eq, %arg1, %c1_i32_158 : i32
    %370 = arith.extui %369 : i1 to i32
    %c0_i32_159 = arith.constant 0 : i32
    %371 = arith.cmpi ne, %370, %c0_i32_159 : i32
    scf.if %371 {
      %372 = vector.shape_cast %366 : vector<64x128xf32> to vector<2x32x128xf32>
      %cst_160 = arith.constant dense<0.000000e+00> : vector<2x128xf32>
      %373 = vector.multi_reduction <add>, %372, %cst_160 [1] : vector<2x32x128xf32> to vector<2x128xf32>
      %cst_161 = arith.constant 3.200000e+01 : f32
      %374 = vector.broadcast %cst_161 : f32 to vector<2x128xf32>
      %375 = arith.divf %373, %374 : vector<2x128xf32>
      %c0_162 = arith.constant 0 : index
      %c0_163 = arith.constant 0 : index
      %376 = vector.load %arg33[%c0_162, %c0_163] : memref<128x128xbf16, #tpu.memory_space<vmem>>, vector<128x128xbf16>
      %377 = arith.truncf %375 : vector<2x128xf32> to vector<2x128xbf16>
      %cst_164 = arith.constant dense<0.000000e+00> : vector<2x128xf32>
      %378 = tpu.matmul %377, %376, %cst_164 {dimension_numbers = #tpu.dot_dimension_numbers<[1], [0], [0], [1], [0, 0, 1, 1], [], []>} : vector<2x128xbf16>, vector<128x128xbf16>, vector<2x128xf32> -> vector<2x128xf32>
      %c0_165 = arith.constant 0 : index
      %c0_166 = arith.constant 0 : index
      %379 = vector.load %arg34[%c0_165, %c0_166] : memref<1x128xf32, #tpu.memory_space<vmem>>, vector<1x128xf32>
      %380 = vector.broadcast %379 : vector<1x128xf32> to vector<2x128xf32>
      %381 = arith.addf %378, %380 : vector<2x128xf32>
      %c0_167 = arith.constant 0 : index
      %c0_168 = arith.constant 0 : index
      %382 = memref.load %arg37[%c0_167, %c0_168] : memref<1x1xf32, #tpu.memory_space<smem>>
      %cst_169 = arith.constant 0.000000e+00 : f32
      %383 = vector.broadcast %cst_169 : f32 to vector<2x128xf32>
      %384 = arith.cmpf oge, %381, %383 : vector<2x128xf32>
      %385 = vector.broadcast %382 : f32 to vector<2x128xf32>
      %386 = arith.mulf %385, %381 : vector<2x128xf32>
      %387 = arith.select %384, %381, %386 : vector<2x128xi1>, vector<2x128xf32>
      %c0_170 = arith.constant 0 : index
      %c0_171 = arith.constant 0 : index
      %388 = vector.load %arg35[%c0_170, %c0_171] : memref<1x128xf32, #tpu.memory_space<vmem>>, vector<1x128xf32>
      %389 = vector.broadcast %388 : vector<1x128xf32> to vector<2x128xf32>
      %390 = arith.mulf %387, %389 : vector<2x128xf32>
      %cst_172 = arith.constant dense<0.000000e+00> : vector<2xf32>
      %391 = vector.multi_reduction <add>, %390, %cst_172 [1] : vector<2x128xf32> to vector<2xf32>
      %392 = vector.shape_cast %391 : vector<2xf32> to vector<2x1xf32>
      %c0_173 = arith.constant 0 : index
      %c0_174 = arith.constant 0 : index
      %393 = vector.load %arg36[%c0_173, %c0_174] : memref<1x1xf32, #tpu.memory_space<vmem>>, vector<1x1xf32>
      %394 = vector.broadcast %393 : vector<1x1xf32> to vector<2x1xf32>
      %395 = arith.addf %392, %394 : vector<2x1xf32>
      %c0_175 = arith.constant 0 : index
      %c0_176 = arith.constant 0 : index
      %396 = vector.load %arg38[%c0_175, %c0_176] : memref<2x1xf32, #tpu.memory_space<vmem>>, vector<2x1xf32>
      tpu.vector_store %arg38[%c0_175, %c0_176], %395 {strides = array<i32>} : memref<2x1xf32, #tpu.memory_space<vmem>>, vector<2x1xf32>,
    } else {
    }
    return
  }
  func.func @transform_0(%arg0: i32, %arg1: i32) -> (i32, i32, i32) {
    %c0_i32 = arith.constant 0 : i32
    %c0_i32_0 = arith.constant 0 : i32
    %c0_i32_1 = arith.constant 0 : i32
    return %arg0, %c0_i32, %c0_i32_0 : i32, i32, i32
  }
  func.func @transform_1(%arg0: i32, %arg1: i32) -> (i32, i32, i32) {
    %c0_i32 = arith.constant 0 : i32
    %c0_i32_0 = arith.constant 0 : i32
    %c0_i32_1 = arith.constant 0 : i32
    return %arg1, %c0_i32, %c0_i32_0 : i32, i32, i32
  }
  func.func @transform_2(%arg0: i32, %arg1: i32) -> (i32, i32, i32) {
    %c0_i32 = arith.constant 0 : i32
    %c0_i32_0 = arith.constant 0 : i32
    %c0_i32_1 = arith.constant 0 : i32
    return %arg1, %c0_i32, %c0_i32_0 : i32, i32, i32
  }
  func.func @transform_3(%arg0: i32, %arg1: i32) -> (i32, i32, i32) {
    %c0_i32 = arith.constant 0 : i32
    %c0_i32_0 = arith.constant 0 : i32
    %c0_i32_1 = arith.constant 0 : i32
    return %arg1, %c0_i32, %c0_i32_0 : i32, i32, i32
  }
  func.func @transform_4(%arg0: i32, %arg1: i32) -> (i32, i32, i32) {
    %c0_i32 = arith.constant 0 : i32
    %c0_i32_0 = arith.constant 0 : i32
    %c0_i32_1 = arith.constant 0 : i32
    return %arg1, %c0_i32, %c0_i32_0 : i32, i32, i32
  }
  func.func @transform_5(%arg0: i32, %arg1: i32) -> (i32, i32, i32) {
    %c0_i32 = arith.constant 0 : i32
    %c0_i32_0 = arith.constant 0 : i32
    %c0_i32_1 = arith.constant 0 : i32
    return %arg1, %c0_i32, %c0_i32_0 : i32, i32, i32
  }
  func.func @transform_6(%arg0: i32, %arg1: i32) -> (i32, i32, i32) {
    %c0_i32 = arith.constant 0 : i32
    %c0_i32_0 = arith.constant 0 : i32
    %c0_i32_1 = arith.constant 0 : i32
    return %arg1, %c0_i32, %c0_i32_0 : i32, i32, i32
  }
  func.func @transform_7(%arg0: i32, %arg1: i32) -> (i32, i32, i32) {
    %c0_i32 = arith.constant 0 : i32
    %c0_i32_0 = arith.constant 0 : i32
    %c0_i32_1 = arith.constant 0 : i32
    return %arg1, %c0_i32, %c0_i32_0 : i32, i32, i32
  }
  func.func @transform_8(%arg0: i32, %arg1: i32) -> (i32, i32, i32) {
    %c0_i32 = arith.constant 0 : i32
    %c0_i32_0 = arith.constant 0 : i32
    %c0_i32_1 = arith.constant 0 : i32
    return %arg1, %c0_i32, %c0_i32_0 : i32, i32, i32
  }
  func.func @transform_9(%arg0: i32, %arg1: i32) -> (i32, i32, i32) {
    %c0_i32 = arith.constant 0 : i32
    %c0_i32_0 = arith.constant 0 : i32
    %c0_i32_1 = arith.constant 0 : i32
    return %arg1, %c0_i32, %c0_i32_0 : i32, i32, i32
  }
  func.func @transform_10(%arg0: i32, %arg1: i32) -> (i32, i32, i32) {
    %c0_i32 = arith.constant 0 : i32
    %c0_i32_0 = arith.constant 0 : i32
    %c0_i32_1 = arith.constant 0 : i32
    return %arg1, %c0_i32, %c0_i32_0 : i32, i32, i32
  }
  func.func @transform_11(%arg0: i32, %arg1: i32) -> (i32, i32, i32) {
    %c0_i32 = arith.constant 0 : i32
    %c0_i32_0 = arith.constant 0 : i32
    %c0_i32_1 = arith.constant 0 : i32
    return %arg1, %c0_i32, %c0_i32_0 : i32, i32, i32
  }
  func.func @transform_12(%arg0: i32, %arg1: i32) -> (i32, i32, i32) {
    %c0_i32 = arith.constant 0 : i32
    %c0_i32_0 = arith.constant 0 : i32
    %c0_i32_1 = arith.constant 0 : i32
    return %arg1, %c0_i32, %c0_i32_0 : i32, i32, i32
  }
  func.func @transform_13(%arg0: i32, %arg1: i32) -> (i32, i32, i32) {
    %c0_i32 = arith.constant 0 : i32
    %c0_i32_0 = arith.constant 0 : i32
    %c0_i32_1 = arith.constant 0 : i32
    return %arg1, %c0_i32, %c0_i32_0 : i32, i32, i32
  }
  func.func @transform_14(%arg0: i32, %arg1: i32) -> (i32, i32, i32) {
    %c0_i32 = arith.constant 0 : i32
    %c0_i32_0 = arith.constant 0 : i32
    %c0_i32_1 = arith.constant 0 : i32
    return %arg1, %c0_i32, %c0_i32_0 : i32, i32, i32
  }
  func.func @transform_15(%arg0: i32, %arg1: i32) -> (i32, i32, i32) {
    %c0_i32 = arith.constant 0 : i32
    %c0_i32_0 = arith.constant 0 : i32
    %c0_i32_1 = arith.constant 0 : i32
    return %arg1, %c0_i32, %c0_i32_0 : i32, i32, i32
  }
  func.func @transform_16(%arg0: i32, %arg1: i32) -> (i32, i32, i32) {
    %c0_i32 = arith.constant 0 : i32
    %c0_i32_0 = arith.constant 0 : i32
    %c0_i32_1 = arith.constant 0 : i32
    return %arg1, %c0_i32, %c0_i32_0 : i32, i32, i32
  }
  func.func @transform_17(%arg0: i32, %arg1: i32) -> (i32, i32, i32) {
    %c0_i32 = arith.constant 0 : i32
    %c0_i32_0 = arith.constant 0 : i32
    %c0_i32_1 = arith.constant 0 : i32
    return %arg1, %c0_i32, %c0_i32_0 : i32, i32, i32
  }
  func.func @transform_18(%arg0: i32, %arg1: i32) -> (i32, i32, i32) {
    %c0_i32 = arith.constant 0 : i32
    %c0_i32_0 = arith.constant 0 : i32
    %c0_i32_1 = arith.constant 0 : i32
    return %arg1, %c0_i32, %c0_i32_0 : i32, i32, i32
  }
  func.func @transform_19(%arg0: i32, %arg1: i32) -> (i32, i32, i32) {
    %c0_i32 = arith.constant 0 : i32
    %c0_i32_0 = arith.constant 0 : i32
    %c0_i32_1 = arith.constant 0 : i32
    return %arg1, %c0_i32, %c0_i32_0 : i32, i32, i32
  }
  func.func @transform_20(%arg0: i32, %arg1: i32) -> (i32, i32, i32) {
    %c0_i32 = arith.constant 0 : i32
    %c0_i32_0 = arith.constant 0 : i32
    %c0_i32_1 = arith.constant 0 : i32
    return %arg1, %c0_i32, %c0_i32_0 : i32, i32, i32
  }
  func.func @transform_21(%arg0: i32, %arg1: i32) -> (i32, i32, i32) {
    %c0_i32 = arith.constant 0 : i32
    %c0_i32_0 = arith.constant 0 : i32
    %c0_i32_1 = arith.constant 0 : i32
    return %arg1, %c0_i32, %c0_i32_0 : i32, i32, i32
  }
  func.func @transform_22(%arg0: i32, %arg1: i32) -> (i32, i32, i32) {
    %c0_i32 = arith.constant 0 : i32
    %c0_i32_0 = arith.constant 0 : i32
    %c0_i32_1 = arith.constant 0 : i32
    return %arg1, %c0_i32, %c0_i32_0 : i32, i32, i32
  }
  func.func @transform_23(%arg0: i32, %arg1: i32) -> (i32, i32, i32) {
    %c0_i32 = arith.constant 0 : i32
    %c0_i32_0 = arith.constant 0 : i32
    %c0_i32_1 = arith.constant 0 : i32
    return %arg1, %c0_i32, %c0_i32_0 : i32, i32, i32
  }
  func.func @transform_24(%arg0: i32, %arg1: i32) -> (i32, i32, i32) {
    %c0_i32 = arith.constant 0 : i32
    %c0_i32_0 = arith.constant 0 : i32
    %c0_i32_1 = arith.constant 0 : i32
    return %arg1, %c0_i32, %c0_i32_0 : i32, i32, i32
  }
  func.func @transform_25(%arg0: i32, %arg1: i32) -> (i32, i32, i32) {
    %c0_i32 = arith.constant 0 : i32
    %c0_i32_0 = arith.constant 0 : i32
    %c0_i32_1 = arith.constant 0 : i32
    return %arg1, %c0_i32, %c0_i32_0 : i32, i32, i32
  }
  func.func @transform_26(%arg0: i32, %arg1: i32) -> (i32, i32, i32) {
    %c0_i32 = arith.constant 0 : i32
    %c0_i32_0 = arith.constant 0 : i32
    %c0_i32_1 = arith.constant 0 : i32
    return %arg1, %c0_i32, %c0_i32_0 : i32, i32, i32
  }
  func.func @transform_27(%arg0: i32, %arg1: i32) -> (i32, i32, i32) {
    %c0_i32 = arith.constant 0 : i32
    %c0_i32_0 = arith.constant 0 : i32
    %c0_i32_1 = arith.constant 0 : i32
    return %arg1, %c0_i32, %c0_i32_0 : i32, i32, i32
  }
  func.func @transform_28(%arg0: i32, %arg1: i32) -> (i32, i32, i32) {
    %c0_i32 = arith.constant 0 : i32
    %c0_i32_0 = arith.constant 0 : i32
    %c0_i32_1 = arith.constant 0 : i32
    return %arg1, %c0_i32, %c0_i32_0 : i32, i32, i32
  }
  func.func @transform_29(%arg0: i32, %arg1: i32) -> (i32, i32, i32) {
    %c0_i32 = arith.constant 0 : i32
    %c0_i32_0 = arith.constant 0 : i32
    %c0_i32_1 = arith.constant 0 : i32
    return %arg1, %c0_i32, %c0_i32_0 : i32, i32, i32
  }
  func.func @transform_30(%arg0: i32, %arg1: i32) -> (i32, i32, i32) {
    %c0_i32 = arith.constant 0 : i32
    %c0_i32_0 = arith.constant 0 : i32
    %c0_i32_1 = arith.constant 0 : i32
    return %arg1, %c0_i32, %c0_i32_0 : i32, i32, i32
  }
  func.func @transform_31(%arg0: i32, %arg1: i32) -> (i32, i32) {
    %c0_i32 = arith.constant 0 : i32
    %c0_i32_0 = arith.constant 0 : i32
    %c0_i32_1 = arith.constant 0 : i32
    return %c0_i32, %c0_i32_0 : i32, i32
  }
  func.func @transform_32(%arg0: i32, %arg1: i32) -> (i32, i32) {
    %c0_i32 = arith.constant 0 : i32
    %c0_i32_0 = arith.constant 0 : i32
    %c0_i32_1 = arith.constant 0 : i32
    return %c0_i32, %c0_i32_0 : i32, i32
  }
  func.func @transform_33(%arg0: i32, %arg1: i32) -> (i32, i32) {
    %c0_i32 = arith.constant 0 : i32
    %c0_i32_0 = arith.constant 0 : i32
    %c0_i32_1 = arith.constant 0 : i32
    return %c0_i32, %c0_i32_0 : i32, i32
  }
  func.func @transform_34(%arg0: i32, %arg1: i32) -> (i32, i32) {
    %c0_i32 = arith.constant 0 : i32
    %c0_i32_0 = arith.constant 0 : i32
    %c0_i32_1 = arith.constant 0 : i32
    return %c0_i32, %c0_i32_0 : i32, i32
  }
  func.func @transform_35(%arg0: i32, %arg1: i32) -> (i32, i32) {
    %c0_i32 = arith.constant 0 : i32
    %c0_i32_0 = arith.constant 0 : i32
    %c0_i32_1 = arith.constant 0 : i32
    return %c0_i32, %c0_i32_0 : i32, i32
  }
  func.func @transform_36(%arg0: i32, %arg1: i32) -> (i32, i32) {
    %c0_i32 = arith.constant 0 : i32
    %c0_i32_0 = arith.constant 0 : i32
    return %arg0, %c0_i32 : i32, i32
  }
}

</mosaic_0001>

<llo_original>
// kernel: conformer_detector_forward.1
$region0: #{conformer_detector_forward.1}
  #allocation0 [shape = 'u32[]', space=smem, size = 0x4, offset = 0x4, fixed_abs, tag = 'smem constant byte address 0x4 - core index']
  #allocation1 [shape = 'u32[144,128]{1,0:T(1,128)}', space=vmem, size = 0x12000, scoped, tag = 'internal scratch']
  #allocation2 [shape = 'f32[2,32,128]{2,1,0:T(8,128)}', space=vmem, size = 0x8000, scoped, tag = 'scratch operand']
  #allocation3 [shape = 'f32[1,1]{1,0:T(1,128)S(1)}', space=vmem, size = 0x200, scoped, tag = 'scoped memory for conformer_detector_forward.1']
  #allocation4 [shape = 'f32[1,1]{1,0:T(1,128)S(6)}', space=smem, size = 0x200, scoped, tag = 'scoped memory for conformer_detector_forward.1']
  %s0 = inlined_call_operand.smem [shape: u32[37], index: -1, kind: input, shape index: {}]
  %s1 = sld [smem:[%s0]]
  %s2 = scalar_lea.smem %s0, 1
  %s3 = sld [smem:[%s2]]
  %s4 = scalar_lea.smem %s0, 2
  %s5 = sld [smem:[%s4]]
  %s6 = scalar_lea.smem %s0, 3
  %s7 = sld [smem:[%s6]]
  %s8 = scalar_lea.smem %s0, 4
  %s9 = sld [smem:[%s8]]
  %s10 = scalar_lea.smem %s0, 5
  %s11 = sld [smem:[%s10]]
  %s12 = scalar_lea.smem %s0, 6
  %s13 = sld [smem:[%s12]]
  %s14 = scalar_lea.smem %s0, 7
  %s15 = sld [smem:[%s14]]
  %s16 = scalar_lea.smem %s0, 8
  %s17 = sld [smem:[%s16]]
  %s18 = scalar_lea.smem %s0, 9
  %s19 = sld [smem:[%s18]]
  %s20 = scalar_lea.smem %s0, 10
  %s21 = sld [smem:[%s20]]
  %s22 = scalar_lea.smem %s0, 11
  %s23 = sld [smem:[%s22]]
  %s24 = scalar_lea.smem %s0, 12
  %s25 = sld [smem:[%s24]]
  %s26 = scalar_lea.smem %s0, 13
  %s27 = sld [smem:[%s26]]
  %s28 = scalar_lea.smem %s0, 14
  %s29 = sld [smem:[%s28]]
  %s30 = scalar_lea.smem %s0, 15
  %s31 = sld [smem:[%s30]]
  %s32 = scalar_lea.smem %s0, 16
  %s33 = sld [smem:[%s32]]
  %s34 = scalar_lea.smem %s0, 17
  %s35 = sld [smem:[%s34]]
  %s36 = scalar_lea.smem %s0, 18
  %s37 = sld [smem:[%s36]]
  %s38 = scalar_lea.smem %s0, 19
  %s39 = sld [smem:[%s38]]
  %s40 = scalar_lea.smem %s0, 20
  %s41 = sld [smem:[%s40]]
  %s42 = scalar_lea.smem %s0, 21
  %s43 = sld [smem:[%s42]]
  %s44 = scalar_lea.smem %s0, 22
  %s45 = sld [smem:[%s44]]
  %s46 = scalar_lea.smem %s0, 23
  %s47 = sld [smem:[%s46]]
  %s48 = scalar_lea.smem %s0, 24
  %s49 = sld [smem:[%s48]]
  %s50 = scalar_lea.smem %s0, 25
  %s51 = sld [smem:[%s50]]
  %s52 = scalar_lea.smem %s0, 26
  %s53 = sld [smem:[%s52]]
  %s54 = scalar_lea.smem %s0, 27
  %s55 = sld [smem:[%s54]]
  %s56 = scalar_lea.smem %s0, 28
  %s57 = sld [smem:[%s56]]
  %s58 = scalar_lea.smem %s0, 29
  %s59 = sld [smem:[%s58]]
  %s60 = scalar_lea.smem %s0, 30
  %s61 = sld [smem:[%s60]]
  %s62 = scalar_lea.smem %s0, 31
  %s63 = sld [smem:[%s62]]
  %s64 = scalar_lea.smem %s0, 32
  %s65 = sld [smem:[%s64]]
  %s66 = scalar_lea.smem %s0, 33
  %s67 = sld [smem:[%s66]]
  %s68 = scalar_lea.smem %s0, 34
  %s69 = sld [smem:[%s68]]
  %s70 = scalar_lea.smem %s0, 35
  %s71 = sld [smem:[%s70]]
  %s72 = scalar_lea.smem %s0, 36
  %s73 = sld [smem:[%s72]]
  %s74 = sld [smem:[#allocation0]]
  $region257: #{conformer_detector_forward.1} parent=0
    _
  %s76 = ssub.s32 1, %s74
  %s77 = scalar_select 0, %s76, %s74
  %v78 = vstv %s69
  %79 = vst [vmem:[#allocation3] sm:$0x1] %v78
  %80 = sst [smem:[#allocation4]] %s71
  $region1: #{conformer_detector_forward.1} parent=0
    #allocation5 [shape = 'u8[1024]{0}', space=vmem, size = 0x400, scoped, tag = 'input window, operand 1']
    #allocation6 [shape = 's32[2]{0}', space=sflag, size = 0x8, scoped, tag = 'scoped memory for conformer_detector_forward.1']
    #allocation7 [shape = 'u8[1024]{0}', space=vmem, size = 0x400, scoped, tag = 'input window, operand 2']
    #allocation8 [shape = 's32[2]{0}', space=sflag, size = 0x8, scoped, tag = 'scoped memory for conformer_detector_forward.1']
    #allocation9 [shape = 'u8[262144]{0}', space=vmem, size = 0x40000, scoped, tag = 'input window, operand 5']
    #allocation10 [shape = 'u8[1024]{0}', space=vmem, size = 0x400, scoped, tag = 'input window, operand 6']
    #allocation11 [shape = 's32[2]{0}', space=sflag, size = 0x8, scoped, tag = 'scoped memory for conformer_detector_forward.1']
    #allocation12 [shape = 'u8[196608]{0}', space=vmem, size = 0x30000, scoped, tag = 'input window, operand 9']
    #allocation13 [shape = 'u8[131072]{0}', space=vmem, size = 0x20000, scoped, tag = 'input window, operand 15']
    #allocation14 [shape = 's32[2]{0}', space=sflag, size = 0x8, scoped, tag = 'scoped memory for conformer_detector_forward.1']
    #allocation15 [shape = 'u8[65536]{0}', space=vmem, size = 0x10000, scoped, tag = 'input window, operand 21']
    #allocation16 [shape = 'u8[1024]{0}', space=vmem, size = 0x400, scoped, tag = 'input window, operand 23']
    #allocation17 [shape = 's32[2]{0}', space=sflag, size = 0x8, scoped, tag = 'scoped memory for conformer_detector_forward.1']
    #allocation18 [shape = 'u8[1024]{0}', space=vmem, size = 0x400, scoped, tag = 'input window, operand 24']
    #allocation19 [shape = 'u8[262144]{0}', space=vmem, size = 0x40000, scoped, tag = 'input window, operand 25']
    #allocation20 [shape = 's32[2]{0}', space=sflag, size = 0x8, scoped, tag = 'scoped memory for conformer_detector_forward.1']
    #allocation21 [shape = 'u8[4096]{0}', space=vmem, size = 0x1000, scoped, tag = 'input window, operand 26']
    #allocation22 [shape = 'u8[262144]{0}', space=vmem, size = 0x40000, scoped, tag = 'input window, operand 27']
    #allocation23 [shape = 's32[2]{0}', space=sflag, size = 0x8, scoped, tag = 'scoped memory for conformer_detector_forward.1']
    #allocation24 [shape = 'u8[1024]{0}', space=vmem, size = 0x400, scoped, tag = 'input window, operand 28']
    #allocation25 [shape = 'u8[1024]{0}', space=vmem, size = 0x400, scoped, tag = 'input window, operand 29']
    #allocation26 [shape = 's32[2]{0}', space=sflag, size = 0x8, scoped, tag = 'scoped memory for conformer_detector_forward.1']
    #allocation27 [shape = 'u8[1024]{0}', space=vmem, size = 0x400, scoped, tag = 'input window, operand 30']
    #allocation28 [shape = 'u8[32768]{0}', space=vmem, size = 0x8000, scoped, tag = 'input window, operand 31, single buffered']
    #allocation29 [shape = 's32[1]{0}', space=sflag, size = 0x4, scoped, tag = 'scoped memory for conformer_detector_forward.1']
    #allocation30 [shape = 'u8[512]{0}', space=vmem, size = 0x400, scoped, tag = 'input window, operand 32, single buffered']
    #allocation31 [shape = 'u8[512]{0}', space=vmem, size = 0x400, scoped, tag = 'input window, operand 33, single buffered']
    #allocation32 [shape = 's32[1]{0}', space=sflag, size = 0x4, scoped, tag = 'scoped memory for conformer_detector_forward.1']
    %81 = vsyncpa [#allocation6], 0
    %s82 = scalar_lea.sflag [#allocation6], 1
    %83 = vsyncpa %s82, 0
    %84 = vsyncpa [#allocation8], 0
    %s85 = scalar_lea.sflag [#allocation8], 1
    %86 = vsyncpa %s85, 0
    %87 = vsyncpa [#allocation11], 0
    %s88 = scalar_lea.sflag [#allocation11], 1
    %89 = vsyncpa %s88, 0
    %90 = vsyncpa [#allocation14], 0
    %s91 = scalar_lea.sflag [#allocation14], 1
    %92 = vsyncpa %s91, 0
    %93 = vsyncpa [#allocation17], 0
    %s94 = scalar_lea.sflag [#allocation17], 1
    %95 = vsyncpa %s94, 0
    %96 = vsyncpa [#allocation20], 0
    %s97 = scalar_lea.sflag [#allocation20], 1
    %98 = vsyncpa %s97, 0
    %99 = vsyncpa [#allocation23], 0
    %s100 = scalar_lea.sflag [#allocation23], 1
    %101 = vsyncpa %s100, 0
    %102 = vsyncpa [#allocation26], 0
    %s103 = scalar_lea.sflag [#allocation26], 1
    %104 = vsyncpa %s103, 0
    %105 = vsyncpa [#allocation29], 0
    %106 = vsyncpa [#allocation32], 0
    loop: start=0, step=1, limit=4
    $region2: #{conformer_detector_forward.1} parent=1 // loop_pre_header
      _
    $region3: #{conformer_detector_forward.1} parent=1 // loop_header
      %s108 = sphi 0, %s112
      %p109 = scmp.ge.s32.totalorder %s108, 4
      %s115 = sphi 0, %s127
      %s116 = sphi 0, %s123
      %s117 = sphi 0, %s115
      %s118 = sphi 0, %s116
      %s119 = sphi 0, %s117
      %s120 = sphi 0, %s118
      %s130 = sphi 0, %s132
      %s133 = sphi 0, %s130
      %s134 = sphi 0, %s133
      %s150 = sphi 0, %s134
      %s156 = sphi 0, %s158
      %s159 = sphi 0, %s156
      %s160 = sphi 0, %s159
      %s176 = sphi 0, %s160
      %s182 = sphi 0, %s184
      %s185 = sphi 0, %s182
      %s186 = sphi 0, %s185
      %s202 = sphi 0, %s186
      %s208 = sphi 0, %s210
      %s211 = sphi 0, %s208
      %s212 = sphi 0, %s211
      %s228 = sphi 0, %s212
      %s234 = sphi 0, %s236
      %s237 = sphi 0, %s234
      %s238 = sphi 0, %s237
      %s254 = sphi 0, %s238
      %s260 = sphi 0, %s262
      %s263 = sphi 0, %s260
      %s264 = sphi 0, %s263
      %s280 = sphi 0, %s264
      %s286 = sphi 0, %s288
      %s289 = sphi 0, %s286
      %s290 = sphi 0, %s289
      %s306 = sphi 0, %s290
      %s312 = sphi 0, %s314
      %s315 = sphi 0, %s312
      %s316 = sphi 0, %s315
      %s332 = sphi 0, %s316
      %s338 = sphi 0, %s340
      %s341 = sphi 0, %s338
      %s342 = sphi 0, %s341
      %s358 = sphi 0, %s342
      %s364 = sphi 0, %s366
      %s367 = sphi 0, %s364
      %s368 = sphi 0, %s367
      %s384 = sphi 0, %s368
      %s390 = sphi 0, %s392
      %s393 = sphi 0, %s390
      %s394 = sphi 0, %s393
      %s410 = sphi 0, %s394
      %s416 = sphi 0, %s418
      %s419 = sphi 0, %s416
      %s420 = sphi 0, %s419
      %s436 = sphi 0, %s420
      %s442 = sphi 0, %s444
      %s445 = sphi 0, %s442
      %s446 = sphi 0, %s445
      %s462 = sphi 0, %s446
      %s468 = sphi 0, %s470
      %s471 = sphi 0, %s468
      %s472 = sphi 0, %s471
      %s488 = sphi 0, %s472
      %s494 = sphi 0, %s496
      %s497 = sphi 0, %s494
      %s498 = sphi 0, %s497
      %s514 = sphi 0, %s498
      %s520 = sphi 0, %s522
      %s523 = sphi 0, %s520
      %s524 = sphi 0, %s523
      %s540 = sphi 0, %s524
      %s546 = sphi 0, %s548
      %s549 = sphi 0, %s546
      %s550 = sphi 0, %s549
      %s566 = sphi 0, %s550
      %s572 = sphi 0, %s574
      %s575 = sphi 0, %s572
      %s576 = sphi 0, %s575
      %s592 = sphi 0, %s576
      %s598 = sphi 0, %s600
      %s601 = sphi 0, %s598
      %s602 = sphi 0, %s601
      %s618 = sphi 0, %s602
      %s624 = sphi 0, %s626
      %s627 = sphi 0, %s624
      %s628 = sphi 0, %s627
      %s644 = sphi 0, %s628
      %s650 = sphi 0, %s652
      %s653 = sphi 0, %s650
      %s654 = sphi 0, %s653
      %s670 = sphi 0, %s654
      %s676 = sphi 0, %s678
      %s679 = sphi 0, %s676
      %s680 = sphi 0, %s679
      %s696 = sphi 0, %s680
      %s702 = sphi 0, %s704
      %s705 = sphi 0, %s702
      %s706 = sphi 0, %s705
      %s722 = sphi 0, %s706
      %s728 = sphi 0, %s730
      %s731 = sphi 0, %s728
      %s732 = sphi 0, %s731
      %s748 = sphi 0, %s732
      %s754 = sphi 0, %s756
      %s757 = sphi 0, %s754
      %s758 = sphi 0, %s757
      %s774 = sphi 0, %s758
      %s780 = sphi 0, %s782
      %s783 = sphi 0, %s780
      %s784 = sphi 0, %s783
      %s800 = sphi 0, %s784
      %s806 = sphi 0, %s808
      %s809 = sphi 0, %s806
      %s810 = sphi 0, %s809
      %s826 = sphi 0, %s810
      %s832 = sphi 0, %s834
      %s835 = sphi 0, %s832
      %s836 = sphi 0, %s835
      %s852 = sphi 0, %s836
      %s858 = sphi 0, %s860
      %s861 = sphi 0, %s858
      %s862 = sphi 0, %s861
      %s878 = sphi 0, %s862
      %s884 = sphi 0, %s886
      %s887 = sphi 0, %s884
      %s888 = sphi 0, %s887
      %s904 = sphi 0, %s888
      %s910 = sphi 0, %s912
      %s913 = sphi 0, %s910
      %s914 = sphi 0, %s913
      %s930 = sphi 0, %s914
      %s934 = sphi 0, %s934
      %s936 = sphi 0, %s934
      %s937 = sphi 0, %s936
      %s951 = sphi 0, %s937
      %s955 = sphi 0, %s955
      %s957 = sphi 0, %s955
      %s958 = sphi 0, %s957
      %s972 = sphi 0, %s958
      %s976 = sphi 0, %s976
      %s978 = sphi 0, %s976
      %s979 = sphi 0, %s978
      %s993 = sphi 0, %s979
      %s997 = sphi 0, %s997
      %s999 = sphi 0, %s997
      %s1000 = sphi 0, %s999
      %s1014 = sphi 0, %s1000
      %s1018 = sphi 0, %s1018
      %s1020 = sphi 0, %s1018
      %s1021 = sphi 0, %s1020
      %s1035 = sphi 0, %s1021
      %s1041 = sphi 0, %s1043
      %s1044 = sphi 0, %s1041
      %s1045 = sphi 0, %s1044
      %s1061 = sphi 0, %s1045
    $region4: #{conformer_detector_forward.1} parent=1 // loop_header_branch
      %111 = sbr.rel (%p109) target = $region8
    $region5: #{conformer_detector_forward.1} parent=1 // loop_body
      %s113 = ssub.s32 %s108, 1
      %s114 = ssub.s32 %s108, 2
      %s121 = sadd.s32 1, %s116
      %p122 = scmp.ge.s32.totalorder %s121, 2
      %s123 = scalar_select %p122, 0, %s121
      %s124 = sadd.s32 1, %s115
      %s125 = scalar_select %p122, %s124, %s115
      %p126 = scmp.ge.s32.totalorder %s125, 1
      %s127 = scalar_select %p126, 0, %s125
      %s128 = ssub.s32 %s115, %s127
      %p129 = scmp.eq.s32.totalorder %s128, 0
      %s131 = sadd.s32 %s130, 1
      %s132 = scalar_select %p129, %s130, %s131
      %p135 = pneg %p129
      %p136 = scmp.eq.s32.totalorder %s108, 1
      %p137 = por %p135, %p136
      %p138 = scmp.ne.s32.totalorder %s130, %s133
      %p139 = scmp.eq.s32.totalorder %s108, 0
      %p140 = por %p138, %p139
      %p141 = scmp.ne.s32.totalorder %s130, %s133
      %p142 = scmp.eq.s32.totalorder %s113, 1
      %p143 = por %p141, %p142
      %p144 = scmp.ne.s32.totalorder %s133, %s134
      %p145 = scmp.eq.s32.totalorder %s113, 0
      %p146 = por %p144, %p145
      %p147 = scmp.ne.s32.totalorder %s133, %s134
      %p148 = scmp.eq.s32.totalorder %s114, 1
      %p149 = por %p147, %p148
      %p151 = scmp.ne.s32.totalorder %s134, %s150
      %p152 = scmp.eq.s32.totalorder %s114, 0
      %p153 = por %p151, %p152
      %s154 = ssub.s32 %s116, %s123
      %p155 = scmp.eq.s32.totalorder %s154, 0
      %s157 = sadd.s32 %s156, 1
      %s158 = scalar_select %p155, %s156, %s157
      %p161 = pneg %p155
      %p162 = scmp.eq.s32.totalorder %s108, 1
      %p163 = por %p161, %p162
      %p164 = scmp.ne.s32.totalorder %s156, %s159
      %p165 = scmp.eq.s32.totalorder %s108, 0
      %p166 = por %p164, %p165
      %p167 = scmp.ne.s32.totalorder %s156, %s159
      %p168 = scmp.eq.s32.totalorder %s113, 1
      %p169 = por %p167, %p168
      %p170 = scmp.ne.s32.totalorder %s159, %s160
      %p171 = scmp.eq.s32.totalorder %s113, 0
      %p172 = por %p170, %p171
      %p173 = scmp.ne.s32.totalorder %s159, %s160
      %p174 = scmp.eq.s32.totalorder %s114, 1
      %p175 = por %p173, %p174
      %p177 = scmp.ne.s32.totalorder %s160, %s176
      %p178 = scmp.eq.s32.totalorder %s114, 0
      %p179 = por %p177, %p178
      %s180 = ssub.s32 %s116, %s123
      %p181 = scmp.eq.s32.totalorder %s180, 0
      %s183 = sadd.s32 %s182, 1
      %s184 = scalar_select %p181, %s182, %s183
      %p187 = pneg %p181
      %p188 = scmp.eq.s32.totalorder %s108, 1
      %p189 = por %p187, %p188
      %p190 = scmp.ne.s32.totalorder %s182, %s185
      %p191 = scmp.eq.s32.totalorder %s108, 0
      %p192 = por %p190, %p191
      %p193 = scmp.ne.s32.totalorder %s182, %s185
      %p194 = scmp.eq.s32.totalorder %s113, 1
      %p195 = por %p193, %p194
      %p196 = scmp.ne.s32.totalorder %s185, %s186
      %p197 = scmp.eq.s32.totalorder %s113, 0
      %p198 = por %p196, %p197
      %p199 = scmp.ne.s32.totalorder %s185, %s186
      %p200 = scmp.eq.s32.totalorder %s114, 1
      %p201 = por %p199, %p200
      %p203 = scmp.ne.s32.totalorder %s186, %s202
      %p204 = scmp.eq.s32.totalorder %s114, 0
      %p205 = por %p203, %p204
      %s206 = ssub.s32 %s116, %s123
      %p207 = scmp.eq.s32.totalorder %s206, 0
      %s209 = sadd.s32 %s208, 1
      %s210 = scalar_select %p207, %s208, %s209
      %p213 = pneg %p207
      %p214 = scmp.eq.s32.totalorder %s108, 1
      %p215 = por %p213, %p214
      %p216 = scmp.ne.s32.totalorder %s208, %s211
      %p217 = scmp.eq.s32.totalorder %s108, 0
      %p218 = por %p216, %p217
      %p219 = scmp.ne.s32.totalorder %s208, %s211
      %p220 = scmp.eq.s32.totalorder %s113, 1
      %p221 = por %p219, %p220
      %p222 = scmp.ne.s32.totalorder %s211, %s212
      %p223 = scmp.eq.s32.totalorder %s113, 0
      %p224 = por %p222, %p223
      %p225 = scmp.ne.s32.totalorder %s211, %s212
      %p226 = scmp.eq.s32.totalorder %s114, 1
      %p227 = por %p225, %p226
      %p229 = scmp.ne.s32.totalorder %s212, %s228
      %p230 = scmp.eq.s32.totalorder %s114, 0
      %p231 = por %p229, %p230
      %s232 = ssub.s32 %s116, %s123
      %p233 = scmp.eq.s32.totalorder %s232, 0
      %s235 = sadd.s32 %s234, 1
      %s236 = scalar_select %p233, %s234, %s235
      %p239 = pneg %p233
      %p240 = scmp.eq.s32.totalorder %s108, 1
      %p241 = por %p239, %p240
      %p242 = scmp.ne.s32.totalorder %s234, %s237
      %p243 = scmp.eq.s32.totalorder %s108, 0
      %p244 = por %p242, %p243
      %p245 = scmp.ne.s32.totalorder %s234, %s237
      %p246 = scmp.eq.s32.totalorder %s113, 1
      %p247 = por %p245, %p246
      %p248 = scmp.ne.s32.totalorder %s237, %s238
      %p249 = scmp.eq.s32.totalorder %s113, 0
      %p250 = por %p248, %p249
      %p251 = scmp.ne.s32.totalorder %s237, %s238
      %p252 = scmp.eq.s32.totalorder %s114, 1
      %p253 = por %p251, %p252
      %p255 = scmp.ne.s32.totalorder %s238, %s254
      %p256 = scmp.eq.s32.totalorder %s114, 0
      %p257 = por %p255, %p256
      %s258 = ssub.s32 %s116, %s123
      %p259 = scmp.eq.s32.totalorder %s258, 0
      %s261 = sadd.s32 %s260, 1
      %s262 = scalar_select %p259, %s260, %s261
      %p265 = pneg %p259
      %p266 = scmp.eq.s32.totalorder %s108, 1
      %p267 = por %p265, %p266
      %p268 = scmp.ne.s32.totalorder %s260, %s263
      %p269 = scmp.eq.s32.totalorder %s108, 0
      %p270 = por %p268, %p269
      %p271 = scmp.ne.s32.totalorder %s260, %s263
      %p272 = scmp.eq.s32.totalorder %s113, 1
      %p273 = por %p271, %p272
      %p274 = scmp.ne.s32.totalorder %s263, %s264
      %p275 = scmp.eq.s32.totalorder %s113, 0
      %p276 = por %p274, %p275
      %p277 = scmp.ne.s32.totalorder %s263, %s264
      %p278 = scmp.eq.s32.totalorder %s114, 1
      %p279 = por %p277, %p278
      %p281 = scmp.ne.s32.totalorder %s264, %s280
      %p282 = scmp.eq.s32.totalorder %s114, 0
      %p283 = por %p281, %p282
      %s284 = ssub.s32 %s116, %s123
      %p285 = scmp.eq.s32.totalorder %s284, 0
      %s287 = sadd.s32 %s286, 1
      %s288 = scalar_select %p285, %s286, %s287
      %p291 = pneg %p285
      %p292 = scmp.eq.s32.totalorder %s108, 1
      %p293 = por %p291, %p292
      %p294 = scmp.ne.s32.totalorder %s286, %s289
      %p295 = scmp.eq.s32.totalorder %s108, 0
      %p296 = por %p294, %p295
      %p297 = scmp.ne.s32.totalorder %s286, %s289
      %p298 = scmp.eq.s32.totalorder %s113, 1
      %p299 = por %p297, %p298
      %p300 = scmp.ne.s32.totalorder %s289, %s290
      %p301 = scmp.eq.s32.totalorder %s113, 0
      %p302 = por %p300, %p301
      %p303 = scmp.ne.s32.totalorder %s289, %s290
      %p304 = scmp.eq.s32.totalorder %s114, 1
      %p305 = por %p303, %p304
      %p307 = scmp.ne.s32.totalorder %s290, %s306
      %p308 = scmp.eq.s32.totalorder %s114, 0
      %p309 = por %p307, %p308
      %s310 = ssub.s32 %s116, %s123
      %p311 = scmp.eq.s32.totalorder %s310, 0
      %s313 = sadd.s32 %s312, 1
      %s314 = scalar_select %p311, %s312, %s313
      %p317 = pneg %p311
      %p318 = scmp.eq.s32.totalorder %s108, 1
      %p319 = por %p317, %p318
      %p320 = scmp.ne.s32.totalorder %s312, %s315
      %p321 = scmp.eq.s32.totalorder %s108, 0
      %p322 = por %p320, %p321
      %p323 = scmp.ne.s32.totalorder %s312, %s315
      %p324 = scmp.eq.s32.totalorder %s113, 1
      %p325 = por %p323, %p324
      %p326 = scmp.ne.s32.totalorder %s315, %s316
      %p327 = scmp.eq.s32.totalorder %s113, 0
      %p328 = por %p326, %p327
      %p329 = scmp.ne.s32.totalorder %s315, %s316
      %p330 = scmp.eq.s32.totalorder %s114, 1
      %p331 = por %p329, %p330
      %p333 = scmp.ne.s32.totalorder %s316, %s332
      %p334 = scmp.eq.s32.totalorder %s114, 0
      %p335 = por %p333, %p334
      %s336 = ssub.s32 %s116, %s123
      %p337 = scmp.eq.s32.totalorder %s336, 0
      %s339 = sadd.s32 %s338, 1
      %s340 = scalar_select %p337, %s338, %s339
      %p343 = pneg %p337
      %p344 = scmp.eq.s32.totalorder %s108, 1
      %p345 = por %p343, %p344
      %p346 = scmp.ne.s32.totalorder %s338, %s341
      %p347 = scmp.eq.s32.totalorder %s108, 0
      %p348 = por %p346, %p347
      %p349 = scmp.ne.s32.totalorder %s338, %s341
      %p350 = scmp.eq.s32.totalorder %s113, 1
      %p351 = por %p349, %p350
      %p352 = scmp.ne.s32.totalorder %s341, %s342
      %p353 = scmp.eq.s32.totalorder %s113, 0
      %p354 = por %p352, %p353
      %p355 = scmp.ne.s32.totalorder %s341, %s342
      %p356 = scmp.eq.s32.totalorder %s114, 1
      %p357 = por %p355, %p356
      %p359 = scmp.ne.s32.totalorder %s342, %s358
      %p360 = scmp.eq.s32.totalorder %s114, 0
      %p361 = por %p359, %p360
      %s362 = ssub.s32 %s116, %s123
      %p363 = scmp.eq.s32.totalorder %s362, 0
      %s365 = sadd.s32 %s364, 1
      %s366 = scalar_select %p363, %s364, %s365
      %p369 = pneg %p363
      %p370 = scmp.eq.s32.totalorder %s108, 1
      %p371 = por %p369, %p370
      %p372 = scmp.ne.s32.totalorder %s364, %s367
      %p373 = scmp.eq.s32.totalorder %s108, 0
      %p374 = por %p372, %p373
      %p375 = scmp.ne.s32.totalorder %s364, %s367
      %p376 = scmp.eq.s32.totalorder %s113, 1
      %p377 = por %p375, %p376
      %p378 = scmp.ne.s32.totalorder %s367, %s368
      %p379 = scmp.eq.s32.totalorder %s113, 0
      %p380 = por %p378, %p379
      %p381 = scmp.ne.s32.totalorder %s367, %s368
      %p382 = scmp.eq.s32.totalorder %s114, 1
      %p383 = por %p381, %p382
      %p385 = scmp.ne.s32.totalorder %s368, %s384
      %p386 = scmp.eq.s32.totalorder %s114, 0
      %p387 = por %p385, %p386
      %s388 = ssub.s32 %s116, %s123
      %p389 = scmp.eq.s32.totalorder %s388, 0
      %s391 = sadd.s32 %s390, 1
      %s392 = scalar_select %p389, %s390, %s391
      %p395 = pneg %p389
      %p396 = scmp.eq.s32.totalorder %s108, 1
      %p397 = por %p395, %p396
      %p398 = scmp.ne.s32.totalorder %s390, %s393
      %p399 = scmp.eq.s32.totalorder %s108, 0
      %p400 = por %p398, %p399
      %p401 = scmp.ne.s32.totalorder %s390, %s393
      %p402 = scmp.eq.s32.totalorder %s113, 1
      %p403 = por %p401, %p402
      %p404 = scmp.ne.s32.totalorder %s393, %s394
      %p405 = scmp.eq.s32.totalorder %s113, 0
      %p406 = por %p404, %p405
      %p407 = scmp.ne.s32.totalorder %s393, %s394
      %p408 = scmp.eq.s32.totalorder %s114, 1
      %p409 = por %p407, %p408
      %p411 = scmp.ne.s32.totalorder %s394, %s410
      %p412 = scmp.eq.s32.totalorder %s114, 0
      %p413 = por %p411, %p412
      %s414 = ssub.s32 %s116, %s123
      %p415 = scmp.eq.s32.totalorder %s414, 0
      %s417 = sadd.s32 %s416, 1
      %s418 = scalar_select %p415, %s416, %s417
      %p421 = pneg %p415
      %p422 = scmp.eq.s32.totalorder %s108, 1
      %p423 = por %p421, %p422
      %p424 = scmp.ne.s32.totalorder %s416, %s419
      %p425 = scmp.eq.s32.totalorder %s108, 0
      %p426 = por %p424, %p425
      %p427 = scmp.ne.s32.totalorder %s416, %s419
      %p428 = scmp.eq.s32.totalorder %s113, 1
      %p429 = por %p427, %p428
      %p430 = scmp.ne.s32.totalorder %s419, %s420
      %p431 = scmp.eq.s32.totalorder %s113, 0
      %p432 = por %p430, %p431
      %p433 = scmp.ne.s32.totalorder %s419, %s420
      %p434 = scmp.eq.s32.totalorder %s114, 1
      %p435 = por %p433, %p434
      %p437 = scmp.ne.s32.totalorder %s420, %s436
      %p438 = scmp.eq.s32.totalorder %s114, 0
      %p439 = por %p437, %p438
      %s440 = ssub.s32 %s116, %s123
      %p441 = scmp.eq.s32.totalorder %s440, 0
      %s443 = sadd.s32 %s442, 1
      %s444 = scalar_select %p441, %s442, %s443
      %p447 = pneg %p441
      %p448 = scmp.eq.s32.totalorder %s108, 1
      %p449 = por %p447, %p448
      %p450 = scmp.ne.s32.totalorder %s442, %s445
      %p451 = scmp.eq.s32.totalorder %s108, 0
      %p452 = por %p450, %p451
      %p453 = scmp.ne.s32.totalorder %s442, %s445
      %p454 = scmp.eq.s32.totalorder %s113, 1
      %p455 = por %p453, %p454
      %p456 = scmp.ne.s32.totalorder %s445, %s446
      %p457 = scmp.eq.s32.totalorder %s113, 0
      %p458 = por %p456, %p457
      %p459 = scmp.ne.s32.totalorder %s445, %s446
      %p460 = scmp.eq.s32.totalorder %s114, 1
      %p461 = por %p459, %p460
      %p463 = scmp.ne.s32.totalorder %s446, %s462
      %p464 = scmp.eq.s32.totalorder %s114, 0
      %p465 = por %p463, %p464
      %s466 = ssub.s32 %s116, %s123
      %p467 = scmp.eq.s32.totalorder %s466, 0
      %s469 = sadd.s32 %s468, 1
      %s470 = scalar_select %p467, %s468, %s469
      %p473 = pneg %p467
      %p474 = scmp.eq.s32.totalorder %s108, 1
      %p475 = por %p473, %p474
      %p476 = scmp.ne.s32.totalorder %s468, %s471
      %p477 = scmp.eq.s32.totalorder %s108, 0
      %p478 = por %p476, %p477
      %p479 = scmp.ne.s32.totalorder %s468, %s471
      %p480 = scmp.eq.s32.totalorder %s113, 1
      %p481 = por %p479, %p480
      %p482 = scmp.ne.s32.totalorder %s471, %s472
      %p483 = scmp.eq.s32.totalorder %s113, 0
      %p484 = por %p482, %p483
      %p485 = scmp.ne.s32.totalorder %s471, %s472
      %p486 = scmp.eq.s32.totalorder %s114, 1
      %p487 = por %p485, %p486
      %p489 = scmp.ne.s32.totalorder %s472, %s488
      %p490 = scmp.eq.s32.totalorder %s114, 0
      %p491 = por %p489, %p490
      %s492 = ssub.s32 %s116, %s123
      %p493 = scmp.eq.s32.totalorder %s492, 0
      %s495 = sadd.s32 %s494, 1
      %s496 = scalar_select %p493, %s494, %s495
      %p499 = pneg %p493
      %p500 = scmp.eq.s32.totalorder %s108, 1
      %p501 = por %p499, %p500
      %p502 = scmp.ne.s32.totalorder %s494, %s497
      %p503 = scmp.eq.s32.totalorder %s108, 0
      %p504 = por %p502, %p503
      %p505 = scmp.ne.s32.totalorder %s494, %s497
      %p506 = scmp.eq.s32.totalorder %s113, 1
      %p507 = por %p505, %p506
      %p508 = scmp.ne.s32.totalorder %s497, %s498
      %p509 = scmp.eq.s32.totalorder %s113, 0
      %p510 = por %p508, %p509
      %p511 = scmp.ne.s32.totalorder %s497, %s498
      %p512 = scmp.eq.s32.totalorder %s114, 1
      %p513 = por %p511, %p512
      %p515 = scmp.ne.s32.totalorder %s498, %s514
      %p516 = scmp.eq.s32.totalorder %s114, 0
      %p517 = por %p515, %p516
      %s518 = ssub.s32 %s116, %s123
      %p519 = scmp.eq.s32.totalorder %s518, 0
      %s521 = sadd.s32 %s520, 1
      %s522 = scalar_select %p519, %s520, %s521
      %p525 = pneg %p519
      %p526 = scmp.eq.s32.totalorder %s108, 1
      %p527 = por %p525, %p526
      %p528 = scmp.ne.s32.totalorder %s520, %s523
      %p529 = scmp.eq.s32.totalorder %s108, 0
      %p530 = por %p528, %p529
      %p531 = scmp.ne.s32.totalorder %s520, %s523
      %p532 = scmp.eq.s32.totalorder %s113, 1
      %p533 = por %p531, %p532
      %p534 = scmp.ne.s32.totalorder %s523, %s524
      %p535 = scmp.eq.s32.totalorder %s113, 0
      %p536 = por %p534, %p535
      %p537 = scmp.ne.s32.totalorder %s523, %s524
      %p538 = scmp.eq.s32.totalorder %s114, 1
      %p539 = por %p537, %p538
      %p541 = scmp.ne.s32.totalorder %s524, %s540
      %p542 = scmp.eq.s32.totalorder %s114, 0
      %p543 = por %p541, %p542
      %s544 = ssub.s32 %s116, %s123
      %p545 = scmp.eq.s32.totalorder %s544, 0
      %s547 = sadd.s32 %s546, 1
      %s548 = scalar_select %p545, %s546, %s547
      %p551 = pneg %p545
      %p552 = scmp.eq.s32.totalorder %s108, 1
      %p553 = por %p551, %p552
      %p554 = scmp.ne.s32.totalorder %s546, %s549
      %p555 = scmp.eq.s32.totalorder %s108, 0
      %p556 = por %p554, %p555
      %p557 = scmp.ne.s32.totalorder %s546, %s549
      %p558 = scmp.eq.s32.totalorder %s113, 1
      %p559 = por %p557, %p558
      %p560 = scmp.ne.s32.totalorder %s549, %s550
      %p561 = scmp.eq.s32.totalorder %s113, 0
      %p562 = por %p560, %p561
      %p563 = scmp.ne.s32.totalorder %s549, %s550
      %p564 = scmp.eq.s32.totalorder %s114, 1
      %p565 = por %p563, %p564
      %p567 = scmp.ne.s32.totalorder %s550, %s566
      %p568 = scmp.eq.s32.totalorder %s114, 0
      %p569 = por %p567, %p568
      %s570 = ssub.s32 %s116, %s123
      %p571 = scmp.eq.s32.totalorder %s570, 0
      %s573 = sadd.s32 %s572, 1
      %s574 = scalar_select %p571, %s572, %s573
      %p577 = pneg %p571
      %p578 = scmp.eq.s32.totalorder %s108, 1
      %p579 = por %p577, %p578
      %p580 = scmp.ne.s32.totalorder %s572, %s575
      %p581 = scmp.eq.s32.totalorder %s108, 0
      %p582 = por %p580, %p581
      %p583 = scmp.ne.s32.totalorder %s572, %s575
      %p584 = scmp.eq.s32.totalorder %s113, 1
      %p585 = por %p583, %p584
      %p586 = scmp.ne.s32.totalorder %s575, %s576
      %p587 = scmp.eq.s32.totalorder %s113, 0
      %p588 = por %p586, %p587
      %p589 = scmp.ne.s32.totalorder %s575, %s576
      %p590 = scmp.eq.s32.totalorder %s114, 1
      %p591 = por %p589, %p590
      %p593 = scmp.ne.s32.totalorder %s576, %s592
      %p594 = scmp.eq.s32.totalorder %s114, 0
      %p595 = por %p593, %p594
      %s596 = ssub.s32 %s116, %s123
      %p597 = scmp.eq.s32.totalorder %s596, 0
      %s599 = sadd.s32 %s598, 1
      %s600 = scalar_select %p597, %s598, %s599
      %p603 = pneg %p597
      %p604 = scmp.eq.s32.totalorder %s108, 1
      %p605 = por %p603, %p604
      %p606 = scmp.ne.s32.totalorder %s598, %s601
      %p607 = scmp.eq.s32.totalorder %s108, 0
      %p608 = por %p606, %p607
      %p609 = scmp.ne.s32.totalorder %s598, %s601
      %p610 = scmp.eq.s32.totalorder %s113, 1
      %p611 = por %p609, %p610
      %p612 = scmp.ne.s32.totalorder %s601, %s602
      %p613 = scmp.eq.s32.totalorder %s113, 0
      %p614 = por %p612, %p613
      %p615 = scmp.ne.s32.totalorder %s601, %s602
      %p616 = scmp.eq.s32.totalorder %s114, 1
      %p617 = por %p615, %p616
      %p619 = scmp.ne.s32.totalorder %s602, %s618
      %p620 = scmp.eq.s32.totalorder %s114, 0
      %p621 = por %p619, %p620
      %s622 = ssub.s32 %s116, %s123
      %p623 = scmp.eq.s32.totalorder %s622, 0
      %s625 = sadd.s32 %s624, 1
      %s626 = scalar_select %p623, %s624, %s625
      %p629 = pneg %p623
      %p630 = scmp.eq.s32.totalorder %s108, 1
      %p631 = por %p629, %p630
      %p632 = scmp.ne.s32.totalorder %s624, %s627
      %p633 = scmp.eq.s32.totalorder %s108, 0
      %p634 = por %p632, %p633
      %p635 = scmp.ne.s32.totalorder %s624, %s627
      %p636 = scmp.eq.s32.totalorder %s113, 1
      %p637 = por %p635, %p636
      %p638 = scmp.ne.s32.totalorder %s627, %s628
      %p639 = scmp.eq.s32.totalorder %s113, 0
      %p640 = por %p638, %p639
      %p641 = scmp.ne.s32.totalorder %s627, %s628
      %p642 = scmp.eq.s32.totalorder %s114, 1
      %p643 = por %p641, %p642
      %p645 = scmp.ne.s32.totalorder %s628, %s644
      %p646 = scmp.eq.s32.totalorder %s114, 0
      %p647 = por %p645, %p646
      %s648 = ssub.s32 %s116, %s123
      %p649 = scmp.eq.s32.totalorder %s648, 0
      %s651 = sadd.s32 %s650, 1
      %s652 = scalar_select %p649, %s650, %s651
      %p655 = pneg %p649
      %p656 = scmp.eq.s32.totalorder %s108, 1
      %p657 = por %p655, %p656
      %p658 = scmp.ne.s32.totalorder %s650, %s653
      %p659 = scmp.eq.s32.totalorder %s108, 0
      %p660 = por %p658, %p659
      %p661 = scmp.ne.s32.totalorder %s650, %s653
      %p662 = scmp.eq.s32.totalorder %s113, 1
      %p663 = por %p661, %p662
      %p664 = scmp.ne.s32.totalorder %s653, %s654
      %p665 = scmp.eq.s32.totalorder %s113, 0
      %p666 = por %p664, %p665
      %p667 = scmp.ne.s32.totalorder %s653, %s654
      %p668 = scmp.eq.s32.totalorder %s114, 1
      %p669 = por %p667, %p668
      %p671 = scmp.ne.s32.totalorder %s654, %s670
      %p672 = scmp.eq.s32.totalorder %s114, 0
      %p673 = por %p671, %p672
      %s674 = ssub.s32 %s116, %s123
      %p675 = scmp.eq.s32.totalorder %s674, 0
      %s677 = sadd.s32 %s676, 1
      %s678 = scalar_select %p675, %s676, %s677
      %p681 = pneg %p675
      %p682 = scmp.eq.s32.totalorder %s108, 1
      %p683 = por %p681, %p682
      %p684 = scmp.ne.s32.totalorder %s676, %s679
      %p685 = scmp.eq.s32.totalorder %s108, 0
      %p686 = por %p684, %p685
      %p687 = scmp.ne.s32.totalorder %s676, %s679
      %p688 = scmp.eq.s32.totalorder %s113, 1
      %p689 = por %p687, %p688
      %p690 = scmp.ne.s32.totalorder %s679, %s680
      %p691 = scmp.eq.s32.totalorder %s113, 0
      %p692 = por %p690, %p691
      %p693 = scmp.ne.s32.totalorder %s679, %s680
      %p694 = scmp.eq.s32.totalorder %s114, 1
      %p695 = por %p693, %p694
      %p697 = scmp.ne.s32.totalorder %s680, %s696
      %p698 = scmp.eq.s32.totalorder %s114, 0
      %p699 = por %p697, %p698
      %s700 = ssub.s32 %s116, %s123
      %p701 = scmp.eq.s32.totalorder %s700, 0
      %s703 = sadd.s32 %s702, 1
      %s704 = scalar_select %p701, %s702, %s703
      %p707 = pneg %p701
      %p708 = scmp.eq.s32.totalorder %s108, 1
      %p709 = por %p707, %p708
      %p710 = scmp.ne.s32.totalorder %s702, %s705
      %p711 = scmp.eq.s32.totalorder %s108, 0
      %p712 = por %p710, %p711
      %p713 = scmp.ne.s32.totalorder %s702, %s705
      %p714 = scmp.eq.s32.totalorder %s113, 1
      %p715 = por %p713, %p714
      %p716 = scmp.ne.s32.totalorder %s705, %s706
      %p717 = scmp.eq.s32.totalorder %s113, 0
      %p718 = por %p716, %p717
      %p719 = scmp.ne.s32.totalorder %s705, %s706
      %p720 = scmp.eq.s32.totalorder %s114, 1
      %p721 = por %p719, %p720
      %p723 = scmp.ne.s32.totalorder %s706, %s722
      %p724 = scmp.eq.s32.totalorder %s114, 0
      %p725 = por %p723, %p724
      %s726 = ssub.s32 %s116, %s123
      %p727 = scmp.eq.s32.totalorder %s726, 0
      %s729 = sadd.s32 %s728, 1
      %s730 = scalar_select %p727, %s728, %s729
      %p733 = pneg %p727
      %p734 = scmp.eq.s32.totalorder %s108, 1
      %p735 = por %p733, %p734
      %p736 = scmp.ne.s32.totalorder %s728, %s731
      %p737 = scmp.eq.s32.totalorder %s108, 0
      %p738 = por %p736, %p737
      %p739 = scmp.ne.s32.totalorder %s728, %s731
      %p740 = scmp.eq.s32.totalorder %s113, 1
      %p741 = por %p739, %p740
      %p742 = scmp.ne.s32.totalorder %s731, %s732
      %p743 = scmp.eq.s32.totalorder %s113, 0
      %p744 = por %p742, %p743
      %p745 = scmp.ne.s32.totalorder %s731, %s732
      %p746 = scmp.eq.s32.totalorder %s114, 1
      %p747 = por %p745, %p746
      %p749 = scmp.ne.s32.totalorder %s732, %s748
      %p750 = scmp.eq.s32.totalorder %s114, 0
      %p751 = por %p749, %p750
      %s752 = ssub.s32 %s116, %s123
      %p753 = scmp.eq.s32.totalorder %s752, 0
      %s755 = sadd.s32 %s754, 1
      %s756 = scalar_select %p753, %s754, %s755
      %p759 = pneg %p753
      %p760 = scmp.eq.s32.totalorder %s108, 1
      %p761 = por %p759, %p760
      %p762 = scmp.ne.s32.totalorder %s754, %s757
      %p763 = scmp.eq.s32.totalorder %s108, 0
      %p764 = por %p762, %p763
      %p765 = scmp.ne.s32.totalorder %s754, %s757
      %p766 = scmp.eq.s32.totalorder %s113, 1
      %p767 = por %p765, %p766
      %p768 = scmp.ne.s32.totalorder %s757, %s758
      %p769 = scmp.eq.s32.totalorder %s113, 0
      %p770 = por %p768, %p769
      %p771 = scmp.ne.s32.totalorder %s757, %s758
      %p772 = scmp.eq.s32.totalorder %s114, 1
      %p773 = por %p771, %p772
      %p775 = scmp.ne.s32.totalorder %s758, %s774
      %p776 = scmp.eq.s32.totalorder %s114, 0
      %p777 = por %p775, %p776
      %s778 = ssub.s32 %s116, %s123
      %p779 = scmp.eq.s32.totalorder %s778, 0
      %s781 = sadd.s32 %s780, 1
      %s782 = scalar_select %p779, %s780, %s781
      %p785 = pneg %p779
      %p786 = scmp.eq.s32.totalorder %s108, 1
      %p787 = por %p785, %p786
      %p788 = scmp.ne.s32.totalorder %s780, %s783
      %p789 = scmp.eq.s32.totalorder %s108, 0
      %p790 = por %p788, %p789
      %p791 = scmp.ne.s32.totalorder %s780, %s783
      %p792 = scmp.eq.s32.totalorder %s113, 1
      %p793 = por %p791, %p792
      %p794 = scmp.ne.s32.totalorder %s783, %s784
      %p795 = scmp.eq.s32.totalorder %s113, 0
      %p796 = por %p794, %p795
      %p797 = scmp.ne.s32.totalorder %s783, %s784
      %p798 = scmp.eq.s32.totalorder %s114, 1
      %p799 = por %p797, %p798
      %p801 = scmp.ne.s32.totalorder %s784, %s800
      %p802 = scmp.eq.s32.totalorder %s114, 0
      %p803 = por %p801, %p802
      %s804 = ssub.s32 %s116, %s123
      %p805 = scmp.eq.s32.totalorder %s804, 0
      %s807 = sadd.s32 %s806, 1
      %s808 = scalar_select %p805, %s806, %s807
      %p811 = pneg %p805
      %p812 = scmp.eq.s32.totalorder %s108, 1
      %p813 = por %p811, %p812
      %p814 = scmp.ne.s32.totalorder %s806, %s809
      %p815 = scmp.eq.s32.totalorder %s108, 0
      %p816 = por %p814, %p815
      %p817 = scmp.ne.s32.totalorder %s806, %s809
      %p818 = scmp.eq.s32.totalorder %s113, 1
      %p819 = por %p817, %p818
      %p820 = scmp.ne.s32.totalorder %s809, %s810
      %p821 = scmp.eq.s32.totalorder %s113, 0
      %p822 = por %p820, %p821
      %p823 = scmp.ne.s32.totalorder %s809, %s810
      %p824 = scmp.eq.s32.totalorder %s114, 1
      %p825 = por %p823, %p824
      %p827 = scmp.ne.s32.totalorder %s810, %s826
      %p828 = scmp.eq.s32.totalorder %s114, 0
      %p829 = por %p827, %p828
      %s830 = ssub.s32 %s116, %s123
      %p831 = scmp.eq.s32.totalorder %s830, 0
      %s833 = sadd.s32 %s832, 1
      %s834 = scalar_select %p831, %s832, %s833
      %p837 = pneg %p831
      %p838 = scmp.eq.s32.totalorder %s108, 1
      %p839 = por %p837, %p838
      %p840 = scmp.ne.s32.totalorder %s832, %s835
      %p841 = scmp.eq.s32.totalorder %s108, 0
      %p842 = por %p840, %p841
      %p843 = scmp.ne.s32.totalorder %s832, %s835
      %p844 = scmp.eq.s32.totalorder %s113, 1
      %p845 = por %p843, %p844
      %p846 = scmp.ne.s32.totalorder %s835, %s836
      %p847 = scmp.eq.s32.totalorder %s113, 0
      %p848 = por %p846, %p847
      %p849 = scmp.ne.s32.totalorder %s835, %s836
      %p850 = scmp.eq.s32.totalorder %s114, 1
      %p851 = por %p849, %p850
      %p853 = scmp.ne.s32.totalorder %s836, %s852
      %p854 = scmp.eq.s32.totalorder %s114, 0
      %p855 = por %p853, %p854
      %s856 = ssub.s32 %s116, %s123
      %p857 = scmp.eq.s32.totalorder %s856, 0
      %s859 = sadd.s32 %s858, 1
      %s860 = scalar_select %p857, %s858, %s859
      %p863 = pneg %p857
      %p864 = scmp.eq.s32.totalorder %s108, 1
      %p865 = por %p863, %p864
      %p866 = scmp.ne.s32.totalorder %s858, %s861
      %p867 = scmp.eq.s32.totalorder %s108, 0
      %p868 = por %p866, %p867
      %p869 = scmp.ne.s32.totalorder %s858, %s861
      %p870 = scmp.eq.s32.totalorder %s113, 1
      %p871 = por %p869, %p870
      %p872 = scmp.ne.s32.totalorder %s861, %s862
      %p873 = scmp.eq.s32.totalorder %s113, 0
      %p874 = por %p872, %p873
      %p875 = scmp.ne.s32.totalorder %s861, %s862
      %p876 = scmp.eq.s32.totalorder %s114, 1
      %p877 = por %p875, %p876
      %p879 = scmp.ne.s32.totalorder %s862, %s878
      %p880 = scmp.eq.s32.totalorder %s114, 0
      %p881 = por %p879, %p880
      %s882 = ssub.s32 %s116, %s123
      %p883 = scmp.eq.s32.totalorder %s882, 0
      %s885 = sadd.s32 %s884, 1
      %s886 = scalar_select %p883, %s884, %s885
      %p889 = pneg %p883
      %p890 = scmp.eq.s32.totalorder %s108, 1
      %p891 = por %p889, %p890
      %p892 = scmp.ne.s32.totalorder %s884, %s887
      %p893 = scmp.eq.s32.totalorder %s108, 0
      %p894 = por %p892, %p893
      %p895 = scmp.ne.s32.totalorder %s884, %s887
      %p896 = scmp.eq.s32.totalorder %s113, 1
      %p897 = por %p895, %p896
      %p898 = scmp.ne.s32.totalorder %s887, %s888
      %p899 = scmp.eq.s32.totalorder %s113, 0
      %p900 = por %p898, %p899
      %p901 = scmp.ne.s32.totalorder %s887, %s888
      %p902 = scmp.eq.s32.totalorder %s114, 1
      %p903 = por %p901, %p902
      %p905 = scmp.ne.s32.totalorder %s888, %s904
      %p906 = scmp.eq.s32.totalorder %s114, 0
      %p907 = por %p905, %p906
      %s908 = ssub.s32 %s116, %s123
      %p909 = scmp.eq.s32.totalorder %s908, 0
      %s911 = sadd.s32 %s910, 1
      %s912 = scalar_select %p909, %s910, %s911
      %p915 = pneg %p909
      %p916 = scmp.eq.s32.totalorder %s108, 1
      %p917 = por %p915, %p916
      %p918 = scmp.ne.s32.totalorder %s910, %s913
      %p919 = scmp.eq.s32.totalorder %s108, 0
      %p920 = por %p918, %p919
      %p921 = scmp.ne.s32.totalorder %s910, %s913
      %p922 = scmp.eq.s32.totalorder %s113, 1
      %p923 = por %p921, %p922
      %p924 = scmp.ne.s32.totalorder %s913, %s914
      %p925 = scmp.eq.s32.totalorder %s113, 0
      %p926 = por %p924, %p925
      %p927 = scmp.ne.s32.totalorder %s913, %s914
      %p928 = scmp.eq.s32.totalorder %s114, 1
      %p929 = por %p927, %p928
      %p931 = scmp.ne.s32.totalorder %s914, %s930
      %p932 = scmp.eq.s32.totalorder %s114, 0
      %p933 = por %p931, %p932
      %s935 = sadd.s32 %s934, 1
      %p938 = scmp.eq.s32.totalorder %s108, 1
      %p939 = scmp.ne.s32.totalorder %s934, %s936
      %p940 = scmp.eq.s32.totalorder %s108, 0
      %p941 = por %p939, %p940
      %p942 = scmp.ne.s32.totalorder %s934, %s936
      %p943 = scmp.eq.s32.totalorder %s113, 1
      %p944 = por %p942, %p943
      %p945 = scmp.ne.s32.totalorder %s936, %s937
      %p946 = scmp.eq.s32.totalorder %s113, 0
      %p947 = por %p945, %p946
      %p948 = scmp.ne.s32.totalorder %s936, %s937
      %p949 = scmp.eq.s32.totalorder %s114, 1
      %p950 = por %p948, %p949
      %p952 = scmp.ne.s32.totalorder %s937, %s951
      %p953 = scmp.eq.s32.totalorder %s114, 0
      %p954 = por %p952, %p953
      %s956 = sadd.s32 %s955, 1
      %p959 = scmp.eq.s32.totalorder %s108, 1
      %p960 = scmp.ne.s32.totalorder %s955, %s957
      %p961 = scmp.eq.s32.totalorder %s108, 0
      %p962 = por %p960, %p961
      %p963 = scmp.ne.s32.totalorder %s955, %s957
      %p964 = scmp.eq.s32.totalorder %s113, 1
      %p965 = por %p963, %p964
      %p966 = scmp.ne.s32.totalorder %s957, %s958
      %p967 = scmp.eq.s32.totalorder %s113, 0
      %p968 = por %p966, %p967
      %p969 = scmp.ne.s32.totalorder %s957, %s958
      %p970 = scmp.eq.s32.totalorder %s114, 1
      %p971 = por %p969, %p970
      %p973 = scmp.ne.s32.totalorder %s958, %s972
      %p974 = scmp.eq.s32.totalorder %s114, 0
      %p975 = por %p973, %p974
      %s977 = sadd.s32 %s976, 1
      %p980 = scmp.eq.s32.totalorder %s108, 1
      %p981 = scmp.ne.s32.totalorder %s976, %s978
      %p982 = scmp.eq.s32.totalorder %s108, 0
      %p983 = por %p981, %p982
      %p984 = scmp.ne.s32.totalorder %s976, %s978
      %p985 = scmp.eq.s32.totalorder %s113, 1
      %p986 = por %p984, %p985
      %p987 = scmp.ne.s32.totalorder %s978, %s979
      %p988 = scmp.eq.s32.totalorder %s113, 0
      %p989 = por %p987, %p988
      %p990 = scmp.ne.s32.totalorder %s978, %s979
      %p991 = scmp.eq.s32.totalorder %s114, 1
      %p992 = por %p990, %p991
      %p994 = scmp.ne.s32.totalorder %s979, %s993
      %p995 = scmp.eq.s32.totalorder %s114, 0
      %p996 = por %p994, %p995
      %s998 = sadd.s32 %s997, 1
      %p1001 = scmp.eq.s32.totalorder %s108, 1
      %p1002 = scmp.ne.s32.totalorder %s997, %s999
      %p1003 = scmp.eq.s32.totalorder %s108, 0
      %p1004 = por %p1002, %p1003
      %p1005 = scmp.ne.s32.totalorder %s997, %s999
      %p1006 = scmp.eq.s32.totalorder %s113, 1
      %p1007 = por %p1005, %p1006
      %p1008 = scmp.ne.s32.totalorder %s999, %s1000
      %p1009 = scmp.eq.s32.totalorder %s113, 0
      %p1010 = por %p1008, %p1009
      %p1011 = scmp.ne.s32.totalorder %s999, %s1000
      %p1012 = scmp.eq.s32.totalorder %s114, 1
      %p1013 = por %p1011, %p1012
      %p1015 = scmp.ne.s32.totalorder %s1000, %s1014
      %p1016 = scmp.eq.s32.totalorder %s114, 0
      %p1017 = por %p1015, %p1016
      %s1019 = sadd.s32 %s1018, 1
      %p1022 = scmp.eq.s32.totalorder %s108, 1
      %p1023 = scmp.ne.s32.totalorder %s1018, %s1020
      %p1024 = scmp.eq.s32.totalorder %s108, 0
      %p1025 = por %p1023, %p1024
      %p1026 = scmp.ne.s32.totalorder %s1018, %s1020
      %p1027 = scmp.eq.s32.totalorder %s113, 1
      %p1028 = por %p1026, %p1027
      %p1029 = scmp.ne.s32.totalorder %s1020, %s1021
      %p1030 = scmp.eq.s32.totalorder %s113, 0
      %p1031 = por %p1029, %p1030
      %p1032 = scmp.ne.s32.totalorder %s1020, %s1021
      %p1033 = scmp.eq.s32.totalorder %s114, 1
      %p1034 = por %p1032, %p1033
      %p1036 = scmp.ne.s32.totalorder %s1021, %s1035
      %p1037 = scmp.eq.s32.totalorder %s114, 0
      %p1038 = por %p1036, %p1037
      %s1039 = ssub.s32 %s115, %s127
      %p1040 = scmp.eq.s32.totalorder %s1039, 0
      %s1042 = sadd.s32 %s1041, 1
      %s1043 = scalar_select %p1040, %s1041, %s1042
      %p1046 = pneg %p1040
      %p1047 = scmp.eq.s32.totalorder %s108, 1
      %p1048 = por %p1046, %p1047
      %p1049 = scmp.ne.s32.totalorder %s1041, %s1044
      %p1050 = scmp.eq.s32.totalorder %s108, 0
      %p1051 = por %p1049, %p1050
      %p1052 = scmp.ne.s32.totalorder %s1041, %s1044
      %p1053 = scmp.eq.s32.totalorder %s113, 1
      %p1054 = por %p1052, %p1053
      %p1055 = scmp.ne.s32.totalorder %s1044, %s1045
      %p1056 = scmp.eq.s32.totalorder %s113, 0
      %p1057 = por %p1055, %p1056
      %p1058 = scmp.ne.s32.totalorder %s1044, %s1045
      %p1059 = scmp.eq.s32.totalorder %s114, 1
      %p1060 = por %p1058, %p1059
      %p1062 = scmp.ne.s32.totalorder %s1045, %s1061
      %p1063 = scmp.eq.s32.totalorder %s114, 0
      %p1064 = por %p1062, %p1063
      %p1065 = scmp.le.s32.totalorder 1, %s108
      %p1066 = scmp.lt.s32.totalorder %s108, 3
      %p1067 = pnand %p1065, %p1066
      %p1068 = pneg %p1067
      // Predicated region
      $region9: #{conformer_detector_forward.1} parent=5 // pred_check
        _
      $region10: #{conformer_detector_forward.1} parent=5 // pred_check_branch
        %1070 = sbr.rel (%p1067) target = $region12
      $region11: #{conformer_detector_forward.1} parent=5 // pred_region
        %s1071 = ssub.s32 %s108, 1
        // Predicated region
        $region13: #{conformer_detector_forward.1} parent=11 // pred_check
          %p1072 = pneg %p146
        $region14: #{conformer_detector_forward.1} parent=11 // pred_check_branch
          %1074 = sbr.rel (%p1072) target = $region16
        $region15: #{conformer_detector_forward.1} parent=11 // pred_region
          %s1075 = smul.u32 2, %s117
          %p1076 = scmp.lt.s32.totalorder %s1075, 1
          %s1077 = scalar_select %p1076, %s1075, 1
          %s1078 = smul.addr %s1077, 4
          %s1079 = smul.addr %s1078, 8
          %s1080 = scalar_lea.vmem %s1, %s1079
          %s1081 = smul.u32 2, %s117
        $region16: #{conformer_detector_forward.1} parent=11 // pred_fallthru
          _
        // Predicated region
        $region17: #{conformer_detector_forward.1} parent=11 // pred_check
          %p1082 = pneg %p947
        $region18: #{conformer_detector_forward.1} parent=11 // pred_check_branch
          %1084 = sbr.rel (%p1082) target = $region20
        $region19: #{conformer_detector_forward.1} parent=11 // pred_region
          %s1086 = ssub.s32 1024, 1024
          %1087 = vsyncadd [#allocation29], %s1086
          %s1088 = sshll.u32 [#allocation28], 4
          %s1089 = int_to_ptr.vmem [resolvable:$true] %s1088
          %1094 = dma.hbm_to_vmem [thread:$0]  %s63, 1024, %s1089, [#allocation29], 64, 64, 4
        $region20: #{conformer_detector_forward.1} parent=11 // pred_fallthru
          _
        // Predicated region
        $region21: #{conformer_detector_forward.1} parent=11 // pred_check
          %p1095 = pneg %p968
        $region22: #{conformer_detector_forward.1} parent=11 // pred_check_branch
          %1097 = sbr.rel (%p1095) target = $region24
        $region23: #{conformer_detector_forward.1} parent=11 // pred_region
          %s1099 = ssub.s32 16, 16
          %1100 = vsyncadd [#allocation29], %s1099
          %s1102 = sshll.u32 [#allocation30], 4
          %s1103 = int_to_ptr.vmem [resolvable:$true] %s1102
          %1105 = dma.hbm_to_vmem [thread:$0]  %s65, 16, %s1103, [#allocation29]
        $region24: #{conformer_detector_forward.1} parent=11 // pred_fallthru
          _
        // Predicated region
        $region25: #{conformer_detector_forward.1} parent=11 // pred_check
          %p1106 = pneg %p989
        $region26: #{conformer_detector_forward.1} parent=11 // pred_check_branch
          %1108 = sbr.rel (%p1106) target = $region28
        $region27: #{conformer_detector_forward.1} parent=11 // pred_region
          %s1110 = ssub.s32 16, 16
          %1111 = vsyncadd [#allocation32], %s1110
          %s1113 = sshll.u32 [#allocation31], 4
          %s1114 = int_to_ptr.vmem [resolvable:$true] %s1113
          %1116 = dma.hbm_to_vmem [thread:$0]  %s67, 16, %s1114, [#allocation32]
        $region28: #{conformer_detector_forward.1} parent=11 // pred_fallthru
          _
        // Predicated region
        $region29: #{conformer_detector_forward.1} parent=11 // pred_check
          %p1117 = pneg %p1010
        $region30: #{conformer_detector_forward.1} parent=11 // pred_check_branch
          %1119 = sbr.rel (%p1117) target = $region32
        $region31: #{conformer_detector_forward.1} parent=11 // pred_region
          _
        $region32: #{conformer_detector_forward.1} parent=11 // pred_fallthru
          _
        // Predicated region
        $region33: #{conformer_detector_forward.1} parent=11 // pred_check
          %p1120 = pneg %p1031
        $region34: #{conformer_detector_forward.1} parent=11 // pred_check_branch
          %1122 = sbr.rel (%p1120) target = $region36
        $region35: #{conformer_detector_forward.1} parent=11 // pred_region
          _
        $region36: #{conformer_detector_forward.1} parent=11 // pred_fallthru
          _
      $region12: #{conformer_detector_forward.1} parent=5 // pred_fallthru
        _
      %p1123 = scmp.lt.s32.totalorder %s108, 2
      // Predicated region
      $region37: #{conformer_detector_forward.1} parent=5 // pred_check
        %p1124 = pneg %p1123
      $region38: #{conformer_detector_forward.1} parent=5 // pred_check_branch
        %1126 = sbr.rel (%p1124) target = $region40
      $region39: #{conformer_detector_forward.1} parent=5 // pred_region
        // Predicated region
        $region41: #{conformer_detector_forward.1} parent=39 // pred_check
          %p1127 = pneg %p166
        $region42: #{conformer_detector_forward.1} parent=39 // pred_check_branch
          %1129 = sbr.rel (%p1127) target = $region44
        $region43: #{conformer_detector_forward.1} parent=39 // pred_region
          %s1130 = sand.u32 %s156, 1
          %s1131 = scalar_lea.sflag [#allocation6], %s1130
          %s1132 = sand.u32 %s156, 1
          %s1133 = scalar_lea.vmem [#allocation5], %s1132
          %s1135 = ssub.s32 16, 16
          %1136 = vsyncadd %s1131, %s1135
          %s1137 = smul.addr %s116, 16
          %s1138 = scalar_lea.hbm %s3, %s1137
          %s1140 = sshll.u32 %s1133, 4
          %s1141 = int_to_ptr.vmem [resolvable:$true] %s1140
          %1143 = dma.hbm_to_vmem [thread:$0]  %s1138, 16, %s1141, %s1131
        $region44: #{conformer_detector_forward.1} parent=39 // pred_fallthru
          _
        // Predicated region
        $region45: #{conformer_detector_forward.1} parent=39 // pred_check
          %p1144 = pneg %p192
        $region46: #{conformer_detector_forward.1} parent=39 // pred_check_branch
          %1146 = sbr.rel (%p1144) target = $region48
        $region47: #{conformer_detector_forward.1} parent=39 // pred_region
          %s1147 = sand.u32 %s108, 1
          %s1148 = scalar_lea.sflag [#allocation8], %s1147
          %s1149 = sand.u32 %s182, 1
          %s1150 = scalar_lea.vmem [#allocation7], %s1149
          %s1152 = ssub.s32 16, 16
          %1153 = vsyncadd %s1148, %s1152
          %s1154 = smul.addr %s116, 16
          %s1155 = scalar_lea.hbm %s5, %s1154
          %s1157 = sshll.u32 %s1150, 4
          %s1158 = int_to_ptr.vmem [resolvable:$true] %s1157
          %1160 = dma.hbm_to_vmem [thread:$0]  %s1155, 16, %s1158, %s1148
        $region48: #{conformer_detector_forward.1} parent=39 // pred_fallthru
          _
        // Predicated region
        $region49: #{conformer_detector_forward.1} parent=39 // pred_check
          %p1161 = pneg %p218
        $region50: #{conformer_detector_forward.1} parent=39 // pred_check_branch
          %1163 = sbr.rel (%p1161) target = $region52
        $region51: #{conformer_detector_forward.1} parent=39 // pred_region
          %p1164 = scmp.lt.s32.totalorder %s116, 1
          %s1165 = scalar_select %p1164, %s116, 1
          %s1166 = smul.addr %s1165, 64
          %s1167 = smul.addr %s1166, 4
          %s1168 = scalar_lea.vmem %s7, %s1167
        $region52: #{conformer_detector_forward.1} parent=39 // pred_fallthru
          _
        // Predicated region
        $region53: #{conformer_detector_forward.1} parent=39 // pred_check
          %p1169 = pneg %p244
        $region54: #{conformer_detector_forward.1} parent=39 // pred_check_branch
          %1171 = sbr.rel (%p1169) target = $region56
        $region55: #{conformer_detector_forward.1} parent=39 // pred_region
          %p1172 = scmp.lt.s32.totalorder %s116, 1
          %s1173 = scalar_select %p1172, %s116, 1
          %s1174 = smul.addr %s1173, 4
          %s1175 = scalar_lea.vmem %s9, %s1174
        $region56: #{conformer_detector_forward.1} parent=39 // pred_fallthru
          _
        // Predicated region
        $region57: #{conformer_detector_forward.1} parent=39 // pred_check
          %p1176 = pneg %p270
        $region58: #{conformer_detector_forward.1} parent=39 // pred_check_branch
          %1178 = sbr.rel (%p1176) target = $region60
        $region59: #{conformer_detector_forward.1} parent=39 // pred_region
          %s1179 = sand.u32 %s108, 1
          %s1180 = scalar_lea.sflag [#allocation8], %s1179
          %s1181 = sand.u32 %s260, 1
          %s1182 = smul.addr %s1181, 256
          %s1183 = scalar_lea.vmem [#allocation9], %s1182
          %s1185 = ssub.s32 4096, 4096
          %1186 = vsyncadd %s1180, %s1185
          %s1187 = smul.addr %s116, 64
          %s1188 = smul.addr %s1187, 64
          %s1189 = scalar_lea.hbm %s11, %s1188
          %s1190 = sshll.u32 %s1183, 4
          %s1191 = int_to_ptr.vmem [resolvable:$true] %s1190
          %1196 = dma.hbm_to_vmem [thread:$0]  %s1189, 4096, %s1191, %s1180, 64, 64, 4
        $region60: #{conformer_detector_forward.1} parent=39 // pred_fallthru
          _
        // Predicated region
        $region61: #{conformer_detector_forward.1} parent=39 // pred_check
          %p1197 = pneg %p296
        $region62: #{conformer_detector_forward.1} parent=39 // pred_check_branch
          %1199 = sbr.rel (%p1197) target = $region64
        $region63: #{conformer_detector_forward.1} parent=39 // pred_region
          %s1200 = sand.u32 %s108, 1
          %s1201 = scalar_lea.sflag [#allocation11], %s1200
          %s1202 = sand.u32 %s286, 1
          %s1203 = scalar_lea.vmem [#allocation10], %s1202
          %s1205 = ssub.s32 16, 16
          %1206 = vsyncadd %s1201, %s1205
          %s1207 = smul.addr %s116, 16
          %s1208 = scalar_lea.hbm %s13, %s1207
          %s1210 = sshll.u32 %s1203, 4
          %s1211 = int_to_ptr.vmem [resolvable:$true] %s1210
          %1213 = dma.hbm_to_vmem [thread:$0]  %s1208, 16, %s1211, %s1201
        $region64: #{conformer_detector_forward.1} parent=39 // pred_fallthru
          _
        // Predicated region
        $region65: #{conformer_detector_forward.1} parent=39 // pred_check
          %p1214 = pneg %p322
        $region66: #{conformer_detector_forward.1} parent=39 // pred_check_branch
          %1216 = sbr.rel (%p1214) target = $region68
        $region67: #{conformer_detector_forward.1} parent=39 // pred_region
          %p1217 = scmp.lt.s32.totalorder %s116, 1
          %s1218 = scalar_select %p1217, %s116, 1
          %s1219 = scalar_lea.vmem %s15, %s1218
        $region68: #{conformer_detector_forward.1} parent=39 // pred_fallthru
          _
        // Predicated region
        $region69: #{conformer_detector_forward.1} parent=39 // pred_check
          %p1220 = pneg %p348
        $region70: #{conformer_detector_forward.1} parent=39 // pred_check_branch
          %1222 = sbr.rel (%p1220) target = $region72
        $region71: #{conformer_detector_forward.1} parent=39 // pred_region
          %p1223 = scmp.lt.s32.totalorder %s116, 1
          %s1224 = scalar_select %p1223, %s116, 1
          %s1225 = scalar_lea.vmem %s17, %s1224
        $region72: #{conformer_detector_forward.1} parent=39 // pred_fallthru
          _
        // Predicated region
        $region73: #{conformer_detector_forward.1} parent=39 // pred_check
          %p1226 = pneg %p374
        $region74: #{conformer_detector_forward.1} parent=39 // pred_check_branch
          %1228 = sbr.rel (%p1226) target = $region76
        $region75: #{conformer_detector_forward.1} parent=39 // pred_region
          %s1229 = sand.u32 %s108, 1
          %s1230 = scalar_lea.sflag [#allocation11], %s1229
          %s1231 = sand.u32 %s364, 1
          %s1232 = smul.addr %s1231, 192
          %s1233 = scalar_lea.vmem [#allocation12], %s1232
          %s1235 = ssub.s32 3072, 3072
          %1236 = vsyncadd %s1230, %s1235
          %s1237 = smul.addr %s116, 48
          %s1238 = smul.addr %s1237, 64
          %s1239 = scalar_lea.hbm %s19, %s1238
          %s1240 = sshll.u32 %s1233, 4
          %s1241 = int_to_ptr.vmem [resolvable:$true] %s1240
          %1246 = dma.hbm_to_vmem [thread:$0]  %s1239, 3072, %s1241, %s1230, 192, 192, 12
        $region76: #{conformer_detector_forward.1} parent=39 // pred_fallthru
          _
        // Predicated region
        $region77: #{conformer_detector_forward.1} parent=39 // pred_check
          %p1247 = pneg %p400
        $region78: #{conformer_detector_forward.1} parent=39 // pred_check_branch
          %1249 = sbr.rel (%p1247) target = $region80
        $region79: #{conformer_detector_forward.1} parent=39 // pred_region
          %p1250 = scmp.lt.s32.totalorder %s116, 1
          %s1251 = scalar_select %p1250, %s116, 1
          %s1252 = smul.addr %s1251, 3
          %s1253 = scalar_lea.vmem %s21, %s1252
        $region80: #{conformer_detector_forward.1} parent=39 // pred_fallthru
          _
        // Predicated region
        $region81: #{conformer_detector_forward.1} parent=39 // pred_check
          %p1254 = pneg %p426
        $region82: #{conformer_detector_forward.1} parent=39 // pred_check_branch
          %1256 = sbr.rel (%p1254) target = $region84
        $region83: #{conformer_detector_forward.1} parent=39 // pred_region
          %p1257 = scmp.lt.s32.totalorder %s116, 1
          %s1258 = scalar_select %p1257, %s116, 1
          %s1259 = smul.addr %s1258, 16
          %s1260 = smul.addr %s1259, 4
          %s1261 = scalar_lea.vmem %s23, %s1260
        $region84: #{conformer_detector_forward.1} parent=39 // pred_fallthru
          _
        // Predicated region
        $region85: #{conformer_detector_forward.1} parent=39 // pred_check
          %p1262 = pneg %p452
        $region86: #{conformer_detector_forward.1} parent=39 // pred_check_branch
          %1264 = sbr.rel (%p1262) target = $region88
        $region87: #{conformer_detector_forward.1} parent=39 // pred_region
          %p1265 = scmp.lt.s32.totalorder %s116, 1
          %s1266 = scalar_select %p1265, %s116, 1
          %s1267 = scalar_lea.vmem %s25, %s1266
        $region88: #{conformer_detector_forward.1} parent=39 // pred_fallthru
          _
        // Predicated region
        $region89: #{conformer_detector_forward.1} parent=39 // pred_check
          %p1268 = pneg %p478
        $region90: #{conformer_detector_forward.1} parent=39 // pred_check_branch
          %1270 = sbr.rel (%p1268) target = $region92
        $region91: #{conformer_detector_forward.1} parent=39 // pred_region
          %p1271 = scmp.lt.s32.totalorder %s116, 1
          %s1272 = scalar_select %p1271, %s116, 1
          %s1273 = scalar_lea.vmem %s27, %s1272
        $region92: #{conformer_detector_forward.1} parent=39 // pred_fallthru
          _
        // Predicated region
        $region93: #{conformer_detector_forward.1} parent=39 // pred_check
          %p1274 = pneg %p504
        $region94: #{conformer_detector_forward.1} parent=39 // pred_check_branch
          %1276 = sbr.rel (%p1274) target = $region96
        $region95: #{conformer_detector_forward.1} parent=39 // pred_region
          %p1277 = scmp.lt.s32.totalorder %s116, 1
          %s1278 = scalar_select %p1277, %s116, 1
          %s1279 = scalar_lea.vmem %s29, %s1278
        $region96: #{conformer_detector_forward.1} parent=39 // pred_fallthru
          _
        // Predicated region
        $region97: #{conformer_detector_forward.1} parent=39 // pred_check
          %p1280 = pneg %p530
        $region98: #{conformer_detector_forward.1} parent=39 // pred_check_branch
          %1282 = sbr.rel (%p1280) target = $region100
        $region99: #{conformer_detector_forward.1} parent=39 // pred_region
          %s1283 = sand.u32 %s108, 1
          %s1284 = scalar_lea.sflag [#allocation14], %s1283
          %s1285 = sand.u32 %s520, 1
          %s1286 = smul.addr %s1285, 128
          %s1287 = scalar_lea.vmem [#allocation13], %s1286
          %s1289 = ssub.s32 2048, 2048
          %1290 = vsyncadd %s1284, %s1289
          %s1291 = smul.addr %s116, 32
          %s1292 = smul.addr %s1291, 64
          %s1293 = scalar_lea.hbm %s31, %s1292
          %s1294 = sshll.u32 %s1287, 4
          %s1295 = int_to_ptr.vmem [resolvable:$true] %s1294
          %1300 = dma.hbm_to_vmem [thread:$0]  %s1293, 2048, %s1295, %s1284, 128, 128, 8
        $region100: #{conformer_detector_forward.1} parent=39 // pred_fallthru
          _
        // Predicated region
        $region101: #{conformer_detector_forward.1} parent=39 // pred_check
          %p1301 = pneg %p556
        $region102: #{conformer_detector_forward.1} parent=39 // pred_check_branch
          %1303 = sbr.rel (%p1301) target = $region104
        $region103: #{conformer_detector_forward.1} parent=39 // pred_region
          %p1304 = scmp.lt.s32.totalorder %s116, 1
          %s1305 = scalar_select %p1304, %s116, 1
          %s1306 = smul.addr %s1305, 2
          %s1307 = scalar_lea.vmem %s33, %s1306
        $region104: #{conformer_detector_forward.1} parent=39 // pred_fallthru
          _
        // Predicated region
        $region105: #{conformer_detector_forward.1} parent=39 // pred_check
          %p1308 = pneg %p582
        $region106: #{conformer_detector_forward.1} parent=39 // pred_check_branch
          %1310 = sbr.rel (%p1308) target = $region108
        $region107: #{conformer_detector_forward.1} parent=39 // pred_region
          %p1311 = scmp.lt.s32.totalorder %s116, 1
          %s1312 = scalar_select %p1311, %s116, 1
          %s1313 = smul.addr %s1312, 4
          %s1314 = scalar_lea.vmem %s35, %s1313
        $region108: #{conformer_detector_forward.1} parent=39 // pred_fallthru
          _
        // Predicated region
        $region109: #{conformer_detector_forward.1} parent=39 // pred_check
          %p1315 = pneg %p608
        $region110: #{conformer_detector_forward.1} parent=39 // pred_check_branch
          %1317 = sbr.rel (%p1315) target = $region112
        $region111: #{conformer_detector_forward.1} parent=39 // pred_region
          %p1318 = scmp.lt.s32.totalorder %s116, 1
          %s1319 = scalar_select %p1318, %s116, 1
          %s1320 = scalar_lea.vmem %s37, %s1319
        $region112: #{conformer_detector_forward.1} parent=39 // pred_fallthru
          _
        // Predicated region
        $region113: #{conformer_detector_forward.1} parent=39 // pred_check
          %p1321 = pneg %p634
        $region114: #{conformer_detector_forward.1} parent=39 // pred_check_branch
          %1323 = sbr.rel (%p1321) target = $region116
        $region115: #{conformer_detector_forward.1} parent=39 // pred_region
          %p1324 = scmp.lt.s32.totalorder %s116, 1
          %s1325 = scalar_select %p1324, %s116, 1
          %s1326 = scalar_lea.vmem %s39, %s1325
        $region116: #{conformer_detector_forward.1} parent=39 // pred_fallthru
          _
        // Predicated region
        $region117: #{conformer_detector_forward.1} parent=39 // pred_check
          %p1327 = pneg %p660
        $region118: #{conformer_detector_forward.1} parent=39 // pred_check_branch
          %1329 = sbr.rel (%p1327) target = $region120
        $region119: #{conformer_detector_forward.1} parent=39 // pred_region
          %p1330 = scmp.lt.s32.totalorder %s116, 1
          %s1331 = scalar_select %p1330, %s116, 1
          %s1332 = scalar_lea.vmem %s41, %s1331
        $region120: #{conformer_detector_forward.1} parent=39 // pred_fallthru
          _
        // Predicated region
        $region121: #{conformer_detector_forward.1} parent=39 // pred_check
          %p1333 = pneg %p686
        $region122: #{conformer_detector_forward.1} parent=39 // pred_check_branch
          %1335 = sbr.rel (%p1333) target = $region124
        $region123: #{conformer_detector_forward.1} parent=39 // pred_region
          %s1336 = sand.u32 %s108, 1
          %s1337 = scalar_lea.sflag [#allocation14], %s1336
          %s1338 = sand.u32 %s676, 1
          %s1339 = smul.addr %s1338, 64
          %s1340 = scalar_lea.vmem [#allocation15], %s1339
          %s1342 = ssub.s32 1024, 1024
          %1343 = vsyncadd %s1337, %s1342
          %s1344 = smul.addr %s116, 16
          %s1345 = smul.addr %s1344, 64
          %s1346 = scalar_lea.hbm %s43, %s1345
          %s1347 = sshll.u32 %s1340, 4
          %s1348 = int_to_ptr.vmem [resolvable:$true] %s1347
          %1353 = dma.hbm_to_vmem [thread:$0]  %s1346, 1024, %s1348, %s1337, 64, 64, 4
        $region124: #{conformer_detector_forward.1} parent=39 // pred_fallthru
          _
        // Predicated region
        $region125: #{conformer_detector_forward.1} parent=39 // pred_check
          %p1354 = pneg %p712
        $region126: #{conformer_detector_forward.1} parent=39 // pred_check_branch
          %1356 = sbr.rel (%p1354) target = $region128
        $region127: #{conformer_detector_forward.1} parent=39 // pred_region
          %p1357 = scmp.lt.s32.totalorder %s116, 1
          %s1358 = scalar_select %p1357, %s116, 1
          %s1359 = scalar_lea.vmem %s45, %s1358
        $region128: #{conformer_detector_forward.1} parent=39 // pred_fallthru
          _
        // Predicated region
        $region129: #{conformer_detector_forward.1} parent=39 // pred_check
          %p1360 = pneg %p738
        $region130: #{conformer_detector_forward.1} parent=39 // pred_check_branch
          %1362 = sbr.rel (%p1360) target = $region132
        $region131: #{conformer_detector_forward.1} parent=39 // pred_region
          %s1363 = sand.u32 %s108, 1
          %s1364 = scalar_lea.sflag [#allocation17], %s1363
          %s1365 = sand.u32 %s728, 1
          %s1366 = scalar_lea.vmem [#allocation16], %s1365
          %s1368 = ssub.s32 16, 16
          %1369 = vsyncadd %s1364, %s1368
          %s1370 = smul.addr %s116, 16
          %s1371 = scalar_lea.hbm %s47, %s1370
          %s1373 = sshll.u32 %s1366, 4
          %s1374 = int_to_ptr.vmem [resolvable:$true] %s1373
          %1376 = dma.hbm_to_vmem [thread:$0]  %s1371, 16, %s1374, %s1364
        $region132: #{conformer_detector_forward.1} parent=39 // pred_fallthru
          _
        // Predicated region
        $region133: #{conformer_detector_forward.1} parent=39 // pred_check
          %p1377 = pneg %p764
        $region134: #{conformer_detector_forward.1} parent=39 // pred_check_branch
          %1379 = sbr.rel (%p1377) target = $region136
        $region135: #{conformer_detector_forward.1} parent=39 // pred_region
          %s1380 = sand.u32 %s108, 1
          %s1381 = scalar_lea.sflag [#allocation17], %s1380
          %s1382 = sand.u32 %s754, 1
          %s1383 = scalar_lea.vmem [#allocation18], %s1382
          %s1385 = ssub.s32 16, 16
          %1386 = vsyncadd %s1381, %s1385
          %s1387 = smul.addr %s116, 16
          %s1388 = scalar_lea.hbm %s49, %s1387
          %s1390 = sshll.u32 %s1383, 4
          %s1391 = int_to_ptr.vmem [resolvable:$true] %s1390
          %1393 = dma.hbm_to_vmem [thread:$0]  %s1388, 16, %s1391, %s1381
        $region136: #{conformer_detector_forward.1} parent=39 // pred_fallthru
          _
        // Predicated region
        $region137: #{conformer_detector_forward.1} parent=39 // pred_check
          %p1394 = pneg %p790
        $region138: #{conformer_detector_forward.1} parent=39 // pred_check_branch
          %1396 = sbr.rel (%p1394) target = $region140
        $region139: #{conformer_detector_forward.1} parent=39 // pred_region
          %s1397 = sand.u32 %s108, 1
          %s1398 = scalar_lea.sflag [#allocation20], %s1397
          %s1399 = sand.u32 %s780, 1
          %s1400 = smul.addr %s1399, 256
          %s1401 = scalar_lea.vmem [#allocation19], %s1400
          %s1403 = ssub.s32 4096, 4096
          %1404 = vsyncadd %s1398, %s1403
          %s1405 = smul.addr %s116, 64
          %s1406 = smul.addr %s1405, 64
          %s1407 = scalar_lea.hbm %s51, %s1406
          %s1408 = sshll.u32 %s1401, 4
          %s1409 = int_to_ptr.vmem [resolvable:$true] %s1408
          %1414 = dma.hbm_to_vmem [thread:$0]  %s1407, 4096, %s1409, %s1398, 256, 256, 16
        $region140: #{conformer_detector_forward.1} parent=39 // pred_fallthru
          _
        // Predicated region
        $region141: #{conformer_detector_forward.1} parent=39 // pred_check
          %p1415 = pneg %p816
        $region142: #{conformer_detector_forward.1} parent=39 // pred_check_branch
          %1417 = sbr.rel (%p1415) target = $region144
        $region143: #{conformer_detector_forward.1} parent=39 // pred_region
          %s1418 = sand.u32 %s108, 1
          %s1419 = scalar_lea.sflag [#allocation20], %s1418
          %s1420 = sand.u32 %s806, 1
          %s1421 = smul.addr %s1420, 4
          %s1422 = scalar_lea.vmem [#allocation21], %s1421
          %s1424 = ssub.s32 64, 64
          %1425 = vsyncadd %s1419, %s1424
          %s1426 = smul.addr %s116, 4
          %s1427 = smul.addr %s1426, 16
          %s1428 = scalar_lea.hbm %s53, %s1427
          %s1430 = sshll.u32 %s1422, 4
          %s1431 = int_to_ptr.vmem [resolvable:$true] %s1430
          %1433 = dma.hbm_to_vmem [thread:$0]  %s1428, 64, %s1431, %s1419
        $region144: #{conformer_detector_forward.1} parent=39 // pred_fallthru
          _
        // Predicated region
        $region145: #{conformer_detector_forward.1} parent=39 // pred_check
          %p1434 = pneg %p842
        $region146: #{conformer_detector_forward.1} parent=39 // pred_check_branch
          %1436 = sbr.rel (%p1434) target = $region148
        $region147: #{conformer_detector_forward.1} parent=39 // pred_region
          %s1437 = sand.u32 %s108, 1
          %s1438 = scalar_lea.sflag [#allocation23], %s1437
          %s1439 = sand.u32 %s832, 1
          %s1440 = smul.addr %s1439, 256
          %s1441 = scalar_lea.vmem [#allocation22], %s1440
          %s1443 = ssub.s32 4096, 4096
          %1444 = vsyncadd %s1438, %s1443
          %s1445 = smul.addr %s116, 64
          %s1446 = smul.addr %s1445, 64
          %s1447 = scalar_lea.hbm %s55, %s1446
          %s1448 = sshll.u32 %s1441, 4
          %s1449 = int_to_ptr.vmem [resolvable:$true] %s1448
          %1454 = dma.hbm_to_vmem [thread:$0]  %s1447, 4096, %s1449, %s1438, 64, 64, 4
        $region148: #{conformer_detector_forward.1} parent=39 // pred_fallthru
          _
        // Predicated region
        $region149: #{conformer_detector_forward.1} parent=39 // pred_check
          %p1455 = pneg %p868
        $region150: #{conformer_detector_forward.1} parent=39 // pred_check_branch
          %1457 = sbr.rel (%p1455) target = $region152
        $region151: #{conformer_detector_forward.1} parent=39 // pred_region
          %s1458 = sand.u32 %s108, 1
          %s1459 = scalar_lea.sflag [#allocation23], %s1458
          %s1460 = sand.u32 %s858, 1
          %s1461 = scalar_lea.vmem [#allocation24], %s1460
          %s1463 = ssub.s32 16, 16
          %1464 = vsyncadd %s1459, %s1463
          %s1465 = smul.addr %s116, 16
          %s1466 = scalar_lea.hbm %s57, %s1465
          %s1468 = sshll.u32 %s1461, 4
          %s1469 = int_to_ptr.vmem [resolvable:$true] %s1468
          %1471 = dma.hbm_to_vmem [thread:$0]  %s1466, 16, %s1469, %s1459
        $region152: #{conformer_detector_forward.1} parent=39 // pred_fallthru
          _
        // Predicated region
        $region153: #{conformer_detector_forward.1} parent=39 // pred_check
          %p1472 = pneg %p894
        $region154: #{conformer_detector_forward.1} parent=39 // pred_check_branch
          %1474 = sbr.rel (%p1472) target = $region156
        $region155: #{conformer_detector_forward.1} parent=39 // pred_region
          %s1475 = sand.u32 %s108, 1
          %s1476 = scalar_lea.sflag [#allocation26], %s1475
          %s1477 = sand.u32 %s884, 1
          %s1478 = scalar_lea.vmem [#allocation25], %s1477
          %s1480 = ssub.s32 16, 16
          %1481 = vsyncadd %s1476, %s1480
          %s1482 = smul.addr %s116, 16
          %s1483 = scalar_lea.hbm %s59, %s1482
          %s1485 = sshll.u32 %s1478, 4
          %s1486 = int_to_ptr.vmem [resolvable:$true] %s1485
          %1488 = dma.hbm_to_vmem [thread:$0]  %s1483, 16, %s1486, %s1476
        $region156: #{conformer_detector_forward.1} parent=39 // pred_fallthru
          _
        // Predicated region
        $region157: #{conformer_detector_forward.1} parent=39 // pred_check
          %p1489 = pneg %p920
        $region158: #{conformer_detector_forward.1} parent=39 // pred_check_branch
          %1491 = sbr.rel (%p1489) target = $region160
        $region159: #{conformer_detector_forward.1} parent=39 // pred_region
          %s1492 = sand.u32 %s108, 1
          %s1493 = scalar_lea.sflag [#allocation26], %s1492
          %s1494 = sand.u32 %s910, 1
          %s1495 = scalar_lea.vmem [#allocation27], %s1494
          %s1497 = ssub.s32 16, 16
          %1498 = vsyncadd %s1493, %s1497
          %s1499 = smul.addr %s116, 16
          %s1500 = scalar_lea.hbm %s61, %s1499
          %s1502 = sshll.u32 %s1495, 4
          %s1503 = int_to_ptr.vmem [resolvable:$true] %s1502
          %1505 = dma.hbm_to_vmem [thread:$0]  %s1500, 16, %s1503, %s1493
        $region160: #{conformer_detector_forward.1} parent=39 // pred_fallthru
          _
      $region40: #{conformer_detector_forward.1} parent=5 // pred_fallthru
        _
      %p1506 = scmp.le.s32.totalorder 1, %s108
      %p1507 = scmp.lt.s32.totalorder %s108, 3
      %p1508 = pnand %p1506, %p1507
      %p1509 = pneg %p1508
      // Predicated region
      $region161: #{conformer_detector_forward.1} parent=5 // pred_check
        _
      $region162: #{conformer_detector_forward.1} parent=5 // pred_check_branch
        %1511 = sbr.rel (%p1508) target = $region164
      $region163: #{conformer_detector_forward.1} parent=5 // pred_region
        %s1512 = ssub.s32 %s108, 1
        %s1513 = sand.u32 %s159, 1
        %s1514 = scalar_lea.sflag [#allocation6], %s1513
        %s1515 = sand.u32 %s159, 1
        %s1516 = scalar_lea.vmem [#allocation5], %s1515
        // Predicated region
        $region165: #{conformer_detector_forward.1} parent=163 // pred_check
          %p1517 = pneg %p172
        $region166: #{conformer_detector_forward.1} parent=163 // pred_check_branch
          %1519 = sbr.rel (%p1517) target = $region168
        $region167: #{conformer_detector_forward.1} parent=163 // pred_region
          %1520 = dma.done %s1514, 16
        $region168: #{conformer_detector_forward.1} parent=163 // pred_fallthru
          _
        %s1521 = sand.u32 %s113, 1
        %s1522 = scalar_lea.sflag [#allocation8], %s1521
        %s1523 = sand.u32 %s185, 1
        %s1524 = scalar_lea.vmem [#allocation7], %s1523
        // Predicated region
        $region169: #{conformer_detector_forward.1} parent=163 // pred_check
          %p1525 = pneg %p198
        $region170: #{conformer_detector_forward.1} parent=163 // pred_check_branch
          %1527 = sbr.rel (%p1525) target = $region172
        $region171: #{conformer_detector_forward.1} parent=163 // pred_region
          %1528 = dma.done %s1522, 16
        $region172: #{conformer_detector_forward.1} parent=163 // pred_fallthru
          _
        %s1529 = sand.u32 %s113, 1
        %s1530 = scalar_lea.sflag [#allocation8], %s1529
        %s1531 = sand.u32 %s263, 1
        %s1532 = smul.addr %s1531, 256
        %s1533 = scalar_lea.vmem [#allocation9], %s1532
        // Predicated region
        $region173: #{conformer_detector_forward.1} parent=163 // pred_check
          %p1534 = pneg %p276
        $region174: #{conformer_detector_forward.1} parent=163 // pred_check_branch
          %1536 = sbr.rel (%p1534) target = $region176
        $region175: #{conformer_detector_forward.1} parent=163 // pred_region
          %1537 = dma.done %s1530, 4096
        $region176: #{conformer_detector_forward.1} parent=163 // pred_fallthru
          _
        %s1538 = sand.u32 %s113, 1
        %s1539 = scalar_lea.sflag [#allocation11], %s1538
        %s1540 = sand.u32 %s289, 1
        %s1541 = scalar_lea.vmem [#allocation10], %s1540
        // Predicated region
        $region177: #{conformer_detector_forward.1} parent=163 // pred_check
          %p1542 = pneg %p302
        $region178: #{conformer_detector_forward.1} parent=163 // pred_check_branch
          %1544 = sbr.rel (%p1542) target = $region180
        $region179: #{conformer_detector_forward.1} parent=163 // pred_region
          %1545 = dma.done %s1539, 16
        $region180: #{conformer_detector_forward.1} parent=163 // pred_fallthru
          _
        %s1546 = sand.u32 %s113, 1
        %s1547 = scalar_lea.sflag [#allocation11], %s1546
        %s1548 = sand.u32 %s367, 1
        %s1549 = smul.addr %s1548, 192
        %s1550 = scalar_lea.vmem [#allocation12], %s1549
        // Predicated region
        $region181: #{conformer_detector_forward.1} parent=163 // pred_check
          %p1551 = pneg %p380
        $region182: #{conformer_detector_forward.1} parent=163 // pred_check_branch
          %1553 = sbr.rel (%p1551) target = $region184
        $region183: #{conformer_detector_forward.1} parent=163 // pred_region
          %1554 = dma.done %s1547, 3072
        $region184: #{conformer_detector_forward.1} parent=163 // pred_fallthru
          _
        %s1555 = sand.u32 %s113, 1
        %s1556 = scalar_lea.sflag [#allocation14], %s1555
        %s1557 = sand.u32 %s523, 1
        %s1558 = smul.addr %s1557, 128
        %s1559 = scalar_lea.vmem [#allocation13], %s1558
        // Predicated region
        $region185: #{conformer_detector_forward.1} parent=163 // pred_check
          %p1560 = pneg %p536
        $region186: #{conformer_detector_forward.1} parent=163 // pred_check_branch
          %1562 = sbr.rel (%p1560) target = $region188
        $region187: #{conformer_detector_forward.1} parent=163 // pred_region
          %1563 = dma.done %s1556, 2048
        $region188: #{conformer_detector_forward.1} parent=163 // pred_fallthru
          _
        %s1564 = sand.u32 %s113, 1
        %s1565 = scalar_lea.sflag [#allocation14], %s1564
        %s1566 = sand.u32 %s679, 1
        %s1567 = smul.addr %s1566, 64
        %s1568 = scalar_lea.vmem [#allocation15], %s1567
        // Predicated region
        $region189: #{conformer_detector_forward.1} parent=163 // pred_check
          %p1569 = pneg %p692
        $region190: #{conformer_detector_forward.1} parent=163 // pred_check_branch
          %1571 = sbr.rel (%p1569) target = $region192
        $region191: #{conformer_detector_forward.1} parent=163 // pred_region
          %1572 = dma.done %s1565, 1024
        $region192: #{conformer_detector_forward.1} parent=163 // pred_fallthru
          _
        %s1573 = sand.u32 %s113, 1
        %s1574 = scalar_lea.sflag [#allocation17], %s1573
        %s1575 = sand.u32 %s731, 1
        %s1576 = scalar_lea.vmem [#allocation16], %s1575
        // Predicated region
        $region193: #{conformer_detector_forward.1} parent=163 // pred_check
          %p1577 = pneg %p744
        $region194: #{conformer_detector_forward.1} parent=163 // pred_check_branch
          %1579 = sbr.rel (%p1577) target = $region196
        $region195: #{conformer_detector_forward.1} parent=163 // pred_region
          %1580 = dma.done %s1574, 16
        $region196: #{conformer_detector_forward.1} parent=163 // pred_fallthru
          _
        %s1581 = sand.u32 %s113, 1
        %s1582 = scalar_lea.sflag [#allocation17], %s1581
        %s1583 = sand.u32 %s757, 1
        %s1584 = scalar_lea.vmem [#allocation18], %s1583
        // Predicated region
        $region197: #{conformer_detector_forward.1} parent=163 // pred_check
          %p1585 = pneg %p770
        $region198: #{conformer_detector_forward.1} parent=163 // pred_check_branch
          %1587 = sbr.rel (%p1585) target = $region200
        $region199: #{conformer_detector_forward.1} parent=163 // pred_region
          %1588 = dma.done %s1582, 16
        $region200: #{conformer_detector_forward.1} parent=163 // pred_fallthru
          _
        %s1589 = sand.u32 %s113, 1
        %s1590 = scalar_lea.sflag [#allocation20], %s1589
        %s1591 = sand.u32 %s783, 1
        %s1592 = smul.addr %s1591, 256
        %s1593 = scalar_lea.vmem [#allocation19], %s1592
        // Predicated region
        $region201: #{conformer_detector_forward.1} parent=163 // pred_check
          %p1594 = pneg %p796
        $region202: #{conformer_detector_forward.1} parent=163 // pred_check_branch
          %1596 = sbr.rel (%p1594) target = $region204
        $region203: #{conformer_detector_forward.1} parent=163 // pred_region
          %1597 = dma.done %s1590, 4096
        $region204: #{conformer_detector_forward.1} parent=163 // pred_fallthru
          _
        %s1598 = sand.u32 %s113, 1
        %s1599 = scalar_lea.sflag [#allocation20], %s1598
        %s1600 = sand.u32 %s809, 1
        %s1601 = smul.addr %s1600, 4
        %s1602 = scalar_lea.vmem [#allocation21], %s1601
        // Predicated region
        $region205: #{conformer_detector_forward.1} parent=163 // pred_check
          %p1603 = pneg %p822
        $region206: #{conformer_detector_forward.1} parent=163 // pred_check_branch
          %1605 = sbr.rel (%p1603) target = $region208
        $region207: #{conformer_detector_forward.1} parent=163 // pred_region
          %1606 = dma.done %s1599, 64
        $region208: #{conformer_detector_forward.1} parent=163 // pred_fallthru
          _
        %s1607 = sand.u32 %s113, 1
        %s1608 = scalar_lea.sflag [#allocation23], %s1607
        %s1609 = sand.u32 %s835, 1
        %s1610 = smul.addr %s1609, 256
        %s1611 = scalar_lea.vmem [#allocation22], %s1610
        // Predicated region
        $region209: #{conformer_detector_forward.1} parent=163 // pred_check
          %p1612 = pneg %p848
        $region210: #{conformer_detector_forward.1} parent=163 // pred_check_branch
          %1614 = sbr.rel (%p1612) target = $region212
        $region211: #{conformer_detector_forward.1} parent=163 // pred_region
          %1615 = dma.done %s1608, 4096
        $region212: #{conformer_detector_forward.1} parent=163 // pred_fallthru
          _
        %s1616 = sand.u32 %s113, 1
        %s1617 = scalar_lea.sflag [#allocation23], %s1616
        %s1618 = sand.u32 %s861, 1
        %s1619 = scalar_lea.vmem [#allocation24], %s1618
        // Predicated region
        $region213: #{conformer_detector_forward.1} parent=163 // pred_check
          %p1620 = pneg %p874
        $region214: #{conformer_detector_forward.1} parent=163 // pred_check_branch
          %1622 = sbr.rel (%p1620) target = $region216
        $region215: #{conformer_detector_forward.1} parent=163 // pred_region
          %1623 = dma.done %s1617, 16
        $region216: #{conformer_detector_forward.1} parent=163 // pred_fallthru
          _
        %s1624 = sand.u32 %s113, 1
        %s1625 = scalar_lea.sflag [#allocation26], %s1624
        %s1626 = sand.u32 %s887, 1
        %s1627 = scalar_lea.vmem [#allocation25], %s1626
        // Predicated region
        $region217: #{conformer_detector_forward.1} parent=163 // pred_check
          %p1628 = pneg %p900
        $region218: #{conformer_detector_forward.1} parent=163 // pred_check_branch
          %1630 = sbr.rel (%p1628) target = $region220
        $region219: #{conformer_detector_forward.1} parent=163 // pred_region
          %1631 = dma.done %s1625, 16
        $region220: #{conformer_detector_forward.1} parent=163 // pred_fallthru
          _
        %s1632 = sand.u32 %s113, 1
        %s1633 = scalar_lea.sflag [#allocation26], %s1632
        %s1634 = sand.u32 %s913, 1
        %s1635 = scalar_lea.vmem [#allocation27], %s1634
        // Predicated region
        $region221: #{conformer_detector_forward.1} parent=163 // pred_check
          %p1636 = pneg %p926
        $region222: #{conformer_detector_forward.1} parent=163 // pred_check_branch
          %1638 = sbr.rel (%p1636) target = $region224
        $region223: #{conformer_detector_forward.1} parent=163 // pred_region
          %1639 = dma.done %s1633, 16
        $region224: #{conformer_detector_forward.1} parent=163 // pred_fallthru
          _
        // Predicated region
        $region225: #{conformer_detector_forward.1} parent=163 // pred_check
          %p1640 = pneg %p947
        $region226: #{conformer_detector_forward.1} parent=163 // pred_check_branch
          %1642 = sbr.rel (%p1640) target = $region228
        $region227: #{conformer_detector_forward.1} parent=163 // pred_region
          %1643 = dma.done [#allocation29], 1024
        $region228: #{conformer_detector_forward.1} parent=163 // pred_fallthru
          _
        // Predicated region
        $region229: #{conformer_detector_forward.1} parent=163 // pred_check
          %p1644 = pneg %p968
        $region230: #{conformer_detector_forward.1} parent=163 // pred_check_branch
          %1646 = sbr.rel (%p1644) target = $region232
        $region231: #{conformer_detector_forward.1} parent=163 // pred_region
          %1647 = dma.done [#allocation29], 16
        $region232: #{conformer_detector_forward.1} parent=163 // pred_fallthru
          _
        // Predicated region
        $region233: #{conformer_detector_forward.1} parent=163 // pred_check
          %p1648 = pneg %p989
        $region234: #{conformer_detector_forward.1} parent=163 // pred_check_branch
          %1650 = sbr.rel (%p1648) target = $region236
        $region235: #{conformer_detector_forward.1} parent=163 // pred_region
          %1651 = dma.done [#allocation32], 16
        $region236: #{conformer_detector_forward.1} parent=163 // pred_fallthru
          _
        %s1652 = smul.u32 2, %s117
        %p1653 = scmp.lt.s32.totalorder %s1652, 1
        %s1654 = scalar_select %p1653, %s1652, 1
        %s1655 = smul.addr %s1654, 4
        %s1656 = smul.addr %s1655, 8
        %s1657 = scalar_lea.vmem %s1, %s1656
        %p1658 = pneg %p146
        %p1659 = pneg %p143
        %s1660 = sand.u32 %s159, 1
        %s1661 = scalar_lea.sflag [#allocation6], %s1660
        %s1662 = sand.u32 %s159, 1
        %s1663 = scalar_lea.vmem [#allocation5], %s1662
        %p1664 = pneg %p172
        %p1665 = pneg %p169
        %s1666 = sand.u32 %s113, 1
        %s1667 = scalar_lea.sflag [#allocation8], %s1666
        %s1668 = sand.u32 %s185, 1
        %s1669 = scalar_lea.vmem [#allocation7], %s1668
        %p1670 = pneg %p198
        %p1671 = pneg %p195
        %p1672 = scmp.lt.s32.totalorder %s118, 1
        %s1673 = scalar_select %p1672, %s118, 1
        %s1674 = smul.addr %s1673, 64
        %s1675 = smul.addr %s1674, 4
        %s1676 = scalar_lea.vmem %s7, %s1675
        %p1677 = pneg %p224
        %p1678 = pneg %p221
        %p1679 = scmp.lt.s32.totalorder %s118, 1
        %s1680 = scalar_select %p1679, %s118, 1
        %s1681 = smul.addr %s1680, 4
        %s1682 = scalar_lea.vmem %s9, %s1681
        %p1683 = pneg %p250
        %p1684 = pneg %p247
        %s1685 = sand.u32 %s113, 1
        %s1686 = scalar_lea.sflag [#allocation8], %s1685
        %s1687 = sand.u32 %s263, 1
        %s1688 = smul.addr %s1687, 256
        %s1689 = scalar_lea.vmem [#allocation9], %s1688
        %p1690 = pneg %p276
        %p1691 = pneg %p273
        %s1692 = sand.u32 %s113, 1
        %s1693 = scalar_lea.sflag [#allocation11], %s1692
        %s1694 = sand.u32 %s289, 1
        %s1695 = scalar_lea.vmem [#allocation10], %s1694
        %p1696 = pneg %p302
        %p1697 = pneg %p299
        %p1698 = scmp.lt.s32.totalorder %s118, 1
        %s1699 = scalar_select %p1698, %s118, 1
        %s1700 = scalar_lea.vmem %s15, %s1699
        %p1701 = pneg %p328
        %p1702 = pneg %p325
        %p1703 = scmp.lt.s32.totalorder %s118, 1
        %s1704 = scalar_select %p1703, %s118, 1
        %s1705 = scalar_lea.vmem %s17, %s1704
        %p1706 = pneg %p354
        %p1707 = pneg %p351
        %s1708 = sand.u32 %s113, 1
        %s1709 = scalar_lea.sflag [#allocation11], %s1708
        %s1710 = sand.u32 %s367, 1
        %s1711 = smul.addr %s1710, 192
        %s1712 = scalar_lea.vmem [#allocation12], %s1711
        %p1713 = pneg %p380
        %p1714 = pneg %p377
        %p1715 = scmp.lt.s32.totalorder %s118, 1
        %s1716 = scalar_select %p1715, %s118, 1
        %s1717 = smul.addr %s1716, 3
        %s1718 = scalar_lea.vmem %s21, %s1717
        %p1719 = pneg %p406
        %p1720 = pneg %p403
        %p1721 = scmp.lt.s32.totalorder %s118, 1
        %s1722 = scalar_select %p1721, %s118, 1
        %s1723 = smul.addr %s1722, 16
        %s1724 = smul.addr %s1723, 4
        %s1725 = scalar_lea.vmem %s23, %s1724
        %p1726 = pneg %p432
        %p1727 = pneg %p429
        %p1728 = scmp.lt.s32.totalorder %s118, 1
        %s1729 = scalar_select %p1728, %s118, 1
        %s1730 = scalar_lea.vmem %s25, %s1729
        %p1731 = pneg %p458
        %p1732 = pneg %p455
        %p1733 = scmp.lt.s32.totalorder %s118, 1
        %s1734 = scalar_select %p1733, %s118, 1
        %s1735 = scalar_lea.vmem %s27, %s1734
        %p1736 = pneg %p484
        %p1737 = pneg %p481
        %p1738 = scmp.lt.s32.totalorder %s118, 1
        %s1739 = scalar_select %p1738, %s118, 1
        %s1740 = scalar_lea.vmem %s29, %s1739
        %p1741 = pneg %p510
        %p1742 = pneg %p507
        %s1743 = sand.u32 %s113, 1
        %s1744 = scalar_lea.sflag [#allocation14], %s1743
        %s1745 = sand.u32 %s523, 1
        %s1746 = smul.addr %s1745, 128
        %s1747 = scalar_lea.vmem [#allocation13], %s1746
        %p1748 = pneg %p536
        %p1749 = pneg %p533
        %p1750 = scmp.lt.s32.totalorder %s118, 1
        %s1751 = scalar_select %p1750, %s118, 1
        %s1752 = smul.addr %s1751, 2
        %s1753 = scalar_lea.vmem %s33, %s1752
        %p1754 = pneg %p562
        %p1755 = pneg %p559
        %p1756 = scmp.lt.s32.totalorder %s118, 1
        %s1757 = scalar_select %p1756, %s118, 1
        %s1758 = smul.addr %s1757, 4
        %s1759 = scalar_lea.vmem %s35, %s1758
        %p1760 = pneg %p588
        %p1761 = pneg %p585
        %p1762 = scmp.lt.s32.totalorder %s118, 1
        %s1763 = scalar_select %p1762, %s118, 1
        %s1764 = scalar_lea.vmem %s37, %s1763
        %p1765 = pneg %p614
        %p1766 = pneg %p611
        %p1767 = scmp.lt.s32.totalorder %s118, 1
        %s1768 = scalar_select %p1767, %s118, 1
        %s1769 = scalar_lea.vmem %s39, %s1768
        %p1770 = pneg %p640
        %p1771 = pneg %p637
        %p1772 = scmp.lt.s32.totalorder %s118, 1
        %s1773 = scalar_select %p1772, %s118, 1
        %s1774 = scalar_lea.vmem %s41, %s1773
        %p1775 = pneg %p666
        %p1776 = pneg %p663
        %s1777 = sand.u32 %s113, 1
        %s1778 = scalar_lea.sflag [#allocation14], %s1777
        %s1779 = sand.u32 %s679, 1
        %s1780 = smul.addr %s1779, 64
        %s1781 = scalar_lea.vmem [#allocation15], %s1780
        %p1782 = pneg %p692
        %p1783 = pneg %p689
        %p1784 = scmp.lt.s32.totalorder %s118, 1
        %s1785 = scalar_select %p1784, %s118, 1
        %s1786 = scalar_lea.vmem %s45, %s1785
        %p1787 = pneg %p718
        %p1788 = pneg %p715
        %s1789 = sand.u32 %s113, 1
        %s1790 = scalar_lea.sflag [#allocation17], %s1789
        %s1791 = sand.u32 %s731, 1
        %s1792 = scalar_lea.vmem [#allocation16], %s1791
        %p1793 = pneg %p744
        %p1794 = pneg %p741
        %s1795 = sand.u32 %s113, 1
        %s1796 = scalar_lea.sflag [#allocation17], %s1795
        %s1797 = sand.u32 %s757, 1
        %s1798 = scalar_lea.vmem [#allocation18], %s1797
        %p1799 = pneg %p770
        %p1800 = pneg %p767
        %s1801 = sand.u32 %s113, 1
        %s1802 = scalar_lea.sflag [#allocation20], %s1801
        %s1803 = sand.u32 %s783, 1
        %s1804 = smul.addr %s1803, 256
        %s1805 = scalar_lea.vmem [#allocation19], %s1804
        %p1806 = pneg %p796
        %p1807 = pneg %p793
        %s1808 = sand.u32 %s113, 1
        %s1809 = scalar_lea.sflag [#allocation20], %s1808
        %s1810 = sand.u32 %s809, 1
        %s1811 = smul.addr %s1810, 4
        %s1812 = scalar_lea.vmem [#allocation21], %s1811
        %p1813 = pneg %p822
        %p1814 = pneg %p819
        %s1815 = sand.u32 %s113, 1
        %s1816 = scalar_lea.sflag [#allocation23], %s1815
        %s1817 = sand.u32 %s835, 1
        %s1818 = smul.addr %s1817, 256
        %s1819 = scalar_lea.vmem [#allocation22], %s1818
        %p1820 = pneg %p848
        %p1821 = pneg %p845
        %s1822 = sand.u32 %s113, 1
        %s1823 = scalar_lea.sflag [#allocation23], %s1822
        %s1824 = sand.u32 %s861, 1
        %s1825 = scalar_lea.vmem [#allocation24], %s1824
        %p1826 = pneg %p874
        %p1827 = pneg %p871
        %s1828 = sand.u32 %s113, 1
        %s1829 = scalar_lea.sflag [#allocation26], %s1828
        %s1830 = sand.u32 %s887, 1
        %s1831 = scalar_lea.vmem [#allocation25], %s1830
        %p1832 = pneg %p900
        %p1833 = pneg %p897
        %s1834 = sand.u32 %s113, 1
        %s1835 = scalar_lea.sflag [#allocation26], %s1834
        %s1836 = sand.u32 %s913, 1
        %s1837 = scalar_lea.vmem [#allocation27], %s1836
        %p1838 = pneg %p926
        %p1839 = pneg %p923
        %p1840 = pneg %p947
        %p1841 = pneg %p944
        %p1842 = pneg %p968
        %p1843 = pneg %p965
        %p1844 = pneg %p989
        %p1845 = pneg %p986
        %p1846 = pneg %p1010
        %p1847 = pneg %p1007
        %p1848 = pneg %p1031
        %p1849 = pneg %p1028
        %p1850 = pneg %p1057
        %p1851 = pneg %p1054
        %p1852 = scmp.lt.s32.totalorder %s117, 0
        %s1853 = scalar_select %p1852, %s117, 0
        %s1854 = smul.addr %s1853, 2
        %s1855 = scalar_lea.vmem %s73, %s1854
        %s1856 = smul.u32 2, %s117
        %p1857 = scmp.lt.s32.totalorder %s1856, 1
        %s1858 = scalar_select %p1857, %s1856, 1
        %s1859 = smul.addr %s1858, 4
        %s1860 = smul.addr %s1859, 8
        %s1861 = scalar_lea.vmem %s1, %s1860
        %s1862 = smul.u32 2, %s117
        %p1863 = scmp.lt.s32.totalorder %s118, 1
        %s1864 = scalar_select %p1863, %s118, 1
        %s1865 = smul.addr %s1864, 64
        %s1866 = smul.addr %s1865, 4
        %s1867 = scalar_lea.vmem %s7, %s1866
        %p1868 = scmp.lt.s32.totalorder %s118, 1
        %s1869 = scalar_select %p1868, %s118, 1
        %s1870 = smul.addr %s1869, 4
        %s1871 = scalar_lea.vmem %s9, %s1870
        %p1872 = scmp.lt.s32.totalorder %s118, 1
        %s1873 = scalar_select %p1872, %s118, 1
        %s1874 = scalar_lea.vmem %s15, %s1873
        %p1875 = scmp.lt.s32.totalorder %s118, 1
        %s1876 = scalar_select %p1875, %s118, 1
        %s1877 = scalar_lea.vmem %s17, %s1876
        %p1878 = scmp.lt.s32.totalorder %s118, 1
        %s1879 = scalar_select %p1878, %s118, 1
        %s1880 = smul.addr %s1879, 3
        %s1881 = scalar_lea.vmem %s21, %s1880
        %p1882 = scmp.lt.s32.totalorder %s118, 1
        %s1883 = scalar_select %p1882, %s118, 1
        %s1884 = smul.addr %s1883, 16
        %s1885 = smul.addr %s1884, 4
        %s1886 = scalar_lea.vmem %s23, %s1885
        %p1887 = scmp.lt.s32.totalorder %s118, 1
        %s1888 = scalar_select %p1887, %s118, 1
        %s1889 = scalar_lea.vmem %s25, %s1888
        %p1890 = scmp.lt.s32.totalorder %s118, 1
        %s1891 = scalar_select %p1890, %s118, 1
        %s1892 = scalar_lea.vmem %s27, %s1891
        %p1893 = scmp.lt.s32.totalorder %s118, 1
        %s1894 = scalar_select %p1893, %s118, 1
        %s1895 = scalar_lea.vmem %s29, %s1894
        %p1896 = scmp.lt.s32.totalorder %s118, 1
        %s1897 = scalar_select %p1896, %s118, 1
        %s1898 = smul.addr %s1897, 2
        %s1899 = scalar_lea.vmem %s33, %s1898
        %p1900 = scmp.lt.s32.totalorder %s118, 1
        %s1901 = scalar_select %p1900, %s118, 1
        %s1902 = smul.addr %s1901, 4
        %s1903 = scalar_lea.vmem %s35, %s1902
        %p1904 = scmp.lt.s32.totalorder %s118, 1
        %s1905 = scalar_select %p1904, %s118, 1
        %s1906 = scalar_lea.vmem %s37, %s1905
        %p1907 = scmp.lt.s32.totalorder %s118, 1
        %s1908 = scalar_select %p1907, %s118, 1
        %s1909 = scalar_lea.vmem %s39, %s1908
        %p1910 = scmp.lt.s32.totalorder %s118, 1
        %s1911 = scalar_select %p1910, %s118, 1
        %s1912 = scalar_lea.vmem %s41, %s1911
        %p1913 = scmp.lt.s32.totalorder %s118, 1
        %s1914 = scalar_select %p1913, %s118, 1
        %s1915 = scalar_lea.vmem %s45, %s1914
        %p1916 = scmp.lt.s32.totalorder %s117, 0
        %s1917 = scalar_select %p1916, %s117, 0
        %s1918 = smul.addr %s1917, 2
        %s1919 = scalar_lea.vmem %s73, %s1918
        %p1921 = scmp.eq.s32.totalorder %s118, 0
        // Predicated region
        $region237: #{conformer_detector_forward.1} parent=163 // pred_check
          %p1922 = pneg %p1921
        $region238: #{conformer_detector_forward.1} parent=163 // pred_check_branch
          %1924 = sbr.rel (%p1922) target = $region240
        $region239: #{conformer_detector_forward.1} parent=163 // pred_region
          %v1925 = vld [vmem:[%s1861] sm:$0xff]
          %v1926 = vld [vmem:[%s1861 + $0x8] sm:$0xff]
          %v1927 = vld [vmem:[%s1861 + $0x10] sm:$0xff]
          %v1928 = vld [vmem:[%s1861 + $0x18] sm:$0xff]
          %v1929 = vld [vmem:[%s1861 + $0x20] sm:$0xff]
          %v1930 = vld [vmem:[%s1861 + $0x28] sm:$0xff]
          %v1931 = vld [vmem:[%s1861 + $0x30] sm:$0xff]
          %v1932 = vld [vmem:[%s1861 + $0x38] sm:$0xff]
          %1933 = vst [vmem:[#allocation2] sm:$0xff] %v1925
          %1934 = vst [vmem:[#allocation2 + $0x8] sm:$0xff] %v1926
          %1935 = vst [vmem:[#allocation2 + $0x10] sm:$0xff] %v1927
          %1936 = vst [vmem:[#allocation2 + $0x18] sm:$0xff] %v1928
          %1937 = vst [vmem:[#allocation2 + $0x20] sm:$0xff] %v1929
          %1938 = vst [vmem:[#allocation2 + $0x28] sm:$0xff] %v1930
          %1939 = vst [vmem:[#allocation2 + $0x30] sm:$0xff] %v1931
          %1940 = vst [vmem:[#allocation2 + $0x38] sm:$0xff] %v1932
        $region240: #{conformer_detector_forward.1} parent=163 // pred_fallthru
          _
        %v1941 = vld [vmem:[#allocation2] sm:$0xff]
        %v1942 = vld [vmem:[#allocation2 + $0x8] sm:$0xff]
        %v1943 = vld [vmem:[#allocation2 + $0x10] sm:$0xff]
        %v1944 = vld [vmem:[#allocation2 + $0x18] sm:$0xff]
        %v1945 = vld [vmem:[#allocation2 + $0x20] sm:$0xff]
        %v1946 = vld [vmem:[#allocation2 + $0x28] sm:$0xff]
        %v1947 = vld [vmem:[#allocation2 + $0x30] sm:$0xff]
        %v1948 = vld [vmem:[#allocation2 + $0x38] sm:$0xff]
        %v1949 = vld [vmem:[%s1516] sm:$0x1]
        %v1950 = vld [vmem:[%s1524] sm:$0x1]
        %1951 = vadd.xlane.f32.xlu0 %v1941
        %v1952 = vpop.xlane.xlu0 %1951
        %1953 = vadd.xlane.f32.xlu0 %v1942
        %v1954 = vpop.xlane.xlu0 %1953
        %1955 = vadd.xlane.f32.xlu0 %v1943
        %v1956 = vpop.xlane.xlu0 %1955
        %1957 = vadd.xlane.f32.xlu0 %v1944
        %v1958 = vpop.xlane.xlu0 %1957
        %1959 = vadd.xlane.f32.xlu0 %v1945
        %v1960 = vpop.xlane.xlu0 %1959
        %1961 = vadd.xlane.f32.xlu0 %v1946
        %v1962 = vpop.xlane.xlu0 %1961
        %1963 = vadd.xlane.f32.xlu0 %v1947
        %v1964 = vpop.xlane.xlu0 %1963
        %1965 = vadd.xlane.f32.xlu0 %v1948
        %v1966 = vpop.xlane.xlu0 %1965
        %v1967 = vrcp.pop 128.0
        %v1968 = vmul.f32 %v1952, %v1967
        %v1969 = vmul.f32 %v1954, %v1967
        %v1970 = vmul.f32 %v1956, %v1967
        %v1971 = vmul.f32 %v1958, %v1967
        %v1972 = vmul.f32 %v1960, %v1967
        %v1973 = vmul.f32 %v1962, %v1967
        %v1974 = vmul.f32 %v1964, %v1967
        %v1975 = vmul.f32 %v1966, %v1967
        %v1976 = vsub.f32 %v1941, %v1968
        %v1977 = vsub.f32 %v1942, %v1969
        %v1978 = vsub.f32 %v1943, %v1970
        %v1979 = vsub.f32 %v1944, %v1971
        %v1980 = vsub.f32 %v1945, %v1972
        %v1981 = vsub.f32 %v1946, %v1973
        %v1982 = vsub.f32 %v1947, %v1974
        %v1983 = vsub.f32 %v1948, %v1975
        %v1984 = vmul.f32 %v1976, %v1976
        %v1985 = vmul.f32 %v1977, %v1977
        %v1986 = vmul.f32 %v1978, %v1978
        %v1987 = vmul.f32 %v1979, %v1979
        %v1988 = vmul.f32 %v1980, %v1980
        %v1989 = vmul.f32 %v1981, %v1981
        %v1990 = vmul.f32 %v1982, %v1982
        %v1991 = vmul.f32 %v1983, %v1983
        %1992 = vadd.xlane.f32.xlu0 %v1984
        %v1993 = vpop.xlane.xlu0 %1992
        %1994 = vadd.xlane.f32.xlu0 %v1985
        %v1995 = vpop.xlane.xlu0 %1994
        %1996 = vadd.xlane.f32.xlu0 %v1986
        %v1997 = vpop.xlane.xlu0 %1996
        %1998 = vadd.xlane.f32.xlu0 %v1987
        %v1999 = vpop.xlane.xlu0 %1998
        %2000 = vadd.xlane.f32.xlu0 %v1988
        %v2001 = vpop.xlane.xlu0 %2000
        %2002 = vadd.xlane.f32.xlu0 %v1989
        %v2003 = vpop.xlane.xlu0 %2002
        %2004 = vadd.xlane.f32.xlu0 %v1990
        %v2005 = vpop.xlane.xlu0 %2004
        %2006 = vadd.xlane.f32.xlu0 %v1991
        %v2007 = vpop.xlane.xlu0 %2006
        %v2008 = vmul.f32 %v1993, %v1967
        %v2009 = vmul.f32 %v1995, %v1967
        %v2010 = vmul.f32 %v1997, %v1967
        %v2011 = vmul.f32 %v1999, %v1967
        %v2012 = vmul.f32 %v2001, %v1967
        %v2013 = vmul.f32 %v2003, %v1967
        %v2014 = vmul.f32 %v2005, %v1967
        %v2015 = vmul.f32 %v2007, %v1967
        %v2016 = vadd.f32 %v2008, 1e-05
        %v2017 = vadd.f32 %v2009, 1e-05
        %v2018 = vadd.f32 %v2010, 1e-05
        %v2019 = vadd.f32 %v2011, 1e-05
        %v2020 = vadd.f32 %v2012, 1e-05
        %v2021 = vadd.f32 %v2013, 1e-05
        %v2022 = vadd.f32 %v2014, 1e-05
        %v2023 = vadd.f32 %v2015, 1e-05
        %v2024 = vrsqrt.pop %v2016
        %v2025 = vrsqrt.pop %v2017
        %v2026 = vrsqrt.pop %v2018
        %v2027 = vrsqrt.pop %v2019
        %v2028 = vrsqrt.pop %v2020
        %v2029 = vrsqrt.pop %v2021
        %v2030 = vrsqrt.pop %v2022
        %v2031 = vrsqrt.pop %v2023
        %v2032 = vmul.f32 %v1976, %v2024
        %v2033 = vmul.f32 %v1977, %v2025
        %v2034 = vmul.f32 %v1978, %v2026
        %v2035 = vmul.f32 %v1979, %v2027
        %v2036 = vmul.f32 %v1980, %v2028
        %v2037 = vmul.f32 %v1981, %v2029
        %v2038 = vmul.f32 %v1982, %v2030
        %v2039 = vmul.f32 %v1983, %v2031
        %v2041 = vlaneseq
        %v2042 = vshrl.u32 %v2041, 7
        %v2043 = vsub.s32 0, %v2042
        %v2044 = vrot.slane %v1949, %v2043
        %v2046 = vmul.f32 %v2032, %v2044
        %v2047 = vmul.f32 %v2033, %v2044
        %v2048 = vmul.f32 %v2034, %v2044
        %v2049 = vmul.f32 %v2035, %v2044
        %v2050 = vmul.f32 %v2036, %v2044
        %v2051 = vmul.f32 %v2037, %v2044
        %v2052 = vmul.f32 %v2038, %v2044
        %v2053 = vmul.f32 %v2039, %v2044
        %v2055 = vlaneseq
        %v2056 = vshrl.u32 %v2055, 7
        %v2057 = vsub.s32 0, %v2056
        %v2058 = vrot.slane %v1950, %v2057
        %v2060 = vadd.f32 %v2046, %v2058
        %v2061 = vadd.f32 %v2047, %v2058
        %v2062 = vadd.f32 %v2048, %v2058
        %v2063 = vadd.f32 %v2049, %v2058
        %v2064 = vadd.f32 %v2050, %v2058
        %v2065 = vadd.f32 %v2051, %v2058
        %v2066 = vadd.f32 %v2052, %v2058
        %v2067 = vadd.f32 %v2053, %v2058
        %v2068 = vld [vmem:[%s1867] sm:$0xff]
        %v2069 = vld [vmem:[%s1867 + $0x8] sm:$0xff]
        %v2070 = vld [vmem:[%s1867 + $0x10] sm:$0xff]
        %v2071 = vld [vmem:[%s1867 + $0x18] sm:$0xff]
        %v2072 = vld [vmem:[%s1867 + $0x20] sm:$0xff]
        %v2073 = vld [vmem:[%s1867 + $0x28] sm:$0xff]
        %v2074 = vld [vmem:[%s1867 + $0x30] sm:$0xff]
        %v2075 = vld [vmem:[%s1867 + $0x38] sm:$0xff]
        %v2076 = vld [vmem:[%s1867 + $0x40] sm:$0xff]
        %v2077 = vld [vmem:[%s1867 + $0x48] sm:$0xff]
        %v2078 = vld [vmem:[%s1867 + $0x50] sm:$0xff]
        %v2079 = vld [vmem:[%s1867 + $0x58] sm:$0xff]
        %v2080 = vld [vmem:[%s1867 + $0x60] sm:$0xff]
        %v2081 = vld [vmem:[%s1867 + $0x68] sm:$0xff]
        %v2082 = vld [vmem:[%s1867 + $0x70] sm:$0xff]
        %v2083 = vld [vmem:[%s1867 + $0x78] sm:$0xff]
        %v2084 = vld [vmem:[%s1867 + $0x80] sm:$0xff]
        %v2085 = vld [vmem:[%s1867 + $0x88] sm:$0xff]
        %v2086 = vld [vmem:[%s1867 + $0x90] sm:$0xff]
        %v2087 = vld [vmem:[%s1867 + $0x98] sm:$0xff]
        %v2088 = vld [vmem:[%s1867 + $0xa0] sm:$0xff]
        %v2089 = vld [vmem:[%s1867 + $0xa8] sm:$0xff]
        %v2090 = vld [vmem:[%s1867 + $0xb0] sm:$0xff]
        %v2091 = vld [vmem:[%s1867 + $0xb8] sm:$0xff]
        %v2092 = vld [vmem:[%s1867 + $0xc0] sm:$0xff]
        %v2093 = vld [vmem:[%s1867 + $0xc8] sm:$0xff]
        %v2094 = vld [vmem:[%s1867 + $0xd0] sm:$0xff]
        %v2095 = vld [vmem:[%s1867 + $0xd8] sm:$0xff]
        %v2096 = vld [vmem:[%s1867 + $0xe0] sm:$0xff]
        %v2097 = vld [vmem:[%s1867 + $0xe8] sm:$0xff]
        %v2098 = vld [vmem:[%s1867 + $0xf0] sm:$0xff]
        %v2099 = vld [vmem:[%s1867 + $0xf8] sm:$0xff]
        %v2100 = vpack.c.bf16 %v2061, %v2060
        %v2101 = vpack.c.bf16 %v2063, %v2062
        %v2102 = vpack.c.bf16 %v2065, %v2064
        %v2103 = vpack.c.bf16 %v2067, %v2066
        %v2104 = vld [vmem:[%s1871] sm:$0xf]
        %v2106 = vlaneseq
        %v2107 = vshrl.u32 %v2106, 7
        %v2108 = vsub.s32 0, %v2107
        %v2109 = vrot.slane %v2104, %v2108
        %v2110 = vlaneseq
        %v2111 = vshrl.u32 %v2110, 7
        %v2112 = vsub.s32 1, %v2111
        %v2113 = vrot.slane %v2104, %v2112
        %v2114 = vlaneseq
        %v2115 = vshrl.u32 %v2114, 7
        %v2116 = vsub.s32 2, %v2115
        %v2117 = vrot.slane %v2104, %v2116
        %v2118 = vlaneseq
        %v2119 = vshrl.u32 %v2118, 7
        %v2120 = vsub.s32 3, %v2119
        %v2121 = vrot.slane %v2104, %v2120
        %v2158 = vunpack.c.l.b16 %v2068
        %v2159 = vunpack.c.h.b16 %v2068
        %v2160 = vunpack.c.l.b16 %v2069
        %v2161 = vunpack.c.h.b16 %v2069
        %v2162 = vunpack.c.l.b16 %v2070
        %v2163 = vunpack.c.h.b16 %v2070
        %v2164 = vunpack.c.l.b16 %v2071
        %v2165 = vunpack.c.h.b16 %v2071
        %v2166 = vunpack.c.l.b16 %v2072
        %v2167 = vunpack.c.h.b16 %v2072
        %v2168 = vunpack.c.l.b16 %v2073
        %v2169 = vunpack.c.h.b16 %v2073
        %v2170 = vunpack.c.l.b16 %v2074
        %v2171 = vunpack.c.h.b16 %v2074
        %v2172 = vunpack.c.l.b16 %v2075
        %v2173 = vunpack.c.h.b16 %v2075
        %v2174 = vunpack.c.l.b16 %v2076
        %v2175 = vunpack.c.h.b16 %v2076
        %v2176 = vunpack.c.l.b16 %v2077
        %v2177 = vunpack.c.h.b16 %v2077
        %v2178 = vunpack.c.l.b16 %v2078
        %v2179 = vunpack.c.h.b16 %v2078
        %v2180 = vunpack.c.l.b16 %v2079
        %v2181 = vunpack.c.h.b16 %v2079
        %v2182 = vunpack.c.l.b16 %v2080
        %v2183 = vunpack.c.h.b16 %v2080
        %v2184 = vunpack.c.l.b16 %v2081
        %v2185 = vunpack.c.h.b16 %v2081
        %v2186 = vunpack.c.l.b16 %v2082
        %v2187 = vunpack.c.h.b16 %v2082
        %v2188 = vunpack.c.l.b16 %v2083
        %v2189 = vunpack.c.h.b16 %v2083
        %v2190 = vunpack.c.l.b16 %v2084
        %v2191 = vunpack.c.h.b16 %v2084
        %v2192 = vunpack.c.l.b16 %v2085
        %v2193 = vunpack.c.h.b16 %v2085
        %v2194 = vunpack.c.l.b16 %v2086
        %v2195 = vunpack.c.h.b16 %v2086
        %v2196 = vunpack.c.l.b16 %v2087
        %v2197 = vunpack.c.h.b16 %v2087
        %v2198 = vunpack.c.l.b16 %v2088
        %v2199 = vunpack.c.h.b16 %v2088
        %v2200 = vunpack.c.l.b16 %v2089
        %v2201 = vunpack.c.h.b16 %v2089
        %v2202 = vunpack.c.l.b16 %v2090
        %v2203 = vunpack.c.h.b16 %v2090
        %v2204 = vunpack.c.l.b16 %v2091
        %v2205 = vunpack.c.h.b16 %v2091
        %v2206 = vunpack.c.l.b16 %v2092
        %v2207 = vunpack.c.h.b16 %v2092
        %v2208 = vunpack.c.l.b16 %v2093
        %v2209 = vunpack.c.h.b16 %v2093
        %v2210 = vunpack.c.l.b16 %v2094
        %v2211 = vunpack.c.h.b16 %v2094
        %v2212 = vunpack.c.l.b16 %v2095
        %v2213 = vunpack.c.h.b16 %v2095
        %v2214 = vunpack.c.l.b16 %v2096
        %v2215 = vunpack.c.h.b16 %v2096
        %v2216 = vunpack.c.l.b16 %v2097
        %v2217 = vunpack.c.h.b16 %v2097
        %v2218 = vunpack.c.l.b16 %v2098
        %v2219 = vunpack.c.h.b16 %v2098
        %v2220 = vunpack.c.l.b16 %v2099
        %v2221 = vunpack.c.h.b16 %v2099
        %v2222 = vpack.c.b16 %v2162, %v2158
        %v2223 = vpack.c.b16 %v2163, %v2159
        %v2224 = vpack.c.b16 %v2164, %v2160
        %v2225 = vpack.c.b16 %v2165, %v2161
        %v2226 = vpack.c.b16 %v2170, %v2166
        %v2227 = vpack.c.b16 %v2171, %v2167
        %v2228 = vpack.c.b16 %v2172, %v2168
        %v2229 = vpack.c.b16 %v2173, %v2169
        %v2230 = vpack.c.b16 %v2178, %v2174
        %v2231 = vpack.c.b16 %v2179, %v2175
        %v2232 = vpack.c.b16 %v2180, %v2176
        %v2233 = vpack.c.b16 %v2181, %v2177
        %v2234 = vpack.c.b16 %v2186, %v2182
        %v2235 = vpack.c.b16 %v2187, %v2183
        %v2236 = vpack.c.b16 %v2188, %v2184
        %v2237 = vpack.c.b16 %v2189, %v2185
        %v2238 = vpack.c.b16 %v2194, %v2190
        %v2239 = vpack.c.b16 %v2195, %v2191
        %v2240 = vpack.c.b16 %v2196, %v2192
        %v2241 = vpack.c.b16 %v2197, %v2193
        %v2242 = vpack.c.b16 %v2202, %v2198
        %v2243 = vpack.c.b16 %v2203, %v2199
        %v2244 = vpack.c.b16 %v2204, %v2200
        %v2245 = vpack.c.b16 %v2205, %v2201
        %v2246 = vpack.c.b16 %v2210, %v2206
        %v2247 = vpack.c.b16 %v2211, %v2207
        %v2248 = vpack.c.b16 %v2212, %v2208
        %v2249 = vpack.c.b16 %v2213, %v2209
        %v2250 = vpack.c.b16 %v2218, %v2214
        %v2251 = vpack.c.b16 %v2219, %v2215
        %v2252 = vpack.c.b16 %v2220, %v2216
        %v2253 = vpack.c.b16 %v2221, %v2217
        %2286 = vmatprep.subr.bf16.mxu0 %v2223
        %2287 = vmatpush1.bf16.msra.mxu0 %v2222
        %2288 = vmatprep.subr.bf16.mxu0 %v2227
        %2289 = vmatpush1.bf16.msra.mxu0 %v2226
        %2290 = vmatprep.subr.bf16.mxu0 %v2231
        %2291 = vmatpush1.bf16.msra.mxu0 %v2230
        %2292 = vmatprep.subr.bf16.mxu0 %v2235
        %2293 = vmatpush1.bf16.msra.mxu0 %v2234
        %2294 = vmatprep.subr.bf16.mxu0 %v2239
        %2295 = vmatpush1.bf16.msra.mxu0 %v2238
        %2296 = vmatprep.subr.bf16.mxu0 %v2243
        %2297 = vmatpush1.bf16.msra.mxu0 %v2242
        %2298 = vmatprep.subr.bf16.mxu0 %v2247
        %2299 = vmatpush1.bf16.msra.mxu0 %v2246
        %2300 = vmatprep.subr.bf16.mxu0 %v2251
        %2301 = vmatpush1.bf16.msra.mxu0 %v2250
        %2302 = vmatprep.subr.bf16.mxu0 0
        %2303 = vmatpush1.bf16.msra.mxu0 0
        %2304 = vmatprep.subr.bf16.mxu0 0
        %2305 = vmatpush1.bf16.msra.mxu0 0
        %2306 = vmatprep.subr.bf16.mxu0 0
        %2307 = vmatpush1.bf16.msra.mxu0 0
        %2308 = vmatprep.subr.bf16.mxu0 0
        %2309 = vmatpush1.bf16.msra.mxu0 0
        %2310 = vmatprep.subr.bf16.mxu0 0
        %2311 = vmatpush1.bf16.msra.mxu0 0
        %2312 = vmatprep.subr.bf16.mxu0 0
        %2313 = vmatpush1.bf16.msra.mxu0 0
        %2314 = vmatprep.subr.bf16.mxu0 0
        %2315 = vmatpush1.bf16.msra.mxu0 0
        %2316 = vmatprep.subr.bf16.mxu0 0
        %2317 = vmatpush1.bf16.msra.mxu0 0
        %2318 = vmatprep.mubr.bf16.mxu0 0
        %2319 = vmatmul.mubr.bf16.gmra.mrb[0].mxu0 %v2100
        %v2320 = vpop.f32.mrb[0].mxu0
        %v2321 = vadd.f32 %v2109, %v2320
        %v2322 = vpop.f32.mrb[0].mxu0
        %v2323 = vadd.f32 %v2113, %v2322
        %v2324 = vpop.f32.mrb[0].mxu0
        %v2325 = vadd.f32 %v2109, %v2324
        %v2326 = vpop.f32.mrb[0].mxu0
        %v2327 = vadd.f32 %v2113, %v2326
        %2328 = vmatprep.mubr.bf16.mxu0 0
        %2329 = vmatmul.mubr.bf16.gmra.mrb[0].mxu0 %v2101
        %v2330 = vpop.f32.mrb[0].mxu0
        %v2331 = vadd.f32 %v2109, %v2330
        %v2332 = vpop.f32.mrb[0].mxu0
        %v2333 = vadd.f32 %v2113, %v2332
        %v2334 = vpop.f32.mrb[0].mxu0
        %v2335 = vadd.f32 %v2109, %v2334
        %v2336 = vpop.f32.mrb[0].mxu0
        %v2337 = vadd.f32 %v2113, %v2336
        %2338 = vmatprep.mubr.bf16.mxu0 0
        %2339 = vmatmul.mubr.bf16.gmra.mrb[0].mxu0 %v2102
        %v2340 = vpop.f32.mrb[0].mxu0
        %v2341 = vadd.f32 %v2109, %v2340
        %v2342 = vpop.f32.mrb[0].mxu0
        %v2343 = vadd.f32 %v2113, %v2342
        %v2344 = vpop.f32.mrb[0].mxu0
        %v2345 = vadd.f32 %v2109, %v2344
        %v2346 = vpop.f32.mrb[0].mxu0
        %v2347 = vadd.f32 %v2113, %v2346
        %2348 = vmatprep.mubr.bf16.mxu0 0
        %2349 = vmatmul.mubr.bf16.gmra.mrb[0].mxu0 %v2103
        %v2350 = vpop.f32.mrb[0].mxu0
        %v2351 = vadd.f32 %v2109, %v2350
        %v2352 = vpop.f32.mrb[0].mxu0
        %v2353 = vadd.f32 %v2113, %v2352
        %v2354 = vpop.f32.mrb[0].mxu0
        %v2355 = vadd.f32 %v2109, %v2354
        %v2356 = vpop.f32.mrb[0].mxu0
        %v2357 = vadd.f32 %v2113, %v2356
        %2358 = vdwg.mxu0
        %2359 = vmatprep.subr.bf16.mxu0 %v2225
        %2360 = vmatpush1.bf16.msra.mxu0 %v2224
        %2361 = vmatprep.subr.bf16.mxu0 %v2229
        %2362 = vmatpush1.bf16.msra.mxu0 %v2228
        %2363 = vmatprep.subr.bf16.mxu0 %v2233
        %2364 = vmatpush1.bf16.msra.mxu0 %v2232
        %2365 = vmatprep.subr.bf16.mxu0 %v2237
        %2366 = vmatpush1.bf16.msra.mxu0 %v2236
        %2367 = vmatprep.subr.bf16.mxu0 %v2241
        %2368 = vmatpush1.bf16.msra.mxu0 %v2240
        %2369 = vmatprep.subr.bf16.mxu0 %v2245
        %2370 = vmatpush1.bf16.msra.mxu0 %v2244
        %2371 = vmatprep.subr.bf16.mxu0 %v2249
        %2372 = vmatpush1.bf16.msra.mxu0 %v2248
        %2373 = vmatprep.subr.bf16.mxu0 %v2253
        %2374 = vmatpush1.bf16.msra.mxu0 %v2252
        %2375 = vmatprep.subr.bf16.mxu0 0
        %2376 = vmatpush1.bf16.msra.mxu0 0
        %2377 = vmatprep.subr.bf16.mxu0 0
        %2378 = vmatpush1.bf16.msra.mxu0 0
        %2379 = vmatprep.subr.bf16.mxu0 0
        %2380 = vmatpush1.bf16.msra.mxu0 0
        %2381 = vmatprep.subr.bf16.mxu0 0
        %2382 = vmatpush1.bf16.msra.mxu0 0
        %2383 = vmatprep.subr.bf16.mxu0 0
        %2384 = vmatpush1.bf16.msra.mxu0 0
        %2385 = vmatprep.subr.bf16.mxu0 0
        %2386 = vmatpush1.bf16.msra.mxu0 0
        %2387 = vmatprep.subr.bf16.mxu0 0
        %2388 = vmatpush1.bf16.msra.mxu0 0
        %2389 = vmatprep.subr.bf16.mxu0 0
        %2390 = vmatpush1.bf16.msra.mxu0 0
        %2391 = vmatprep.mubr.bf16.mxu0 0
        %2392 = vmatmul.mubr.bf16.gmra.mrb[0].mxu0 %v2100
        %v2393 = vpop.f32.mrb[0].mxu0
        %v2394 = vadd.f32 %v2117, %v2393
        %v2395 = vpop.f32.mrb[0].mxu0
        %v2396 = vadd.f32 %v2121, %v2395
        %v2397 = vpop.f32.mrb[0].mxu0
        %v2398 = vadd.f32 %v2117, %v2397
        %v2399 = vpop.f32.mrb[0].mxu0
        %v2400 = vadd.f32 %v2121, %v2399
        %2401 = vmatprep.mubr.bf16.mxu0 0
        %2402 = vmatmul.mubr.bf16.gmra.mrb[0].mxu0 %v2101
        %v2403 = vpop.f32.mrb[0].mxu0
        %v2404 = vadd.f32 %v2117, %v2403
        %v2405 = vpop.f32.mrb[0].mxu0
        %v2406 = vadd.f32 %v2121, %v2405
        %v2407 = vpop.f32.mrb[0].mxu0
        %v2408 = vadd.f32 %v2117, %v2407
        %v2409 = vpop.f32.mrb[0].mxu0
        %v2410 = vadd.f32 %v2121, %v2409
        %2411 = vmatprep.mubr.bf16.mxu0 0
        %2412 = vmatmul.mubr.bf16.gmra.mrb[0].mxu0 %v2102
        %v2413 = vpop.f32.mrb[0].mxu0
        %v2414 = vadd.f32 %v2117, %v2413
        %v2415 = vpop.f32.mrb[0].mxu0
        %v2416 = vadd.f32 %v2121, %v2415
        %v2417 = vpop.f32.mrb[0].mxu0
        %v2418 = vadd.f32 %v2117, %v2417
        %v2419 = vpop.f32.mrb[0].mxu0
        %v2420 = vadd.f32 %v2121, %v2419
        %2421 = vmatprep.mubr.bf16.mxu0 0
        %2422 = vmatmul.mubr.bf16.gmra.mrb[0].mxu0 %v2103
        %v2423 = vpop.f32.mrb[0].mxu0
        %v2424 = vadd.f32 %v2117, %v2423
        %v2425 = vpop.f32.mrb[0].mxu0
        %v2426 = vadd.f32 %v2121, %v2425
        %v2427 = vpop.f32.mrb[0].mxu0
        %v2428 = vadd.f32 %v2117, %v2427
        %v2429 = vpop.f32.mrb[0].mxu0
        %v2430 = vadd.f32 %v2121, %v2429
        %2431 = vdwg.mxu0
        %v2432 = vxor.u32 %v2321, 2147483648
        %v2433 = vxor.u32 %v2323, 2147483648
        %v2434 = vxor.u32 %v2394, 2147483648
        %v2435 = vxor.u32 %v2396, 2147483648
        %v2436 = vxor.u32 %v2325, 2147483648
        %v2437 = vxor.u32 %v2327, 2147483648
        %v2438 = vxor.u32 %v2398, 2147483648
        %v2439 = vxor.u32 %v2400, 2147483648
        %v2440 = vxor.u32 %v2331, 2147483648
        %v2441 = vxor.u32 %v2333, 2147483648
        %v2442 = vxor.u32 %v2404, 2147483648
        %v2443 = vxor.u32 %v2406, 2147483648
        %v2444 = vxor.u32 %v2335, 2147483648
        %v2445 = vxor.u32 %v2337, 2147483648
        %v2446 = vxor.u32 %v2408, 2147483648
        %v2447 = vxor.u32 %v2410, 2147483648
        %v2448 = vxor.u32 %v2341, 2147483648
        %v2449 = vxor.u32 %v2343, 2147483648
        %v2450 = vxor.u32 %v2414, 2147483648
        %v2451 = vxor.u32 %v2416, 2147483648
        %v2452 = vxor.u32 %v2345, 2147483648
        %v2453 = vxor.u32 %v2347, 2147483648
        %v2454 = vxor.u32 %v2418, 2147483648
        %v2455 = vxor.u32 %v2420, 2147483648
        %v2456 = vxor.u32 %v2351, 2147483648
        %v2457 = vxor.u32 %v2353, 2147483648
        %v2458 = vxor.u32 %v2424, 2147483648
        %v2459 = vxor.u32 %v2426, 2147483648
        %v2460 = vxor.u32 %v2355, 2147483648
        %v2461 = vxor.u32 %v2357, 2147483648
        %v2462 = vxor.u32 %v2428, 2147483648
        %v2463 = vxor.u32 %v2430, 2147483648
        %v2464 = vmul.f32 %v2432, 1.442695
        %v2465 = vpow.pop %v2464
        %v2466 = vmul.f32 %v2433, 1.442695
        %v2467 = vpow.pop %v2466
        %v2468 = vmul.f32 %v2434, 1.442695
        %v2469 = vpow.pop %v2468
        %v2470 = vmul.f32 %v2435, 1.442695
        %v2471 = vpow.pop %v2470
        %v2472 = vmul.f32 %v2436, 1.442695
        %v2473 = vpow.pop %v2472
        %v2474 = vmul.f32 %v2437, 1.442695
        %v2475 = vpow.pop %v2474
        %v2476 = vmul.f32 %v2438, 1.442695
        %v2477 = vpow.pop %v2476
        %v2478 = vmul.f32 %v2439, 1.442695
        %v2479 = vpow.pop %v2478
        %v2480 = vmul.f32 %v2440, 1.442695
        %v2481 = vpow.pop %v2480
        %v2482 = vmul.f32 %v2441, 1.442695
        %v2483 = vpow.pop %v2482
        %v2484 = vmul.f32 %v2442, 1.442695
        %v2485 = vpow.pop %v2484
        %v2486 = vmul.f32 %v2443, 1.442695
        %v2487 = vpow.pop %v2486
        %v2488 = vmul.f32 %v2444, 1.442695
        %v2489 = vpow.pop %v2488
        %v2490 = vmul.f32 %v2445, 1.442695
        %v2491 = vpow.pop %v2490
        %v2492 = vmul.f32 %v2446, 1.442695
        %v2493 = vpow.pop %v2492
        %v2494 = vmul.f32 %v2447, 1.442695
        %v2495 = vpow.pop %v2494
        %v2496 = vmul.f32 %v2448, 1.442695
        %v2497 = vpow.pop %v2496
        %v2498 = vmul.f32 %v2449, 1.442695
        %v2499 = vpow.pop %v2498
        %v2500 = vmul.f32 %v2450, 1.442695
        %v2501 = vpow.pop %v2500
        %v2502 = vmul.f32 %v2451, 1.442695
        %v2503 = vpow.pop %v2502
        %v2504 = vmul.f32 %v2452, 1.442695
        %v2505 = vpow.pop %v2504
        %v2506 = vmul.f32 %v2453, 1.442695
        %v2507 = vpow.pop %v2506
        %v2508 = vmul.f32 %v2454, 1.442695
        %v2509 = vpow.pop %v2508
        %v2510 = vmul.f32 %v2455, 1.442695
        %v2511 = vpow.pop %v2510
        %v2512 = vmul.f32 %v2456, 1.442695
        %v2513 = vpow.pop %v2512
        %v2514 = vmul.f32 %v2457, 1.442695
        %v2515 = vpow.pop %v2514
        %v2516 = vmul.f32 %v2458, 1.442695
        %v2517 = vpow.pop %v2516
        %v2518 = vmul.f32 %v2459, 1.442695
        %v2519 = vpow.pop %v2518
        %v2520 = vmul.f32 %v2460, 1.442695
        %v2521 = vpow.pop %v2520
        %v2522 = vmul.f32 %v2461, 1.442695
        %v2523 = vpow.pop %v2522
        %v2524 = vmul.f32 %v2462, 1.442695
        %v2525 = vpow.pop %v2524
        %v2526 = vmul.f32 %v2463, 1.442695
        %v2527 = vpow.pop %v2526
        %v2528 = vadd.f32 %v2465, 1.0
        %v2529 = vadd.f32 %v2467, 1.0
        %v2530 = vadd.f32 %v2469, 1.0
        %v2531 = vadd.f32 %v2471, 1.0
        %v2532 = vadd.f32 %v2473, 1.0
        %v2533 = vadd.f32 %v2475, 1.0
        %v2534 = vadd.f32 %v2477, 1.0
        %v2535 = vadd.f32 %v2479, 1.0
        %v2536 = vadd.f32 %v2481, 1.0
        %v2537 = vadd.f32 %v2483, 1.0
        %v2538 = vadd.f32 %v2485, 1.0
        %v2539 = vadd.f32 %v2487, 1.0
        %v2540 = vadd.f32 %v2489, 1.0
        %v2541 = vadd.f32 %v2491, 1.0
        %v2542 = vadd.f32 %v2493, 1.0
        %v2543 = vadd.f32 %v2495, 1.0
        %v2544 = vadd.f32 %v2497, 1.0
        %v2545 = vadd.f32 %v2499, 1.0
        %v2546 = vadd.f32 %v2501, 1.0
        %v2547 = vadd.f32 %v2503, 1.0
        %v2548 = vadd.f32 %v2505, 1.0
        %v2549 = vadd.f32 %v2507, 1.0
        %v2550 = vadd.f32 %v2509, 1.0
        %v2551 = vadd.f32 %v2511, 1.0
        %v2552 = vadd.f32 %v2513, 1.0
        %v2553 = vadd.f32 %v2515, 1.0
        %v2554 = vadd.f32 %v2517, 1.0
        %v2555 = vadd.f32 %v2519, 1.0
        %v2556 = vadd.f32 %v2521, 1.0
        %v2557 = vadd.f32 %v2523, 1.0
        %v2558 = vadd.f32 %v2525, 1.0
        %v2559 = vadd.f32 %v2527, 1.0
        %v2560 = vrcp.pop %v2528
        %v2561 = vmul.f32 1.0, %v2560
        %v2562 = vrcp.pop %v2529
        %v2563 = vmul.f32 1.0, %v2562
        %v2564 = vrcp.pop %v2530
        %v2565 = vmul.f32 1.0, %v2564
        %v2566 = vrcp.pop %v2531
        %v2567 = vmul.f32 1.0, %v2566
        %v2568 = vrcp.pop %v2532
        %v2569 = vmul.f32 1.0, %v2568
        %v2570 = vrcp.pop %v2533
        %v2571 = vmul.f32 1.0, %v2570
        %v2572 = vrcp.pop %v2534
        %v2573 = vmul.f32 1.0, %v2572
        %v2574 = vrcp.pop %v2535
        %v2575 = vmul.f32 1.0, %v2574
        %v2576 = vrcp.pop %v2536
        %v2577 = vmul.f32 1.0, %v2576
        %v2578 = vrcp.pop %v2537
        %v2579 = vmul.f32 1.0, %v2578
        %v2580 = vrcp.pop %v2538
        %v2581 = vmul.f32 1.0, %v2580
        %v2582 = vrcp.pop %v2539
        %v2583 = vmul.f32 1.0, %v2582
        %v2584 = vrcp.pop %v2540
        %v2585 = vmul.f32 1.0, %v2584
        %v2586 = vrcp.pop %v2541
        %v2587 = vmul.f32 1.0, %v2586
        %v2588 = vrcp.pop %v2542
        %v2589 = vmul.f32 1.0, %v2588
        %v2590 = vrcp.pop %v2543
        %v2591 = vmul.f32 1.0, %v2590
        %v2592 = vrcp.pop %v2544
        %v2593 = vmul.f32 1.0, %v2592
        %v2594 = vrcp.pop %v2545
        %v2595 = vmul.f32 1.0, %v2594
        %v2596 = vrcp.pop %v2546
        %v2597 = vmul.f32 1.0, %v2596
        %v2598 = vrcp.pop %v2547
        %v2599 = vmul.f32 1.0, %v2598
        %v2600 = vrcp.pop %v2548
        %v2601 = vmul.f32 1.0, %v2600
        %v2602 = vrcp.pop %v2549
        %v2603 = vmul.f32 1.0, %v2602
        %v2604 = vrcp.pop %v2550
        %v2605 = vmul.f32 1.0, %v2604
        %v2606 = vrcp.pop %v2551
        %v2607 = vmul.f32 1.0, %v2606
        %v2608 = vrcp.pop %v2552
        %v2609 = vmul.f32 1.0, %v2608
        %v2610 = vrcp.pop %v2553
        %v2611 = vmul.f32 1.0, %v2610
        %v2612 = vrcp.pop %v2554
        %v2613 = vmul.f32 1.0, %v2612
        %v2614 = vrcp.pop %v2555
        %v2615 = vmul.f32 1.0, %v2614
        %v2616 = vrcp.pop %v2556
        %v2617 = vmul.f32 1.0, %v2616
        %v2618 = vrcp.pop %v2557
        %v2619 = vmul.f32 1.0, %v2618
        %v2620 = vrcp.pop %v2558
        %v2621 = vmul.f32 1.0, %v2620
        %v2622 = vrcp.pop %v2559
        %v2623 = vmul.f32 1.0, %v2622
        %v2624 = vmul.f32 %v2321, %v2561
        %v2625 = vmul.f32 %v2323, %v2563
        %v2626 = vmul.f32 %v2394, %v2565
        %v2627 = vmul.f32 %v2396, %v2567
        %v2628 = vmul.f32 %v2325, %v2569
        %v2629 = vmul.f32 %v2327, %v2571
        %v2630 = vmul.f32 %v2398, %v2573
        %v2631 = vmul.f32 %v2400, %v2575
        %v2632 = vmul.f32 %v2331, %v2577
        %v2633 = vmul.f32 %v2333, %v2579
        %v2634 = vmul.f32 %v2404, %v2581
        %v2635 = vmul.f32 %v2406, %v2583
        %v2636 = vmul.f32 %v2335, %v2585
        %v2637 = vmul.f32 %v2337, %v2587
        %v2638 = vmul.f32 %v2408, %v2589
        %v2639 = vmul.f32 %v2410, %v2591
        %v2640 = vmul.f32 %v2341, %v2593
        %v2641 = vmul.f32 %v2343, %v2595
        %v2642 = vmul.f32 %v2414, %v2597
        %v2643 = vmul.f32 %v2416, %v2599
        %v2644 = vmul.f32 %v2345, %v2601
        %v2645 = vmul.f32 %v2347, %v2603
        %v2646 = vmul.f32 %v2418, %v2605
        %v2647 = vmul.f32 %v2420, %v2607
        %v2648 = vmul.f32 %v2351, %v2609
        %v2649 = vmul.f32 %v2353, %v2611
        %v2650 = vmul.f32 %v2424, %v2613
        %v2651 = vmul.f32 %v2426, %v2615
        %v2652 = vmul.f32 %v2355, %v2617
        %v2653 = vmul.f32 %v2357, %v2619
        %v2654 = vmul.f32 %v2428, %v2621
        %v2655 = vmul.f32 %v2430, %v2623
        %v2656 = vld [vmem:[%s1533] sm:$0xf]
        %v2657 = vld [vmem:[%s1533 + $0x4] sm:$0xf]
        %v2658 = vld [vmem:[%s1533 + $0x8] sm:$0xf]
        %v2659 = vld [vmem:[%s1533 + $0xc] sm:$0xf]
        %v2660 = vld [vmem:[%s1533 + $0x10] sm:$0xf]
        %v2661 = vld [vmem:[%s1533 + $0x14] sm:$0xf]
        %v2662 = vld [vmem:[%s1533 + $0x18] sm:$0xf]
        %v2663 = vld [vmem:[%s1533 + $0x1c] sm:$0xf]
        %v2664 = vld [vmem:[%s1533 + $0x20] sm:$0xf]
        %v2665 = vld [vmem:[%s1533 + $0x24] sm:$0xf]
        %v2666 = vld [vmem:[%s1533 + $0x28] sm:$0xf]
        %v2667 = vld [vmem:[%s1533 + $0x2c] sm:$0xf]
        %v2668 = vld [vmem:[%s1533 + $0x30] sm:$0xf]
        %v2669 = vld [vmem:[%s1533 + $0x34] sm:$0xf]
        %v2670 = vld [vmem:[%s1533 + $0x38] sm:$0xf]
        %v2671 = vld [vmem:[%s1533 + $0x3c] sm:$0xf]
        %v2672 = vld [vmem:[%s1533 + $0x40] sm:$0xf]
        %v2673 = vld [vmem:[%s1533 + $0x44] sm:$0xf]
        %v2674 = vld [vmem:[%s1533 + $0x48] sm:$0xf]
        %v2675 = vld [vmem:[%s1533 + $0x4c] sm:$0xf]
        %v2676 = vld [vmem:[%s1533 + $0x50] sm:$0xf]
        %v2677 = vld [vmem:[%s1533 + $0x54] sm:$0xf]
        %v2678 = vld [vmem:[%s1533 + $0x58] sm:$0xf]
        %v2679 = vld [vmem:[%s1533 + $0x5c] sm:$0xf]
        %v2680 = vld [vmem:[%s1533 + $0x60] sm:$0xf]
        %v2681 = vld [vmem:[%s1533 + $0x64] sm:$0xf]
        %v2682 = vld [vmem:[%s1533 + $0x68] sm:$0xf]
        %v2683 = vld [vmem:[%s1533 + $0x6c] sm:$0xf]
        %v2684 = vld [vmem:[%s1533 + $0x70] sm:$0xf]
        %v2685 = vld [vmem:[%s1533 + $0x74] sm:$0xf]
        %v2686 = vld [vmem:[%s1533 + $0x78] sm:$0xf]
        %v2687 = vld [vmem:[%s1533 + $0x7c] sm:$0xf]
        %v2688 = vld [vmem:[%s1533 + $0x80] sm:$0xf]
        %v2689 = vld [vmem:[%s1533 + $0x84] sm:$0xf]
        %v2690 = vld [vmem:[%s1533 + $0x88] sm:$0xf]
        %v2691 = vld [vmem:[%s1533 + $0x8c] sm:$0xf]
        %v2692 = vld [vmem:[%s1533 + $0x90] sm:$0xf]
        %v2693 = vld [vmem:[%s1533 + $0x94] sm:$0xf]
        %v2694 = vld [vmem:[%s1533 + $0x98] sm:$0xf]
        %v2695 = vld [vmem:[%s1533 + $0x9c] sm:$0xf]
        %v2696 = vld [vmem:[%s1533 + $0xa0] sm:$0xf]
        %v2697 = vld [vmem:[%s1533 + $0xa4] sm:$0xf]
        %v2698 = vld [vmem:[%s1533 + $0xa8] sm:$0xf]
        %v2699 = vld [vmem:[%s1533 + $0xac] sm:$0xf]
        %v2700 = vld [vmem:[%s1533 + $0xb0] sm:$0xf]
        %v2701 = vld [vmem:[%s1533 + $0xb4] sm:$0xf]
        %v2702 = vld [vmem:[%s1533 + $0xb8] sm:$0xf]
        %v2703 = vld [vmem:[%s1533 + $0xbc] sm:$0xf]
        %v2704 = vld [vmem:[%s1533 + $0xc0] sm:$0xf]
        %v2705 = vld [vmem:[%s1533 + $0xc4] sm:$0xf]
        %v2706 = vld [vmem:[%s1533 + $0xc8] sm:$0xf]
        %v2707 = vld [vmem:[%s1533 + $0xcc] sm:$0xf]
        %v2708 = vld [vmem:[%s1533 + $0xd0] sm:$0xf]
        %v2709 = vld [vmem:[%s1533 + $0xd4] sm:$0xf]
        %v2710 = vld [vmem:[%s1533 + $0xd8] sm:$0xf]
        %v2711 = vld [vmem:[%s1533 + $0xdc] sm:$0xf]
        %v2712 = vld [vmem:[%s1533 + $0xe0] sm:$0xf]
        %v2713 = vld [vmem:[%s1533 + $0xe4] sm:$0xf]
        %v2714 = vld [vmem:[%s1533 + $0xe8] sm:$0xf]
        %v2715 = vld [vmem:[%s1533 + $0xec] sm:$0xf]
        %v2716 = vld [vmem:[%s1533 + $0xf0] sm:$0xf]
        %v2717 = vld [vmem:[%s1533 + $0xf4] sm:$0xf]
        %v2718 = vld [vmem:[%s1533 + $0xf8] sm:$0xf]
        %v2719 = vld [vmem:[%s1533 + $0xfc] sm:$0xf]
        %v2720 = vpack.c.bf16 %v2628, %v2624
        %v2721 = vpack.c.bf16 %v2629, %v2625
        %v2722 = vpack.c.bf16 %v2630, %v2626
        %v2723 = vpack.c.bf16 %v2631, %v2627
        %v2724 = vpack.c.bf16 %v2636, %v2632
        %v2725 = vpack.c.bf16 %v2637, %v2633
        %v2726 = vpack.c.bf16 %v2638, %v2634
        %v2727 = vpack.c.bf16 %v2639, %v2635
        %v2728 = vpack.c.bf16 %v2644, %v2640
        %v2729 = vpack.c.bf16 %v2645, %v2641
        %v2730 = vpack.c.bf16 %v2646, %v2642
        %v2731 = vpack.c.bf16 %v2647, %v2643
        %v2732 = vpack.c.bf16 %v2652, %v2648
        %v2733 = vpack.c.bf16 %v2653, %v2649
        %v2734 = vpack.c.bf16 %v2654, %v2650
        %v2735 = vpack.c.bf16 %v2655, %v2651
        %v2736 = vld [vmem:[%s1541] sm:$0x1]
        %v2738 = vlaneseq
        %v2739 = vshrl.u32 %v2738, 7
        %v2740 = vsub.s32 0, %v2739
        %v2741 = vrot.slane %v2736, %v2740
        %v2807 = vunpack.c.l.b16 %v2656
        %v2808 = vunpack.c.l.b16 %v2657
        %v2809 = vunpack.c.l.b16 %v2658
        %v2810 = vunpack.c.l.b16 %v2659
        %v2811 = vunpack.c.l.b16 %v2660
        %v2812 = vunpack.c.l.b16 %v2661
        %v2813 = vunpack.c.l.b16 %v2662
        %v2814 = vunpack.c.l.b16 %v2663
        %v2815 = vunpack.c.l.b16 %v2664
        %v2816 = vunpack.c.l.b16 %v2665
        %v2817 = vunpack.c.l.b16 %v2666
        %v2818 = vunpack.c.l.b16 %v2667
        %v2819 = vunpack.c.l.b16 %v2668
        %v2820 = vunpack.c.l.b16 %v2669
        %v2821 = vunpack.c.l.b16 %v2670
        %v2822 = vunpack.c.l.b16 %v2671
        %v2823 = vunpack.c.l.b16 %v2672
        %v2824 = vunpack.c.l.b16 %v2673
        %v2825 = vunpack.c.l.b16 %v2674
        %v2826 = vunpack.c.l.b16 %v2675
        %v2827 = vunpack.c.l.b16 %v2676
        %v2828 = vunpack.c.l.b16 %v2677
        %v2829 = vunpack.c.l.b16 %v2678
        %v2830 = vunpack.c.l.b16 %v2679
        %v2831 = vunpack.c.l.b16 %v2680
        %v2832 = vunpack.c.l.b16 %v2681
        %v2833 = vunpack.c.l.b16 %v2682
        %v2834 = vunpack.c.l.b16 %v2683
        %v2835 = vunpack.c.l.b16 %v2684
        %v2836 = vunpack.c.l.b16 %v2685
        %v2837 = vunpack.c.l.b16 %v2686
        %v2838 = vunpack.c.l.b16 %v2687
        %v2839 = vunpack.c.l.b16 %v2688
        %v2840 = vunpack.c.l.b16 %v2689
        %v2841 = vunpack.c.l.b16 %v2690
        %v2842 = vunpack.c.l.b16 %v2691
        %v2843 = vunpack.c.l.b16 %v2692
        %v2844 = vunpack.c.l.b16 %v2693
        %v2845 = vunpack.c.l.b16 %v2694
        %v2846 = vunpack.c.l.b16 %v2695
        %v2847 = vunpack.c.l.b16 %v2696
        %v2848 = vunpack.c.l.b16 %v2697
        %v2849 = vunpack.c.l.b16 %v2698
        %v2850 = vunpack.c.l.b16 %v2699
        %v2851 = vunpack.c.l.b16 %v2700
        %v2852 = vunpack.c.l.b16 %v2701
        %v2853 = vunpack.c.l.b16 %v2702
        %v2854 = vunpack.c.l.b16 %v2703
        %v2855 = vunpack.c.l.b16 %v2704
        %v2856 = vunpack.c.l.b16 %v2705
        %v2857 = vunpack.c.l.b16 %v2706
        %v2858 = vunpack.c.l.b16 %v2707
        %v2859 = vunpack.c.l.b16 %v2708
        %v2860 = vunpack.c.l.b16 %v2709
        %v2861 = vunpack.c.l.b16 %v2710
        %v2862 = vunpack.c.l.b16 %v2711
        %v2863 = vunpack.c.l.b16 %v2712
        %v2864 = vunpack.c.l.b16 %v2713
        %v2865 = vunpack.c.l.b16 %v2714
        %v2866 = vunpack.c.l.b16 %v2715
        %v2867 = vunpack.c.l.b16 %v2716
        %v2868 = vunpack.c.l.b16 %v2717
        %v2869 = vunpack.c.l.b16 %v2718
        %v2870 = vunpack.c.l.b16 %v2719
        %v2871 = vpack.c.b16 %v2808, %v2807
        %v2872 = vpack.c.b16 %v2810, %v2809
        %v2873 = vpack.c.b16 %v2812, %v2811
        %v2874 = vpack.c.b16 %v2814, %v2813
        %v2875 = vpack.c.b16 %v2816, %v2815
        %v2876 = vpack.c.b16 %v2818, %v2817
        %v2877 = vpack.c.b16 %v2820, %v2819
        %v2878 = vpack.c.b16 %v2822, %v2821
        %v2879 = vpack.c.b16 %v2824, %v2823
        %v2880 = vpack.c.b16 %v2826, %v2825
        %v2881 = vpack.c.b16 %v2828, %v2827
        %v2882 = vpack.c.b16 %v2830, %v2829
        %v2883 = vpack.c.b16 %v2832, %v2831
        %v2884 = vpack.c.b16 %v2834, %v2833
        %v2885 = vpack.c.b16 %v2836, %v2835
        %v2886 = vpack.c.b16 %v2838, %v2837
        %v2887 = vpack.c.b16 %v2840, %v2839
        %v2888 = vpack.c.b16 %v2842, %v2841
        %v2889 = vpack.c.b16 %v2844, %v2843
        %v2890 = vpack.c.b16 %v2846, %v2845
        %v2891 = vpack.c.b16 %v2848, %v2847
        %v2892 = vpack.c.b16 %v2850, %v2849
        %v2893 = vpack.c.b16 %v2852, %v2851
        %v2894 = vpack.c.b16 %v2854, %v2853
        %v2895 = vpack.c.b16 %v2856, %v2855
        %v2896 = vpack.c.b16 %v2858, %v2857
        %v2897 = vpack.c.b16 %v2860, %v2859
        %v2898 = vpack.c.b16 %v2862, %v2861
        %v2899 = vpack.c.b16 %v2864, %v2863
        %v2900 = vpack.c.b16 %v2866, %v2865
        %v2901 = vpack.c.b16 %v2868, %v2867
        %v2902 = vpack.c.b16 %v2870, %v2869
        %2935 = vmatprep.subr.bf16.mxu0 0
        %2936 = vmatpush1.bf16.msra.mxu0 %v2871
        %2937 = vmatprep.subr.bf16.mxu0 0
        %2938 = vmatpush1.bf16.msra.mxu0 %v2872
        %2939 = vmatprep.subr.bf16.mxu0 0
        %2940 = vmatpush1.bf16.msra.mxu0 %v2873
        %2941 = vmatprep.subr.bf16.mxu0 0
        %2942 = vmatpush1.bf16.msra.mxu0 %v2874
        %2943 = vmatprep.subr.bf16.mxu0 0
        %2944 = vmatpush1.bf16.msra.mxu0 %v2875
        %2945 = vmatprep.subr.bf16.mxu0 0
        %2946 = vmatpush1.bf16.msra.mxu0 %v2876
        %2947 = vmatprep.subr.bf16.mxu0 0
        %2948 = vmatpush1.bf16.msra.mxu0 %v2877
        %2949 = vmatprep.subr.bf16.mxu0 0
        %2950 = vmatpush1.bf16.msra.mxu0 %v2878
        %2951 = vmatprep.subr.bf16.mxu0 0
        %2952 = vmatpush1.bf16.msra.mxu0 %v2879
        %2953 = vmatprep.subr.bf16.mxu0 0
        %2954 = vmatpush1.bf16.msra.mxu0 %v2880
        %2955 = vmatprep.subr.bf16.mxu0 0
        %2956 = vmatpush1.bf16.msra.mxu0 %v2881
        %2957 = vmatprep.subr.bf16.mxu0 0
        %2958 = vmatpush1.bf16.msra.mxu0 %v2882
        %2959 = vmatprep.subr.bf16.mxu0 0
        %2960 = vmatpush1.bf16.msra.mxu0 %v2883
        %2961 = vmatprep.subr.bf16.mxu0 0
        %2962 = vmatpush1.bf16.msra.mxu0 %v2884
        %2963 = vmatprep.subr.bf16.mxu0 0
        %2964 = vmatpush1.bf16.msra.mxu0 %v2885
        %2965 = vmatprep.subr.bf16.mxu0 0
        %2966 = vmatpush1.bf16.msra.mxu0 %v2886
        %2967 = vmatprep.mubr.bf16.mxu0 %v2721
        %2968 = vmatmul.mubr.bf16.gmra.mrb[0].mxu0 %v2720
        %v2969 = vpop.f32.mrb[0].mxu0
        %v2970 = vadd.f32 %v2741, %v2969
        %v2971 = vpop.f32.mrb[0].mxu0
        %v2972 = vpop.f32.mrb[0].mxu0
        %v2973 = vadd.f32 %v2741, %v2972
        %v2974 = vpop.f32.mrb[0].mxu0
        %2975 = vmatprep.mubr.bf16.mxu0 %v2725
        %2976 = vmatmul.mubr.bf16.gmra.mrb[0].mxu0 %v2724
        %v2977 = vpop.f32.mrb[0].mxu0
        %v2978 = vadd.f32 %v2741, %v2977
        %v2979 = vpop.f32.mrb[0].mxu0
        %v2980 = vpop.f32.mrb[0].mxu0
        %v2981 = vadd.f32 %v2741, %v2980
        %v2982 = vpop.f32.mrb[0].mxu0
        %2983 = vmatprep.mubr.bf16.mxu0 %v2729
        %2984 = vmatmul.mubr.bf16.gmra.mrb[0].mxu0 %v2728
        %v2985 = vpop.f32.mrb[0].mxu0
        %v2986 = vadd.f32 %v2741, %v2985
        %v2987 = vpop.f32.mrb[0].mxu0
        %v2988 = vpop.f32.mrb[0].mxu0
        %v2989 = vadd.f32 %v2741, %v2988
        %v2990 = vpop.f32.mrb[0].mxu0
        %2991 = vmatprep.mubr.bf16.mxu0 %v2733
        %2992 = vmatmul.mubr.bf16.gmra.mrb[0].mxu0 %v2732
        %v2993 = vpop.f32.mrb[0].mxu0
        %v2994 = vadd.f32 %v2741, %v2993
        %v2995 = vpop.f32.mrb[0].mxu0
        %v2996 = vpop.f32.mrb[0].mxu0
        %v2997 = vadd.f32 %v2741, %v2996
        %v2998 = vpop.f32.mrb[0].mxu0
        %2999 = vdwg.mxu0
        %3000 = vmatprep.subr.bf16.mxu0 0
        %3001 = vmatpush1.bf16.msra.mxu0 %v2887
        %3002 = vmatprep.subr.bf16.mxu0 0
        %3003 = vmatpush1.bf16.msra.mxu0 %v2888
        %3004 = vmatprep.subr.bf16.mxu0 0
        %3005 = vmatpush1.bf16.msra.mxu0 %v2889
        %3006 = vmatprep.subr.bf16.mxu0 0
        %3007 = vmatpush1.bf16.msra.mxu0 %v2890
        %3008 = vmatprep.subr.bf16.mxu0 0
        %3009 = vmatpush1.bf16.msra.mxu0 %v2891
        %3010 = vmatprep.subr.bf16.mxu0 0
        %3011 = vmatpush1.bf16.msra.mxu0 %v2892
        %3012 = vmatprep.subr.bf16.mxu0 0
        %3013 = vmatpush1.bf16.msra.mxu0 %v2893
        %3014 = vmatprep.subr.bf16.mxu0 0
        %3015 = vmatpush1.bf16.msra.mxu0 %v2894
        %3016 = vmatprep.subr.bf16.mxu0 0
        %3017 = vmatpush1.bf16.msra.mxu0 %v2895
        %3018 = vmatprep.subr.bf16.mxu0 0
        %3019 = vmatpush1.bf16.msra.mxu0 %v2896
        %3020 = vmatprep.subr.bf16.mxu0 0
        %3021 = vmatpush1.bf16.msra.mxu0 %v2897
        %3022 = vmatprep.subr.bf16.mxu0 0
        %3023 = vmatpush1.bf16.msra.mxu0 %v2898
        %3024 = vmatprep.subr.bf16.mxu0 0
        %3025 = vmatpush1.bf16.msra.mxu0 %v2899
        %3026 = vmatprep.subr.bf16.mxu0 0
        %3027 = vmatpush1.bf16.msra.mxu0 %v2900
        %3028 = vmatprep.subr.bf16.mxu0 0
        %3029 = vmatpush1.bf16.msra.mxu0 %v2901
        %3030 = vmatprep.subr.bf16.mxu0 0
        %3031 = vmatpush1.bf16.msra.mxu0 %v2902
        %3032 = vmatprep.mubr.bf16.mxu0 %v2723
        %3033 = vmatmul.mubr.bf16.gmra.mrb[0].mxu0 %v2722
        %v3034 = vpop.f32.mrb[0].mxu0
        %v3035 = vadd.f32 %v2970, %v3034
        %v3036 = vpop.f32.mrb[0].mxu0
        %v3037 = vpop.f32.mrb[0].mxu0
        %v3038 = vadd.f32 %v2973, %v3037
        %v3039 = vpop.f32.mrb[0].mxu0
        %3040 = vmatprep.mubr.bf16.mxu0 %v2727
        %3041 = vmatmul.mubr.bf16.gmra.mrb[0].mxu0 %v2726
        %v3042 = vpop.f32.mrb[0].mxu0
        %v3043 = vadd.f32 %v2978, %v3042
        %v3044 = vpop.f32.mrb[0].mxu0
        %v3045 = vpop.f32.mrb[0].mxu0
        %v3046 = vadd.f32 %v2981, %v3045
        %v3047 = vpop.f32.mrb[0].mxu0
        %3048 = vmatprep.mubr.bf16.mxu0 %v2731
        %3049 = vmatmul.mubr.bf16.gmra.mrb[0].mxu0 %v2730
        %v3050 = vpop.f32.mrb[0].mxu0
        %v3051 = vadd.f32 %v2986, %v3050
        %v3052 = vpop.f32.mrb[0].mxu0
        %v3053 = vpop.f32.mrb[0].mxu0
        %v3054 = vadd.f32 %v2989, %v3053
        %v3055 = vpop.f32.mrb[0].mxu0
        %3056 = vmatprep.mubr.bf16.mxu0 %v2735
        %3057 = vmatmul.mubr.bf16.gmra.mrb[0].mxu0 %v2734
        %v3058 = vpop.f32.mrb[0].mxu0
        %v3059 = vadd.f32 %v2994, %v3058
        %v3060 = vpop.f32.mrb[0].mxu0
        %v3061 = vpop.f32.mrb[0].mxu0
        %v3062 = vadd.f32 %v2997, %v3061
        %v3063 = vpop.f32.mrb[0].mxu0
        %3064 = vdwg.mxu0
        %v3065 = vmul.f32 %v3035, 0.5
        %v3066 = vmul.f32 %v3038, 0.5
        %v3067 = vmul.f32 %v3043, 0.5
        %v3068 = vmul.f32 %v3046, 0.5
        %v3069 = vmul.f32 %v3051, 0.5
        %v3070 = vmul.f32 %v3054, 0.5
        %v3071 = vmul.f32 %v3059, 0.5
        %v3072 = vmul.f32 %v3062, 0.5
        %v3073 = vadd.f32 %v1941, %v3065
        %v3074 = vadd.f32 %v1942, %v3066
        %v3075 = vadd.f32 %v1943, %v3067
        %v3076 = vadd.f32 %v1944, %v3068
        %v3077 = vadd.f32 %v1945, %v3069
        %v3078 = vadd.f32 %v1946, %v3070
        %v3079 = vadd.f32 %v1947, %v3071
        %v3080 = vadd.f32 %v1948, %v3072
        %v3081 = vld [vmem:[%s1874] sm:$0x1]
        %v3082 = vld [vmem:[%s1877] sm:$0x1]
        %3083 = vadd.xlane.f32.xlu0 %v3073
        %v3084 = vpop.xlane.xlu0 %3083
        %3085 = vadd.xlane.f32.xlu0 %v3074
        %v3086 = vpop.xlane.xlu0 %3085
        %3087 = vadd.xlane.f32.xlu0 %v3075
        %v3088 = vpop.xlane.xlu0 %3087
        %3089 = vadd.xlane.f32.xlu0 %v3076
        %v3090 = vpop.xlane.xlu0 %3089
        %3091 = vadd.xlane.f32.xlu0 %v3077
        %v3092 = vpop.xlane.xlu0 %3091
        %3093 = vadd.xlane.f32.xlu0 %v3078
        %v3094 = vpop.xlane.xlu0 %3093
        %3095 = vadd.xlane.f32.xlu0 %v3079
        %v3096 = vpop.xlane.xlu0 %3095
        %3097 = vadd.xlane.f32.xlu0 %v3080
        %v3098 = vpop.xlane.xlu0 %3097
        %v3099 = vmul.f32 %v3084, %v1967
        %v3100 = vmul.f32 %v3086, %v1967
        %v3101 = vmul.f32 %v3088, %v1967
        %v3102 = vmul.f32 %v3090, %v1967
        %v3103 = vmul.f32 %v3092, %v1967
        %v3104 = vmul.f32 %v3094, %v1967
        %v3105 = vmul.f32 %v3096, %v1967
        %v3106 = vmul.f32 %v3098, %v1967
        %v3107 = vsub.f32 %v3073, %v3099
        %v3108 = vsub.f32 %v3074, %v3100
        %v3109 = vsub.f32 %v3075, %v3101
        %v3110 = vsub.f32 %v3076, %v3102
        %v3111 = vsub.f32 %v3077, %v3103
        %v3112 = vsub.f32 %v3078, %v3104
        %v3113 = vsub.f32 %v3079, %v3105
        %v3114 = vsub.f32 %v3080, %v3106
        %v3115 = vmul.f32 %v3107, %v3107
        %v3116 = vmul.f32 %v3108, %v3108
        %v3117 = vmul.f32 %v3109, %v3109
        %v3118 = vmul.f32 %v3110, %v3110
        %v3119 = vmul.f32 %v3111, %v3111
        %v3120 = vmul.f32 %v3112, %v3112
        %v3121 = vmul.f32 %v3113, %v3113
        %v3122 = vmul.f32 %v3114, %v3114
        %3123 = vadd.xlane.f32.xlu0 %v3115
        %v3124 = vpop.xlane.xlu0 %3123
        %3125 = vadd.xlane.f32.xlu0 %v3116
        %v3126 = vpop.xlane.xlu0 %3125
        %3127 = vadd.xlane.f32.xlu0 %v3117
        %v3128 = vpop.xlane.xlu0 %3127
        %3129 = vadd.xlane.f32.xlu0 %v3118
        %v3130 = vpop.xlane.xlu0 %3129
        %3131 = vadd.xlane.f32.xlu0 %v3119
        %v3132 = vpop.xlane.xlu0 %3131
        %3133 = vadd.xlane.f32.xlu0 %v3120
        %v3134 = vpop.xlane.xlu0 %3133
        %3135 = vadd.xlane.f32.xlu0 %v3121
        %v3136 = vpop.xlane.xlu0 %3135
        %3137 = vadd.xlane.f32.xlu0 %v3122
        %v3138 = vpop.xlane.xlu0 %3137
        %v3139 = vmul.f32 %v3124, %v1967
        %v3140 = vmul.f32 %v3126, %v1967
        %v3141 = vmul.f32 %v3128, %v1967
        %v3142 = vmul.f32 %v3130, %v1967
        %v3143 = vmul.f32 %v3132, %v1967
        %v3144 = vmul.f32 %v3134, %v1967
        %v3145 = vmul.f32 %v3136, %v1967
        %v3146 = vmul.f32 %v3138, %v1967
        %v3147 = vadd.f32 %v3139, 1e-05
        %v3148 = vadd.f32 %v3140, 1e-05
        %v3149 = vadd.f32 %v3141, 1e-05
        %v3150 = vadd.f32 %v3142, 1e-05
        %v3151 = vadd.f32 %v3143, 1e-05
        %v3152 = vadd.f32 %v3144, 1e-05
        %v3153 = vadd.f32 %v3145, 1e-05
        %v3154 = vadd.f32 %v3146, 1e-05
        %v3155 = vrsqrt.pop %v3147
        %v3156 = vrsqrt.pop %v3148
        %v3157 = vrsqrt.pop %v3149
        %v3158 = vrsqrt.pop %v3150
        %v3159 = vrsqrt.pop %v3151
        %v3160 = vrsqrt.pop %v3152
        %v3161 = vrsqrt.pop %v3153
        %v3162 = vrsqrt.pop %v3154
        %v3163 = vmul.f32 %v3107, %v3155
        %v3164 = vmul.f32 %v3108, %v3156
        %v3165 = vmul.f32 %v3109, %v3157
        %v3166 = vmul.f32 %v3110, %v3158
        %v3167 = vmul.f32 %v3111, %v3159
        %v3168 = vmul.f32 %v3112, %v3160
        %v3169 = vmul.f32 %v3113, %v3161
        %v3170 = vmul.f32 %v3114, %v3162
        %v3172 = vlaneseq
        %v3173 = vshrl.u32 %v3172, 7
        %v3174 = vsub.s32 0, %v3173
        %v3175 = vrot.slane %v3081, %v3174
        %v3177 = vmul.f32 %v3163, %v3175
        %v3178 = vmul.f32 %v3164, %v3175
        %v3179 = vmul.f32 %v3165, %v3175
        %v3180 = vmul.f32 %v3166, %v3175
        %v3181 = vmul.f32 %v3167, %v3175
        %v3182 = vmul.f32 %v3168, %v3175
        %v3183 = vmul.f32 %v3169, %v3175
        %v3184 = vmul.f32 %v3170, %v3175
        %v3186 = vlaneseq
        %v3187 = vshrl.u32 %v3186, 7
        %v3188 = vsub.s32 0, %v3187
        %v3189 = vrot.slane %v3082, %v3188
        %v3191 = vadd.f32 %v3177, %v3189
        %v3192 = vadd.f32 %v3178, %v3189
        %v3193 = vadd.f32 %v3179, %v3189
        %v3194 = vadd.f32 %v3180, %v3189
        %v3195 = vadd.f32 %v3181, %v3189
        %v3196 = vadd.f32 %v3182, %v3189
        %v3197 = vadd.f32 %v3183, %v3189
        %v3198 = vadd.f32 %v3184, %v3189
        %v3199 = vld [vmem:[%s1550] sm:$0xff]
        %v3200 = vld [vmem:[%s1550 + $0x8] sm:$0xf]
        %v3201 = vld [vmem:[%s1550 + $0xc] sm:$0xff]
        %v3202 = vld [vmem:[%s1550 + $0x14] sm:$0xf]
        %v3203 = vld [vmem:[%s1550 + $0x18] sm:$0xff]
        %v3204 = vld [vmem:[%s1550 + $0x20] sm:$0xf]
        %v3205 = vld [vmem:[%s1550 + $0x24] sm:$0xff]
        %v3206 = vld [vmem:[%s1550 + $0x2c] sm:$0xf]
        %v3207 = vld [vmem:[%s1550 + $0x30] sm:$0xff]
        %v3208 = vld [vmem:[%s1550 + $0x38] sm:$0xf]
        %v3209 = vld [vmem:[%s1550 + $0x3c] sm:$0xff]
        %v3210 = vld [vmem:[%s1550 + $0x44] sm:$0xf]
        %v3211 = vld [vmem:[%s1550 + $0x48] sm:$0xff]
        %v3212 = vld [vmem:[%s1550 + $0x50] sm:$0xf]
        %v3213 = vld [vmem:[%s1550 + $0x54] sm:$0xff]
        %v3214 = vld [vmem:[%s1550 + $0x5c] sm:$0xf]
        %v3215 = vld [vmem:[%s1550 + $0x60] sm:$0xff]
        %v3216 = vld [vmem:[%s1550 + $0x68] sm:$0xf]
        %v3217 = vld [vmem:[%s1550 + $0x6c] sm:$0xff]
        %v3218 = vld [vmem:[%s1550 + $0x74] sm:$0xf]
        %v3219 = vld [vmem:[%s1550 + $0x78] sm:$0xff]
        %v3220 = vld [vmem:[%s1550 + $0x80] sm:$0xf]
        %v3221 = vld [vmem:[%s1550 + $0x84] sm:$0xff]
        %v3222 = vld [vmem:[%s1550 + $0x8c] sm:$0xf]
        %v3223 = vld [vmem:[%s1550 + $0x90] sm:$0xff]
        %v3224 = vld [vmem:[%s1550 + $0x98] sm:$0xf]
        %v3225 = vld [vmem:[%s1550 + $0x9c] sm:$0xff]
        %v3226 = vld [vmem:[%s1550 + $0xa4] sm:$0xf]
        %v3227 = vld [vmem:[%s1550 + $0xa8] sm:$0xff]
        %v3228 = vld [vmem:[%s1550 + $0xb0] sm:$0xf]
        %v3229 = vld [vmem:[%s1550 + $0xb4] sm:$0xff]
        %v3230 = vld [vmem:[%s1550 + $0xbc] sm:$0xf]
        %v3231 = vpack.c.bf16 %v3192, %v3191
        %v3232 = vpack.c.bf16 %v3194, %v3193
        %v3233 = vpack.c.bf16 %v3196, %v3195
        %v3234 = vpack.c.bf16 %v3198, %v3197
        %v3235 = vld [vmem:[%s1881] sm:$0x7]
        %v3237 = vlaneseq
        %v3238 = vshrl.u32 %v3237, 7
        %v3239 = vsub.s32 0, %v3238
        %v3240 = vrot.slane %v3235, %v3239
        %v3241 = vlaneseq
        %v3242 = vshrl.u32 %v3241, 7
        %v3243 = vsub.s32 1, %v3242
        %v3244 = vrot.slane %v3235, %v3243
        %v3245 = vlaneseq
        %v3246 = vshrl.u32 %v3245, 7
        %v3247 = vsub.s32 2, %v3246
        %v3248 = vrot.slane %v3235, %v3247
        %v3284 = vunpack.c.l.b16 %v3199
        %v3285 = vunpack.c.h.b16 %v3199
        %v3286 = vunpack.c.l.b16 %v3200
        %v3287 = vunpack.c.l.b16 %v3201
        %v3288 = vunpack.c.h.b16 %v3201
        %v3289 = vunpack.c.l.b16 %v3202
        %v3290 = vunpack.c.l.b16 %v3203
        %v3291 = vunpack.c.h.b16 %v3203
        %v3292 = vunpack.c.l.b16 %v3204
        %v3293 = vunpack.c.l.b16 %v3205
        %v3294 = vunpack.c.h.b16 %v3205
        %v3295 = vunpack.c.l.b16 %v3206
        %v3296 = vunpack.c.l.b16 %v3207
        %v3297 = vunpack.c.h.b16 %v3207
        %v3298 = vunpack.c.l.b16 %v3208
        %v3299 = vunpack.c.l.b16 %v3209
        %v3300 = vunpack.c.h.b16 %v3209
        %v3301 = vunpack.c.l.b16 %v3210
        %v3302 = vunpack.c.l.b16 %v3211
        %v3303 = vunpack.c.h.b16 %v3211
        %v3304 = vunpack.c.l.b16 %v3212
        %v3305 = vunpack.c.l.b16 %v3213
        %v3306 = vunpack.c.h.b16 %v3213
        %v3307 = vunpack.c.l.b16 %v3214
        %v3308 = vunpack.c.l.b16 %v3215
        %v3309 = vunpack.c.h.b16 %v3215
        %v3310 = vunpack.c.l.b16 %v3216
        %v3311 = vunpack.c.l.b16 %v3217
        %v3312 = vunpack.c.h.b16 %v3217
        %v3313 = vunpack.c.l.b16 %v3218
        %v3314 = vunpack.c.l.b16 %v3219
        %v3315 = vunpack.c.h.b16 %v3219
        %v3316 = vunpack.c.l.b16 %v3220
        %v3317 = vunpack.c.l.b16 %v3221
        %v3318 = vunpack.c.h.b16 %v3221
        %v3319 = vunpack.c.l.b16 %v3222
        %v3320 = vunpack.c.l.b16 %v3223
        %v3321 = vunpack.c.h.b16 %v3223
        %v3322 = vunpack.c.l.b16 %v3224
        %v3323 = vunpack.c.l.b16 %v3225
        %v3324 = vunpack.c.h.b16 %v3225
        %v3325 = vunpack.c.l.b16 %v3226
        %v3326 = vunpack.c.l.b16 %v3227
        %v3327 = vunpack.c.h.b16 %v3227
        %v3328 = vunpack.c.l.b16 %v3228
        %v3329 = vunpack.c.l.b16 %v3229
        %v3330 = vunpack.c.h.b16 %v3229
        %v3331 = vunpack.c.l.b16 %v3230
        %v3332 = vpack.c.b16 %v3287, %v3284
        %v3333 = vpack.c.b16 %v3288, %v3285
        %v3334 = vpack.c.b16 %v3289, %v3286
        %v3335 = vpack.c.b16 %v3293, %v3290
        %v3336 = vpack.c.b16 %v3294, %v3291
        %v3337 = vpack.c.b16 %v3295, %v3292
        %v3338 = vpack.c.b16 %v3299, %v3296
        %v3339 = vpack.c.b16 %v3300, %v3297
        %v3340 = vpack.c.b16 %v3301, %v3298
        %v3341 = vpack.c.b16 %v3305, %v3302
        %v3342 = vpack.c.b16 %v3306, %v3303
        %v3343 = vpack.c.b16 %v3307, %v3304
        %v3344 = vpack.c.b16 %v3311, %v3308
        %v3345 = vpack.c.b16 %v3312, %v3309
        %v3346 = vpack.c.b16 %v3313, %v3310
        %v3347 = vpack.c.b16 %v3317, %v3314
        %v3348 = vpack.c.b16 %v3318, %v3315
        %v3349 = vpack.c.b16 %v3319, %v3316
        %v3350 = vpack.c.b16 %v3323, %v3320
        %v3351 = vpack.c.b16 %v3324, %v3321
        %v3352 = vpack.c.b16 %v3325, %v3322
        %v3353 = vpack.c.b16 %v3329, %v3326
        %v3354 = vpack.c.b16 %v3330, %v3327
        %v3355 = vpack.c.b16 %v3331, %v3328
        %3380 = vmatprep.subr.bf16.mxu0 %v3333
        %3381 = vmatpush1.bf16.msra.mxu0 %v3332
        %3382 = vmatprep.subr.bf16.mxu0 %v3336
        %3383 = vmatpush1.bf16.msra.mxu0 %v3335
        %3384 = vmatprep.subr.bf16.mxu0 %v3339
        %3385 = vmatpush1.bf16.msra.mxu0 %v3338
        %3386 = vmatprep.subr.bf16.mxu0 %v3342
        %3387 = vmatpush1.bf16.msra.mxu0 %v3341
        %3388 = vmatprep.subr.bf16.mxu0 %v3345
        %3389 = vmatpush1.bf16.msra.mxu0 %v3344
        %3390 = vmatprep.subr.bf16.mxu0 %v3348
        %3391 = vmatpush1.bf16.msra.mxu0 %v3347
        %3392 = vmatprep.subr.bf16.mxu0 %v3351
        %3393 = vmatpush1.bf16.msra.mxu0 %v3350
        %3394 = vmatprep.subr.bf16.mxu0 %v3354
        %3395 = vmatpush1.bf16.msra.mxu0 %v3353
        %3396 = vmatprep.subr.bf16.mxu0 0
        %3397 = vmatpush1.bf16.msra.mxu0 0
        %3398 = vmatprep.subr.bf16.mxu0 0
        %3399 = vmatpush1.bf16.msra.mxu0 0
        %3400 = vmatprep.subr.bf16.mxu0 0
        %3401 = vmatpush1.bf16.msra.mxu0 0
        %3402 = vmatprep.subr.bf16.mxu0 0
        %3403 = vmatpush1.bf16.msra.mxu0 0
        %3404 = vmatprep.subr.bf16.mxu0 0
        %3405 = vmatpush1.bf16.msra.mxu0 0
        %3406 = vmatprep.subr.bf16.mxu0 0
        %3407 = vmatpush1.bf16.msra.mxu0 0
        %3408 = vmatprep.subr.bf16.mxu0 0
        %3409 = vmatpush1.bf16.msra.mxu0 0
        %3410 = vmatprep.subr.bf16.mxu0 0
        %3411 = vmatpush1.bf16.msra.mxu0 0
        %3412 = vmatprep.mubr.bf16.mxu0 0
        %3413 = vmatmul.mubr.bf16.gmra.mrb[0].mxu0 %v3231
        %v3414 = vpop.f32.mrb[0].mxu0
        %v3415 = vadd.f32 %v3240, %v3414
        %v3416 = vpop.f32.mrb[0].mxu0
        %v3417 = vadd.f32 %v3244, %v3416
        %v3418 = vpop.f32.mrb[0].mxu0
        %v3419 = vadd.f32 %v3240, %v3418
        %v3420 = vpop.f32.mrb[0].mxu0
        %v3421 = vadd.f32 %v3244, %v3420
        %3422 = vmatprep.mubr.bf16.mxu0 0
        %3423 = vmatmul.mubr.bf16.gmra.mrb[0].mxu0 %v3232
        %v3424 = vpop.f32.mrb[0].mxu0
        %v3425 = vadd.f32 %v3240, %v3424
        %v3426 = vpop.f32.mrb[0].mxu0
        %v3427 = vadd.f32 %v3244, %v3426
        %v3428 = vpop.f32.mrb[0].mxu0
        %v3429 = vadd.f32 %v3240, %v3428
        %v3430 = vpop.f32.mrb[0].mxu0
        %v3431 = vadd.f32 %v3244, %v3430
        %3432 = vmatprep.mubr.bf16.mxu0 0
        %3433 = vmatmul.mubr.bf16.gmra.mrb[0].mxu0 %v3233
        %v3434 = vpop.f32.mrb[0].mxu0
        %v3435 = vadd.f32 %v3240, %v3434
        %v3436 = vpop.f32.mrb[0].mxu0
        %v3437 = vadd.f32 %v3244, %v3436
        %v3438 = vpop.f32.mrb[0].mxu0
        %v3439 = vadd.f32 %v3240, %v3438
        %v3440 = vpop.f32.mrb[0].mxu0
        %v3441 = vadd.f32 %v3244, %v3440
        %3442 = vmatprep.mubr.bf16.mxu0 0
        %3443 = vmatmul.mubr.bf16.gmra.mrb[0].mxu0 %v3234
        %v3444 = vpop.f32.mrb[0].mxu0
        %v3445 = vadd.f32 %v3240, %v3444
        %v3446 = vpop.f32.mrb[0].mxu0
        %v3447 = vadd.f32 %v3244, %v3446
        %v3448 = vpop.f32.mrb[0].mxu0
        %v3449 = vadd.f32 %v3240, %v3448
        %v3450 = vpop.f32.mrb[0].mxu0
        %v3451 = vadd.f32 %v3244, %v3450
        %3452 = vdwg.mxu0
        %3453 = vmatprep.subr.bf16.mxu0 0
        %3454 = vmatpush1.bf16.msra.mxu0 %v3334
        %3455 = vmatprep.subr.bf16.mxu0 0
        %3456 = vmatpush1.bf16.msra.mxu0 %v3337
        %3457 = vmatprep.subr.bf16.mxu0 0
        %3458 = vmatpush1.bf16.msra.mxu0 %v3340
        %3459 = vmatprep.subr.bf16.mxu0 0
        %3460 = vmatpush1.bf16.msra.mxu0 %v3343
        %3461 = vmatprep.subr.bf16.mxu0 0
        %3462 = vmatpush1.bf16.msra.mxu0 %v3346
        %3463 = vmatprep.subr.bf16.mxu0 0
        %3464 = vmatpush1.bf16.msra.mxu0 %v3349
        %3465 = vmatprep.subr.bf16.mxu0 0
        %3466 = vmatpush1.bf16.msra.mxu0 %v3352
        %3467 = vmatprep.subr.bf16.mxu0 0
        %3468 = vmatpush1.bf16.msra.mxu0 %v3355
        %3469 = vmatprep.subr.bf16.mxu0 0
        %3470 = vmatpush1.bf16.msra.mxu0 0
        %3471 = vmatprep.subr.bf16.mxu0 0
        %3472 = vmatpush1.bf16.msra.mxu0 0
        %3473 = vmatprep.subr.bf16.mxu0 0
        %3474 = vmatpush1.bf16.msra.mxu0 0
        %3475 = vmatprep.subr.bf16.mxu0 0
        %3476 = vmatpush1.bf16.msra.mxu0 0
        %3477 = vmatprep.subr.bf16.mxu0 0
        %3478 = vmatpush1.bf16.msra.mxu0 0
        %3479 = vmatprep.subr.bf16.mxu0 0
        %3480 = vmatpush1.bf16.msra.mxu0 0
        %3481 = vmatprep.subr.bf16.mxu0 0
        %3482 = vmatpush1.bf16.msra.mxu0 0
        %3483 = vmatprep.subr.bf16.mxu0 0
        %3484 = vmatpush1.bf16.msra.mxu0 0
        %3485 = vmatprep.mubr.bf16.mxu0 0
        %3486 = vmatmul.mubr.bf16.gmra.mrb[0].mxu0 %v3231
        %v3487 = vpop.f32.mrb[0].mxu0
        %v3488 = vadd.f32 %v3248, %v3487
        %v3489 = vpop.f32.mrb[0].mxu0
        %v3490 = vpop.f32.mrb[0].mxu0
        %v3491 = vadd.f32 %v3248, %v3490
        %v3492 = vpop.f32.mrb[0].mxu0
        %3493 = vmatprep.mubr.bf16.mxu0 0
        %3494 = vmatmul.mubr.bf16.gmra.mrb[0].mxu0 %v3232
        %v3495 = vpop.f32.mrb[0].mxu0
        %v3496 = vadd.f32 %v3248, %v3495
        %v3497 = vpop.f32.mrb[0].mxu0
        %v3498 = vpop.f32.mrb[0].mxu0
        %v3499 = vadd.f32 %v3248, %v3498
        %v3500 = vpop.f32.mrb[0].mxu0
        %3501 = vmatprep.mubr.bf16.mxu0 0
        %3502 = vmatmul.mubr.bf16.gmra.mrb[0].mxu0 %v3233
        %v3503 = vpop.f32.mrb[0].mxu0
        %v3504 = vadd.f32 %v3248, %v3503
        %v3505 = vpop.f32.mrb[0].mxu0
        %v3506 = vpop.f32.mrb[0].mxu0
        %v3507 = vadd.f32 %v3248, %v3506
        %v3508 = vpop.f32.mrb[0].mxu0
        %3509 = vmatprep.mubr.bf16.mxu0 0
        %3510 = vmatmul.mubr.bf16.gmra.mrb[0].mxu0 %v3234
        %v3511 = vpop.f32.mrb[0].mxu0
        %v3512 = vadd.f32 %v3248, %v3511
        %v3513 = vpop.f32.mrb[0].mxu0
        %v3514 = vpop.f32.mrb[0].mxu0
        %v3515 = vadd.f32 %v3248, %v3514
        %v3516 = vpop.f32.mrb[0].mxu0
        %3517 = vdwg.mxu0
        %v3518 = vpack.c.bf16 %v3419, %v3415
        %v3519 = vpack.c.bf16 %v3429, %v3425
        %v3520 = vpack.c.bf16 %v3439, %v3435
        %v3521 = vpack.c.bf16 %v3449, %v3445
        %v3522 = vpack.c.bf16 %v3421, %v3417
        %v3523 = vpack.c.bf16 %v3431, %v3427
        %v3524 = vpack.c.bf16 %v3441, %v3437
        %v3525 = vpack.c.bf16 %v3451, %v3447
        %v3526 = vpack.c.bf16 %v3491, %v3488
        %v3527 = vpack.c.bf16 %v3499, %v3496
        %v3528 = vpack.c.bf16 %v3507, %v3504
        %v3529 = vpack.c.bf16 %v3515, %v3512
        %vm3530 = vcmask 261120
        %v3532 = vsel %vm3530, %v3518, 0
        %v3535 = vsel %vm3530, %v3519, 0
        %v3538 = vsel %vm3530, %v3522, 0
        %v3541 = vsel %vm3530, %v3523, 0
        %3543 = vmatprep.subr.bf16.mxu0 0
        %3544 = vmatpush1.bf16.xpose.msra.mxu0 %v3538
        %3545 = vmatprep.subr.bf16.mxu0 0
        %3546 = vmatpush1.bf16.xpose.msra.mxu0 %v3541
        %3547 = vmatprep.subr.bf16.mxu0 0
        %3548 = vmatpush1.bf16.xpose.msra.mxu0 0
        %3549 = vmatprep.subr.bf16.mxu0 0
        %3550 = vmatpush1.bf16.xpose.msra.mxu0 0
        %3551 = vmatprep.subr.bf16.mxu0 0
        %3552 = vmatpush1.bf16.xpose.msra.mxu0 0
        %3553 = vmatprep.subr.bf16.mxu0 0
        %3554 = vmatpush1.bf16.xpose.msra.mxu0 0
        %3555 = vmatprep.subr.bf16.mxu0 0
        %3556 = vmatpush1.bf16.xpose.msra.mxu0 0
        %3557 = vmatprep.subr.bf16.mxu0 0
        %3558 = vmatpush1.bf16.xpose.msra.mxu0 0
        %3559 = vmatprep.subr.bf16.mxu0 0
        %3560 = vmatpush1.bf16.xpose.msra.mxu0 0
        %3561 = vmatprep.subr.bf16.mxu0 0
        %3562 = vmatpush1.bf16.xpose.msra.mxu0 0
        %3563 = vmatprep.subr.bf16.mxu0 0
        %3564 = vmatpush1.bf16.xpose.msra.mxu0 0
        %3565 = vmatprep.subr.bf16.mxu0 0
        %3566 = vmatpush1.bf16.xpose.msra.mxu0 0
        %3567 = vmatprep.subr.bf16.mxu0 0
        %3568 = vmatpush1.bf16.xpose.msra.mxu0 0
        %3569 = vmatprep.subr.bf16.mxu0 0
        %3570 = vmatpush1.bf16.xpose.msra.mxu0 0
        %3571 = vmatprep.subr.bf16.mxu0 0
        %3572 = vmatpush1.bf16.xpose.msra.mxu0 0
        %3573 = vmatprep.subr.bf16.mxu0 0
        %3574 = vmatpush1.bf16.xpose.msra.mxu0 0
        %3575 = vmatprep.mubr.bf16.mxu0 0
        %3576 = vmatmul.mubr.bf16.gmra.mrb[0].mxu0 %v3532
        %v3577 = vpop.f32.mrb[0].mxu0
        %v3578 = vadd.f32 0.0, %v3577
        %v3579 = vpop.f32.mrb[0].mxu0
        %v3580 = vpop.f32.mrb[0].mxu0
        %v3581 = vadd.f32 0.0, %v3580
        %v3582 = vpop.f32.mrb[0].mxu0
        %3583 = vmatprep.mubr.bf16.mxu0 0
        %3584 = vmatmul.mubr.bf16.gmra.mrb[0].mxu0 %v3535
        %v3585 = vpop.f32.mrb[0].mxu0
        %v3586 = vadd.f32 0.0, %v3585
        %v3587 = vpop.f32.mrb[0].mxu0
        %v3588 = vpop.f32.mrb[0].mxu0
        %v3589 = vadd.f32 0.0, %v3588
        %v3590 = vpop.f32.mrb[0].mxu0
        %3591 = vdwg.mxu0
        %v3593 = vsel %vm3530, %v3520, 0
        %v3596 = vsel %vm3530, %v3521, 0
        %v3599 = vsel %vm3530, %v3524, 0
        %v3602 = vsel %vm3530, %v3525, 0
        %3604 = vmatprep.subr.bf16.mxu0 0
        %3605 = vmatpush1.bf16.xpose.msra.mxu0 %v3599
        %3606 = vmatprep.subr.bf16.mxu0 0
        %3607 = vmatpush1.bf16.xpose.msra.mxu0 %v3602
        %3608 = vmatprep.subr.bf16.mxu0 0
        %3609 = vmatpush1.bf16.xpose.msra.mxu0 0
        %3610 = vmatprep.subr.bf16.mxu0 0
        %3611 = vmatpush1.bf16.xpose.msra.mxu0 0
        %3612 = vmatprep.subr.bf16.mxu0 0
        %3613 = vmatpush1.bf16.xpose.msra.mxu0 0
        %3614 = vmatprep.subr.bf16.mxu0 0
        %3615 = vmatpush1.bf16.xpose.msra.mxu0 0
        %3616 = vmatprep.subr.bf16.mxu0 0
        %3617 = vmatpush1.bf16.xpose.msra.mxu0 0
        %3618 = vmatprep.subr.bf16.mxu0 0
        %3619 = vmatpush1.bf16.xpose.msra.mxu0 0
        %3620 = vmatprep.subr.bf16.mxu0 0
        %3621 = vmatpush1.bf16.xpose.msra.mxu0 0
        %3622 = vmatprep.subr.bf16.mxu0 0
        %3623 = vmatpush1.bf16.xpose.msra.mxu0 0
        %3624 = vmatprep.subr.bf16.mxu0 0
        %3625 = vmatpush1.bf16.xpose.msra.mxu0 0
        %3626 = vmatprep.subr.bf16.mxu0 0
        %3627 = vmatpush1.bf16.xpose.msra.mxu0 0
        %3628 = vmatprep.subr.bf16.mxu0 0
        %3629 = vmatpush1.bf16.xpose.msra.mxu0 0
        %3630 = vmatprep.subr.bf16.mxu0 0
        %3631 = vmatpush1.bf16.xpose.msra.mxu0 0
        %3632 = vmatprep.subr.bf16.mxu0 0
        %3633 = vmatpush1.bf16.xpose.msra.mxu0 0
        %3634 = vmatprep.subr.bf16.mxu0 0
        %3635 = vmatpush1.bf16.xpose.msra.mxu0 0
        %3636 = vmatprep.mubr.bf16.mxu0 0
        %3637 = vmatmul.mubr.bf16.gmra.mrb[0].mxu0 %v3593
        %v3638 = vpop.f32.mrb[0].mxu0
        %v3639 = vadd.f32 0.0, %v3638
        %v3640 = vpop.f32.mrb[0].mxu0
        %v3641 = vpop.f32.mrb[0].mxu0
        %v3642 = vadd.f32 0.0, %v3641
        %v3643 = vpop.f32.mrb[0].mxu0
        %3644 = vmatprep.mubr.bf16.mxu0 0
        %3645 = vmatmul.mubr.bf16.gmra.mrb[0].mxu0 %v3596
        %v3646 = vpop.f32.mrb[0].mxu0
        %v3647 = vadd.f32 0.0, %v3646
        %v3648 = vpop.f32.mrb[0].mxu0
        %v3649 = vpop.f32.mrb[0].mxu0
        %v3650 = vadd.f32 0.0, %v3649
        %v3651 = vpop.f32.mrb[0].mxu0
        %3652 = vdwg.mxu0
        %v3653 = vmul.f32 %v3578, 0.17677669
        %v3654 = vmul.f32 %v3581, 0.17677669
        %v3655 = vmul.f32 %v3586, 0.17677669
        %v3656 = vmul.f32 %v3589, 0.17677669
        %v3657 = vmul.f32 %v3639, 0.17677669
        %v3658 = vmul.f32 %v3642, 0.17677669
        %v3659 = vmul.f32 %v3647, 0.17677669
        %v3660 = vmul.f32 %v3650, 0.17677669
        %v3661 = vsel %vm3530, %v3653, -inf
        %3662 = vmax.xlane.f32.xlu0 %v3661
        %v3663 = vpop.xlane.xlu0 %3662
        %v3664 = vsel %vm3530, %v3654, -inf
        %3665 = vmax.xlane.f32.xlu0 %v3664
        %v3666 = vpop.xlane.xlu0 %3665
        %v3667 = vsel %vm3530, %v3655, -inf
        %3668 = vmax.xlane.f32.xlu0 %v3667
        %v3669 = vpop.xlane.xlu0 %3668
        %v3670 = vsel %vm3530, %v3656, -inf
        %3671 = vmax.xlane.f32.xlu0 %v3670
        %v3672 = vpop.xlane.xlu0 %3671
        %v3673 = vsel %vm3530, %v3657, -inf
        %3674 = vmax.xlane.f32.xlu0 %v3673
        %v3675 = vpop.xlane.xlu0 %3674
        %v3676 = vsel %vm3530, %v3658, -inf
        %3677 = vmax.xlane.f32.xlu0 %v3676
        %v3678 = vpop.xlane.xlu0 %3677
        %v3679 = vsel %vm3530, %v3659, -inf
        %3680 = vmax.xlane.f32.xlu0 %v3679
        %v3681 = vpop.xlane.xlu0 %3680
        %v3682 = vsel %vm3530, %v3660, -inf
        %3683 = vmax.xlane.f32.xlu0 %v3682
        %v3684 = vpop.xlane.xlu0 %3683
        %v3685 = vsub.f32 %v3653, %v3663
        %v3686 = vsub.f32 %v3654, %v3666
        %v3687 = vsub.f32 %v3655, %v3669
        %v3688 = vsub.f32 %v3656, %v3672
        %v3689 = vsub.f32 %v3657, %v3675
        %v3690 = vsub.f32 %v3658, %v3678
        %v3691 = vsub.f32 %v3659, %v3681
        %v3692 = vsub.f32 %v3660, %v3684
        %v3693 = vmul.f32 %v3685, 1.442695
        %v3694 = vpow.pop %v3693
        %v3695 = vmul.f32 %v3686, 1.442695
        %v3696 = vpow.pop %v3695
        %v3697 = vmul.f32 %v3687, 1.442695
        %v3698 = vpow.pop %v3697
        %v3699 = vmul.f32 %v3688, 1.442695
        %v3700 = vpow.pop %v3699
        %v3701 = vmul.f32 %v3689, 1.442695
        %v3702 = vpow.pop %v3701
        %v3703 = vmul.f32 %v3690, 1.442695
        %v3704 = vpow.pop %v3703
        %v3705 = vmul.f32 %v3691, 1.442695
        %v3706 = vpow.pop %v3705
        %v3707 = vmul.f32 %v3692, 1.442695
        %v3708 = vpow.pop %v3707
        %v3709 = vsel %vm3530, %v3694, 0.0
        %3710 = vadd.xlane.f32.xlu0 %v3709
        %v3711 = vpop.xlane.xlu0 %3710
        %v3712 = vsel %vm3530, %v3696, 0.0
        %3713 = vadd.xlane.f32.xlu0 %v3712
        %v3714 = vpop.xlane.xlu0 %3713
        %v3715 = vsel %vm3530, %v3698, 0.0
        %3716 = vadd.xlane.f32.xlu0 %v3715
        %v3717 = vpop.xlane.xlu0 %3716
        %v3718 = vsel %vm3530, %v3700, 0.0
        %3719 = vadd.xlane.f32.xlu0 %v3718
        %v3720 = vpop.xlane.xlu0 %3719
        %v3721 = vsel %vm3530, %v3702, 0.0
        %3722 = vadd.xlane.f32.xlu0 %v3721
        %v3723 = vpop.xlane.xlu0 %3722
        %v3724 = vsel %vm3530, %v3704, 0.0
        %3725 = vadd.xlane.f32.xlu0 %v3724
        %v3726 = vpop.xlane.xlu0 %3725
        %v3727 = vsel %vm3530, %v3706, 0.0
        %3728 = vadd.xlane.f32.xlu0 %v3727
        %v3729 = vpop.xlane.xlu0 %3728
        %v3730 = vsel %vm3530, %v3708, 0.0
        %3731 = vadd.xlane.f32.xlu0 %v3730
        %v3732 = vpop.xlane.xlu0 %3731
        %v3733 = vrcp.pop %v3711
        %v3734 = vrcp.pop %v3714
        %v3735 = vrcp.pop %v3717
        %v3736 = vrcp.pop %v3720
        %v3737 = vrcp.pop %v3723
        %v3738 = vrcp.pop %v3726
        %v3739 = vrcp.pop %v3729
        %v3740 = vrcp.pop %v3732
        %v3741 = vmul.f32 %v3694, %v3733
        %v3742 = vmul.f32 %v3696, %v3734
        %v3743 = vmul.f32 %v3698, %v3735
        %v3744 = vmul.f32 %v3700, %v3736
        %v3745 = vmul.f32 %v3702, %v3737
        %v3746 = vmul.f32 %v3704, %v3738
        %v3747 = vmul.f32 %v3706, %v3739
        %v3748 = vmul.f32 %v3708, %v3740
        %v3749 = vpack.c.bf16 %v3742, %v3741
        %v3750 = vpack.c.bf16 %v3744, %v3743
        %v3751 = vpack.c.bf16 %v3746, %v3745
        %v3752 = vpack.c.bf16 %v3748, %v3747
        %v3754 = vsel %vm3530, %v3749, 0
        %v3757 = vsel %vm3530, %v3750, 0
        %3759 = vmatprep.subr.bf16.mxu0 0
        %3760 = vmatpush1.bf16.msra.mxu0 %v3526
        %3761 = vmatprep.subr.bf16.mxu0 0
        %3762 = vmatpush1.bf16.msra.mxu0 %v3527
        %3763 = vmatprep.subr.bf16.mxu0 0
        %3764 = vmatpush1.bf16.msra.mxu0 0
        %3765 = vmatprep.subr.bf16.mxu0 0
        %3766 = vmatpush1.bf16.msra.mxu0 0
        %3767 = vmatprep.subr.bf16.mxu0 0
        %3768 = vmatpush1.bf16.msra.mxu0 0
        %3769 = vmatprep.subr.bf16.mxu0 0
        %3770 = vmatpush1.bf16.msra.mxu0 0
        %3771 = vmatprep.subr.bf16.mxu0 0
        %3772 = vmatpush1.bf16.msra.mxu0 0
        %3773 = vmatprep.subr.bf16.mxu0 0
        %3774 = vmatpush1.bf16.msra.mxu0 0
        %3775 = vmatprep.subr.bf16.mxu0 0
        %3776 = vmatpush1.bf16.msra.mxu0 0
        %3777 = vmatprep.subr.bf16.mxu0 0
        %3778 = vmatpush1.bf16.msra.mxu0 0
        %3779 = vmatprep.subr.bf16.mxu0 0
        %3780 = vmatpush1.bf16.msra.mxu0 0
        %3781 = vmatprep.subr.bf16.mxu0 0
        %3782 = vmatpush1.bf16.msra.mxu0 0
        %3783 = vmatprep.subr.bf16.mxu0 0
        %3784 = vmatpush1.bf16.msra.mxu0 0
        %3785 = vmatprep.subr.bf16.mxu0 0
        %3786 = vmatpush1.bf16.msra.mxu0 0
        %3787 = vmatprep.subr.bf16.mxu0 0
        %3788 = vmatpush1.bf16.msra.mxu0 0
        %3789 = vmatprep.subr.bf16.mxu0 0
        %3790 = vmatpush1.bf16.msra.mxu0 0
        %3791 = vmatprep.mubr.bf16.mxu0 0
        %3792 = vmatmul.mubr.bf16.gmra.mrb[0].mxu0 %v3754
        %v3793 = vpop.f32.mrb[0].mxu0
        %v3794 = vadd.f32 0.0, %v3793
        %v3795 = vpop.f32.mrb[0].mxu0
        %v3796 = vpop.f32.mrb[0].mxu0
        %v3797 = vadd.f32 0.0, %v3796
        %v3798 = vpop.f32.mrb[0].mxu0
        %3799 = vmatprep.mubr.bf16.mxu0 0
        %3800 = vmatmul.mubr.bf16.gmra.mrb[0].mxu0 %v3757
        %v3801 = vpop.f32.mrb[0].mxu0
        %v3802 = vadd.f32 0.0, %v3801
        %v3803 = vpop.f32.mrb[0].mxu0
        %v3804 = vpop.f32.mrb[0].mxu0
        %v3805 = vadd.f32 0.0, %v3804
        %v3806 = vpop.f32.mrb[0].mxu0
        %3807 = vdwg.mxu0
        %v3809 = vsel %vm3530, %v3751, 0
        %v3812 = vsel %vm3530, %v3752, 0
        %3814 = vmatprep.subr.bf16.mxu0 0
        %3815 = vmatpush1.bf16.msra.mxu0 %v3528
        %3816 = vmatprep.subr.bf16.mxu0 0
        %3817 = vmatpush1.bf16.msra.mxu0 %v3529
        %3818 = vmatprep.subr.bf16.mxu0 0
        %3819 = vmatpush1.bf16.msra.mxu0 0
        %3820 = vmatprep.subr.bf16.mxu0 0
        %3821 = vmatpush1.bf16.msra.mxu0 0
        %3822 = vmatprep.subr.bf16.mxu0 0
        %3823 = vmatpush1.bf16.msra.mxu0 0
        %3824 = vmatprep.subr.bf16.mxu0 0
        %3825 = vmatpush1.bf16.msra.mxu0 0
        %3826 = vmatprep.subr.bf16.mxu0 0
        %3827 = vmatpush1.bf16.msra.mxu0 0
        %3828 = vmatprep.subr.bf16.mxu0 0
        %3829 = vmatpush1.bf16.msra.mxu0 0
        %3830 = vmatprep.subr.bf16.mxu0 0
        %3831 = vmatpush1.bf16.msra.mxu0 0
        %3832 = vmatprep.subr.bf16.mxu0 0
        %3833 = vmatpush1.bf16.msra.mxu0 0
        %3834 = vmatprep.subr.bf16.mxu0 0
        %3835 = vmatpush1.bf16.msra.mxu0 0
        %3836 = vmatprep.subr.bf16.mxu0 0
        %3837 = vmatpush1.bf16.msra.mxu0 0
        %3838 = vmatprep.subr.bf16.mxu0 0
        %3839 = vmatpush1.bf16.msra.mxu0 0
        %3840 = vmatprep.subr.bf16.mxu0 0
        %3841 = vmatpush1.bf16.msra.mxu0 0
        %3842 = vmatprep.subr.bf16.mxu0 0
        %3843 = vmatpush1.bf16.msra.mxu0 0
        %3844 = vmatprep.subr.bf16.mxu0 0
        %3845 = vmatpush1.bf16.msra.mxu0 0
        %3846 = vmatprep.mubr.bf16.mxu0 0
        %3847 = vmatmul.mubr.bf16.gmra.mrb[0].mxu0 %v3809
        %v3848 = vpop.f32.mrb[0].mxu0
        %v3849 = vadd.f32 0.0, %v3848
        %v3850 = vpop.f32.mrb[0].mxu0
        %v3851 = vpop.f32.mrb[0].mxu0
        %v3852 = vadd.f32 0.0, %v3851
        %v3853 = vpop.f32.mrb[0].mxu0
        %3854 = vmatprep.mubr.bf16.mxu0 0
        %3855 = vmatmul.mubr.bf16.gmra.mrb[0].mxu0 %v3812
        %v3856 = vpop.f32.mrb[0].mxu0
        %v3857 = vadd.f32 0.0, %v3856
        %v3858 = vpop.f32.mrb[0].mxu0
        %v3859 = vpop.f32.mrb[0].mxu0
        %v3860 = vadd.f32 0.0, %v3859
        %v3861 = vpop.f32.mrb[0].mxu0
        %3862 = vdwg.mxu0
        %3865 = vrot.lane.b32.xlu0 %v3518, 96
        %v3866 = vpop.permute.xlu0 %3865
        %3867 = vrot.lane.b32.xlu0 %v3519, 96
        %v3868 = vpop.permute.xlu0 %3867
        %3871 = vrot.lane.b32.xlu0 %v3522, 96
        %v3872 = vpop.permute.xlu0 %3871
        %3873 = vrot.lane.b32.xlu0 %v3523, 96
        %v3874 = vpop.permute.xlu0 %3873
        %v3876 = vsel %vm3530, %v3866, 0
        %v3879 = vsel %vm3530, %v3868, 0
        %v3882 = vsel %vm3530, %v3872, 0
        %v3885 = vsel %vm3530, %v3874, 0
        %3887 = vmatprep.subr.bf16.mxu0 0
        %3888 = vmatpush1.bf16.xpose.msra.mxu0 %v3882
        %3889 = vmatprep.subr.bf16.mxu0 0
        %3890 = vmatpush1.bf16.xpose.msra.mxu0 %v3885
        %3891 = vmatprep.subr.bf16.mxu0 0
        %3892 = vmatpush1.bf16.xpose.msra.mxu0 0
        %3893 = vmatprep.subr.bf16.mxu0 0
        %3894 = vmatpush1.bf16.xpose.msra.mxu0 0
        %3895 = vmatprep.subr.bf16.mxu0 0
        %3896 = vmatpush1.bf16.xpose.msra.mxu0 0
        %3897 = vmatprep.subr.bf16.mxu0 0
        %3898 = vmatpush1.bf16.xpose.msra.mxu0 0
        %3899 = vmatprep.subr.bf16.mxu0 0
        %3900 = vmatpush1.bf16.xpose.msra.mxu0 0
        %3901 = vmatprep.subr.bf16.mxu0 0
        %3902 = vmatpush1.bf16.xpose.msra.mxu0 0
        %3903 = vmatprep.subr.bf16.mxu0 0
        %3904 = vmatpush1.bf16.xpose.msra.mxu0 0
        %3905 = vmatprep.subr.bf16.mxu0 0
        %3906 = vmatpush1.bf16.xpose.msra.mxu0 0
        %3907 = vmatprep.subr.bf16.mxu0 0
        %3908 = vmatpush1.bf16.xpose.msra.mxu0 0
        %3909 = vmatprep.subr.bf16.mxu0 0
        %3910 = vmatpush1.bf16.xpose.msra.mxu0 0
        %3911 = vmatprep.subr.bf16.mxu0 0
        %3912 = vmatpush1.bf16.xpose.msra.mxu0 0
        %3913 = vmatprep.subr.bf16.mxu0 0
        %3914 = vmatpush1.bf16.xpose.msra.mxu0 0
        %3915 = vmatprep.subr.bf16.mxu0 0
        %3916 = vmatpush1.bf16.xpose.msra.mxu0 0
        %3917 = vmatprep.subr.bf16.mxu0 0
        %3918 = vmatpush1.bf16.xpose.msra.mxu0 0
        %3919 = vmatprep.mubr.bf16.mxu0 0
        %3920 = vmatmul.mubr.bf16.gmra.mrb[0].mxu0 %v3876
        %v3921 = vpop.f32.mrb[0].mxu0
        %v3922 = vadd.f32 0.0, %v3921
        %v3923 = vpop.f32.mrb[0].mxu0
        %v3924 = vpop.f32.mrb[0].mxu0
        %v3925 = vadd.f32 0.0, %v3924
        %v3926 = vpop.f32.mrb[0].mxu0
        %3927 = vmatprep.mubr.bf16.mxu0 0
        %3928 = vmatmul.mubr.bf16.gmra.mrb[0].mxu0 %v3879
        %v3929 = vpop.f32.mrb[0].mxu0
        %v3930 = vadd.f32 0.0, %v3929
        %v3931 = vpop.f32.mrb[0].mxu0
        %v3932 = vpop.f32.mrb[0].mxu0
        %v3933 = vadd.f32 0.0, %v3932
        %v3934 = vpop.f32.mrb[0].mxu0
        %3935 = vdwg.mxu0
        %3938 = vrot.lane.b32.xlu0 %v3520, 96
        %v3939 = vpop.permute.xlu0 %3938
        %3940 = vrot.lane.b32.xlu0 %v3521, 96
        %v3941 = vpop.permute.xlu0 %3940
        %3944 = vrot.lane.b32.xlu0 %v3524, 96
        %v3945 = vpop.permute.xlu0 %3944
        %3946 = vrot.lane.b32.xlu0 %v3525, 96
        %v3947 = vpop.permute.xlu0 %3946
        %v3949 = vsel %vm3530, %v3939, 0
        %v3952 = vsel %vm3530, %v3941, 0
        %v3955 = vsel %vm3530, %v3945, 0
        %v3958 = vsel %vm3530, %v3947, 0
        %3960 = vmatprep.subr.bf16.mxu0 0
        %3961 = vmatpush1.bf16.xpose.msra.mxu0 %v3955
        %3962 = vmatprep.subr.bf16.mxu0 0
        %3963 = vmatpush1.bf16.xpose.msra.mxu0 %v3958
        %3964 = vmatprep.subr.bf16.mxu0 0
        %3965 = vmatpush1.bf16.xpose.msra.mxu0 0
        %3966 = vmatprep.subr.bf16.mxu0 0
        %3967 = vmatpush1.bf16.xpose.msra.mxu0 0
        %3968 = vmatprep.subr.bf16.mxu0 0
        %3969 = vmatpush1.bf16.xpose.msra.mxu0 0
        %3970 = vmatprep.subr.bf16.mxu0 0
        %3971 = vmatpush1.bf16.xpose.msra.mxu0 0
        %3972 = vmatprep.subr.bf16.mxu0 0
        %3973 = vmatpush1.bf16.xpose.msra.mxu0 0
        %3974 = vmatprep.subr.bf16.mxu0 0
        %3975 = vmatpush1.bf16.xpose.msra.mxu0 0
        %3976 = vmatprep.subr.bf16.mxu0 0
        %3977 = vmatpush1.bf16.xpose.msra.mxu0 0
        %3978 = vmatprep.subr.bf16.mxu0 0
        %3979 = vmatpush1.bf16.xpose.msra.mxu0 0
        %3980 = vmatprep.subr.bf16.mxu0 0
        %3981 = vmatpush1.bf16.xpose.msra.mxu0 0
        %3982 = vmatprep.subr.bf16.mxu0 0
        %3983 = vmatpush1.bf16.xpose.msra.mxu0 0
        %3984 = vmatprep.subr.bf16.mxu0 0
        %3985 = vmatpush1.bf16.xpose.msra.mxu0 0
        %3986 = vmatprep.subr.bf16.mxu0 0
        %3987 = vmatpush1.bf16.xpose.msra.mxu0 0
        %3988 = vmatprep.subr.bf16.mxu0 0
        %3989 = vmatpush1.bf16.xpose.msra.mxu0 0
        %3990 = vmatprep.subr.bf16.mxu0 0
        %3991 = vmatpush1.bf16.xpose.msra.mxu0 0
        %3992 = vmatprep.mubr.bf16.mxu0 0
        %3993 = vmatmul.mubr.bf16.gmra.mrb[0].mxu0 %v3949
        %v3994 = vpop.f32.mrb[0].mxu0
        %v3995 = vadd.f32 0.0, %v3994
        %v3996 = vpop.f32.mrb[0].mxu0
        %v3997 = vpop.f32.mrb[0].mxu0
        %v3998 = vadd.f32 0.0, %v3997
        %v3999 = vpop.f32.mrb[0].mxu0
        %4000 = vmatprep.mubr.bf16.mxu0 0
        %4001 = vmatmul.mubr.bf16.gmra.mrb[0].mxu0 %v3952
        %v4002 = vpop.f32.mrb[0].mxu0
        %v4003 = vadd.f32 0.0, %v4002
        %v4004 = vpop.f32.mrb[0].mxu0
        %v4005 = vpop.f32.mrb[0].mxu0
        %v4006 = vadd.f32 0.0, %v4005
        %v4007 = vpop.f32.mrb[0].mxu0
        %4008 = vdwg.mxu0
        %v4009 = vmul.f32 %v3922, 0.17677669
        %v4010 = vmul.f32 %v3925, 0.17677669
        %v4011 = vmul.f32 %v3930, 0.17677669
        %v4012 = vmul.f32 %v3933, 0.17677669
        %v4013 = vmul.f32 %v3995, 0.17677669
        %v4014 = vmul.f32 %v3998, 0.17677669
        %v4015 = vmul.f32 %v4003, 0.17677669
        %v4016 = vmul.f32 %v4006, 0.17677669
        %v4017 = vsel %vm3530, %v4009, -inf
        %4018 = vmax.xlane.f32.xlu0 %v4017
        %v4019 = vpop.xlane.xlu0 %4018
        %v4020 = vsel %vm3530, %v4010, -inf
        %4021 = vmax.xlane.f32.xlu0 %v4020
        %v4022 = vpop.xlane.xlu0 %4021
        %v4023 = vsel %vm3530, %v4011, -inf
        %4024 = vmax.xlane.f32.xlu0 %v4023
        %v4025 = vpop.xlane.xlu0 %4024
        %v4026 = vsel %vm3530, %v4012, -inf
        %4027 = vmax.xlane.f32.xlu0 %v4026
        %v4028 = vpop.xlane.xlu0 %4027
        %v4029 = vsel %vm3530, %v4013, -inf
        %4030 = vmax.xlane.f32.xlu0 %v4029
        %v4031 = vpop.xlane.xlu0 %4030
        %v4032 = vsel %vm3530, %v4014, -inf
        %4033 = vmax.xlane.f32.xlu0 %v4032
        %v4034 = vpop.xlane.xlu0 %4033
        %v4035 = vsel %vm3530, %v4015, -inf
        %4036 = vmax.xlane.f32.xlu0 %v4035
        %v4037 = vpop.xlane.xlu0 %4036
        %v4038 = vsel %vm3530, %v4016, -inf
        %4039 = vmax.xlane.f32.xlu0 %v4038
        %v4040 = vpop.xlane.xlu0 %4039
        %v4041 = vsub.f32 %v4009, %v4019
        %v4042 = vsub.f32 %v4010, %v4022
        %v4043 = vsub.f32 %v4011, %v4025
        %v4044 = vsub.f32 %v4012, %v4028
        %v4045 = vsub.f32 %v4013, %v4031
        %v4046 = vsub.f32 %v4014, %v4034
        %v4047 = vsub.f32 %v4015, %v4037
        %v4048 = vsub.f32 %v4016, %v4040
        %v4049 = vmul.f32 %v4041, 1.442695
        %v4050 = vpow.pop %v4049
        %v4051 = vmul.f32 %v4042, 1.442695
        %v4052 = vpow.pop %v4051
        %v4053 = vmul.f32 %v4043, 1.442695
        %v4054 = vpow.pop %v4053
        %v4055 = vmul.f32 %v4044, 1.442695
        %v4056 = vpow.pop %v4055
        %v4057 = vmul.f32 %v4045, 1.442695
        %v4058 = vpow.pop %v4057
        %v4059 = vmul.f32 %v4046, 1.442695
        %v4060 = vpow.pop %v4059
        %v4061 = vmul.f32 %v4047, 1.442695
        %v4062 = vpow.pop %v4061
        %v4063 = vmul.f32 %v4048, 1.442695
        %v4064 = vpow.pop %v4063
        %v4065 = vsel %vm3530, %v4050, 0.0
        %4066 = vadd.xlane.f32.xlu0 %v4065
        %v4067 = vpop.xlane.xlu0 %4066
        %v4068 = vsel %vm3530, %v4052, 0.0
        %4069 = vadd.xlane.f32.xlu0 %v4068
        %v4070 = vpop.xlane.xlu0 %4069
        %v4071 = vsel %vm3530, %v4054, 0.0
        %4072 = vadd.xlane.f32.xlu0 %v4071
        %v4073 = vpop.xlane.xlu0 %4072
        %v4074 = vsel %vm3530, %v4056, 0.0
        %4075 = vadd.xlane.f32.xlu0 %v4074
        %v4076 = vpop.xlane.xlu0 %4075
        %v4077 = vsel %vm3530, %v4058, 0.0
        %4078 = vadd.xlane.f32.xlu0 %v4077
        %v4079 = vpop.xlane.xlu0 %4078
        %v4080 = vsel %vm3530, %v4060, 0.0
        %4081 = vadd.xlane.f32.xlu0 %v4080
        %v4082 = vpop.xlane.xlu0 %4081
        %v4083 = vsel %vm3530, %v4062, 0.0
        %4084 = vadd.xlane.f32.xlu0 %v4083
        %v4085 = vpop.xlane.xlu0 %4084
        %v4086 = vsel %vm3530, %v4064, 0.0
        %4087 = vadd.xlane.f32.xlu0 %v4086
        %v4088 = vpop.xlane.xlu0 %4087
        %v4089 = vrcp.pop %v4067
        %v4090 = vrcp.pop %v4070
        %v4091 = vrcp.pop %v4073
        %v4092 = vrcp.pop %v4076
        %v4093 = vrcp.pop %v4079
        %v4094 = vrcp.pop %v4082
        %v4095 = vrcp.pop %v4085
        %v4096 = vrcp.pop %v4088
        %v4097 = vmul.f32 %v4050, %v4089
        %v4098 = vmul.f32 %v4052, %v4090
        %v4099 = vmul.f32 %v4054, %v4091
        %v4100 = vmul.f32 %v4056, %v4092
        %v4101 = vmul.f32 %v4058, %v4093
        %v4102 = vmul.f32 %v4060, %v4094
        %v4103 = vmul.f32 %v4062, %v4095
        %v4104 = vmul.f32 %v4064, %v4096
        %v4105 = vpack.c.bf16 %v4098, %v4097
        %v4106 = vpack.c.bf16 %v4100, %v4099
        %v4107 = vpack.c.bf16 %v4102, %v4101
        %v4108 = vpack.c.bf16 %v4104, %v4103
        %4111 = vrot.lane.b32.xlu0 %v3526, 96
        %v4112 = vpop.permute.xlu0 %4111
        %4113 = vrot.lane.b32.xlu0 %v3527, 96
        %v4114 = vpop.permute.xlu0 %4113
        %v4118 = vsel %vm3530, %v4105, 0
        %v4121 = vsel %vm3530, %v4106, 0
        %4123 = vmatprep.subr.bf16.mxu0 0
        %4124 = vmatpush1.bf16.msra.mxu0 %v4112
        %4125 = vmatprep.subr.bf16.mxu0 0
        %4126 = vmatpush1.bf16.msra.mxu0 %v4114
        %4127 = vmatprep.subr.bf16.mxu0 0
        %4128 = vmatpush1.bf16.msra.mxu0 0
        %4129 = vmatprep.subr.bf16.mxu0 0
        %4130 = vmatpush1.bf16.msra.mxu0 0
        %4131 = vmatprep.subr.bf16.mxu0 0
        %4132 = vmatpush1.bf16.msra.mxu0 0
        %4133 = vmatprep.subr.bf16.mxu0 0
        %4134 = vmatpush1.bf16.msra.mxu0 0
        %4135 = vmatprep.subr.bf16.mxu0 0
        %4136 = vmatpush1.bf16.msra.mxu0 0
        %4137 = vmatprep.subr.bf16.mxu0 0
        %4138 = vmatpush1.bf16.msra.mxu0 0
        %4139 = vmatprep.subr.bf16.mxu0 0
        %4140 = vmatpush1.bf16.msra.mxu0 0
        %4141 = vmatprep.subr.bf16.mxu0 0
        %4142 = vmatpush1.bf16.msra.mxu0 0
        %4143 = vmatprep.subr.bf16.mxu0 0
        %4144 = vmatpush1.bf16.msra.mxu0 0
        %4145 = vmatprep.subr.bf16.mxu0 0
        %4146 = vmatpush1.bf16.msra.mxu0 0
        %4147 = vmatprep.subr.bf16.mxu0 0
        %4148 = vmatpush1.bf16.msra.mxu0 0
        %4149 = vmatprep.subr.bf16.mxu0 0
        %4150 = vmatpush1.bf16.msra.mxu0 0
        %4151 = vmatprep.subr.bf16.mxu0 0
        %4152 = vmatpush1.bf16.msra.mxu0 0
        %4153 = vmatprep.subr.bf16.mxu0 0
        %4154 = vmatpush1.bf16.msra.mxu0 0
        %4155 = vmatprep.mubr.bf16.mxu0 0
        %4156 = vmatmul.mubr.bf16.gmra.mrb[0].mxu0 %v4118
        %v4157 = vpop.f32.mrb[0].mxu0
        %v4158 = vadd.f32 0.0, %v4157
        %v4159 = vpop.f32.mrb[0].mxu0
        %v4160 = vpop.f32.mrb[0].mxu0
        %v4161 = vadd.f32 0.0, %v4160
        %v4162 = vpop.f32.mrb[0].mxu0
        %4163 = vmatprep.mubr.bf16.mxu0 0
        %4164 = vmatmul.mubr.bf16.gmra.mrb[0].mxu0 %v4121
        %v4165 = vpop.f32.mrb[0].mxu0
        %v4166 = vadd.f32 0.0, %v4165
        %v4167 = vpop.f32.mrb[0].mxu0
        %v4168 = vpop.f32.mrb[0].mxu0
        %v4169 = vadd.f32 0.0, %v4168
        %v4170 = vpop.f32.mrb[0].mxu0
        %4171 = vdwg.mxu0
        %4174 = vrot.lane.b32.xlu0 %v3528, 96
        %v4175 = vpop.permute.xlu0 %4174
        %4176 = vrot.lane.b32.xlu0 %v3529, 96
        %v4177 = vpop.permute.xlu0 %4176
        %v4181 = vsel %vm3530, %v4107, 0
        %v4184 = vsel %vm3530, %v4108, 0
        %4186 = vmatprep.subr.bf16.mxu0 0
        %4187 = vmatpush1.bf16.msra.mxu0 %v4175
        %4188 = vmatprep.subr.bf16.mxu0 0
        %4189 = vmatpush1.bf16.msra.mxu0 %v4177
        %4190 = vmatprep.subr.bf16.mxu0 0
        %4191 = vmatpush1.bf16.msra.mxu0 0
        %4192 = vmatprep.subr.bf16.mxu0 0
        %4193 = vmatpush1.bf16.msra.mxu0 0
        %4194 = vmatprep.subr.bf16.mxu0 0
        %4195 = vmatpush1.bf16.msra.mxu0 0
        %4196 = vmatprep.subr.bf16.mxu0 0
        %4197 = vmatpush1.bf16.msra.mxu0 0
        %4198 = vmatprep.subr.bf16.mxu0 0
        %4199 = vmatpush1.bf16.msra.mxu0 0
        %4200 = vmatprep.subr.bf16.mxu0 0
        %4201 = vmatpush1.bf16.msra.mxu0 0
        %4202 = vmatprep.subr.bf16.mxu0 0
        %4203 = vmatpush1.bf16.msra.mxu0 0
        %4204 = vmatprep.subr.bf16.mxu0 0
        %4205 = vmatpush1.bf16.msra.mxu0 0
        %4206 = vmatprep.subr.bf16.mxu0 0
        %4207 = vmatpush1.bf16.msra.mxu0 0
        %4208 = vmatprep.subr.bf16.mxu0 0
        %4209 = vmatpush1.bf16.msra.mxu0 0
        %4210 = vmatprep.subr.bf16.mxu0 0
        %4211 = vmatpush1.bf16.msra.mxu0 0
        %4212 = vmatprep.subr.bf16.mxu0 0
        %4213 = vmatpush1.bf16.msra.mxu0 0
        %4214 = vmatprep.subr.bf16.mxu0 0
        %4215 = vmatpush1.bf16.msra.mxu0 0
        %4216 = vmatprep.subr.bf16.mxu0 0
        %4217 = vmatpush1.bf16.msra.mxu0 0
        %4218 = vmatprep.mubr.bf16.mxu0 0
        %4219 = vmatmul.mubr.bf16.gmra.mrb[0].mxu0 %v4181
        %v4220 = vpop.f32.mrb[0].mxu0
        %v4221 = vadd.f32 0.0, %v4220
        %v4222 = vpop.f32.mrb[0].mxu0
        %v4223 = vpop.f32.mrb[0].mxu0
        %v4224 = vadd.f32 0.0, %v4223
        %v4225 = vpop.f32.mrb[0].mxu0
        %4226 = vmatprep.mubr.bf16.mxu0 0
        %4227 = vmatmul.mubr.bf16.gmra.mrb[0].mxu0 %v4184
        %v4228 = vpop.f32.mrb[0].mxu0
        %v4229 = vadd.f32 0.0, %v4228
        %v4230 = vpop.f32.mrb[0].mxu0
        %v4231 = vpop.f32.mrb[0].mxu0
        %v4232 = vadd.f32 0.0, %v4231
        %v4233 = vpop.f32.mrb[0].mxu0
        %4234 = vdwg.mxu0
        %4235 = vrot.lane.b32.xlu0 %v3518, 64
        %v4236 = vpop.permute.xlu0 %4235
        %4237 = vrot.lane.b32.xlu0 %v3519, 64
        %v4238 = vpop.permute.xlu0 %4237
        %4239 = vrot.lane.b32.xlu0 %v3522, 64
        %v4240 = vpop.permute.xlu0 %4239
        %4241 = vrot.lane.b32.xlu0 %v3523, 64
        %v4242 = vpop.permute.xlu0 %4241
        %v4244 = vsel %vm3530, %v4236, 0
        %v4247 = vsel %vm3530, %v4238, 0
        %v4250 = vsel %vm3530, %v4240, 0
        %v4253 = vsel %vm3530, %v4242, 0
        %4255 = vmatprep.subr.bf16.mxu0 0
        %4256 = vmatpush1.bf16.xpose.msra.mxu0 %v4250
        %4257 = vmatprep.subr.bf16.mxu0 0
        %4258 = vmatpush1.bf16.xpose.msra.mxu0 %v4253
        %4259 = vmatprep.subr.bf16.mxu0 0
        %4260 = vmatpush1.bf16.xpose.msra.mxu0 0
        %4261 = vmatprep.subr.bf16.mxu0 0
        %4262 = vmatpush1.bf16.xpose.msra.mxu0 0
        %4263 = vmatprep.subr.bf16.mxu0 0
        %4264 = vmatpush1.bf16.xpose.msra.mxu0 0
        %4265 = vmatprep.subr.bf16.mxu0 0
        %4266 = vmatpush1.bf16.xpose.msra.mxu0 0
        %4267 = vmatprep.subr.bf16.mxu0 0
        %4268 = vmatpush1.bf16.xpose.msra.mxu0 0
        %4269 = vmatprep.subr.bf16.mxu0 0
        %4270 = vmatpush1.bf16.xpose.msra.mxu0 0
        %4271 = vmatprep.subr.bf16.mxu0 0
        %4272 = vmatpush1.bf16.xpose.msra.mxu0 0
        %4273 = vmatprep.subr.bf16.mxu0 0
        %4274 = vmatpush1.bf16.xpose.msra.mxu0 0
        %4275 = vmatprep.subr.bf16.mxu0 0
        %4276 = vmatpush1.bf16.xpose.msra.mxu0 0
        %4277 = vmatprep.subr.bf16.mxu0 0
        %4278 = vmatpush1.bf16.xpose.msra.mxu0 0
        %4279 = vmatprep.subr.bf16.mxu0 0
        %4280 = vmatpush1.bf16.xpose.msra.mxu0 0
        %4281 = vmatprep.subr.bf16.mxu0 0
        %4282 = vmatpush1.bf16.xpose.msra.mxu0 0
        %4283 = vmatprep.subr.bf16.mxu0 0
        %4284 = vmatpush1.bf16.xpose.msra.mxu0 0
        %4285 = vmatprep.subr.bf16.mxu0 0
        %4286 = vmatpush1.bf16.xpose.msra.mxu0 0
        %4287 = vmatprep.mubr.bf16.mxu0 0
        %4288 = vmatmul.mubr.bf16.gmra.mrb[0].mxu0 %v4244
        %v4289 = vpop.f32.mrb[0].mxu0
        %v4290 = vadd.f32 0.0, %v4289
        %v4291 = vpop.f32.mrb[0].mxu0
        %v4292 = vpop.f32.mrb[0].mxu0
        %v4293 = vadd.f32 0.0, %v4292
        %v4294 = vpop.f32.mrb[0].mxu0
        %4295 = vmatprep.mubr.bf16.mxu0 0
        %4296 = vmatmul.mubr.bf16.gmra.mrb[0].mxu0 %v4247
        %v4297 = vpop.f32.mrb[0].mxu0
        %v4298 = vadd.f32 0.0, %v4297
        %v4299 = vpop.f32.mrb[0].mxu0
        %v4300 = vpop.f32.mrb[0].mxu0
        %v4301 = vadd.f32 0.0, %v4300
        %v4302 = vpop.f32.mrb[0].mxu0
        %4303 = vdwg.mxu0
        %4304 = vrot.lane.b32.xlu0 %v3520, 64
        %v4305 = vpop.permute.xlu0 %4304
        %4306 = vrot.lane.b32.xlu0 %v3521, 64
        %v4307 = vpop.permute.xlu0 %4306
        %4308 = vrot.lane.b32.xlu0 %v3524, 64
        %v4309 = vpop.permute.xlu0 %4308
        %4310 = vrot.lane.b32.xlu0 %v3525, 64
        %v4311 = vpop.permute.xlu0 %4310
        %v4313 = vsel %vm3530, %v4305, 0
        %v4316 = vsel %vm3530, %v4307, 0
        %v4319 = vsel %vm3530, %v4309, 0
        %v4322 = vsel %vm3530, %v4311, 0
        %4324 = vmatprep.subr.bf16.mxu0 0
        %4325 = vmatpush1.bf16.xpose.msra.mxu0 %v4319
        %4326 = vmatprep.subr.bf16.mxu0 0
        %4327 = vmatpush1.bf16.xpose.msra.mxu0 %v4322
        %4328 = vmatprep.subr.bf16.mxu0 0
        %4329 = vmatpush1.bf16.xpose.msra.mxu0 0
        %4330 = vmatprep.subr.bf16.mxu0 0
        %4331 = vmatpush1.bf16.xpose.msra.mxu0 0
        %4332 = vmatprep.subr.bf16.mxu0 0
        %4333 = vmatpush1.bf16.xpose.msra.mxu0 0
        %4334 = vmatprep.subr.bf16.mxu0 0
        %4335 = vmatpush1.bf16.xpose.msra.mxu0 0
        %4336 = vmatprep.subr.bf16.mxu0 0
        %4337 = vmatpush1.bf16.xpose.msra.mxu0 0
        %4338 = vmatprep.subr.bf16.mxu0 0
        %4339 = vmatpush1.bf16.xpose.msra.mxu0 0
        %4340 = vmatprep.subr.bf16.mxu0 0
        %4341 = vmatpush1.bf16.xpose.msra.mxu0 0
        %4342 = vmatprep.subr.bf16.mxu0 0
        %4343 = vmatpush1.bf16.xpose.msra.mxu0 0
        %4344 = vmatprep.subr.bf16.mxu0 0
        %4345 = vmatpush1.bf16.xpose.msra.mxu0 0
        %4346 = vmatprep.subr.bf16.mxu0 0
        %4347 = vmatpush1.bf16.xpose.msra.mxu0 0
        %4348 = vmatprep.subr.bf16.mxu0 0
        %4349 = vmatpush1.bf16.xpose.msra.mxu0 0
        %4350 = vmatprep.subr.bf16.mxu0 0
        %4351 = vmatpush1.bf16.xpose.msra.mxu0 0
        %4352 = vmatprep.subr.bf16.mxu0 0
        %4353 = vmatpush1.bf16.xpose.msra.mxu0 0
        %4354 = vmatprep.subr.bf16.mxu0 0
        %4355 = vmatpush1.bf16.xpose.msra.mxu0 0
        %4356 = vmatprep.mubr.bf16.mxu0 0
        %4357 = vmatmul.mubr.bf16.gmra.mrb[0].mxu0 %v4313
        %v4358 = vpop.f32.mrb[0].mxu0
        %v4359 = vadd.f32 0.0, %v4358
        %v4360 = vpop.f32.mrb[0].mxu0
        %v4361 = vpop.f32.mrb[0].mxu0
        %v4362 = vadd.f32 0.0, %v4361
        %v4363 = vpop.f32.mrb[0].mxu0
        %4364 = vmatprep.mubr.bf16.mxu0 0
        %4365 = vmatmul.mubr.bf16.gmra.mrb[0].mxu0 %v4316
        %v4366 = vpop.f32.mrb[0].mxu0
        %v4367 = vadd.f32 0.0, %v4366
        %v4368 = vpop.f32.mrb[0].mxu0
        %v4369 = vpop.f32.mrb[0].mxu0
        %v4370 = vadd.f32 0.0, %v4369
        %v4371 = vpop.f32.mrb[0].mxu0
        %4372 = vdwg.mxu0
        %v4373 = vmul.f32 %v4290, 0.17677669
        %v4374 = vmul.f32 %v4293, 0.17677669
        %v4375 = vmul.f32 %v4298, 0.17677669
        %v4376 = vmul.f32 %v4301, 0.17677669
        %v4377 = vmul.f32 %v4359, 0.17677669
        %v4378 = vmul.f32 %v4362, 0.17677669
        %v4379 = vmul.f32 %v4367, 0.17677669
        %v4380 = vmul.f32 %v4370, 0.17677669
        %v4381 = vsel %vm3530, %v4373, -inf
        %4382 = vmax.xlane.f32.xlu0 %v4381
        %v4383 = vpop.xlane.xlu0 %4382
        %v4384 = vsel %vm3530, %v4374, -inf
        %4385 = vmax.xlane.f32.xlu0 %v4384
        %v4386 = vpop.xlane.xlu0 %4385
        %v4387 = vsel %vm3530, %v4375, -inf
        %4388 = vmax.xlane.f32.xlu0 %v4387
        %v4389 = vpop.xlane.xlu0 %4388
        %v4390 = vsel %vm3530, %v4376, -inf
        %4391 = vmax.xlane.f32.xlu0 %v4390
        %v4392 = vpop.xlane.xlu0 %4391
        %v4393 = vsel %vm3530, %v4377, -inf
        %4394 = vmax.xlane.f32.xlu0 %v4393
        %v4395 = vpop.xlane.xlu0 %4394
        %v4396 = vsel %vm3530, %v4378, -inf
        %4397 = vmax.xlane.f32.xlu0 %v4396
        %v4398 = vpop.xlane.xlu0 %4397
        %v4399 = vsel %vm3530, %v4379, -inf
        %4400 = vmax.xlane.f32.xlu0 %v4399
        %v4401 = vpop.xlane.xlu0 %4400
        %v4402 = vsel %vm3530, %v4380, -inf
        %4403 = vmax.xlane.f32.xlu0 %v4402
        %v4404 = vpop.xlane.xlu0 %4403
        %v4405 = vsub.f32 %v4373, %v4383
        %v4406 = vsub.f32 %v4374, %v4386
        %v4407 = vsub.f32 %v4375, %v4389
        %v4408 = vsub.f32 %v4376, %v4392
        %v4409 = vsub.f32 %v4377, %v4395
        %v4410 = vsub.f32 %v4378, %v4398
        %v4411 = vsub.f32 %v4379, %v4401
        %v4412 = vsub.f32 %v4380, %v4404
        %v4413 = vmul.f32 %v4405, 1.442695
        %v4414 = vpow.pop %v4413
        %v4415 = vmul.f32 %v4406, 1.442695
        %v4416 = vpow.pop %v4415
        %v4417 = vmul.f32 %v4407, 1.442695
        %v4418 = vpow.pop %v4417
        %v4419 = vmul.f32 %v4408, 1.442695
        %v4420 = vpow.pop %v4419
        %v4421 = vmul.f32 %v4409, 1.442695
        %v4422 = vpow.pop %v4421
        %v4423 = vmul.f32 %v4410, 1.442695
        %v4424 = vpow.pop %v4423
        %v4425 = vmul.f32 %v4411, 1.442695
        %v4426 = vpow.pop %v4425
        %v4427 = vmul.f32 %v4412, 1.442695
        %v4428 = vpow.pop %v4427
        %v4429 = vsel %vm3530, %v4414, 0.0
        %4430 = vadd.xlane.f32.xlu0 %v4429
        %v4431 = vpop.xlane.xlu0 %4430
        %v4432 = vsel %vm3530, %v4416, 0.0
        %4433 = vadd.xlane.f32.xlu0 %v4432
        %v4434 = vpop.xlane.xlu0 %4433
        %v4435 = vsel %vm3530, %v4418, 0.0
        %4436 = vadd.xlane.f32.xlu0 %v4435
        %v4437 = vpop.xlane.xlu0 %4436
        %v4438 = vsel %vm3530, %v4420, 0.0
        %4439 = vadd.xlane.f32.xlu0 %v4438
        %v4440 = vpop.xlane.xlu0 %4439
        %v4441 = vsel %vm3530, %v4422, 0.0
        %4442 = vadd.xlane.f32.xlu0 %v4441
        %v4443 = vpop.xlane.xlu0 %4442
        %v4444 = vsel %vm3530, %v4424, 0.0
        %4445 = vadd.xlane.f32.xlu0 %v4444
        %v4446 = vpop.xlane.xlu0 %4445
        %v4447 = vsel %vm3530, %v4426, 0.0
        %4448 = vadd.xlane.f32.xlu0 %v4447
        %v4449 = vpop.xlane.xlu0 %4448
        %v4450 = vsel %vm3530, %v4428, 0.0
        %4451 = vadd.xlane.f32.xlu0 %v4450
        %v4452 = vpop.xlane.xlu0 %4451
        %v4453 = vrcp.pop %v4431
        %v4454 = vrcp.pop %v4434
        %v4455 = vrcp.pop %v4437
        %v4456 = vrcp.pop %v4440
        %v4457 = vrcp.pop %v4443
        %v4458 = vrcp.pop %v4446
        %v4459 = vrcp.pop %v4449
        %v4460 = vrcp.pop %v4452
        %v4461 = vmul.f32 %v4414, %v4453
        %v4462 = vmul.f32 %v4416, %v4454
        %v4463 = vmul.f32 %v4418, %v4455
        %v4464 = vmul.f32 %v4420, %v4456
        %v4465 = vmul.f32 %v4422, %v4457
        %v4466 = vmul.f32 %v4424, %v4458
        %v4467 = vmul.f32 %v4426, %v4459
        %v4468 = vmul.f32 %v4428, %v4460
        %v4469 = vpack.c.bf16 %v4462, %v4461
        %v4470 = vpack.c.bf16 %v4464, %v4463
        %v4471 = vpack.c.bf16 %v4466, %v4465
        %v4472 = vpack.c.bf16 %v4468, %v4467
        %4473 = vrot.lane.b32.xlu0 %v3526, 64
        %v4474 = vpop.permute.xlu0 %4473
        %4475 = vrot.lane.b32.xlu0 %v3527, 64
        %v4476 = vpop.permute.xlu0 %4475
        %v4480 = vsel %vm3530, %v4469, 0
        %v4483 = vsel %vm3530, %v4470, 0
        %4485 = vmatprep.subr.bf16.mxu0 0
        %4486 = vmatpush1.bf16.msra.mxu0 %v4474
        %4487 = vmatprep.subr.bf16.mxu0 0
        %4488 = vmatpush1.bf16.msra.mxu0 %v4476
        %4489 = vmatprep.subr.bf16.mxu0 0
        %4490 = vmatpush1.bf16.msra.mxu0 0
        %4491 = vmatprep.subr.bf16.mxu0 0
        %4492 = vmatpush1.bf16.msra.mxu0 0
        %4493 = vmatprep.subr.bf16.mxu0 0
        %4494 = vmatpush1.bf16.msra.mxu0 0
        %4495 = vmatprep.subr.bf16.mxu0 0
        %4496 = vmatpush1.bf16.msra.mxu0 0
        %4497 = vmatprep.subr.bf16.mxu0 0
        %4498 = vmatpush1.bf16.msra.mxu0 0
        %4499 = vmatprep.subr.bf16.mxu0 0
        %4500 = vmatpush1.bf16.msra.mxu0 0
        %4501 = vmatprep.subr.bf16.mxu0 0
        %4502 = vmatpush1.bf16.msra.mxu0 0
        %4503 = vmatprep.subr.bf16.mxu0 0
        %4504 = vmatpush1.bf16.msra.mxu0 0
        %4505 = vmatprep.subr.bf16.mxu0 0
        %4506 = vmatpush1.bf16.msra.mxu0 0
        %4507 = vmatprep.subr.bf16.mxu0 0
        %4508 = vmatpush1.bf16.msra.mxu0 0
        %4509 = vmatprep.subr.bf16.mxu0 0
        %4510 = vmatpush1.bf16.msra.mxu0 0
        %4511 = vmatprep.subr.bf16.mxu0 0
        %4512 = vmatpush1.bf16.msra.mxu0 0
        %4513 = vmatprep.subr.bf16.mxu0 0
        %4514 = vmatpush1.bf16.msra.mxu0 0
        %4515 = vmatprep.subr.bf16.mxu0 0
        %4516 = vmatpush1.bf16.msra.mxu0 0
        %4517 = vmatprep.mubr.bf16.mxu0 0
        %4518 = vmatmul.mubr.bf16.gmra.mrb[0].mxu0 %v4480
        %v4519 = vpop.f32.mrb[0].mxu0
        %v4520 = vadd.f32 0.0, %v4519
        %v4521 = vpop.f32.mrb[0].mxu0
        %v4522 = vpop.f32.mrb[0].mxu0
        %v4523 = vadd.f32 0.0, %v4522
        %v4524 = vpop.f32.mrb[0].mxu0
        %4525 = vmatprep.mubr.bf16.mxu0 0
        %4526 = vmatmul.mubr.bf16.gmra.mrb[0].mxu0 %v4483
        %v4527 = vpop.f32.mrb[0].mxu0
        %v4528 = vadd.f32 0.0, %v4527
        %v4529 = vpop.f32.mrb[0].mxu0
        %v4530 = vpop.f32.mrb[0].mxu0
        %v4531 = vadd.f32 0.0, %v4530
        %v4532 = vpop.f32.mrb[0].mxu0
        %4533 = vdwg.mxu0
        %4534 = vrot.lane.b32.xlu0 %v3528, 64
        %v4535 = vpop.permute.xlu0 %4534
        %4536 = vrot.lane.b32.xlu0 %v3529, 64
        %v4537 = vpop.permute.xlu0 %4536
        %v4541 = vsel %vm3530, %v4471, 0
        %v4544 = vsel %vm3530, %v4472, 0
        %4546 = vmatprep.subr.bf16.mxu0 0
        %4547 = vmatpush1.bf16.msra.mxu0 %v4535
        %4548 = vmatprep.subr.bf16.mxu0 0
        %4549 = vmatpush1.bf16.msra.mxu0 %v4537
        %4550 = vmatprep.subr.bf16.mxu0 0
        %4551 = vmatpush1.bf16.msra.mxu0 0
        %4552 = vmatprep.subr.bf16.mxu0 0
        %4553 = vmatpush1.bf16.msra.mxu0 0
        %4554 = vmatprep.subr.bf16.mxu0 0
        %4555 = vmatpush1.bf16.msra.mxu0 0
        %4556 = vmatprep.subr.bf16.mxu0 0
        %4557 = vmatpush1.bf16.msra.mxu0 0
        %4558 = vmatprep.subr.bf16.mxu0 0
        %4559 = vmatpush1.bf16.msra.mxu0 0
        %4560 = vmatprep.subr.bf16.mxu0 0
        %4561 = vmatpush1.bf16.msra.mxu0 0
        %4562 = vmatprep.subr.bf16.mxu0 0
        %4563 = vmatpush1.bf16.msra.mxu0 0
        %4564 = vmatprep.subr.bf16.mxu0 0
        %4565 = vmatpush1.bf16.msra.mxu0 0
        %4566 = vmatprep.subr.bf16.mxu0 0
        %4567 = vmatpush1.bf16.msra.mxu0 0
        %4568 = vmatprep.subr.bf16.mxu0 0
        %4569 = vmatpush1.bf16.msra.mxu0 0
        %4570 = vmatprep.subr.bf16.mxu0 0
        %4571 = vmatpush1.bf16.msra.mxu0 0
        %4572 = vmatprep.subr.bf16.mxu0 0
        %4573 = vmatpush1.bf16.msra.mxu0 0
        %4574 = vmatprep.subr.bf16.mxu0 0
        %4575 = vmatpush1.bf16.msra.mxu0 0
        %4576 = vmatprep.subr.bf16.mxu0 0
        %4577 = vmatpush1.bf16.msra.mxu0 0
        %4578 = vmatprep.mubr.bf16.mxu0 0
        %4579 = vmatmul.mubr.bf16.gmra.mrb[0].mxu0 %v4541
        %v4580 = vpop.f32.mrb[0].mxu0
        %v4581 = vadd.f32 0.0, %v4580
        %v4582 = vpop.f32.mrb[0].mxu0
        %v4583 = vpop.f32.mrb[0].mxu0
        %v4584 = vadd.f32 0.0, %v4583
        %v4585 = vpop.f32.mrb[0].mxu0
        %4586 = vmatprep.mubr.bf16.mxu0 0
        %4587 = vmatmul.mubr.bf16.gmra.mrb[0].mxu0 %v4544
        %v4588 = vpop.f32.mrb[0].mxu0
        %v4589 = vadd.f32 0.0, %v4588
        %v4590 = vpop.f32.mrb[0].mxu0
        %v4591 = vpop.f32.mrb[0].mxu0
        %v4592 = vadd.f32 0.0, %v4591
        %v4593 = vpop.f32.mrb[0].mxu0
        %4594 = vdwg.mxu0
        %4595 = vrot.lane.b32.xlu0 %v3518, 32
        %v4596 = vpop.permute.xlu0 %4595
        %4597 = vrot.lane.b32.xlu0 %v3519, 32
        %v4598 = vpop.permute.xlu0 %4597
        %4599 = vrot.lane.b32.xlu0 %v3522, 32
        %v4600 = vpop.permute.xlu0 %4599
        %4601 = vrot.lane.b32.xlu0 %v3523, 32
        %v4602 = vpop.permute.xlu0 %4601
        %v4604 = vsel %vm3530, %v4596, 0
        %v4607 = vsel %vm3530, %v4598, 0
        %v4610 = vsel %vm3530, %v4600, 0
        %v4613 = vsel %vm3530, %v4602, 0
        %4615 = vmatprep.subr.bf16.mxu0 0
        %4616 = vmatpush1.bf16.xpose.msra.mxu0 %v4610
        %4617 = vmatprep.subr.bf16.mxu0 0
        %4618 = vmatpush1.bf16.xpose.msra.mxu0 %v4613
        %4619 = vmatprep.subr.bf16.mxu0 0
        %4620 = vmatpush1.bf16.xpose.msra.mxu0 0
        %4621 = vmatprep.subr.bf16.mxu0 0
        %4622 = vmatpush1.bf16.xpose.msra.mxu0 0
        %4623 = vmatprep.subr.bf16.mxu0 0
        %4624 = vmatpush1.bf16.xpose.msra.mxu0 0
        %4625 = vmatprep.subr.bf16.mxu0 0
        %4626 = vmatpush1.bf16.xpose.msra.mxu0 0
        %4627 = vmatprep.subr.bf16.mxu0 0
        %4628 = vmatpush1.bf16.xpose.msra.mxu0 0
        %4629 = vmatprep.subr.bf16.mxu0 0
        %4630 = vmatpush1.bf16.xpose.msra.mxu0 0
        %4631 = vmatprep.subr.bf16.mxu0 0
        %4632 = vmatpush1.bf16.xpose.msra.mxu0 0
        %4633 = vmatprep.subr.bf16.mxu0 0
        %4634 = vmatpush1.bf16.xpose.msra.mxu0 0
        %4635 = vmatprep.subr.bf16.mxu0 0
        %4636 = vmatpush1.bf16.xpose.msra.mxu0 0
        %4637 = vmatprep.subr.bf16.mxu0 0
        %4638 = vmatpush1.bf16.xpose.msra.mxu0 0
        %4639 = vmatprep.subr.bf16.mxu0 0
        %4640 = vmatpush1.bf16.xpose.msra.mxu0 0
        %4641 = vmatprep.subr.bf16.mxu0 0
        %4642 = vmatpush1.bf16.xpose.msra.mxu0 0
        %4643 = vmatprep.subr.bf16.mxu0 0
        %4644 = vmatpush1.bf16.xpose.msra.mxu0 0
        %4645 = vmatprep.subr.bf16.mxu0 0
        %4646 = vmatpush1.bf16.xpose.msra.mxu0 0
        %4647 = vmatprep.mubr.bf16.mxu0 0
        %4648 = vmatmul.mubr.bf16.gmra.mrb[0].mxu0 %v4604
        %v4649 = vpop.f32.mrb[0].mxu0
        %v4650 = vadd.f32 0.0, %v4649
        %v4651 = vpop.f32.mrb[0].mxu0
        %v4652 = vpop.f32.mrb[0].mxu0
        %v4653 = vadd.f32 0.0, %v4652
        %v4654 = vpop.f32.mrb[0].mxu0
        %4655 = vmatprep.mubr.bf16.mxu0 0
        %4656 = vmatmul.mubr.bf16.gmra.mrb[0].mxu0 %v4607
        %v4657 = vpop.f32.mrb[0].mxu0
        %v4658 = vadd.f32 0.0, %v4657
        %v4659 = vpop.f32.mrb[0].mxu0
        %v4660 = vpop.f32.mrb[0].mxu0
        %v4661 = vadd.f32 0.0, %v4660
        %v4662 = vpop.f32.mrb[0].mxu0
        %4663 = vdwg.mxu0
        %4664 = vrot.lane.b32.xlu0 %v3520, 32
        %v4665 = vpop.permute.xlu0 %4664
        %4666 = vrot.lane.b32.xlu0 %v3521, 32
        %v4667 = vpop.permute.xlu0 %4666
        %4668 = vrot.lane.b32.xlu0 %v3524, 32
        %v4669 = vpop.permute.xlu0 %4668
        %4670 = vrot.lane.b32.xlu0 %v3525, 32
        %v4671 = vpop.permute.xlu0 %4670
        %v4673 = vsel %vm3530, %v4665, 0
        %v4676 = vsel %vm3530, %v4667, 0
        %v4679 = vsel %vm3530, %v4669, 0
        %v4682 = vsel %vm3530, %v4671, 0
        %4684 = vmatprep.subr.bf16.mxu0 0
        %4685 = vmatpush1.bf16.xpose.msra.mxu0 %v4679
        %4686 = vmatprep.subr.bf16.mxu0 0
        %4687 = vmatpush1.bf16.xpose.msra.mxu0 %v4682
        %4688 = vmatprep.subr.bf16.mxu0 0
        %4689 = vmatpush1.bf16.xpose.msra.mxu0 0
        %4690 = vmatprep.subr.bf16.mxu0 0
        %4691 = vmatpush1.bf16.xpose.msra.mxu0 0
        %4692 = vmatprep.subr.bf16.mxu0 0
        %4693 = vmatpush1.bf16.xpose.msra.mxu0 0
        %4694 = vmatprep.subr.bf16.mxu0 0
        %4695 = vmatpush1.bf16.xpose.msra.mxu0 0
        %4696 = vmatprep.subr.bf16.mxu0 0
        %4697 = vmatpush1.bf16.xpose.msra.mxu0 0
        %4698 = vmatprep.subr.bf16.mxu0 0
        %4699 = vmatpush1.bf16.xpose.msra.mxu0 0
        %4700 = vmatprep.subr.bf16.mxu0 0
        %4701 = vmatpush1.bf16.xpose.msra.mxu0 0
        %4702 = vmatprep.subr.bf16.mxu0 0
        %4703 = vmatpush1.bf16.xpose.msra.mxu0 0
        %4704 = vmatprep.subr.bf16.mxu0 0
        %4705 = vmatpush1.bf16.xpose.msra.mxu0 0
        %4706 = vmatprep.subr.bf16.mxu0 0
        %4707 = vmatpush1.bf16.xpose.msra.mxu0 0
        %4708 = vmatprep.subr.bf16.mxu0 0
        %4709 = vmatpush1.bf16.xpose.msra.mxu0 0
        %4710 = vmatprep.subr.bf16.mxu0 0
        %4711 = vmatpush1.bf16.xpose.msra.mxu0 0
        %4712 = vmatprep.subr.bf16.mxu0 0
        %4713 = vmatpush1.bf16.xpose.msra.mxu0 0
        %4714 = vmatprep.subr.bf16.mxu0 0
        %4715 = vmatpush1.bf16.xpose.msra.mxu0 0
        %4716 = vmatprep.mubr.bf16.mxu0 0
        %4717 = vmatmul.mubr.bf16.gmra.mrb[0].mxu0 %v4673
        %v4718 = vpop.f32.mrb[0].mxu0
        %v4719 = vadd.f32 0.0, %v4718
        %v4720 = vpop.f32.mrb[0].mxu0
        %v4721 = vpop.f32.mrb[0].mxu0
        %v4722 = vadd.f32 0.0, %v4721
        %v4723 = vpop.f32.mrb[0].mxu0
        %4724 = vmatprep.mubr.bf16.mxu0 0
        %4725 = vmatmul.mubr.bf16.gmra.mrb[0].mxu0 %v4676
        %v4726 = vpop.f32.mrb[0].mxu0
        %v4727 = vadd.f32 0.0, %v4726
        %v4728 = vpop.f32.mrb[0].mxu0
        %v4729 = vpop.f32.mrb[0].mxu0
        %v4730 = vadd.f32 0.0, %v4729
        %v4731 = vpop.f32.mrb[0].mxu0
        %4732 = vdwg.mxu0
        %v4733 = vmul.f32 %v4650, 0.17677669
        %v4734 = vmul.f32 %v4653, 0.17677669
        %v4735 = vmul.f32 %v4658, 0.17677669
        %v4736 = vmul.f32 %v4661, 0.17677669
        %v4737 = vmul.f32 %v4719, 0.17677669
        %v4738 = vmul.f32 %v4722, 0.17677669
        %v4739 = vmul.f32 %v4727, 0.17677669
        %v4740 = vmul.f32 %v4730, 0.17677669
        %v4741 = vsel %vm3530, %v4733, -inf
        %4742 = vmax.xlane.f32.xlu0 %v4741
        %v4743 = vpop.xlane.xlu0 %4742
        %v4744 = vsel %vm3530, %v4734, -inf
        %4745 = vmax.xlane.f32.xlu0 %v4744
        %v4746 = vpop.xlane.xlu0 %4745
        %v4747 = vsel %vm3530, %v4735, -inf
        %4748 = vmax.xlane.f32.xlu0 %v4747
        %v4749 = vpop.xlane.xlu0 %4748
        %v4750 = vsel %vm3530, %v4736, -inf
        %4751 = vmax.xlane.f32.xlu0 %v4750
        %v4752 = vpop.xlane.xlu0 %4751
        %v4753 = vsel %vm3530, %v4737, -inf
        %4754 = vmax.xlane.f32.xlu0 %v4753
        %v4755 = vpop.xlane.xlu0 %4754
        %v4756 = vsel %vm3530, %v4738, -inf
        %4757 = vmax.xlane.f32.xlu0 %v4756
        %v4758 = vpop.xlane.xlu0 %4757
        %v4759 = vsel %vm3530, %v4739, -inf
        %4760 = vmax.xlane.f32.xlu0 %v4759
        %v4761 = vpop.xlane.xlu0 %4760
        %v4762 = vsel %vm3530, %v4740, -inf
        %4763 = vmax.xlane.f32.xlu0 %v4762
        %v4764 = vpop.xlane.xlu0 %4763
        %v4765 = vsub.f32 %v4733, %v4743
        %v4766 = vsub.f32 %v4734, %v4746
        %v4767 = vsub.f32 %v4735, %v4749
        %v4768 = vsub.f32 %v4736, %v4752
        %v4769 = vsub.f32 %v4737, %v4755
        %v4770 = vsub.f32 %v4738, %v4758
        %v4771 = vsub.f32 %v4739, %v4761
        %v4772 = vsub.f32 %v4740, %v4764
        %v4773 = vmul.f32 %v4765, 1.442695
        %v4774 = vpow.pop %v4773
        %v4775 = vmul.f32 %v4766, 1.442695
        %v4776 = vpow.pop %v4775
        %v4777 = vmul.f32 %v4767, 1.442695
        %v4778 = vpow.pop %v4777
        %v4779 = vmul.f32 %v4768, 1.442695
        %v4780 = vpow.pop %v4779
        %v4781 = vmul.f32 %v4769, 1.442695
        %v4782 = vpow.pop %v4781
        %v4783 = vmul.f32 %v4770, 1.442695
        %v4784 = vpow.pop %v4783
        %v4785 = vmul.f32 %v4771, 1.442695
        %v4786 = vpow.pop %v4785
        %v4787 = vmul.f32 %v4772, 1.442695
        %v4788 = vpow.pop %v4787
        %v4789 = vsel %vm3530, %v4774, 0.0
        %4790 = vadd.xlane.f32.xlu0 %v4789
        %v4791 = vpop.xlane.xlu0 %4790
        %v4792 = vsel %vm3530, %v4776, 0.0
        %4793 = vadd.xlane.f32.xlu0 %v4792
        %v4794 = vpop.xlane.xlu0 %4793
        %v4795 = vsel %vm3530, %v4778, 0.0
        %4796 = vadd.xlane.f32.xlu0 %v4795
        %v4797 = vpop.xlane.xlu0 %4796
        %v4798 = vsel %vm3530, %v4780, 0.0
        %4799 = vadd.xlane.f32.xlu0 %v4798
        %v4800 = vpop.xlane.xlu0 %4799
        %v4801 = vsel %vm3530, %v4782, 0.0
        %4802 = vadd.xlane.f32.xlu0 %v4801
        %v4803 = vpop.xlane.xlu0 %4802
        %v4804 = vsel %vm3530, %v4784, 0.0
        %4805 = vadd.xlane.f32.xlu0 %v4804
        %v4806 = vpop.xlane.xlu0 %4805
        %v4807 = vsel %vm3530, %v4786, 0.0
        %4808 = vadd.xlane.f32.xlu0 %v4807
        %v4809 = vpop.xlane.xlu0 %4808
        %v4810 = vsel %vm3530, %v4788, 0.0
        %4811 = vadd.xlane.f32.xlu0 %v4810
        %v4812 = vpop.xlane.xlu0 %4811
        %v4813 = vrcp.pop %v4791
        %v4814 = vrcp.pop %v4794
        %v4815 = vrcp.pop %v4797
        %v4816 = vrcp.pop %v4800
        %v4817 = vrcp.pop %v4803
        %v4818 = vrcp.pop %v4806
        %v4819 = vrcp.pop %v4809
        %v4820 = vrcp.pop %v4812
        %v4821 = vmul.f32 %v4774, %v4813
        %v4822 = vmul.f32 %v4776, %v4814
        %v4823 = vmul.f32 %v4778, %v4815
        %v4824 = vmul.f32 %v4780, %v4816
        %v4825 = vmul.f32 %v4782, %v4817
        %v4826 = vmul.f32 %v4784, %v4818
        %v4827 = vmul.f32 %v4786, %v4819
        %v4828 = vmul.f32 %v4788, %v4820
        %v4829 = vpack.c.bf16 %v4822, %v4821
        %v4830 = vpack.c.bf16 %v4824, %v4823
        %v4831 = vpack.c.bf16 %v4826, %v4825
        %v4832 = vpack.c.bf16 %v4828, %v4827
        %4833 = vrot.lane.b32.xlu0 %v3526, 32
        %v4834 = vpop.permute.xlu0 %4833
        %4835 = vrot.lane.b32.xlu0 %v3527, 32
        %v4836 = vpop.permute.xlu0 %4835
        %v4840 = vsel %vm3530, %v4829, 0
        %v4843 = vsel %vm3530, %v4830, 0
        %4845 = vmatprep.subr.bf16.mxu0 0
        %4846 = vmatpush1.bf16.msra.mxu0 %v4834
        %4847 = vmatprep.subr.bf16.mxu0 0
        %4848 = vmatpush1.bf16.msra.mxu0 %v4836
        %4849 = vmatprep.subr.bf16.mxu0 0
        %4850 = vmatpush1.bf16.msra.mxu0 0
        %4851 = vmatprep.subr.bf16.mxu0 0
        %4852 = vmatpush1.bf16.msra.mxu0 0
        %4853 = vmatprep.subr.bf16.mxu0 0
        %4854 = vmatpush1.bf16.msra.mxu0 0
        %4855 = vmatprep.subr.bf16.mxu0 0
        %4856 = vmatpush1.bf16.msra.mxu0 0
        %4857 = vmatprep.subr.bf16.mxu0 0
        %4858 = vmatpush1.bf16.msra.mxu0 0
        %4859 = vmatprep.subr.bf16.mxu0 0
        %4860 = vmatpush1.bf16.msra.mxu0 0
        %4861 = vmatprep.subr.bf16.mxu0 0
        %4862 = vmatpush1.bf16.msra.mxu0 0
        %4863 = vmatprep.subr.bf16.mxu0 0
        %4864 = vmatpush1.bf16.msra.mxu0 0
        %4865 = vmatprep.subr.bf16.mxu0 0
        %4866 = vmatpush1.bf16.msra.mxu0 0
        %4867 = vmatprep.subr.bf16.mxu0 0
        %4868 = vmatpush1.bf16.msra.mxu0 0
        %4869 = vmatprep.subr.bf16.mxu0 0
        %4870 = vmatpush1.bf16.msra.mxu0 0
        %4871 = vmatprep.subr.bf16.mxu0 0
        %4872 = vmatpush1.bf16.msra.mxu0 0
        %4873 = vmatprep.subr.bf16.mxu0 0
        %4874 = vmatpush1.bf16.msra.mxu0 0
        %4875 = vmatprep.subr.bf16.mxu0 0
        %4876 = vmatpush1.bf16.msra.mxu0 0
        %4877 = vmatprep.mubr.bf16.mxu0 0
        %4878 = vmatmul.mubr.bf16.gmra.mrb[0].mxu0 %v4840
        %v4879 = vpop.f32.mrb[0].mxu0
        %v4880 = vadd.f32 0.0, %v4879
        %v4881 = vpop.f32.mrb[0].mxu0
        %v4882 = vpop.f32.mrb[0].mxu0
        %v4883 = vadd.f32 0.0, %v4882
        %v4884 = vpop.f32.mrb[0].mxu0
        %4885 = vmatprep.mubr.bf16.mxu0 0
        %4886 = vmatmul.mubr.bf16.gmra.mrb[0].mxu0 %v4843
        %v4887 = vpop.f32.mrb[0].mxu0
        %v4888 = vadd.f32 0.0, %v4887
        %v4889 = vpop.f32.mrb[0].mxu0
        %v4890 = vpop.f32.mrb[0].mxu0
        %v4891 = vadd.f32 0.0, %v4890
        %v4892 = vpop.f32.mrb[0].mxu0
        %4893 = vdwg.mxu0
        %4894 = vrot.lane.b32.xlu0 %v3528, 32
        %v4895 = vpop.permute.xlu0 %4894
        %4896 = vrot.lane.b32.xlu0 %v3529, 32
        %v4897 = vpop.permute.xlu0 %4896
        %v4901 = vsel %vm3530, %v4831, 0
        %v4904 = vsel %vm3530, %v4832, 0
        %4906 = vmatprep.subr.bf16.mxu0 0
        %4907 = vmatpush1.bf16.msra.mxu0 %v4895
        %4908 = vmatprep.subr.bf16.mxu0 0
        %4909 = vmatpush1.bf16.msra.mxu0 %v4897
        %4910 = vmatprep.subr.bf16.mxu0 0
        %4911 = vmatpush1.bf16.msra.mxu0 0
        %4912 = vmatprep.subr.bf16.mxu0 0
        %4913 = vmatpush1.bf16.msra.mxu0 0
        %4914 = vmatprep.subr.bf16.mxu0 0
        %4915 = vmatpush1.bf16.msra.mxu0 0
        %4916 = vmatprep.subr.bf16.mxu0 0
        %4917 = vmatpush1.bf16.msra.mxu0 0
        %4918 = vmatprep.subr.bf16.mxu0 0
        %4919 = vmatpush1.bf16.msra.mxu0 0
        %4920 = vmatprep.subr.bf16.mxu0 0
        %4921 = vmatpush1.bf16.msra.mxu0 0
        %4922 = vmatprep.subr.bf16.mxu0 0
        %4923 = vmatpush1.bf16.msra.mxu0 0
        %4924 = vmatprep.subr.bf16.mxu0 0
        %4925 = vmatpush1.bf16.msra.mxu0 0
        %4926 = vmatprep.subr.bf16.mxu0 0
        %4927 = vmatpush1.bf16.msra.mxu0 0
        %4928 = vmatprep.subr.bf16.mxu0 0
        %4929 = vmatpush1.bf16.msra.mxu0 0
        %4930 = vmatprep.subr.bf16.mxu0 0
        %4931 = vmatpush1.bf16.msra.mxu0 0
        %4932 = vmatprep.subr.bf16.mxu0 0
        %4933 = vmatpush1.bf16.msra.mxu0 0
        %4934 = vmatprep.subr.bf16.mxu0 0
        %4935 = vmatpush1.bf16.msra.mxu0 0
        %4936 = vmatprep.subr.bf16.mxu0 0
        %4937 = vmatpush1.bf16.msra.mxu0 0
        %4938 = vmatprep.mubr.bf16.mxu0 0
        %4939 = vmatmul.mubr.bf16.gmra.mrb[0].mxu0 %v4901
        %v4940 = vpop.f32.mrb[0].mxu0
        %v4941 = vadd.f32 0.0, %v4940
        %v4942 = vpop.f32.mrb[0].mxu0
        %v4943 = vpop.f32.mrb[0].mxu0
        %v4944 = vadd.f32 0.0, %v4943
        %v4945 = vpop.f32.mrb[0].mxu0
        %4946 = vmatprep.mubr.bf16.mxu0 0
        %4947 = vmatmul.mubr.bf16.gmra.mrb[0].mxu0 %v4904
        %v4948 = vpop.f32.mrb[0].mxu0
        %v4949 = vadd.f32 0.0, %v4948
        %v4950 = vpop.f32.mrb[0].mxu0
        %v4951 = vpop.f32.mrb[0].mxu0
        %v4952 = vadd.f32 0.0, %v4951
        %v4953 = vpop.f32.mrb[0].mxu0
        %4954 = vdwg.mxu0
        %4963 = vrot.lane.b32.xlu0 %v4158, 32
        %v4964 = vpop.permute.xlu0 %4963
        %4965 = vrot.lane.b32.xlu0 %v4161, 32
        %v4966 = vpop.permute.xlu0 %4965
        %4967 = vrot.lane.b32.xlu0 %v4166, 32
        %v4968 = vpop.permute.xlu0 %4967
        %4969 = vrot.lane.b32.xlu0 %v4169, 32
        %v4970 = vpop.permute.xlu0 %4969
        %4971 = vrot.lane.b32.xlu0 %v4221, 32
        %v4972 = vpop.permute.xlu0 %4971
        %4973 = vrot.lane.b32.xlu0 %v4224, 32
        %v4974 = vpop.permute.xlu0 %4973
        %4975 = vrot.lane.b32.xlu0 %v4229, 32
        %v4976 = vpop.permute.xlu0 %4975
        %4977 = vrot.lane.b32.xlu0 %v4232, 32
        %v4978 = vpop.permute.xlu0 %4977
        %4995 = vrot.lane.b32.xlu0 %v4520, 64
        %v4996 = vpop.permute.xlu0 %4995
        %4997 = vrot.lane.b32.xlu0 %v4523, 64
        %v4998 = vpop.permute.xlu0 %4997
        %4999 = vrot.lane.b32.xlu0 %v4528, 64
        %v5000 = vpop.permute.xlu0 %4999
        %5001 = vrot.lane.b32.xlu0 %v4531, 64
        %v5002 = vpop.permute.xlu0 %5001
        %5003 = vrot.lane.b32.xlu0 %v4581, 64
        %v5004 = vpop.permute.xlu0 %5003
        %5005 = vrot.lane.b32.xlu0 %v4584, 64
        %v5006 = vpop.permute.xlu0 %5005
        %5007 = vrot.lane.b32.xlu0 %v4589, 64
        %v5008 = vpop.permute.xlu0 %5007
        %5009 = vrot.lane.b32.xlu0 %v4592, 64
        %v5010 = vpop.permute.xlu0 %5009
        %5027 = vrot.lane.b32.xlu0 %v4880, 96
        %v5028 = vpop.permute.xlu0 %5027
        %5029 = vrot.lane.b32.xlu0 %v4883, 96
        %v5030 = vpop.permute.xlu0 %5029
        %5031 = vrot.lane.b32.xlu0 %v4888, 96
        %v5032 = vpop.permute.xlu0 %5031
        %5033 = vrot.lane.b32.xlu0 %v4891, 96
        %v5034 = vpop.permute.xlu0 %5033
        %5035 = vrot.lane.b32.xlu0 %v4941, 96
        %v5036 = vpop.permute.xlu0 %5035
        %5037 = vrot.lane.b32.xlu0 %v4944, 96
        %v5038 = vpop.permute.xlu0 %5037
        %5039 = vrot.lane.b32.xlu0 %v4949, 96
        %v5040 = vpop.permute.xlu0 %5039
        %5041 = vrot.lane.b32.xlu0 %v4952, 96
        %v5042 = vpop.permute.xlu0 %5041
        %v5051 = vsel %vm3530, %v3794, %v4964
        %v5052 = vsel %vm3530, %v3797, %v4966
        %v5053 = vsel %vm3530, %v3802, %v4968
        %v5054 = vsel %vm3530, %v3805, %v4970
        %v5055 = vsel %vm3530, %v3849, %v4972
        %v5056 = vsel %vm3530, %v3852, %v4974
        %v5057 = vsel %vm3530, %v3857, %v4976
        %v5058 = vsel %vm3530, %v3860, %v4978
        %vm5059 = vcmask 523264
        %v5060 = vsel %vm5059, %v5051, %v4996
        %v5061 = vsel %vm5059, %v5052, %v4998
        %v5062 = vsel %vm5059, %v5053, %v5000
        %v5063 = vsel %vm5059, %v5054, %v5002
        %v5064 = vsel %vm5059, %v5055, %v5004
        %v5065 = vsel %vm5059, %v5056, %v5006
        %v5066 = vsel %vm5059, %v5057, %v5008
        %v5067 = vsel %vm5059, %v5058, %v5010
        %vm5068 = vcmask 785408
        %v5069 = vsel %vm5068, %v5060, %v5028
        %v5070 = vsel %vm5068, %v5061, %v5030
        %v5071 = vsel %vm5068, %v5062, %v5032
        %v5072 = vsel %vm5068, %v5063, %v5034
        %v5073 = vsel %vm5068, %v5064, %v5036
        %v5074 = vsel %vm5068, %v5065, %v5038
        %v5075 = vsel %vm5068, %v5066, %v5040
        %v5076 = vsel %vm5068, %v5067, %v5042
        %v5077 = vld [vmem:[%s1886] sm:$0xf]
        %v5078 = vld [vmem:[%s1886 + $0x4] sm:$0xf]
        %v5079 = vld [vmem:[%s1886 + $0x8] sm:$0xf]
        %v5080 = vld [vmem:[%s1886 + $0xc] sm:$0xf]
        %v5081 = vld [vmem:[%s1886 + $0x10] sm:$0xf]
        %v5082 = vld [vmem:[%s1886 + $0x14] sm:$0xf]
        %v5083 = vld [vmem:[%s1886 + $0x18] sm:$0xf]
        %v5084 = vld [vmem:[%s1886 + $0x1c] sm:$0xf]
        %v5085 = vld [vmem:[%s1886 + $0x20] sm:$0xf]
        %v5086 = vld [vmem:[%s1886 + $0x24] sm:$0xf]
        %v5087 = vld [vmem:[%s1886 + $0x28] sm:$0xf]
        %v5088 = vld [vmem:[%s1886 + $0x2c] sm:$0xf]
        %v5089 = vld [vmem:[%s1886 + $0x30] sm:$0xf]
        %v5090 = vld [vmem:[%s1886 + $0x34] sm:$0xf]
        %v5091 = vld [vmem:[%s1886 + $0x38] sm:$0xf]
        %v5092 = vld [vmem:[%s1886 + $0x3c] sm:$0xf]
        %v5093 = vpack.c.bf16 %v5070, %v5069
        %v5094 = vpack.c.bf16 %v5072, %v5071
        %v5095 = vpack.c.bf16 %v5074, %v5073
        %v5096 = vpack.c.bf16 %v5076, %v5075
        %v5113 = vunpack.c.l.b16 %v5077
        %v5114 = vunpack.c.l.b16 %v5078
        %v5115 = vunpack.c.l.b16 %v5079
        %v5116 = vunpack.c.l.b16 %v5080
        %v5117 = vunpack.c.l.b16 %v5081
        %v5118 = vunpack.c.l.b16 %v5082
        %v5119 = vunpack.c.l.b16 %v5083
        %v5120 = vunpack.c.l.b16 %v5084
        %v5121 = vunpack.c.l.b16 %v5085
        %v5122 = vunpack.c.l.b16 %v5086
        %v5123 = vunpack.c.l.b16 %v5087
        %v5124 = vunpack.c.l.b16 %v5088
        %v5125 = vunpack.c.l.b16 %v5089
        %v5126 = vunpack.c.l.b16 %v5090
        %v5127 = vunpack.c.l.b16 %v5091
        %v5128 = vunpack.c.l.b16 %v5092
        %v5129 = vpack.c.b16 %v5114, %v5113
        %v5130 = vpack.c.b16 %v5116, %v5115
        %v5131 = vpack.c.b16 %v5118, %v5117
        %v5132 = vpack.c.b16 %v5120, %v5119
        %v5133 = vpack.c.b16 %v5122, %v5121
        %v5134 = vpack.c.b16 %v5124, %v5123
        %v5135 = vpack.c.b16 %v5126, %v5125
        %v5136 = vpack.c.b16 %v5128, %v5127
        %5145 = vmatprep.subr.bf16.mxu0 0
        %5146 = vmatpush1.bf16.msra.mxu0 %v5129
        %5147 = vmatprep.subr.bf16.mxu0 0
        %5148 = vmatpush1.bf16.msra.mxu0 %v5130
        %5149 = vmatprep.subr.bf16.mxu0 0
        %5150 = vmatpush1.bf16.msra.mxu0 %v5131
        %5151 = vmatprep.subr.bf16.mxu0 0
        %5152 = vmatpush1.bf16.msra.mxu0 %v5132
        %5153 = vmatprep.subr.bf16.mxu0 0
        %5154 = vmatpush1.bf16.msra.mxu0 %v5133
        %5155 = vmatprep.subr.bf16.mxu0 0
        %5156 = vmatpush1.bf16.msra.mxu0 %v5134
        %5157 = vmatprep.subr.bf16.mxu0 0
        %5158 = vmatpush1.bf16.msra.mxu0 %v5135
        %5159 = vmatprep.subr.bf16.mxu0 0
        %5160 = vmatpush1.bf16.msra.mxu0 %v5136
        %5161 = vmatprep.subr.bf16.mxu0 0
        %5162 = vmatpush1.bf16.msra.mxu0 0
        %5163 = vmatprep.subr.bf16.mxu0 0
        %5164 = vmatpush1.bf16.msra.mxu0 0
        %5165 = vmatprep.subr.bf16.mxu0 0
        %5166 = vmatpush1.bf16.msra.mxu0 0
        %5167 = vmatprep.subr.bf16.mxu0 0
        %5168 = vmatpush1.bf16.msra.mxu0 0
        %5169 = vmatprep.subr.bf16.mxu0 0
        %5170 = vmatpush1.bf16.msra.mxu0 0
        %5171 = vmatprep.subr.bf16.mxu0 0
        %5172 = vmatpush1.bf16.msra.mxu0 0
        %5173 = vmatprep.subr.bf16.mxu0 0
        %5174 = vmatpush1.bf16.msra.mxu0 0
        %5175 = vmatprep.subr.bf16.mxu0 0
        %5176 = vmatpush1.bf16.msra.mxu0 0
        %5177 = vmatprep.mubr.bf16.mxu0 0
        %5178 = vmatmul.mubr.bf16.gmra.mrb[0].mxu0 %v5093
        %v5179 = vpop.f32.mrb[0].mxu0
        %v5180 = vadd.f32 0.0, %v5179
        %v5181 = vpop.f32.mrb[0].mxu0
        %v5182 = vpop.f32.mrb[0].mxu0
        %v5183 = vadd.f32 0.0, %v5182
        %v5184 = vpop.f32.mrb[0].mxu0
        %5185 = vmatprep.mubr.bf16.mxu0 0
        %5186 = vmatmul.mubr.bf16.gmra.mrb[0].mxu0 %v5094
        %v5187 = vpop.f32.mrb[0].mxu0
        %v5188 = vadd.f32 0.0, %v5187
        %v5189 = vpop.f32.mrb[0].mxu0
        %v5190 = vpop.f32.mrb[0].mxu0
        %v5191 = vadd.f32 0.0, %v5190
        %v5192 = vpop.f32.mrb[0].mxu0
        %5193 = vmatprep.mubr.bf16.mxu0 0
        %5194 = vmatmul.mubr.bf16.gmra.mrb[0].mxu0 %v5095
        %v5195 = vpop.f32.mrb[0].mxu0
        %v5196 = vadd.f32 0.0, %v5195
        %v5197 = vpop.f32.mrb[0].mxu0
        %v5198 = vpop.f32.mrb[0].mxu0
        %v5199 = vadd.f32 0.0, %v5198
        %v5200 = vpop.f32.mrb[0].mxu0
        %5201 = vmatprep.mubr.bf16.mxu0 0
        %5202 = vmatmul.mubr.bf16.gmra.mrb[0].mxu0 %v5096
        %v5203 = vpop.f32.mrb[0].mxu0
        %v5204 = vadd.f32 0.0, %v5203
        %v5205 = vpop.f32.mrb[0].mxu0
        %v5206 = vpop.f32.mrb[0].mxu0
        %v5207 = vadd.f32 0.0, %v5206
        %v5208 = vpop.f32.mrb[0].mxu0
        %5209 = vdwg.mxu0
        %v5210 = vadd.f32 %v3073, %v5180
        %v5211 = vadd.f32 %v3074, %v5183
        %v5212 = vadd.f32 %v3075, %v5188
        %v5213 = vadd.f32 %v3076, %v5191
        %v5214 = vadd.f32 %v3077, %v5196
        %v5215 = vadd.f32 %v3078, %v5199
        %v5216 = vadd.f32 %v3079, %v5204
        %v5217 = vadd.f32 %v3080, %v5207
        %v5218 = vld [vmem:[%s1889] sm:$0x1]
        %v5220 = vlaneseq
        %v5221 = vshrl.u32 %v5220, 7
        %v5222 = vsub.s32 0, %v5221
        %v5223 = vrot.slane %v5218, %v5222
        %v5225 = vadd.f32 %v5210, %v5223
        %v5226 = vadd.f32 %v5211, %v5223
        %v5227 = vadd.f32 %v5212, %v5223
        %v5228 = vadd.f32 %v5213, %v5223
        %v5229 = vadd.f32 %v5214, %v5223
        %v5230 = vadd.f32 %v5215, %v5223
        %v5231 = vadd.f32 %v5216, %v5223
        %v5232 = vadd.f32 %v5217, %v5223
        %v5233 = vld [vmem:[%s1892] sm:$0x1]
        %v5234 = vld [vmem:[%s1895] sm:$0x1]
        %5235 = vadd.xlane.f32.xlu0 %v5225
        %v5236 = vpop.xlane.xlu0 %5235
        %5237 = vadd.xlane.f32.xlu0 %v5226
        %v5238 = vpop.xlane.xlu0 %5237
        %5239 = vadd.xlane.f32.xlu0 %v5227
        %v5240 = vpop.xlane.xlu0 %5239
        %5241 = vadd.xlane.f32.xlu0 %v5228
        %v5242 = vpop.xlane.xlu0 %5241
        %5243 = vadd.xlane.f32.xlu0 %v5229
        %v5244 = vpop.xlane.xlu0 %5243
        %5245 = vadd.xlane.f32.xlu0 %v5230
        %v5246 = vpop.xlane.xlu0 %5245
        %5247 = vadd.xlane.f32.xlu0 %v5231
        %v5248 = vpop.xlane.xlu0 %5247
        %5249 = vadd.xlane.f32.xlu0 %v5232
        %v5250 = vpop.xlane.xlu0 %5249
        %v5251 = vmul.f32 %v5236, %v1967
        %v5252 = vmul.f32 %v5238, %v1967
        %v5253 = vmul.f32 %v5240, %v1967
        %v5254 = vmul.f32 %v5242, %v1967
        %v5255 = vmul.f32 %v5244, %v1967
        %v5256 = vmul.f32 %v5246, %v1967
        %v5257 = vmul.f32 %v5248, %v1967
        %v5258 = vmul.f32 %v5250, %v1967
        %v5259 = vsub.f32 %v5225, %v5251
        %v5260 = vsub.f32 %v5226, %v5252
        %v5261 = vsub.f32 %v5227, %v5253
        %v5262 = vsub.f32 %v5228, %v5254
        %v5263 = vsub.f32 %v5229, %v5255
        %v5264 = vsub.f32 %v5230, %v5256
        %v5265 = vsub.f32 %v5231, %v5257
        %v5266 = vsub.f32 %v5232, %v5258
        %v5267 = vmul.f32 %v5259, %v5259
        %v5268 = vmul.f32 %v5260, %v5260
        %v5269 = vmul.f32 %v5261, %v5261
        %v5270 = vmul.f32 %v5262, %v5262
        %v5271 = vmul.f32 %v5263, %v5263
        %v5272 = vmul.f32 %v5264, %v5264
        %v5273 = vmul.f32 %v5265, %v5265
        %v5274 = vmul.f32 %v5266, %v5266
        %5275 = vadd.xlane.f32.xlu0 %v5267
        %v5276 = vpop.xlane.xlu0 %5275
        %5277 = vadd.xlane.f32.xlu0 %v5268
        %v5278 = vpop.xlane.xlu0 %5277
        %5279 = vadd.xlane.f32.xlu0 %v5269
        %v5280 = vpop.xlane.xlu0 %5279
        %5281 = vadd.xlane.f32.xlu0 %v5270
        %v5282 = vpop.xlane.xlu0 %5281
        %5283 = vadd.xlane.f32.xlu0 %v5271
        %v5284 = vpop.xlane.xlu0 %5283
        %5285 = vadd.xlane.f32.xlu0 %v5272
        %v5286 = vpop.xlane.xlu0 %5285
        %5287 = vadd.xlane.f32.xlu0 %v5273
        %v5288 = vpop.xlane.xlu0 %5287
        %5289 = vadd.xlane.f32.xlu0 %v5274
        %v5290 = vpop.xlane.xlu0 %5289
        %v5291 = vmul.f32 %v5276, %v1967
        %v5292 = vmul.f32 %v5278, %v1967
        %v5293 = vmul.f32 %v5280, %v1967
        %v5294 = vmul.f32 %v5282, %v1967
        %v5295 = vmul.f32 %v5284, %v1967
        %v5296 = vmul.f32 %v5286, %v1967
        %v5297 = vmul.f32 %v5288, %v1967
        %v5298 = vmul.f32 %v5290, %v1967
        %v5299 = vadd.f32 %v5291, 1e-05
        %v5300 = vadd.f32 %v5292, 1e-05
        %v5301 = vadd.f32 %v5293, 1e-05
        %v5302 = vadd.f32 %v5294, 1e-05
        %v5303 = vadd.f32 %v5295, 1e-05
        %v5304 = vadd.f32 %v5296, 1e-05
        %v5305 = vadd.f32 %v5297, 1e-05
        %v5306 = vadd.f32 %v5298, 1e-05
        %v5307 = vrsqrt.pop %v5299
        %v5308 = vrsqrt.pop %v5300
        %v5309 = vrsqrt.pop %v5301
        %v5310 = vrsqrt.pop %v5302
        %v5311 = vrsqrt.pop %v5303
        %v5312 = vrsqrt.pop %v5304
        %v5313 = vrsqrt.pop %v5305
        %v5314 = vrsqrt.pop %v5306
        %v5315 = vmul.f32 %v5259, %v5307
        %v5316 = vmul.f32 %v5260, %v5308
        %v5317 = vmul.f32 %v5261, %v5309
        %v5318 = vmul.f32 %v5262, %v5310
        %v5319 = vmul.f32 %v5263, %v5311
        %v5320 = vmul.f32 %v5264, %v5312
        %v5321 = vmul.f32 %v5265, %v5313
        %v5322 = vmul.f32 %v5266, %v5314
        %v5324 = vlaneseq
        %v5325 = vshrl.u32 %v5324, 7
        %v5326 = vsub.s32 0, %v5325
        %v5327 = vrot.slane %v5233, %v5326
        %v5329 = vmul.f32 %v5315, %v5327
        %v5330 = vmul.f32 %v5316, %v5327
        %v5331 = vmul.f32 %v5317, %v5327
        %v5332 = vmul.f32 %v5318, %v5327
        %v5333 = vmul.f32 %v5319, %v5327
        %v5334 = vmul.f32 %v5320, %v5327
        %v5335 = vmul.f32 %v5321, %v5327
        %v5336 = vmul.f32 %v5322, %v5327
        %v5338 = vlaneseq
        %v5339 = vshrl.u32 %v5338, 7
        %v5340 = vsub.s32 0, %v5339
        %v5341 = vrot.slane %v5234, %v5340
        %v5343 = vadd.f32 %v5329, %v5341
        %v5344 = vadd.f32 %v5330, %v5341
        %v5345 = vadd.f32 %v5331, %v5341
        %v5346 = vadd.f32 %v5332, %v5341
        %v5347 = vadd.f32 %v5333, %v5341
        %v5348 = vadd.f32 %v5334, %v5341
        %v5349 = vadd.f32 %v5335, %v5341
        %v5350 = vadd.f32 %v5336, %v5341
        %v5351 = vld [vmem:[%s1559] sm:$0xff]
        %v5352 = vld [vmem:[%s1559 + $0x8] sm:$0xff]
        %v5353 = vld [vmem:[%s1559 + $0x10] sm:$0xff]
        %v5354 = vld [vmem:[%s1559 + $0x18] sm:$0xff]
        %v5355 = vld [vmem:[%s1559 + $0x20] sm:$0xff]
        %v5356 = vld [vmem:[%s1559 + $0x28] sm:$0xff]
        %v5357 = vld [vmem:[%s1559 + $0x30] sm:$0xff]
        %v5358 = vld [vmem:[%s1559 + $0x38] sm:$0xff]
        %v5359 = vld [vmem:[%s1559 + $0x40] sm:$0xff]
        %v5360 = vld [vmem:[%s1559 + $0x48] sm:$0xff]
        %v5361 = vld [vmem:[%s1559 + $0x50] sm:$0xff]
        %v5362 = vld [vmem:[%s1559 + $0x58] sm:$0xff]
        %v5363 = vld [vmem:[%s1559 + $0x60] sm:$0xff]
        %v5364 = vld [vmem:[%s1559 + $0x68] sm:$0xff]
        %v5365 = vld [vmem:[%s1559 + $0x70] sm:$0xff]
        %v5366 = vld [vmem:[%s1559 + $0x78] sm:$0xff]
        %v5367 = vpack.c.bf16 %v5344, %v5343
        %v5368 = vpack.c.bf16 %v5346, %v5345
        %v5369 = vpack.c.bf16 %v5348, %v5347
        %v5370 = vpack.c.bf16 %v5350, %v5349
        %v5371 = vld [vmem:[%s1899] sm:$0x3]
        %v5373 = vlaneseq
        %v5374 = vshrl.u32 %v5373, 7
        %v5375 = vsub.s32 0, %v5374
        %v5376 = vrot.slane %v5371, %v5375
        %v5377 = vlaneseq
        %v5378 = vshrl.u32 %v5377, 7
        %v5379 = vsub.s32 1, %v5378
        %v5380 = vrot.slane %v5371, %v5379
        %v5399 = vunpack.c.l.b16 %v5351
        %v5400 = vunpack.c.h.b16 %v5351
        %v5401 = vunpack.c.l.b16 %v5352
        %v5402 = vunpack.c.h.b16 %v5352
        %v5403 = vunpack.c.l.b16 %v5353
        %v5404 = vunpack.c.h.b16 %v5353
        %v5405 = vunpack.c.l.b16 %v5354
        %v5406 = vunpack.c.h.b16 %v5354
        %v5407 = vunpack.c.l.b16 %v5355
        %v5408 = vunpack.c.h.b16 %v5355
        %v5409 = vunpack.c.l.b16 %v5356
        %v5410 = vunpack.c.h.b16 %v5356
        %v5411 = vunpack.c.l.b16 %v5357
        %v5412 = vunpack.c.h.b16 %v5357
        %v5413 = vunpack.c.l.b16 %v5358
        %v5414 = vunpack.c.h.b16 %v5358
        %v5415 = vunpack.c.l.b16 %v5359
        %v5416 = vunpack.c.h.b16 %v5359
        %v5417 = vunpack.c.l.b16 %v5360
        %v5418 = vunpack.c.h.b16 %v5360
        %v5419 = vunpack.c.l.b16 %v5361
        %v5420 = vunpack.c.h.b16 %v5361
        %v5421 = vunpack.c.l.b16 %v5362
        %v5422 = vunpack.c.h.b16 %v5362
        %v5423 = vunpack.c.l.b16 %v5363
        %v5424 = vunpack.c.h.b16 %v5363
        %v5425 = vunpack.c.l.b16 %v5364
        %v5426 = vunpack.c.h.b16 %v5364
        %v5427 = vunpack.c.l.b16 %v5365
        %v5428 = vunpack.c.h.b16 %v5365
        %v5429 = vunpack.c.l.b16 %v5366
        %v5430 = vunpack.c.h.b16 %v5366
        %v5431 = vpack.c.b16 %v5401, %v5399
        %v5432 = vpack.c.b16 %v5402, %v5400
        %v5433 = vpack.c.b16 %v5405, %v5403
        %v5434 = vpack.c.b16 %v5406, %v5404
        %v5435 = vpack.c.b16 %v5409, %v5407
        %v5436 = vpack.c.b16 %v5410, %v5408
        %v5437 = vpack.c.b16 %v5413, %v5411
        %v5438 = vpack.c.b16 %v5414, %v5412
        %v5439 = vpack.c.b16 %v5417, %v5415
        %v5440 = vpack.c.b16 %v5418, %v5416
        %v5441 = vpack.c.b16 %v5421, %v5419
        %v5442 = vpack.c.b16 %v5422, %v5420
        %v5443 = vpack.c.b16 %v5425, %v5423
        %v5444 = vpack.c.b16 %v5426, %v5424
        %v5445 = vpack.c.b16 %v5429, %v5427
        %v5446 = vpack.c.b16 %v5430, %v5428
        %5463 = vmatprep.subr.bf16.mxu0 %v5432
        %5464 = vmatpush1.bf16.msra.mxu0 %v5431
        %5465 = vmatprep.subr.bf16.mxu0 %v5434
        %5466 = vmatpush1.bf16.msra.mxu0 %v5433
        %5467 = vmatprep.subr.bf16.mxu0 %v5436
        %5468 = vmatpush1.bf16.msra.mxu0 %v5435
        %5469 = vmatprep.subr.bf16.mxu0 %v5438
        %5470 = vmatpush1.bf16.msra.mxu0 %v5437
        %5471 = vmatprep.subr.bf16.mxu0 %v5440
        %5472 = vmatpush1.bf16.msra.mxu0 %v5439
        %5473 = vmatprep.subr.bf16.mxu0 %v5442
        %5474 = vmatpush1.bf16.msra.mxu0 %v5441
        %5475 = vmatprep.subr.bf16.mxu0 %v5444
        %5476 = vmatpush1.bf16.msra.mxu0 %v5443
        %5477 = vmatprep.subr.bf16.mxu0 %v5446
        %5478 = vmatpush1.bf16.msra.mxu0 %v5445
        %5479 = vmatprep.subr.bf16.mxu0 0
        %5480 = vmatpush1.bf16.msra.mxu0 0
        %5481 = vmatprep.subr.bf16.mxu0 0
        %5482 = vmatpush1.bf16.msra.mxu0 0
        %5483 = vmatprep.subr.bf16.mxu0 0
        %5484 = vmatpush1.bf16.msra.mxu0 0
        %5485 = vmatprep.subr.bf16.mxu0 0
        %5486 = vmatpush1.bf16.msra.mxu0 0
        %5487 = vmatprep.subr.bf16.mxu0 0
        %5488 = vmatpush1.bf16.msra.mxu0 0
        %5489 = vmatprep.subr.bf16.mxu0 0
        %5490 = vmatpush1.bf16.msra.mxu0 0
        %5491 = vmatprep.subr.bf16.mxu0 0
        %5492 = vmatpush1.bf16.msra.mxu0 0
        %5493 = vmatprep.subr.bf16.mxu0 0
        %5494 = vmatpush1.bf16.msra.mxu0 0
        %5495 = vmatprep.mubr.bf16.mxu0 0
        %5496 = vmatmul.mubr.bf16.gmra.mrb[0].mxu0 %v5367
        %v5497 = vpop.f32.mrb[0].mxu0
        %v5498 = vadd.f32 %v5376, %v5497
        %v5499 = vpop.f32.mrb[0].mxu0
        %v5500 = vadd.f32 %v5380, %v5499
        %v5501 = vpop.f32.mrb[0].mxu0
        %v5502 = vadd.f32 %v5376, %v5501
        %v5503 = vpop.f32.mrb[0].mxu0
        %v5504 = vadd.f32 %v5380, %v5503
        %5505 = vmatprep.mubr.bf16.mxu0 0
        %5506 = vmatmul.mubr.bf16.gmra.mrb[0].mxu0 %v5368
        %v5507 = vpop.f32.mrb[0].mxu0
        %v5508 = vadd.f32 %v5376, %v5507
        %v5509 = vpop.f32.mrb[0].mxu0
        %v5510 = vadd.f32 %v5380, %v5509
        %v5511 = vpop.f32.mrb[0].mxu0
        %v5512 = vadd.f32 %v5376, %v5511
        %v5513 = vpop.f32.mrb[0].mxu0
        %v5514 = vadd.f32 %v5380, %v5513
        %5515 = vmatprep.mubr.bf16.mxu0 0
        %5516 = vmatmul.mubr.bf16.gmra.mrb[0].mxu0 %v5369
        %v5517 = vpop.f32.mrb[0].mxu0
        %v5518 = vadd.f32 %v5376, %v5517
        %v5519 = vpop.f32.mrb[0].mxu0
        %v5520 = vadd.f32 %v5380, %v5519
        %v5521 = vpop.f32.mrb[0].mxu0
        %v5522 = vadd.f32 %v5376, %v5521
        %v5523 = vpop.f32.mrb[0].mxu0
        %v5524 = vadd.f32 %v5380, %v5523
        %5525 = vmatprep.mubr.bf16.mxu0 0
        %5526 = vmatmul.mubr.bf16.gmra.mrb[0].mxu0 %v5370
        %v5527 = vpop.f32.mrb[0].mxu0
        %v5528 = vadd.f32 %v5376, %v5527
        %v5529 = vpop.f32.mrb[0].mxu0
        %v5530 = vadd.f32 %v5380, %v5529
        %v5531 = vpop.f32.mrb[0].mxu0
        %v5532 = vadd.f32 %v5376, %v5531
        %v5533 = vpop.f32.mrb[0].mxu0
        %v5534 = vadd.f32 %v5380, %v5533
        %5535 = vdwg.mxu0
        %v5536 = vxor.u32 %v5500, 2147483648
        %v5537 = vxor.u32 %v5504, 2147483648
        %v5538 = vxor.u32 %v5510, 2147483648
        %v5539 = vxor.u32 %v5514, 2147483648
        %v5540 = vxor.u32 %v5520, 2147483648
        %v5541 = vxor.u32 %v5524, 2147483648
        %v5542 = vxor.u32 %v5530, 2147483648
        %v5543 = vxor.u32 %v5534, 2147483648
        %v5544 = vmul.f32 %v5536, 1.442695
        %v5545 = vpow.pop %v5544
        %v5546 = vmul.f32 %v5537, 1.442695
        %v5547 = vpow.pop %v5546
        %v5548 = vmul.f32 %v5538, 1.442695
        %v5549 = vpow.pop %v5548
        %v5550 = vmul.f32 %v5539, 1.442695
        %v5551 = vpow.pop %v5550
        %v5552 = vmul.f32 %v5540, 1.442695
        %v5553 = vpow.pop %v5552
        %v5554 = vmul.f32 %v5541, 1.442695
        %v5555 = vpow.pop %v5554
        %v5556 = vmul.f32 %v5542, 1.442695
        %v5557 = vpow.pop %v5556
        %v5558 = vmul.f32 %v5543, 1.442695
        %v5559 = vpow.pop %v5558
        %v5560 = vadd.f32 %v5545, 1.0
        %v5561 = vadd.f32 %v5547, 1.0
        %v5562 = vadd.f32 %v5549, 1.0
        %v5563 = vadd.f32 %v5551, 1.0
        %v5564 = vadd.f32 %v5553, 1.0
        %v5565 = vadd.f32 %v5555, 1.0
        %v5566 = vadd.f32 %v5557, 1.0
        %v5567 = vadd.f32 %v5559, 1.0
        %v5568 = vrcp.pop %v5560
        %v5569 = vmul.f32 1.0, %v5568
        %v5570 = vrcp.pop %v5561
        %v5571 = vmul.f32 1.0, %v5570
        %v5572 = vrcp.pop %v5562
        %v5573 = vmul.f32 1.0, %v5572
        %v5574 = vrcp.pop %v5563
        %v5575 = vmul.f32 1.0, %v5574
        %v5576 = vrcp.pop %v5564
        %v5577 = vmul.f32 1.0, %v5576
        %v5578 = vrcp.pop %v5565
        %v5579 = vmul.f32 1.0, %v5578
        %v5580 = vrcp.pop %v5566
        %v5581 = vmul.f32 1.0, %v5580
        %v5582 = vrcp.pop %v5567
        %v5583 = vmul.f32 1.0, %v5582
        %v5584 = vmul.f32 %v5498, %v5569
        %v5585 = vmul.f32 %v5502, %v5571
        %v5586 = vmul.f32 %v5508, %v5573
        %v5587 = vmul.f32 %v5512, %v5575
        %v5588 = vmul.f32 %v5518, %v5577
        %v5589 = vmul.f32 %v5522, %v5579
        %v5590 = vmul.f32 %v5528, %v5581
        %v5591 = vmul.f32 %v5532, %v5583
        %v5592 = vlaneseq
        %v5593 = vshrl.u32 %v5592, 7
        %v5594 = vadd.s32 %v5593, 8
        %v5595 = vadd.s32 %v5593, 16
        %v5596 = vadd.s32 %v5593, 24
        %v5597 = vld [vmem:[%s1903] sm:$0x7]
        %v5598 = vrot.slane %v5584, 7
        %v5599 = vrot.slane %v5585, 7
        %v5600 = vrot.slane %v5586, 7
        %v5601 = vrot.slane %v5587, 7
        %v5602 = vrot.slane %v5588, 7
        %v5603 = vrot.slane %v5589, 7
        %v5604 = vrot.slane %v5590, 7
        %v5605 = vrot.slane %v5591, 7
        %vm5606 = vcmp.lt.s32.totalorder %v5593, 1
        %v5607 = vsel %vm5606, %v5604, %v5605
        %v5608 = vsel %vm5606, %v5603, %v5604
        %v5609 = vsel %vm5606, %v5602, %v5603
        %v5610 = vsel %vm5606, %v5601, %v5602
        %v5611 = vsel %vm5606, %v5600, %v5601
        %v5612 = vsel %vm5606, %v5599, %v5600
        %v5613 = vsel %vm5606, %v5598, %v5599
        %v5614 = vsel %vm5606, %v5605, %v5598
        %vm5615 = vcmp.ge.s32.totalorder %v5593, 1
        %vm5616 = vcmp.ge.s32.totalorder %v5594, 1
        %vm5617 = vcmp.ge.s32.totalorder %v5595, 1
        %vm5618 = vcmp.ge.s32.totalorder %v5596, 1
        %v5619 = vlaneseq
        %v5620 = vshrl.u32 %v5619, 7
        %v5621 = vsub.s32 0, %v5620
        %v5622 = vrot.slane %v5597, %v5621
        %v5623 = vmul.f32 %v5614, %v5622
        %v5624 = vmul.f32 %v5613, %v5622
        %v5625 = vmul.f32 %v5612, %v5622
        %v5626 = vmul.f32 %v5611, %v5622
        %v5627 = vmul.f32 %v5610, %v5622
        %v5628 = vmul.f32 %v5609, %v5622
        %v5629 = vmul.f32 %v5608, %v5622
        %v5630 = vmul.f32 %v5607, %v5622
        %v5631 = vsel %vm5615, %v5623, 0.0
        %v5632 = vsel %vm5616, %v5624, 0.0
        %v5633 = vsel %vm5617, %v5625, 0.0
        %v5634 = vsel %vm5618, %v5626, 0.0
        %v5635 = vsel %vm5615, %v5627, 0.0
        %v5636 = vsel %vm5616, %v5628, 0.0
        %v5637 = vsel %vm5617, %v5629, 0.0
        %v5638 = vsel %vm5618, %v5630, 0.0
        %v5639 = vadd.f32 %v5631, 0.0
        %v5640 = vadd.f32 %v5632, 0.0
        %v5641 = vadd.f32 %v5633, 0.0
        %v5642 = vadd.f32 %v5634, 0.0
        %v5643 = vadd.f32 %v5635, 0.0
        %v5644 = vadd.f32 %v5636, 0.0
        %v5645 = vadd.f32 %v5637, 0.0
        %v5646 = vadd.f32 %v5638, 0.0
        %v5647 = vlaneseq
        %v5648 = vshrl.u32 %v5647, 7
        %v5649 = vsub.s32 1, %v5648
        %v5650 = vrot.slane %v5597, %v5649
        %v5651 = vmul.f32 %v5584, %v5650
        %v5652 = vmul.f32 %v5585, %v5650
        %v5653 = vmul.f32 %v5586, %v5650
        %v5654 = vmul.f32 %v5587, %v5650
        %v5655 = vmul.f32 %v5588, %v5650
        %v5656 = vmul.f32 %v5589, %v5650
        %v5657 = vmul.f32 %v5590, %v5650
        %v5658 = vmul.f32 %v5591, %v5650
        %v5659 = vadd.f32 %v5639, %v5651
        %v5660 = vadd.f32 %v5640, %v5652
        %v5661 = vadd.f32 %v5641, %v5653
        %v5662 = vadd.f32 %v5642, %v5654
        %v5663 = vadd.f32 %v5643, %v5655
        %v5664 = vadd.f32 %v5644, %v5656
        %v5665 = vadd.f32 %v5645, %v5657
        %v5666 = vadd.f32 %v5646, %v5658
        %v5667 = vrot.slane %v5584, 1
        %v5668 = vrot.slane %v5585, 1
        %v5669 = vrot.slane %v5586, 1
        %v5670 = vrot.slane %v5587, 1
        %v5671 = vrot.slane %v5588, 1
        %v5672 = vrot.slane %v5589, 1
        %v5673 = vrot.slane %v5590, 1
        %v5674 = vrot.slane %v5591, 1
        %vm5675 = vcmp.lt.s32.totalorder %v5593, 7
        %v5676 = vsel %vm5675, %v5673, %v5674
        %v5677 = vsel %vm5675, %v5672, %v5673
        %v5678 = vsel %vm5675, %v5671, %v5672
        %v5679 = vsel %vm5675, %v5670, %v5671
        %v5680 = vsel %vm5675, %v5669, %v5670
        %v5681 = vsel %vm5675, %v5668, %v5669
        %v5682 = vsel %vm5675, %v5667, %v5668
        %v5683 = vsel %vm5675, %v5674, %v5667
        %vm5684 = vcmp.lt.s32.totalorder %v5593, 31
        %vm5685 = vcmp.lt.s32.totalorder %v5594, 31
        %vm5686 = vcmp.lt.s32.totalorder %v5595, 31
        %vm5687 = vcmp.lt.s32.totalorder %v5596, 31
        %v5688 = vlaneseq
        %v5689 = vshrl.u32 %v5688, 7
        %v5690 = vsub.s32 2, %v5689
        %v5691 = vrot.slane %v5597, %v5690
        %v5692 = vmul.f32 %v5682, %v5691
        %v5693 = vmul.f32 %v5681, %v5691
        %v5694 = vmul.f32 %v5680, %v5691
        %v5695 = vmul.f32 %v5679, %v5691
        %v5696 = vmul.f32 %v5678, %v5691
        %v5697 = vmul.f32 %v5677, %v5691
        %v5698 = vmul.f32 %v5676, %v5691
        %v5699 = vmul.f32 %v5683, %v5691
        %v5700 = vsel %vm5684, %v5692, 0.0
        %v5701 = vsel %vm5685, %v5693, 0.0
        %v5702 = vsel %vm5686, %v5694, 0.0
        %v5703 = vsel %vm5687, %v5695, 0.0
        %v5704 = vsel %vm5684, %v5696, 0.0
        %v5705 = vsel %vm5685, %v5697, 0.0
        %v5706 = vsel %vm5686, %v5698, 0.0
        %v5707 = vsel %vm5687, %v5699, 0.0
        %v5708 = vadd.f32 %v5659, %v5700
        %v5709 = vadd.f32 %v5660, %v5701
        %v5710 = vadd.f32 %v5661, %v5702
        %v5711 = vadd.f32 %v5662, %v5703
        %v5712 = vadd.f32 %v5663, %v5704
        %v5713 = vadd.f32 %v5664, %v5705
        %v5714 = vadd.f32 %v5665, %v5706
        %v5715 = vadd.f32 %v5666, %v5707
        %v5716 = vld [vmem:[%s1906] sm:$0x1]
        %v5718 = vlaneseq
        %v5719 = vshrl.u32 %v5718, 7
        %v5720 = vsub.s32 0, %v5719
        %v5721 = vrot.slane %v5716, %v5720
        %v5723 = vadd.f32 %v5708, %v5721
        %v5724 = vadd.f32 %v5709, %v5721
        %v5725 = vadd.f32 %v5710, %v5721
        %v5726 = vadd.f32 %v5711, %v5721
        %v5727 = vadd.f32 %v5712, %v5721
        %v5728 = vadd.f32 %v5713, %v5721
        %v5729 = vadd.f32 %v5714, %v5721
        %v5730 = vadd.f32 %v5715, %v5721
        %v5731 = vld [vmem:[%s1909] sm:$0x1]
        %v5733 = vlaneseq
        %v5734 = vshrl.u32 %v5733, 7
        %v5735 = vsub.s32 0, %v5734
        %v5736 = vrot.slane %v5731, %v5735
        %v5738 = vmul.f32 %v5723, %v5736
        %v5739 = vmul.f32 %v5724, %v5736
        %v5740 = vmul.f32 %v5725, %v5736
        %v5741 = vmul.f32 %v5726, %v5736
        %v5742 = vmul.f32 %v5727, %v5736
        %v5743 = vmul.f32 %v5728, %v5736
        %v5744 = vmul.f32 %v5729, %v5736
        %v5745 = vmul.f32 %v5730, %v5736
        %v5746 = vld [vmem:[%s1912] sm:$0x1]
        %v5748 = vlaneseq
        %v5749 = vshrl.u32 %v5748, 7
        %v5750 = vsub.s32 0, %v5749
        %v5751 = vrot.slane %v5746, %v5750
        %v5753 = vadd.f32 %v5738, %v5751
        %v5754 = vadd.f32 %v5739, %v5751
        %v5755 = vadd.f32 %v5740, %v5751
        %v5756 = vadd.f32 %v5741, %v5751
        %v5757 = vadd.f32 %v5742, %v5751
        %v5758 = vadd.f32 %v5743, %v5751
        %v5759 = vadd.f32 %v5744, %v5751
        %v5760 = vadd.f32 %v5745, %v5751
        %v5761 = vxor.u32 %v5753, 2147483648
        %v5762 = vxor.u32 %v5754, 2147483648
        %v5763 = vxor.u32 %v5755, 2147483648
        %v5764 = vxor.u32 %v5756, 2147483648
        %v5765 = vxor.u32 %v5757, 2147483648
        %v5766 = vxor.u32 %v5758, 2147483648
        %v5767 = vxor.u32 %v5759, 2147483648
        %v5768 = vxor.u32 %v5760, 2147483648
        %v5769 = vmul.f32 %v5761, 1.442695
        %v5770 = vpow.pop %v5769
        %v5771 = vmul.f32 %v5762, 1.442695
        %v5772 = vpow.pop %v5771
        %v5773 = vmul.f32 %v5763, 1.442695
        %v5774 = vpow.pop %v5773
        %v5775 = vmul.f32 %v5764, 1.442695
        %v5776 = vpow.pop %v5775
        %v5777 = vmul.f32 %v5765, 1.442695
        %v5778 = vpow.pop %v5777
        %v5779 = vmul.f32 %v5766, 1.442695
        %v5780 = vpow.pop %v5779
        %v5781 = vmul.f32 %v5767, 1.442695
        %v5782 = vpow.pop %v5781
        %v5783 = vmul.f32 %v5768, 1.442695
        %v5784 = vpow.pop %v5783
        %v5785 = vadd.f32 %v5770, 1.0
        %v5786 = vadd.f32 %v5772, 1.0
        %v5787 = vadd.f32 %v5774, 1.0
        %v5788 = vadd.f32 %v5776, 1.0
        %v5789 = vadd.f32 %v5778, 1.0
        %v5790 = vadd.f32 %v5780, 1.0
        %v5791 = vadd.f32 %v5782, 1.0
        %v5792 = vadd.f32 %v5784, 1.0
        %v5793 = vrcp.pop %v5785
        %v5794 = vmul.f32 1.0, %v5793
        %v5795 = vrcp.pop %v5786
        %v5796 = vmul.f32 1.0, %v5795
        %v5797 = vrcp.pop %v5787
        %v5798 = vmul.f32 1.0, %v5797
        %v5799 = vrcp.pop %v5788
        %v5800 = vmul.f32 1.0, %v5799
        %v5801 = vrcp.pop %v5789
        %v5802 = vmul.f32 1.0, %v5801
        %v5803 = vrcp.pop %v5790
        %v5804 = vmul.f32 1.0, %v5803
        %v5805 = vrcp.pop %v5791
        %v5806 = vmul.f32 1.0, %v5805
        %v5807 = vrcp.pop %v5792
        %v5808 = vmul.f32 1.0, %v5807
        %v5809 = vmul.f32 %v5753, %v5794
        %v5810 = vmul.f32 %v5754, %v5796
        %v5811 = vmul.f32 %v5755, %v5798
        %v5812 = vmul.f32 %v5756, %v5800
        %v5813 = vmul.f32 %v5757, %v5802
        %v5814 = vmul.f32 %v5758, %v5804
        %v5815 = vmul.f32 %v5759, %v5806
        %v5816 = vmul.f32 %v5760, %v5808
        %v5817 = vld [vmem:[%s1568] sm:$0xf]
        %v5818 = vld [vmem:[%s1568 + $0x4] sm:$0xf]
        %v5819 = vld [vmem:[%s1568 + $0x8] sm:$0xf]
        %v5820 = vld [vmem:[%s1568 + $0xc] sm:$0xf]
        %v5821 = vld [vmem:[%s1568 + $0x10] sm:$0xf]
        %v5822 = vld [vmem:[%s1568 + $0x14] sm:$0xf]
        %v5823 = vld [vmem:[%s1568 + $0x18] sm:$0xf]
        %v5824 = vld [vmem:[%s1568 + $0x1c] sm:$0xf]
        %v5825 = vld [vmem:[%s1568 + $0x20] sm:$0xf]
        %v5826 = vld [vmem:[%s1568 + $0x24] sm:$0xf]
        %v5827 = vld [vmem:[%s1568 + $0x28] sm:$0xf]
        %v5828 = vld [vmem:[%s1568 + $0x2c] sm:$0xf]
        %v5829 = vld [vmem:[%s1568 + $0x30] sm:$0xf]
        %v5830 = vld [vmem:[%s1568 + $0x34] sm:$0xf]
        %v5831 = vld [vmem:[%s1568 + $0x38] sm:$0xf]
        %v5832 = vld [vmem:[%s1568 + $0x3c] sm:$0xf]
        %v5833 = vpack.c.bf16 %v5810, %v5809
        %v5834 = vpack.c.bf16 %v5812, %v5811
        %v5835 = vpack.c.bf16 %v5814, %v5813
        %v5836 = vpack.c.bf16 %v5816, %v5815
        %v5853 = vunpack.c.l.b16 %v5817
        %v5854 = vunpack.c.l.b16 %v5818
        %v5855 = vunpack.c.l.b16 %v5819
        %v5856 = vunpack.c.l.b16 %v5820
        %v5857 = vunpack.c.l.b16 %v5821
        %v5858 = vunpack.c.l.b16 %v5822
        %v5859 = vunpack.c.l.b16 %v5823
        %v5860 = vunpack.c.l.b16 %v5824
        %v5861 = vunpack.c.l.b16 %v5825
        %v5862 = vunpack.c.l.b16 %v5826
        %v5863 = vunpack.c.l.b16 %v5827
        %v5864 = vunpack.c.l.b16 %v5828
        %v5865 = vunpack.c.l.b16 %v5829
        %v5866 = vunpack.c.l.b16 %v5830
        %v5867 = vunpack.c.l.b16 %v5831
        %v5868 = vunpack.c.l.b16 %v5832
        %v5869 = vpack.c.b16 %v5854, %v5853
        %v5870 = vpack.c.b16 %v5856, %v5855
        %v5871 = vpack.c.b16 %v5858, %v5857
        %v5872 = vpack.c.b16 %v5860, %v5859
        %v5873 = vpack.c.b16 %v5862, %v5861
        %v5874 = vpack.c.b16 %v5864, %v5863
        %v5875 = vpack.c.b16 %v5866, %v5865
        %v5876 = vpack.c.b16 %v5868, %v5867
        %5885 = vmatprep.subr.bf16.mxu0 0
        %5886 = vmatpush1.bf16.msra.mxu0 %v5869
        %5887 = vmatprep.subr.bf16.mxu0 0
        %5888 = vmatpush1.bf16.msra.mxu0 %v5870
        %5889 = vmatprep.subr.bf16.mxu0 0
        %5890 = vmatpush1.bf16.msra.mxu0 %v5871
        %5891 = vmatprep.subr.bf16.mxu0 0
        %5892 = vmatpush1.bf16.msra.mxu0 %v5872
        %5893 = vmatprep.subr.bf16.mxu0 0
        %5894 = vmatpush1.bf16.msra.mxu0 %v5873
        %5895 = vmatprep.subr.bf16.mxu0 0
        %5896 = vmatpush1.bf16.msra.mxu0 %v5874
        %5897 = vmatprep.subr.bf16.mxu0 0
        %5898 = vmatpush1.bf16.msra.mxu0 %v5875
        %5899 = vmatprep.subr.bf16.mxu0 0
        %5900 = vmatpush1.bf16.msra.mxu0 %v5876
        %5901 = vmatprep.subr.bf16.mxu0 0
        %5902 = vmatpush1.bf16.msra.mxu0 0
        %5903 = vmatprep.subr.bf16.mxu0 0
        %5904 = vmatpush1.bf16.msra.mxu0 0
        %5905 = vmatprep.subr.bf16.mxu0 0
        %5906 = vmatpush1.bf16.msra.mxu0 0
        %5907 = vmatprep.subr.bf16.mxu0 0
        %5908 = vmatpush1.bf16.msra.mxu0 0
        %5909 = vmatprep.subr.bf16.mxu0 0
        %5910 = vmatpush1.bf16.msra.mxu0 0
        %5911 = vmatprep.subr.bf16.mxu0 0
        %5912 = vmatpush1.bf16.msra.mxu0 0
        %5913 = vmatprep.subr.bf16.mxu0 0
        %5914 = vmatpush1.bf16.msra.mxu0 0
        %5915 = vmatprep.subr.bf16.mxu0 0
        %5916 = vmatpush1.bf16.msra.mxu0 0
        %5917 = vmatprep.mubr.bf16.mxu0 0
        %5918 = vmatmul.mubr.bf16.gmra.mrb[0].mxu0 %v5833
        %v5919 = vpop.f32.mrb[0].mxu0
        %v5920 = vadd.f32 0.0, %v5919
        %v5921 = vpop.f32.mrb[0].mxu0
        %v5922 = vpop.f32.mrb[0].mxu0
        %v5923 = vadd.f32 0.0, %v5922
        %v5924 = vpop.f32.mrb[0].mxu0
        %5925 = vmatprep.mubr.bf16.mxu0 0
        %5926 = vmatmul.mubr.bf16.gmra.mrb[0].mxu0 %v5834
        %v5927 = vpop.f32.mrb[0].mxu0
        %v5928 = vadd.f32 0.0, %v5927
        %v5929 = vpop.f32.mrb[0].mxu0
        %v5930 = vpop.f32.mrb[0].mxu0
        %v5931 = vadd.f32 0.0, %v5930
        %v5932 = vpop.f32.mrb[0].mxu0
        %5933 = vmatprep.mubr.bf16.mxu0 0
        %5934 = vmatmul.mubr.bf16.gmra.mrb[0].mxu0 %v5835
        %v5935 = vpop.f32.mrb[0].mxu0
        %v5936 = vadd.f32 0.0, %v5935
        %v5937 = vpop.f32.mrb[0].mxu0
        %v5938 = vpop.f32.mrb[0].mxu0
        %v5939 = vadd.f32 0.0, %v5938
        %v5940 = vpop.f32.mrb[0].mxu0
        %5941 = vmatprep.mubr.bf16.mxu0 0
        %5942 = vmatmul.mubr.bf16.gmra.mrb[0].mxu0 %v5836
        %v5943 = vpop.f32.mrb[0].mxu0
        %v5944 = vadd.f32 0.0, %v5943
        %v5945 = vpop.f32.mrb[0].mxu0
        %v5946 = vpop.f32.mrb[0].mxu0
        %v5947 = vadd.f32 0.0, %v5946
        %v5948 = vpop.f32.mrb[0].mxu0
        %5949 = vdwg.mxu0
        %v5950 = vadd.f32 %v5225, %v5920
        %v5951 = vadd.f32 %v5226, %v5923
        %v5952 = vadd.f32 %v5227, %v5928
        %v5953 = vadd.f32 %v5228, %v5931
        %v5954 = vadd.f32 %v5229, %v5936
        %v5955 = vadd.f32 %v5230, %v5939
        %v5956 = vadd.f32 %v5231, %v5944
        %v5957 = vadd.f32 %v5232, %v5947
        %v5958 = vld [vmem:[%s1915] sm:$0x1]
        %v5960 = vlaneseq
        %v5961 = vshrl.u32 %v5960, 7
        %v5962 = vsub.s32 0, %v5961
        %v5963 = vrot.slane %v5958, %v5962
        %v5965 = vadd.f32 %v5950, %v5963
        %v5966 = vadd.f32 %v5951, %v5963
        %v5967 = vadd.f32 %v5952, %v5963
        %v5968 = vadd.f32 %v5953, %v5963
        %v5969 = vadd.f32 %v5954, %v5963
        %v5970 = vadd.f32 %v5955, %v5963
        %v5971 = vadd.f32 %v5956, %v5963
        %v5972 = vadd.f32 %v5957, %v5963
        %v5973 = vld [vmem:[%s1576] sm:$0x1]
        %v5974 = vld [vmem:[%s1584] sm:$0x1]
        %5975 = vadd.xlane.f32.xlu0 %v5965
        %v5976 = vpop.xlane.xlu0 %5975
        %5977 = vadd.xlane.f32.xlu0 %v5966
        %v5978 = vpop.xlane.xlu0 %5977
        %5979 = vadd.xlane.f32.xlu0 %v5967
        %v5980 = vpop.xlane.xlu0 %5979
        %5981 = vadd.xlane.f32.xlu0 %v5968
        %v5982 = vpop.xlane.xlu0 %5981
        %5983 = vadd.xlane.f32.xlu0 %v5969
        %v5984 = vpop.xlane.xlu0 %5983
        %5985 = vadd.xlane.f32.xlu0 %v5970
        %v5986 = vpop.xlane.xlu0 %5985
        %5987 = vadd.xlane.f32.xlu0 %v5971
        %v5988 = vpop.xlane.xlu0 %5987
        %5989 = vadd.xlane.f32.xlu0 %v5972
        %v5990 = vpop.xlane.xlu0 %5989
        %v5991 = vmul.f32 %v5976, %v1967
        %v5992 = vmul.f32 %v5978, %v1967
        %v5993 = vmul.f32 %v5980, %v1967
        %v5994 = vmul.f32 %v5982, %v1967
        %v5995 = vmul.f32 %v5984, %v1967
        %v5996 = vmul.f32 %v5986, %v1967
        %v5997 = vmul.f32 %v5988, %v1967
        %v5998 = vmul.f32 %v5990, %v1967
        %v5999 = vsub.f32 %v5965, %v5991
        %v6000 = vsub.f32 %v5966, %v5992
        %v6001 = vsub.f32 %v5967, %v5993
        %v6002 = vsub.f32 %v5968, %v5994
        %v6003 = vsub.f32 %v5969, %v5995
        %v6004 = vsub.f32 %v5970, %v5996
        %v6005 = vsub.f32 %v5971, %v5997
        %v6006 = vsub.f32 %v5972, %v5998
        %v6007 = vmul.f32 %v5999, %v5999
        %v6008 = vmul.f32 %v6000, %v6000
        %v6009 = vmul.f32 %v6001, %v6001
        %v6010 = vmul.f32 %v6002, %v6002
        %v6011 = vmul.f32 %v6003, %v6003
        %v6012 = vmul.f32 %v6004, %v6004
        %v6013 = vmul.f32 %v6005, %v6005
        %v6014 = vmul.f32 %v6006, %v6006
        %6015 = vadd.xlane.f32.xlu0 %v6007
        %v6016 = vpop.xlane.xlu0 %6015
        %6017 = vadd.xlane.f32.xlu0 %v6008
        %v6018 = vpop.xlane.xlu0 %6017
        %6019 = vadd.xlane.f32.xlu0 %v6009
        %v6020 = vpop.xlane.xlu0 %6019
        %6021 = vadd.xlane.f32.xlu0 %v6010
        %v6022 = vpop.xlane.xlu0 %6021
        %6023 = vadd.xlane.f32.xlu0 %v6011
        %v6024 = vpop.xlane.xlu0 %6023
        %6025 = vadd.xlane.f32.xlu0 %v6012
        %v6026 = vpop.xlane.xlu0 %6025
        %6027 = vadd.xlane.f32.xlu0 %v6013
        %v6028 = vpop.xlane.xlu0 %6027
        %6029 = vadd.xlane.f32.xlu0 %v6014
        %v6030 = vpop.xlane.xlu0 %6029
        %v6031 = vmul.f32 %v6016, %v1967
        %v6032 = vmul.f32 %v6018, %v1967
        %v6033 = vmul.f32 %v6020, %v1967
        %v6034 = vmul.f32 %v6022, %v1967
        %v6035 = vmul.f32 %v6024, %v1967
        %v6036 = vmul.f32 %v6026, %v1967
        %v6037 = vmul.f32 %v6028, %v1967
        %v6038 = vmul.f32 %v6030, %v1967
        %v6039 = vadd.f32 %v6031, 1e-05
        %v6040 = vadd.f32 %v6032, 1e-05
        %v6041 = vadd.f32 %v6033, 1e-05
        %v6042 = vadd.f32 %v6034, 1e-05
        %v6043 = vadd.f32 %v6035, 1e-05
        %v6044 = vadd.f32 %v6036, 1e-05
        %v6045 = vadd.f32 %v6037, 1e-05
        %v6046 = vadd.f32 %v6038, 1e-05
        %v6047 = vrsqrt.pop %v6039
        %v6048 = vrsqrt.pop %v6040
        %v6049 = vrsqrt.pop %v6041
        %v6050 = vrsqrt.pop %v6042
        %v6051 = vrsqrt.pop %v6043
        %v6052 = vrsqrt.pop %v6044
        %v6053 = vrsqrt.pop %v6045
        %v6054 = vrsqrt.pop %v6046
        %v6055 = vmul.f32 %v5999, %v6047
        %v6056 = vmul.f32 %v6000, %v6048
        %v6057 = vmul.f32 %v6001, %v6049
        %v6058 = vmul.f32 %v6002, %v6050
        %v6059 = vmul.f32 %v6003, %v6051
        %v6060 = vmul.f32 %v6004, %v6052
        %v6061 = vmul.f32 %v6005, %v6053
        %v6062 = vmul.f32 %v6006, %v6054
        %v6064 = vlaneseq
        %v6065 = vshrl.u32 %v6064, 7
        %v6066 = vsub.s32 0, %v6065
        %v6067 = vrot.slane %v5973, %v6066
        %v6069 = vmul.f32 %v6055, %v6067
        %v6070 = vmul.f32 %v6056, %v6067
        %v6071 = vmul.f32 %v6057, %v6067
        %v6072 = vmul.f32 %v6058, %v6067
        %v6073 = vmul.f32 %v6059, %v6067
        %v6074 = vmul.f32 %v6060, %v6067
        %v6075 = vmul.f32 %v6061, %v6067
        %v6076 = vmul.f32 %v6062, %v6067
        %v6078 = vlaneseq
        %v6079 = vshrl.u32 %v6078, 7
        %v6080 = vsub.s32 0, %v6079
        %v6081 = vrot.slane %v5974, %v6080
        %v6083 = vadd.f32 %v6069, %v6081
        %v6084 = vadd.f32 %v6070, %v6081
        %v6085 = vadd.f32 %v6071, %v6081
        %v6086 = vadd.f32 %v6072, %v6081
        %v6087 = vadd.f32 %v6073, %v6081
        %v6088 = vadd.f32 %v6074, %v6081
        %v6089 = vadd.f32 %v6075, %v6081
        %v6090 = vadd.f32 %v6076, %v6081
        %v6091 = vld [vmem:[%s1593] sm:$0xff]
        %v6092 = vld [vmem:[%s1593 + $0x8] sm:$0xff]
        %v6093 = vld [vmem:[%s1593 + $0x10] sm:$0xff]
        %v6094 = vld [vmem:[%s1593 + $0x18] sm:$0xff]
        %v6095 = vld [vmem:[%s1593 + $0x20] sm:$0xff]
        %v6096 = vld [vmem:[%s1593 + $0x28] sm:$0xff]
        %v6097 = vld [vmem:[%s1593 + $0x30] sm:$0xff]
        %v6098 = vld [vmem:[%s1593 + $0x38] sm:$0xff]
        %v6099 = vld [vmem:[%s1593 + $0x40] sm:$0xff]
        %v6100 = vld [vmem:[%s1593 + $0x48] sm:$0xff]
        %v6101 = vld [vmem:[%s1593 + $0x50] sm:$0xff]
        %v6102 = vld [vmem:[%s1593 + $0x58] sm:$0xff]
        %v6103 = vld [vmem:[%s1593 + $0x60] sm:$0xff]
        %v6104 = vld [vmem:[%s1593 + $0x68] sm:$0xff]
        %v6105 = vld [vmem:[%s1593 + $0x70] sm:$0xff]
        %v6106 = vld [vmem:[%s1593 + $0x78] sm:$0xff]
        %v6107 = vld [vmem:[%s1593 + $0x80] sm:$0xff]
        %v6108 = vld [vmem:[%s1593 + $0x88] sm:$0xff]
        %v6109 = vld [vmem:[%s1593 + $0x90] sm:$0xff]
        %v6110 = vld [vmem:[%s1593 + $0x98] sm:$0xff]
        %v6111 = vld [vmem:[%s1593 + $0xa0] sm:$0xff]
        %v6112 = vld [vmem:[%s1593 + $0xa8] sm:$0xff]
        %v6113 = vld [vmem:[%s1593 + $0xb0] sm:$0xff]
        %v6114 = vld [vmem:[%s1593 + $0xb8] sm:$0xff]
        %v6115 = vld [vmem:[%s1593 + $0xc0] sm:$0xff]
        %v6116 = vld [vmem:[%s1593 + $0xc8] sm:$0xff]
        %v6117 = vld [vmem:[%s1593 + $0xd0] sm:$0xff]
        %v6118 = vld [vmem:[%s1593 + $0xd8] sm:$0xff]
        %v6119 = vld [vmem:[%s1593 + $0xe0] sm:$0xff]
        %v6120 = vld [vmem:[%s1593 + $0xe8] sm:$0xff]
        %v6121 = vld [vmem:[%s1593 + $0xf0] sm:$0xff]
        %v6122 = vld [vmem:[%s1593 + $0xf8] sm:$0xff]
        %v6123 = vpack.c.bf16 %v6084, %v6083
        %v6124 = vpack.c.bf16 %v6086, %v6085
        %v6125 = vpack.c.bf16 %v6088, %v6087
        %v6126 = vpack.c.bf16 %v6090, %v6089
        %v6127 = vld [vmem:[%s1602] sm:$0xf]
        %v6129 = vlaneseq
        %v6130 = vshrl.u32 %v6129, 7
        %v6131 = vsub.s32 0, %v6130
        %v6132 = vrot.slane %v6127, %v6131
        %v6133 = vlaneseq
        %v6134 = vshrl.u32 %v6133, 7
        %v6135 = vsub.s32 1, %v6134
        %v6136 = vrot.slane %v6127, %v6135
        %v6137 = vlaneseq
        %v6138 = vshrl.u32 %v6137, 7
        %v6139 = vsub.s32 2, %v6138
        %v6140 = vrot.slane %v6127, %v6139
        %v6141 = vlaneseq
        %v6142 = vshrl.u32 %v6141, 7
        %v6143 = vsub.s32 3, %v6142
        %v6144 = vrot.slane %v6127, %v6143
        %v6181 = vunpack.c.l.b16 %v6091
        %v6182 = vunpack.c.h.b16 %v6091
        %v6183 = vunpack.c.l.b16 %v6092
        %v6184 = vunpack.c.h.b16 %v6092
        %v6185 = vunpack.c.l.b16 %v6093
        %v6186 = vunpack.c.h.b16 %v6093
        %v6187 = vunpack.c.l.b16 %v6094
        %v6188 = vunpack.c.h.b16 %v6094
        %v6189 = vunpack.c.l.b16 %v6095
        %v6190 = vunpack.c.h.b16 %v6095
        %v6191 = vunpack.c.l.b16 %v6096
        %v6192 = vunpack.c.h.b16 %v6096
        %v6193 = vunpack.c.l.b16 %v6097
        %v6194 = vunpack.c.h.b16 %v6097
        %v6195 = vunpack.c.l.b16 %v6098
        %v6196 = vunpack.c.h.b16 %v6098
        %v6197 = vunpack.c.l.b16 %v6099
        %v6198 = vunpack.c.h.b16 %v6099
        %v6199 = vunpack.c.l.b16 %v6100
        %v6200 = vunpack.c.h.b16 %v6100
        %v6201 = vunpack.c.l.b16 %v6101
        %v6202 = vunpack.c.h.b16 %v6101
        %v6203 = vunpack.c.l.b16 %v6102
        %v6204 = vunpack.c.h.b16 %v6102
        %v6205 = vunpack.c.l.b16 %v6103
        %v6206 = vunpack.c.h.b16 %v6103
        %v6207 = vunpack.c.l.b16 %v6104
        %v6208 = vunpack.c.h.b16 %v6104
        %v6209 = vunpack.c.l.b16 %v6105
        %v6210 = vunpack.c.h.b16 %v6105
        %v6211 = vunpack.c.l.b16 %v6106
        %v6212 = vunpack.c.h.b16 %v6106
        %v6213 = vunpack.c.l.b16 %v6107
        %v6214 = vunpack.c.h.b16 %v6107
        %v6215 = vunpack.c.l.b16 %v6108
        %v6216 = vunpack.c.h.b16 %v6108
        %v6217 = vunpack.c.l.b16 %v6109
        %v6218 = vunpack.c.h.b16 %v6109
        %v6219 = vunpack.c.l.b16 %v6110
        %v6220 = vunpack.c.h.b16 %v6110
        %v6221 = vunpack.c.l.b16 %v6111
        %v6222 = vunpack.c.h.b16 %v6111
        %v6223 = vunpack.c.l.b16 %v6112
        %v6224 = vunpack.c.h.b16 %v6112
        %v6225 = vunpack.c.l.b16 %v6113
        %v6226 = vunpack.c.h.b16 %v6113
        %v6227 = vunpack.c.l.b16 %v6114
        %v6228 = vunpack.c.h.b16 %v6114
        %v6229 = vunpack.c.l.b16 %v6115
        %v6230 = vunpack.c.h.b16 %v6115
        %v6231 = vunpack.c.l.b16 %v6116
        %v6232 = vunpack.c.h.b16 %v6116
        %v6233 = vunpack.c.l.b16 %v6117
        %v6234 = vunpack.c.h.b16 %v6117
        %v6235 = vunpack.c.l.b16 %v6118
        %v6236 = vunpack.c.h.b16 %v6118
        %v6237 = vunpack.c.l.b16 %v6119
        %v6238 = vunpack.c.h.b16 %v6119
        %v6239 = vunpack.c.l.b16 %v6120
        %v6240 = vunpack.c.h.b16 %v6120
        %v6241 = vunpack.c.l.b16 %v6121
        %v6242 = vunpack.c.h.b16 %v6121
        %v6243 = vunpack.c.l.b16 %v6122
        %v6244 = vunpack.c.h.b16 %v6122
        %v6245 = vpack.c.b16 %v6185, %v6181
        %v6246 = vpack.c.b16 %v6186, %v6182
        %v6247 = vpack.c.b16 %v6187, %v6183
        %v6248 = vpack.c.b16 %v6188, %v6184
        %v6249 = vpack.c.b16 %v6193, %v6189
        %v6250 = vpack.c.b16 %v6194, %v6190
        %v6251 = vpack.c.b16 %v6195, %v6191
        %v6252 = vpack.c.b16 %v6196, %v6192
        %v6253 = vpack.c.b16 %v6201, %v6197
        %v6254 = vpack.c.b16 %v6202, %v6198
        %v6255 = vpack.c.b16 %v6203, %v6199
        %v6256 = vpack.c.b16 %v6204, %v6200
        %v6257 = vpack.c.b16 %v6209, %v6205
        %v6258 = vpack.c.b16 %v6210, %v6206
        %v6259 = vpack.c.b16 %v6211, %v6207
        %v6260 = vpack.c.b16 %v6212, %v6208
        %v6261 = vpack.c.b16 %v6217, %v6213
        %v6262 = vpack.c.b16 %v6218, %v6214
        %v6263 = vpack.c.b16 %v6219, %v6215
        %v6264 = vpack.c.b16 %v6220, %v6216
        %v6265 = vpack.c.b16 %v6225, %v6221
        %v6266 = vpack.c.b16 %v6226, %v6222
        %v6267 = vpack.c.b16 %v6227, %v6223
        %v6268 = vpack.c.b16 %v6228, %v6224
        %v6269 = vpack.c.b16 %v6233, %v6229
        %v6270 = vpack.c.b16 %v6234, %v6230
        %v6271 = vpack.c.b16 %v6235, %v6231
        %v6272 = vpack.c.b16 %v6236, %v6232
        %v6273 = vpack.c.b16 %v6241, %v6237
        %v6274 = vpack.c.b16 %v6242, %v6238
        %v6275 = vpack.c.b16 %v6243, %v6239
        %v6276 = vpack.c.b16 %v6244, %v6240
        %6309 = vmatprep.subr.bf16.mxu0 %v6246
        %6310 = vmatpush1.bf16.msra.mxu0 %v6245
        %6311 = vmatprep.subr.bf16.mxu0 %v6250
        %6312 = vmatpush1.bf16.msra.mxu0 %v6249
        %6313 = vmatprep.subr.bf16.mxu0 %v6254
        %6314 = vmatpush1.bf16.msra.mxu0 %v6253
        %6315 = vmatprep.subr.bf16.mxu0 %v6258
        %6316 = vmatpush1.bf16.msra.mxu0 %v6257
        %6317 = vmatprep.subr.bf16.mxu0 %v6262
        %6318 = vmatpush1.bf16.msra.mxu0 %v6261
        %6319 = vmatprep.subr.bf16.mxu0 %v6266
        %6320 = vmatpush1.bf16.msra.mxu0 %v6265
        %6321 = vmatprep.subr.bf16.mxu0 %v6270
        %6322 = vmatpush1.bf16.msra.mxu0 %v6269
        %6323 = vmatprep.subr.bf16.mxu0 %v6274
        %6324 = vmatpush1.bf16.msra.mxu0 %v6273
        %6325 = vmatprep.subr.bf16.mxu0 0
        %6326 = vmatpush1.bf16.msra.mxu0 0
        %6327 = vmatprep.subr.bf16.mxu0 0
        %6328 = vmatpush1.bf16.msra.mxu0 0
        %6329 = vmatprep.subr.bf16.mxu0 0
        %6330 = vmatpush1.bf16.msra.mxu0 0
        %6331 = vmatprep.subr.bf16.mxu0 0
        %6332 = vmatpush1.bf16.msra.mxu0 0
        %6333 = vmatprep.subr.bf16.mxu0 0
        %6334 = vmatpush1.bf16.msra.mxu0 0
        %6335 = vmatprep.subr.bf16.mxu0 0
        %6336 = vmatpush1.bf16.msra.mxu0 0
        %6337 = vmatprep.subr.bf16.mxu0 0
        %6338 = vmatpush1.bf16.msra.mxu0 0
        %6339 = vmatprep.subr.bf16.mxu0 0
        %6340 = vmatpush1.bf16.msra.mxu0 0
        %6341 = vmatprep.mubr.bf16.mxu0 0
        %6342 = vmatmul.mubr.bf16.gmra.mrb[0].mxu0 %v6123
        %v6343 = vpop.f32.mrb[0].mxu0
        %v6344 = vadd.f32 %v6132, %v6343
        %v6345 = vpop.f32.mrb[0].mxu0
        %v6346 = vadd.f32 %v6136, %v6345
        %v6347 = vpop.f32.mrb[0].mxu0
        %v6348 = vadd.f32 %v6132, %v6347
        %v6349 = vpop.f32.mrb[0].mxu0
        %v6350 = vadd.f32 %v6136, %v6349
        %6351 = vmatprep.mubr.bf16.mxu0 0
        %6352 = vmatmul.mubr.bf16.gmra.mrb[0].mxu0 %v6124
        %v6353 = vpop.f32.mrb[0].mxu0
        %v6354 = vadd.f32 %v6132, %v6353
        %v6355 = vpop.f32.mrb[0].mxu0
        %v6356 = vadd.f32 %v6136, %v6355
        %v6357 = vpop.f32.mrb[0].mxu0
        %v6358 = vadd.f32 %v6132, %v6357
        %v6359 = vpop.f32.mrb[0].mxu0
        %v6360 = vadd.f32 %v6136, %v6359
        %6361 = vmatprep.mubr.bf16.mxu0 0
        %6362 = vmatmul.mubr.bf16.gmra.mrb[0].mxu0 %v6125
        %v6363 = vpop.f32.mrb[0].mxu0
        %v6364 = vadd.f32 %v6132, %v6363
        %v6365 = vpop.f32.mrb[0].mxu0
        %v6366 = vadd.f32 %v6136, %v6365
        %v6367 = vpop.f32.mrb[0].mxu0
        %v6368 = vadd.f32 %v6132, %v6367
        %v6369 = vpop.f32.mrb[0].mxu0
        %v6370 = vadd.f32 %v6136, %v6369
        %6371 = vmatprep.mubr.bf16.mxu0 0
        %6372 = vmatmul.mubr.bf16.gmra.mrb[0].mxu0 %v6126
        %v6373 = vpop.f32.mrb[0].mxu0
        %v6374 = vadd.f32 %v6132, %v6373
        %v6375 = vpop.f32.mrb[0].mxu0
        %v6376 = vadd.f32 %v6136, %v6375
        %v6377 = vpop.f32.mrb[0].mxu0
        %v6378 = vadd.f32 %v6132, %v6377
        %v6379 = vpop.f32.mrb[0].mxu0
        %v6380 = vadd.f32 %v6136, %v6379
        %6381 = vdwg.mxu0
        %6382 = vmatprep.subr.bf16.mxu0 %v6248
        %6383 = vmatpush1.bf16.msra.mxu0 %v6247
        %6384 = vmatprep.subr.bf16.mxu0 %v6252
        %6385 = vmatpush1.bf16.msra.mxu0 %v6251
        %6386 = vmatprep.subr.bf16.mxu0 %v6256
        %6387 = vmatpush1.bf16.msra.mxu0 %v6255
        %6388 = vmatprep.subr.bf16.mxu0 %v6260
        %6389 = vmatpush1.bf16.msra.mxu0 %v6259
        %6390 = vmatprep.subr.bf16.mxu0 %v6264
        %6391 = vmatpush1.bf16.msra.mxu0 %v6263
        %6392 = vmatprep.subr.bf16.mxu0 %v6268
        %6393 = vmatpush1.bf16.msra.mxu0 %v6267
        %6394 = vmatprep.subr.bf16.mxu0 %v6272
        %6395 = vmatpush1.bf16.msra.mxu0 %v6271
        %6396 = vmatprep.subr.bf16.mxu0 %v6276
        %6397 = vmatpush1.bf16.msra.mxu0 %v6275
        %6398 = vmatprep.subr.bf16.mxu0 0
        %6399 = vmatpush1.bf16.msra.mxu0 0
        %6400 = vmatprep.subr.bf16.mxu0 0
        %6401 = vmatpush1.bf16.msra.mxu0 0
        %6402 = vmatprep.subr.bf16.mxu0 0
        %6403 = vmatpush1.bf16.msra.mxu0 0
        %6404 = vmatprep.subr.bf16.mxu0 0
        %6405 = vmatpush1.bf16.msra.mxu0 0
        %6406 = vmatprep.subr.bf16.mxu0 0
        %6407 = vmatpush1.bf16.msra.mxu0 0
        %6408 = vmatprep.subr.bf16.mxu0 0
        %6409 = vmatpush1.bf16.msra.mxu0 0
        %6410 = vmatprep.subr.bf16.mxu0 0
        %6411 = vmatpush1.bf16.msra.mxu0 0
        %6412 = vmatprep.subr.bf16.mxu0 0
        %6413 = vmatpush1.bf16.msra.mxu0 0
        %6414 = vmatprep.mubr.bf16.mxu0 0
        %6415 = vmatmul.mubr.bf16.gmra.mrb[0].mxu0 %v6123
        %v6416 = vpop.f32.mrb[0].mxu0
        %v6417 = vadd.f32 %v6140, %v6416
        %v6418 = vpop.f32.mrb[0].mxu0
        %v6419 = vadd.f32 %v6144, %v6418
        %v6420 = vpop.f32.mrb[0].mxu0
        %v6421 = vadd.f32 %v6140, %v6420
        %v6422 = vpop.f32.mrb[0].mxu0
        %v6423 = vadd.f32 %v6144, %v6422
        %6424 = vmatprep.mubr.bf16.mxu0 0
        %6425 = vmatmul.mubr.bf16.gmra.mrb[0].mxu0 %v6124
        %v6426 = vpop.f32.mrb[0].mxu0
        %v6427 = vadd.f32 %v6140, %v6426
        %v6428 = vpop.f32.mrb[0].mxu0
        %v6429 = vadd.f32 %v6144, %v6428
        %v6430 = vpop.f32.mrb[0].mxu0
        %v6431 = vadd.f32 %v6140, %v6430
        %v6432 = vpop.f32.mrb[0].mxu0
        %v6433 = vadd.f32 %v6144, %v6432
        %6434 = vmatprep.mubr.bf16.mxu0 0
        %6435 = vmatmul.mubr.bf16.gmra.mrb[0].mxu0 %v6125
        %v6436 = vpop.f32.mrb[0].mxu0
        %v6437 = vadd.f32 %v6140, %v6436
        %v6438 = vpop.f32.mrb[0].mxu0
        %v6439 = vadd.f32 %v6144, %v6438
        %v6440 = vpop.f32.mrb[0].mxu0
        %v6441 = vadd.f32 %v6140, %v6440
        %v6442 = vpop.f32.mrb[0].mxu0
        %v6443 = vadd.f32 %v6144, %v6442
        %6444 = vmatprep.mubr.bf16.mxu0 0
        %6445 = vmatmul.mubr.bf16.gmra.mrb[0].mxu0 %v6126
        %v6446 = vpop.f32.mrb[0].mxu0
        %v6447 = vadd.f32 %v6140, %v6446
        %v6448 = vpop.f32.mrb[0].mxu0
        %v6449 = vadd.f32 %v6144, %v6448
        %v6450 = vpop.f32.mrb[0].mxu0
        %v6451 = vadd.f32 %v6140, %v6450
        %v6452 = vpop.f32.mrb[0].mxu0
        %v6453 = vadd.f32 %v6144, %v6452
        %6454 = vdwg.mxu0
        %v6455 = vxor.u32 %v6344, 2147483648
        %v6456 = vxor.u32 %v6346, 2147483648
        %v6457 = vxor.u32 %v6417, 2147483648
        %v6458 = vxor.u32 %v6419, 2147483648
        %v6459 = vxor.u32 %v6348, 2147483648
        %v6460 = vxor.u32 %v6350, 2147483648
        %v6461 = vxor.u32 %v6421, 2147483648
        %v6462 = vxor.u32 %v6423, 2147483648
        %v6463 = vxor.u32 %v6354, 2147483648
        %v6464 = vxor.u32 %v6356, 2147483648
        %v6465 = vxor.u32 %v6427, 2147483648
        %v6466 = vxor.u32 %v6429, 2147483648
        %v6467 = vxor.u32 %v6358, 2147483648
        %v6468 = vxor.u32 %v6360, 2147483648
        %v6469 = vxor.u32 %v6431, 2147483648
        %v6470 = vxor.u32 %v6433, 2147483648
        %v6471 = vxor.u32 %v6364, 2147483648
        %v6472 = vxor.u32 %v6366, 2147483648
        %v6473 = vxor.u32 %v6437, 2147483648
        %v6474 = vxor.u32 %v6439, 2147483648
        %v6475 = vxor.u32 %v6368, 2147483648
        %v6476 = vxor.u32 %v6370, 2147483648
        %v6477 = vxor.u32 %v6441, 2147483648
        %v6478 = vxor.u32 %v6443, 2147483648
        %v6479 = vxor.u32 %v6374, 2147483648
        %v6480 = vxor.u32 %v6376, 2147483648
        %v6481 = vxor.u32 %v6447, 2147483648
        %v6482 = vxor.u32 %v6449, 2147483648
        %v6483 = vxor.u32 %v6378, 2147483648
        %v6484 = vxor.u32 %v6380, 2147483648
        %v6485 = vxor.u32 %v6451, 2147483648
        %v6486 = vxor.u32 %v6453, 2147483648
        %v6487 = vmul.f32 %v6455, 1.442695
        %v6488 = vpow.pop %v6487
        %v6489 = vmul.f32 %v6456, 1.442695
        %v6490 = vpow.pop %v6489
        %v6491 = vmul.f32 %v6457, 1.442695
        %v6492 = vpow.pop %v6491
        %v6493 = vmul.f32 %v6458, 1.442695
        %v6494 = vpow.pop %v6493
        %v6495 = vmul.f32 %v6459, 1.442695
        %v6496 = vpow.pop %v6495
        %v6497 = vmul.f32 %v6460, 1.442695
        %v6498 = vpow.pop %v6497
        %v6499 = vmul.f32 %v6461, 1.442695
        %v6500 = vpow.pop %v6499
        %v6501 = vmul.f32 %v6462, 1.442695
        %v6502 = vpow.pop %v6501
        %v6503 = vmul.f32 %v6463, 1.442695
        %v6504 = vpow.pop %v6503
        %v6505 = vmul.f32 %v6464, 1.442695
        %v6506 = vpow.pop %v6505
        %v6507 = vmul.f32 %v6465, 1.442695
        %v6508 = vpow.pop %v6507
        %v6509 = vmul.f32 %v6466, 1.442695
        %v6510 = vpow.pop %v6509
        %v6511 = vmul.f32 %v6467, 1.442695
        %v6512 = vpow.pop %v6511
        %v6513 = vmul.f32 %v6468, 1.442695
        %v6514 = vpow.pop %v6513
        %v6515 = vmul.f32 %v6469, 1.442695
        %v6516 = vpow.pop %v6515
        %v6517 = vmul.f32 %v6470, 1.442695
        %v6518 = vpow.pop %v6517
        %v6519 = vmul.f32 %v6471, 1.442695
        %v6520 = vpow.pop %v6519
        %v6521 = vmul.f32 %v6472, 1.442695
        %v6522 = vpow.pop %v6521
        %v6523 = vmul.f32 %v6473, 1.442695
        %v6524 = vpow.pop %v6523
        %v6525 = vmul.f32 %v6474, 1.442695
        %v6526 = vpow.pop %v6525
        %v6527 = vmul.f32 %v6475, 1.442695
        %v6528 = vpow.pop %v6527
        %v6529 = vmul.f32 %v6476, 1.442695
        %v6530 = vpow.pop %v6529
        %v6531 = vmul.f32 %v6477, 1.442695
        %v6532 = vpow.pop %v6531
        %v6533 = vmul.f32 %v6478, 1.442695
        %v6534 = vpow.pop %v6533
        %v6535 = vmul.f32 %v6479, 1.442695
        %v6536 = vpow.pop %v6535
        %v6537 = vmul.f32 %v6480, 1.442695
        %v6538 = vpow.pop %v6537
        %v6539 = vmul.f32 %v6481, 1.442695
        %v6540 = vpow.pop %v6539
        %v6541 = vmul.f32 %v6482, 1.442695
        %v6542 = vpow.pop %v6541
        %v6543 = vmul.f32 %v6483, 1.442695
        %v6544 = vpow.pop %v6543
        %v6545 = vmul.f32 %v6484, 1.442695
        %v6546 = vpow.pop %v6545
        %v6547 = vmul.f32 %v6485, 1.442695
        %v6548 = vpow.pop %v6547
        %v6549 = vmul.f32 %v6486, 1.442695
        %v6550 = vpow.pop %v6549
        %v6551 = vadd.f32 %v6488, 1.0
        %v6552 = vadd.f32 %v6490, 1.0
        %v6553 = vadd.f32 %v6492, 1.0
        %v6554 = vadd.f32 %v6494, 1.0
        %v6555 = vadd.f32 %v6496, 1.0
        %v6556 = vadd.f32 %v6498, 1.0
        %v6557 = vadd.f32 %v6500, 1.0
        %v6558 = vadd.f32 %v6502, 1.0
        %v6559 = vadd.f32 %v6504, 1.0
        %v6560 = vadd.f32 %v6506, 1.0
        %v6561 = vadd.f32 %v6508, 1.0
        %v6562 = vadd.f32 %v6510, 1.0
        %v6563 = vadd.f32 %v6512, 1.0
        %v6564 = vadd.f32 %v6514, 1.0
        %v6565 = vadd.f32 %v6516, 1.0
        %v6566 = vadd.f32 %v6518, 1.0
        %v6567 = vadd.f32 %v6520, 1.0
        %v6568 = vadd.f32 %v6522, 1.0
        %v6569 = vadd.f32 %v6524, 1.0
        %v6570 = vadd.f32 %v6526, 1.0
        %v6571 = vadd.f32 %v6528, 1.0
        %v6572 = vadd.f32 %v6530, 1.0
        %v6573 = vadd.f32 %v6532, 1.0
        %v6574 = vadd.f32 %v6534, 1.0
        %v6575 = vadd.f32 %v6536, 1.0
        %v6576 = vadd.f32 %v6538, 1.0
        %v6577 = vadd.f32 %v6540, 1.0
        %v6578 = vadd.f32 %v6542, 1.0
        %v6579 = vadd.f32 %v6544, 1.0
        %v6580 = vadd.f32 %v6546, 1.0
        %v6581 = vadd.f32 %v6548, 1.0
        %v6582 = vadd.f32 %v6550, 1.0
        %v6583 = vrcp.pop %v6551
        %v6584 = vmul.f32 1.0, %v6583
        %v6585 = vrcp.pop %v6552
        %v6586 = vmul.f32 1.0, %v6585
        %v6587 = vrcp.pop %v6553
        %v6588 = vmul.f32 1.0, %v6587
        %v6589 = vrcp.pop %v6554
        %v6590 = vmul.f32 1.0, %v6589
        %v6591 = vrcp.pop %v6555
        %v6592 = vmul.f32 1.0, %v6591
        %v6593 = vrcp.pop %v6556
        %v6594 = vmul.f32 1.0, %v6593
        %v6595 = vrcp.pop %v6557
        %v6596 = vmul.f32 1.0, %v6595
        %v6597 = vrcp.pop %v6558
        %v6598 = vmul.f32 1.0, %v6597
        %v6599 = vrcp.pop %v6559
        %v6600 = vmul.f32 1.0, %v6599
        %v6601 = vrcp.pop %v6560
        %v6602 = vmul.f32 1.0, %v6601
        %v6603 = vrcp.pop %v6561
        %v6604 = vmul.f32 1.0, %v6603
        %v6605 = vrcp.pop %v6562
        %v6606 = vmul.f32 1.0, %v6605
        %v6607 = vrcp.pop %v6563
        %v6608 = vmul.f32 1.0, %v6607
        %v6609 = vrcp.pop %v6564
        %v6610 = vmul.f32 1.0, %v6609
        %v6611 = vrcp.pop %v6565
        %v6612 = vmul.f32 1.0, %v6611
        %v6613 = vrcp.pop %v6566
        %v6614 = vmul.f32 1.0, %v6613
        %v6615 = vrcp.pop %v6567
        %v6616 = vmul.f32 1.0, %v6615
        %v6617 = vrcp.pop %v6568
        %v6618 = vmul.f32 1.0, %v6617
        %v6619 = vrcp.pop %v6569
        %v6620 = vmul.f32 1.0, %v6619
        %v6621 = vrcp.pop %v6570
        %v6622 = vmul.f32 1.0, %v6621
        %v6623 = vrcp.pop %v6571
        %v6624 = vmul.f32 1.0, %v6623
        %v6625 = vrcp.pop %v6572
        %v6626 = vmul.f32 1.0, %v6625
        %v6627 = vrcp.pop %v6573
        %v6628 = vmul.f32 1.0, %v6627
        %v6629 = vrcp.pop %v6574
        %v6630 = vmul.f32 1.0, %v6629
        %v6631 = vrcp.pop %v6575
        %v6632 = vmul.f32 1.0, %v6631
        %v6633 = vrcp.pop %v6576
        %v6634 = vmul.f32 1.0, %v6633
        %v6635 = vrcp.pop %v6577
        %v6636 = vmul.f32 1.0, %v6635
        %v6637 = vrcp.pop %v6578
        %v6638 = vmul.f32 1.0, %v6637
        %v6639 = vrcp.pop %v6579
        %v6640 = vmul.f32 1.0, %v6639
        %v6641 = vrcp.pop %v6580
        %v6642 = vmul.f32 1.0, %v6641
        %v6643 = vrcp.pop %v6581
        %v6644 = vmul.f32 1.0, %v6643
        %v6645 = vrcp.pop %v6582
        %v6646 = vmul.f32 1.0, %v6645
        %v6647 = vmul.f32 %v6344, %v6584
        %v6648 = vmul.f32 %v6346, %v6586
        %v6649 = vmul.f32 %v6417, %v6588
        %v6650 = vmul.f32 %v6419, %v6590
        %v6651 = vmul.f32 %v6348, %v6592
        %v6652 = vmul.f32 %v6350, %v6594
        %v6653 = vmul.f32 %v6421, %v6596
        %v6654 = vmul.f32 %v6423, %v6598
        %v6655 = vmul.f32 %v6354, %v6600
        %v6656 = vmul.f32 %v6356, %v6602
        %v6657 = vmul.f32 %v6427, %v6604
        %v6658 = vmul.f32 %v6429, %v6606
        %v6659 = vmul.f32 %v6358, %v6608
        %v6660 = vmul.f32 %v6360, %v6610
        %v6661 = vmul.f32 %v6431, %v6612
        %v6662 = vmul.f32 %v6433, %v6614
        %v6663 = vmul.f32 %v6364, %v6616
        %v6664 = vmul.f32 %v6366, %v6618
        %v6665 = vmul.f32 %v6437, %v6620
        %v6666 = vmul.f32 %v6439, %v6622
        %v6667 = vmul.f32 %v6368, %v6624
        %v6668 = vmul.f32 %v6370, %v6626
        %v6669 = vmul.f32 %v6441, %v6628
        %v6670 = vmul.f32 %v6443, %v6630
        %v6671 = vmul.f32 %v6374, %v6632
        %v6672 = vmul.f32 %v6376, %v6634
        %v6673 = vmul.f32 %v6447, %v6636
        %v6674 = vmul.f32 %v6449, %v6638
        %v6675 = vmul.f32 %v6378, %v6640
        %v6676 = vmul.f32 %v6380, %v6642
        %v6677 = vmul.f32 %v6451, %v6644
        %v6678 = vmul.f32 %v6453, %v6646
        %v6679 = vld [vmem:[%s1611] sm:$0xf]
        %v6680 = vld [vmem:[%s1611 + $0x4] sm:$0xf]
        %v6681 = vld [vmem:[%s1611 + $0x8] sm:$0xf]
        %v6682 = vld [vmem:[%s1611 + $0xc] sm:$0xf]
        %v6683 = vld [vmem:[%s1611 + $0x10] sm:$0xf]
        %v6684 = vld [vmem:[%s1611 + $0x14] sm:$0xf]
        %v6685 = vld [vmem:[%s1611 + $0x18] sm:$0xf]
        %v6686 = vld [vmem:[%s1611 + $0x1c] sm:$0xf]
        %v6687 = vld [vmem:[%s1611 + $0x20] sm:$0xf]
        %v6688 = vld [vmem:[%s1611 + $0x24] sm:$0xf]
        %v6689 = vld [vmem:[%s1611 + $0x28] sm:$0xf]
        %v6690 = vld [vmem:[%s1611 + $0x2c] sm:$0xf]
        %v6691 = vld [vmem:[%s1611 + $0x30] sm:$0xf]
        %v6692 = vld [vmem:[%s1611 + $0x34] sm:$0xf]
        %v6693 = vld [vmem:[%s1611 + $0x38] sm:$0xf]
        %v6694 = vld [vmem:[%s1611 + $0x3c] sm:$0xf]
        %v6695 = vld [vmem:[%s1611 + $0x40] sm:$0xf]
        %v6696 = vld [vmem:[%s1611 + $0x44] sm:$0xf]
        %v6697 = vld [vmem:[%s1611 + $0x48] sm:$0xf]
        %v6698 = vld [vmem:[%s1611 + $0x4c] sm:$0xf]
        %v6699 = vld [vmem:[%s1611 + $0x50] sm:$0xf]
        %v6700 = vld [vmem:[%s1611 + $0x54] sm:$0xf]
        %v6701 = vld [vmem:[%s1611 + $0x58] sm:$0xf]
        %v6702 = vld [vmem:[%s1611 + $0x5c] sm:$0xf]
        %v6703 = vld [vmem:[%s1611 + $0x60] sm:$0xf]
        %v6704 = vld [vmem:[%s1611 + $0x64] sm:$0xf]
        %v6705 = vld [vmem:[%s1611 + $0x68] sm:$0xf]
        %v6706 = vld [vmem:[%s1611 + $0x6c] sm:$0xf]
        %v6707 = vld [vmem:[%s1611 + $0x70] sm:$0xf]
        %v6708 = vld [vmem:[%s1611 + $0x74] sm:$0xf]
        %v6709 = vld [vmem:[%s1611 + $0x78] sm:$0xf]
        %v6710 = vld [vmem:[%s1611 + $0x7c] sm:$0xf]
        %v6711 = vld [vmem:[%s1611 + $0x80] sm:$0xf]
        %v6712 = vld [vmem:[%s1611 + $0x84] sm:$0xf]
        %v6713 = vld [vmem:[%s1611 + $0x88] sm:$0xf]
        %v6714 = vld [vmem:[%s1611 + $0x8c] sm:$0xf]
        %v6715 = vld [vmem:[%s1611 + $0x90] sm:$0xf]
        %v6716 = vld [vmem:[%s1611 + $0x94] sm:$0xf]
        %v6717 = vld [vmem:[%s1611 + $0x98] sm:$0xf]
        %v6718 = vld [vmem:[%s1611 + $0x9c] sm:$0xf]
        %v6719 = vld [vmem:[%s1611 + $0xa0] sm:$0xf]
        %v6720 = vld [vmem:[%s1611 + $0xa4] sm:$0xf]
        %v6721 = vld [vmem:[%s1611 + $0xa8] sm:$0xf]
        %v6722 = vld [vmem:[%s1611 + $0xac] sm:$0xf]
        %v6723 = vld [vmem:[%s1611 + $0xb0] sm:$0xf]
        %v6724 = vld [vmem:[%s1611 + $0xb4] sm:$0xf]
        %v6725 = vld [vmem:[%s1611 + $0xb8] sm:$0xf]
        %v6726 = vld [vmem:[%s1611 + $0xbc] sm:$0xf]
        %v6727 = vld [vmem:[%s1611 + $0xc0] sm:$0xf]
        %v6728 = vld [vmem:[%s1611 + $0xc4] sm:$0xf]
        %v6729 = vld [vmem:[%s1611 + $0xc8] sm:$0xf]
        %v6730 = vld [vmem:[%s1611 + $0xcc] sm:$0xf]
        %v6731 = vld [vmem:[%s1611 + $0xd0] sm:$0xf]
        %v6732 = vld [vmem:[%s1611 + $0xd4] sm:$0xf]
        %v6733 = vld [vmem:[%s1611 + $0xd8] sm:$0xf]
        %v6734 = vld [vmem:[%s1611 + $0xdc] sm:$0xf]
        %v6735 = vld [vmem:[%s1611 + $0xe0] sm:$0xf]
        %v6736 = vld [vmem:[%s1611 + $0xe4] sm:$0xf]
        %v6737 = vld [vmem:[%s1611 + $0xe8] sm:$0xf]
        %v6738 = vld [vmem:[%s1611 + $0xec] sm:$0xf]
        %v6739 = vld [vmem:[%s1611 + $0xf0] sm:$0xf]
        %v6740 = vld [vmem:[%s1611 + $0xf4] sm:$0xf]
        %v6741 = vld [vmem:[%s1611 + $0xf8] sm:$0xf]
        %v6742 = vld [vmem:[%s1611 + $0xfc] sm:$0xf]
        %v6743 = vpack.c.bf16 %v6651, %v6647
        %v6744 = vpack.c.bf16 %v6652, %v6648
        %v6745 = vpack.c.bf16 %v6653, %v6649
        %v6746 = vpack.c.bf16 %v6654, %v6650
        %v6747 = vpack.c.bf16 %v6659, %v6655
        %v6748 = vpack.c.bf16 %v6660, %v6656
        %v6749 = vpack.c.bf16 %v6661, %v6657
        %v6750 = vpack.c.bf16 %v6662, %v6658
        %v6751 = vpack.c.bf16 %v6667, %v6663
        %v6752 = vpack.c.bf16 %v6668, %v6664
        %v6753 = vpack.c.bf16 %v6669, %v6665
        %v6754 = vpack.c.bf16 %v6670, %v6666
        %v6755 = vpack.c.bf16 %v6675, %v6671
        %v6756 = vpack.c.bf16 %v6676, %v6672
        %v6757 = vpack.c.bf16 %v6677, %v6673
        %v6758 = vpack.c.bf16 %v6678, %v6674
        %v6759 = vld [vmem:[%s1619] sm:$0x1]
        %v6761 = vlaneseq
        %v6762 = vshrl.u32 %v6761, 7
        %v6763 = vsub.s32 0, %v6762
        %v6764 = vrot.slane %v6759, %v6763
        %v6830 = vunpack.c.l.b16 %v6679
        %v6831 = vunpack.c.l.b16 %v6680
        %v6832 = vunpack.c.l.b16 %v6681
        %v6833 = vunpack.c.l.b16 %v6682
        %v6834 = vunpack.c.l.b16 %v6683
        %v6835 = vunpack.c.l.b16 %v6684
        %v6836 = vunpack.c.l.b16 %v6685
        %v6837 = vunpack.c.l.b16 %v6686
        %v6838 = vunpack.c.l.b16 %v6687
        %v6839 = vunpack.c.l.b16 %v6688
        %v6840 = vunpack.c.l.b16 %v6689
        %v6841 = vunpack.c.l.b16 %v6690
        %v6842 = vunpack.c.l.b16 %v6691
        %v6843 = vunpack.c.l.b16 %v6692
        %v6844 = vunpack.c.l.b16 %v6693
        %v6845 = vunpack.c.l.b16 %v6694
        %v6846 = vunpack.c.l.b16 %v6695
        %v6847 = vunpack.c.l.b16 %v6696
        %v6848 = vunpack.c.l.b16 %v6697
        %v6849 = vunpack.c.l.b16 %v6698
        %v6850 = vunpack.c.l.b16 %v6699
        %v6851 = vunpack.c.l.b16 %v6700
        %v6852 = vunpack.c.l.b16 %v6701
        %v6853 = vunpack.c.l.b16 %v6702
        %v6854 = vunpack.c.l.b16 %v6703
        %v6855 = vunpack.c.l.b16 %v6704
        %v6856 = vunpack.c.l.b16 %v6705
        %v6857 = vunpack.c.l.b16 %v6706
        %v6858 = vunpack.c.l.b16 %v6707
        %v6859 = vunpack.c.l.b16 %v6708
        %v6860 = vunpack.c.l.b16 %v6709
        %v6861 = vunpack.c.l.b16 %v6710
        %v6862 = vunpack.c.l.b16 %v6711
        %v6863 = vunpack.c.l.b16 %v6712
        %v6864 = vunpack.c.l.b16 %v6713
        %v6865 = vunpack.c.l.b16 %v6714
        %v6866 = vunpack.c.l.b16 %v6715
        %v6867 = vunpack.c.l.b16 %v6716
        %v6868 = vunpack.c.l.b16 %v6717
        %v6869 = vunpack.c.l.b16 %v6718
        %v6870 = vunpack.c.l.b16 %v6719
        %v6871 = vunpack.c.l.b16 %v6720
        %v6872 = vunpack.c.l.b16 %v6721
        %v6873 = vunpack.c.l.b16 %v6722
        %v6874 = vunpack.c.l.b16 %v6723
        %v6875 = vunpack.c.l.b16 %v6724
        %v6876 = vunpack.c.l.b16 %v6725
        %v6877 = vunpack.c.l.b16 %v6726
        %v6878 = vunpack.c.l.b16 %v6727
        %v6879 = vunpack.c.l.b16 %v6728
        %v6880 = vunpack.c.l.b16 %v6729
        %v6881 = vunpack.c.l.b16 %v6730
        %v6882 = vunpack.c.l.b16 %v6731
        %v6883 = vunpack.c.l.b16 %v6732
        %v6884 = vunpack.c.l.b16 %v6733
        %v6885 = vunpack.c.l.b16 %v6734
        %v6886 = vunpack.c.l.b16 %v6735
        %v6887 = vunpack.c.l.b16 %v6736
        %v6888 = vunpack.c.l.b16 %v6737
        %v6889 = vunpack.c.l.b16 %v6738
        %v6890 = vunpack.c.l.b16 %v6739
        %v6891 = vunpack.c.l.b16 %v6740
        %v6892 = vunpack.c.l.b16 %v6741
        %v6893 = vunpack.c.l.b16 %v6742
        %v6894 = vpack.c.b16 %v6831, %v6830
        %v6895 = vpack.c.b16 %v6833, %v6832
        %v6896 = vpack.c.b16 %v6835, %v6834
        %v6897 = vpack.c.b16 %v6837, %v6836
        %v6898 = vpack.c.b16 %v6839, %v6838
        %v6899 = vpack.c.b16 %v6841, %v6840
        %v6900 = vpack.c.b16 %v6843, %v6842
        %v6901 = vpack.c.b16 %v6845, %v6844
        %v6902 = vpack.c.b16 %v6847, %v6846
        %v6903 = vpack.c.b16 %v6849, %v6848
        %v6904 = vpack.c.b16 %v6851, %v6850
        %v6905 = vpack.c.b16 %v6853, %v6852
        %v6906 = vpack.c.b16 %v6855, %v6854
        %v6907 = vpack.c.b16 %v6857, %v6856
        %v6908 = vpack.c.b16 %v6859, %v6858
        %v6909 = vpack.c.b16 %v6861, %v6860
        %v6910 = vpack.c.b16 %v6863, %v6862
        %v6911 = vpack.c.b16 %v6865, %v6864
        %v6912 = vpack.c.b16 %v6867, %v6866
        %v6913 = vpack.c.b16 %v6869, %v6868
        %v6914 = vpack.c.b16 %v6871, %v6870
        %v6915 = vpack.c.b16 %v6873, %v6872
        %v6916 = vpack.c.b16 %v6875, %v6874
        %v6917 = vpack.c.b16 %v6877, %v6876
        %v6918 = vpack.c.b16 %v6879, %v6878
        %v6919 = vpack.c.b16 %v6881, %v6880
        %v6920 = vpack.c.b16 %v6883, %v6882
        %v6921 = vpack.c.b16 %v6885, %v6884
        %v6922 = vpack.c.b16 %v6887, %v6886
        %v6923 = vpack.c.b16 %v6889, %v6888
        %v6924 = vpack.c.b16 %v6891, %v6890
        %v6925 = vpack.c.b16 %v6893, %v6892
        %6958 = vmatprep.subr.bf16.mxu0 0
        %6959 = vmatpush1.bf16.msra.mxu0 %v6894
        %6960 = vmatprep.subr.bf16.mxu0 0
        %6961 = vmatpush1.bf16.msra.mxu0 %v6895
        %6962 = vmatprep.subr.bf16.mxu0 0
        %6963 = vmatpush1.bf16.msra.mxu0 %v6896
        %6964 = vmatprep.subr.bf16.mxu0 0
        %6965 = vmatpush1.bf16.msra.mxu0 %v6897
        %6966 = vmatprep.subr.bf16.mxu0 0
        %6967 = vmatpush1.bf16.msra.mxu0 %v6898
        %6968 = vmatprep.subr.bf16.mxu0 0
        %6969 = vmatpush1.bf16.msra.mxu0 %v6899
        %6970 = vmatprep.subr.bf16.mxu0 0
        %6971 = vmatpush1.bf16.msra.mxu0 %v6900
        %6972 = vmatprep.subr.bf16.mxu0 0
        %6973 = vmatpush1.bf16.msra.mxu0 %v6901
        %6974 = vmatprep.subr.bf16.mxu0 0
        %6975 = vmatpush1.bf16.msra.mxu0 %v6902
        %6976 = vmatprep.subr.bf16.mxu0 0
        %6977 = vmatpush1.bf16.msra.mxu0 %v6903
        %6978 = vmatprep.subr.bf16.mxu0 0
        %6979 = vmatpush1.bf16.msra.mxu0 %v6904
        %6980 = vmatprep.subr.bf16.mxu0 0
        %6981 = vmatpush1.bf16.msra.mxu0 %v6905
        %6982 = vmatprep.subr.bf16.mxu0 0
        %6983 = vmatpush1.bf16.msra.mxu0 %v6906
        %6984 = vmatprep.subr.bf16.mxu0 0
        %6985 = vmatpush1.bf16.msra.mxu0 %v6907
        %6986 = vmatprep.subr.bf16.mxu0 0
        %6987 = vmatpush1.bf16.msra.mxu0 %v6908
        %6988 = vmatprep.subr.bf16.mxu0 0
        %6989 = vmatpush1.bf16.msra.mxu0 %v6909
        %6990 = vmatprep.mubr.bf16.mxu0 %v6744
        %6991 = vmatmul.mubr.bf16.gmra.mrb[0].mxu0 %v6743
        %v6992 = vpop.f32.mrb[0].mxu0
        %v6993 = vadd.f32 %v6764, %v6992
        %v6994 = vpop.f32.mrb[0].mxu0
        %v6995 = vpop.f32.mrb[0].mxu0
        %v6996 = vadd.f32 %v6764, %v6995
        %v6997 = vpop.f32.mrb[0].mxu0
        %6998 = vmatprep.mubr.bf16.mxu0 %v6748
        %6999 = vmatmul.mubr.bf16.gmra.mrb[0].mxu0 %v6747
        %v7000 = vpop.f32.mrb[0].mxu0
        %v7001 = vadd.f32 %v6764, %v7000
        %v7002 = vpop.f32.mrb[0].mxu0
        %v7003 = vpop.f32.mrb[0].mxu0
        %v7004 = vadd.f32 %v6764, %v7003
        %v7005 = vpop.f32.mrb[0].mxu0
        %7006 = vmatprep.mubr.bf16.mxu0 %v6752
        %7007 = vmatmul.mubr.bf16.gmra.mrb[0].mxu0 %v6751
        %v7008 = vpop.f32.mrb[0].mxu0
        %v7009 = vadd.f32 %v6764, %v7008
        %v7010 = vpop.f32.mrb[0].mxu0
        %v7011 = vpop.f32.mrb[0].mxu0
        %v7012 = vadd.f32 %v6764, %v7011
        %v7013 = vpop.f32.mrb[0].mxu0
        %7014 = vmatprep.mubr.bf16.mxu0 %v6756
        %7015 = vmatmul.mubr.bf16.gmra.mrb[0].mxu0 %v6755
        %v7016 = vpop.f32.mrb[0].mxu0
        %v7017 = vadd.f32 %v6764, %v7016
        %v7018 = vpop.f32.mrb[0].mxu0
        %v7019 = vpop.f32.mrb[0].mxu0
        %v7020 = vadd.f32 %v6764, %v7019
        %v7021 = vpop.f32.mrb[0].mxu0
        %7022 = vdwg.mxu0
        %7023 = vmatprep.subr.bf16.mxu0 0
        %7024 = vmatpush1.bf16.msra.mxu0 %v6910
        %7025 = vmatprep.subr.bf16.mxu0 0
        %7026 = vmatpush1.bf16.msra.mxu0 %v6911
        %7027 = vmatprep.subr.bf16.mxu0 0
        %7028 = vmatpush1.bf16.msra.mxu0 %v6912
        %7029 = vmatprep.subr.bf16.mxu0 0
        %7030 = vmatpush1.bf16.msra.mxu0 %v6913
        %7031 = vmatprep.subr.bf16.mxu0 0
        %7032 = vmatpush1.bf16.msra.mxu0 %v6914
        %7033 = vmatprep.subr.bf16.mxu0 0
        %7034 = vmatpush1.bf16.msra.mxu0 %v6915
        %7035 = vmatprep.subr.bf16.mxu0 0
        %7036 = vmatpush1.bf16.msra.mxu0 %v6916
        %7037 = vmatprep.subr.bf16.mxu0 0
        %7038 = vmatpush1.bf16.msra.mxu0 %v6917
        %7039 = vmatprep.subr.bf16.mxu0 0
        %7040 = vmatpush1.bf16.msra.mxu0 %v6918
        %7041 = vmatprep.subr.bf16.mxu0 0
        %7042 = vmatpush1.bf16.msra.mxu0 %v6919
        %7043 = vmatprep.subr.bf16.mxu0 0
        %7044 = vmatpush1.bf16.msra.mxu0 %v6920
        %7045 = vmatprep.subr.bf16.mxu0 0
        %7046 = vmatpush1.bf16.msra.mxu0 %v6921
        %7047 = vmatprep.subr.bf16.mxu0 0
        %7048 = vmatpush1.bf16.msra.mxu0 %v6922
        %7049 = vmatprep.subr.bf16.mxu0 0
        %7050 = vmatpush1.bf16.msra.mxu0 %v6923
        %7051 = vmatprep.subr.bf16.mxu0 0
        %7052 = vmatpush1.bf16.msra.mxu0 %v6924
        %7053 = vmatprep.subr.bf16.mxu0 0
        %7054 = vmatpush1.bf16.msra.mxu0 %v6925
        %7055 = vmatprep.mubr.bf16.mxu0 %v6746
        %7056 = vmatmul.mubr.bf16.gmra.mrb[0].mxu0 %v6745
        %v7057 = vpop.f32.mrb[0].mxu0
        %v7058 = vadd.f32 %v6993, %v7057
        %v7059 = vpop.f32.mrb[0].mxu0
        %v7060 = vpop.f32.mrb[0].mxu0
        %v7061 = vadd.f32 %v6996, %v7060
        %v7062 = vpop.f32.mrb[0].mxu0
        %7063 = vmatprep.mubr.bf16.mxu0 %v6750
        %7064 = vmatmul.mubr.bf16.gmra.mrb[0].mxu0 %v6749
        %v7065 = vpop.f32.mrb[0].mxu0
        %v7066 = vadd.f32 %v7001, %v7065
        %v7067 = vpop.f32.mrb[0].mxu0
        %v7068 = vpop.f32.mrb[0].mxu0
        %v7069 = vadd.f32 %v7004, %v7068
        %v7070 = vpop.f32.mrb[0].mxu0
        %7071 = vmatprep.mubr.bf16.mxu0 %v6754
        %7072 = vmatmul.mubr.bf16.gmra.mrb[0].mxu0 %v6753
        %v7073 = vpop.f32.mrb[0].mxu0
        %v7074 = vadd.f32 %v7009, %v7073
        %v7075 = vpop.f32.mrb[0].mxu0
        %v7076 = vpop.f32.mrb[0].mxu0
        %v7077 = vadd.f32 %v7012, %v7076
        %v7078 = vpop.f32.mrb[0].mxu0
        %7079 = vmatprep.mubr.bf16.mxu0 %v6758
        %7080 = vmatmul.mubr.bf16.gmra.mrb[0].mxu0 %v6757
        %v7081 = vpop.f32.mrb[0].mxu0
        %v7082 = vadd.f32 %v7017, %v7081
        %v7083 = vpop.f32.mrb[0].mxu0
        %v7084 = vpop.f32.mrb[0].mxu0
        %v7085 = vadd.f32 %v7020, %v7084
        %v7086 = vpop.f32.mrb[0].mxu0
        %7087 = vdwg.mxu0
        %v7088 = vmul.f32 %v7058, 0.5
        %v7089 = vmul.f32 %v7061, 0.5
        %v7090 = vmul.f32 %v7066, 0.5
        %v7091 = vmul.f32 %v7069, 0.5
        %v7092 = vmul.f32 %v7074, 0.5
        %v7093 = vmul.f32 %v7077, 0.5
        %v7094 = vmul.f32 %v7082, 0.5
        %v7095 = vmul.f32 %v7085, 0.5
        %v7096 = vadd.f32 %v5965, %v7088
        %v7097 = vadd.f32 %v5966, %v7089
        %v7098 = vadd.f32 %v5967, %v7090
        %v7099 = vadd.f32 %v5968, %v7091
        %v7100 = vadd.f32 %v5969, %v7092
        %v7101 = vadd.f32 %v5970, %v7093
        %v7102 = vadd.f32 %v5971, %v7094
        %v7103 = vadd.f32 %v5972, %v7095
        %v7104 = vld [vmem:[%s1627] sm:$0x1]
        %v7105 = vld [vmem:[%s1635] sm:$0x1]
        %7106 = vadd.xlane.f32.xlu0 %v7096
        %v7107 = vpop.xlane.xlu0 %7106
        %7108 = vadd.xlane.f32.xlu0 %v7097
        %v7109 = vpop.xlane.xlu0 %7108
        %7110 = vadd.xlane.f32.xlu0 %v7098
        %v7111 = vpop.xlane.xlu0 %7110
        %7112 = vadd.xlane.f32.xlu0 %v7099
        %v7113 = vpop.xlane.xlu0 %7112
        %7114 = vadd.xlane.f32.xlu0 %v7100
        %v7115 = vpop.xlane.xlu0 %7114
        %7116 = vadd.xlane.f32.xlu0 %v7101
        %v7117 = vpop.xlane.xlu0 %7116
        %7118 = vadd.xlane.f32.xlu0 %v7102
        %v7119 = vpop.xlane.xlu0 %7118
        %7120 = vadd.xlane.f32.xlu0 %v7103
        %v7121 = vpop.xlane.xlu0 %7120
        %v7122 = vmul.f32 %v7107, %v1967
        %v7123 = vmul.f32 %v7109, %v1967
        %v7124 = vmul.f32 %v7111, %v1967
        %v7125 = vmul.f32 %v7113, %v1967
        %v7126 = vmul.f32 %v7115, %v1967
        %v7127 = vmul.f32 %v7117, %v1967
        %v7128 = vmul.f32 %v7119, %v1967
        %v7129 = vmul.f32 %v7121, %v1967
        %v7130 = vsub.f32 %v7096, %v7122
        %v7131 = vsub.f32 %v7097, %v7123
        %v7132 = vsub.f32 %v7098, %v7124
        %v7133 = vsub.f32 %v7099, %v7125
        %v7134 = vsub.f32 %v7100, %v7126
        %v7135 = vsub.f32 %v7101, %v7127
        %v7136 = vsub.f32 %v7102, %v7128
        %v7137 = vsub.f32 %v7103, %v7129
        %v7138 = vmul.f32 %v7130, %v7130
        %v7139 = vmul.f32 %v7131, %v7131
        %v7140 = vmul.f32 %v7132, %v7132
        %v7141 = vmul.f32 %v7133, %v7133
        %v7142 = vmul.f32 %v7134, %v7134
        %v7143 = vmul.f32 %v7135, %v7135
        %v7144 = vmul.f32 %v7136, %v7136
        %v7145 = vmul.f32 %v7137, %v7137
        %7146 = vadd.xlane.f32.xlu0 %v7138
        %v7147 = vpop.xlane.xlu0 %7146
        %7148 = vadd.xlane.f32.xlu0 %v7139
        %v7149 = vpop.xlane.xlu0 %7148
        %7150 = vadd.xlane.f32.xlu0 %v7140
        %v7151 = vpop.xlane.xlu0 %7150
        %7152 = vadd.xlane.f32.xlu0 %v7141
        %v7153 = vpop.xlane.xlu0 %7152
        %7154 = vadd.xlane.f32.xlu0 %v7142
        %v7155 = vpop.xlane.xlu0 %7154
        %7156 = vadd.xlane.f32.xlu0 %v7143
        %v7157 = vpop.xlane.xlu0 %7156
        %7158 = vadd.xlane.f32.xlu0 %v7144
        %v7159 = vpop.xlane.xlu0 %7158
        %7160 = vadd.xlane.f32.xlu0 %v7145
        %v7161 = vpop.xlane.xlu0 %7160
        %v7162 = vmul.f32 %v7147, %v1967
        %v7163 = vmul.f32 %v7149, %v1967
        %v7164 = vmul.f32 %v7151, %v1967
        %v7165 = vmul.f32 %v7153, %v1967
        %v7166 = vmul.f32 %v7155, %v1967
        %v7167 = vmul.f32 %v7157, %v1967
        %v7168 = vmul.f32 %v7159, %v1967
        %v7169 = vmul.f32 %v7161, %v1967
        %v7170 = vadd.f32 %v7162, 1e-05
        %v7171 = vadd.f32 %v7163, 1e-05
        %v7172 = vadd.f32 %v7164, 1e-05
        %v7173 = vadd.f32 %v7165, 1e-05
        %v7174 = vadd.f32 %v7166, 1e-05
        %v7175 = vadd.f32 %v7167, 1e-05
        %v7176 = vadd.f32 %v7168, 1e-05
        %v7177 = vadd.f32 %v7169, 1e-05
        %v7178 = vrsqrt.pop %v7170
        %v7179 = vrsqrt.pop %v7171
        %v7180 = vrsqrt.pop %v7172
        %v7181 = vrsqrt.pop %v7173
        %v7182 = vrsqrt.pop %v7174
        %v7183 = vrsqrt.pop %v7175
        %v7184 = vrsqrt.pop %v7176
        %v7185 = vrsqrt.pop %v7177
        %v7186 = vmul.f32 %v7130, %v7178
        %v7187 = vmul.f32 %v7131, %v7179
        %v7188 = vmul.f32 %v7132, %v7180
        %v7189 = vmul.f32 %v7133, %v7181
        %v7190 = vmul.f32 %v7134, %v7182
        %v7191 = vmul.f32 %v7135, %v7183
        %v7192 = vmul.f32 %v7136, %v7184
        %v7193 = vmul.f32 %v7137, %v7185
        %v7195 = vlaneseq
        %v7196 = vshrl.u32 %v7195, 7
        %v7197 = vsub.s32 0, %v7196
        %v7198 = vrot.slane %v7104, %v7197
        %v7200 = vmul.f32 %v7186, %v7198
        %v7201 = vmul.f32 %v7187, %v7198
        %v7202 = vmul.f32 %v7188, %v7198
        %v7203 = vmul.f32 %v7189, %v7198
        %v7204 = vmul.f32 %v7190, %v7198
        %v7205 = vmul.f32 %v7191, %v7198
        %v7206 = vmul.f32 %v7192, %v7198
        %v7207 = vmul.f32 %v7193, %v7198
        %v7209 = vlaneseq
        %v7210 = vshrl.u32 %v7209, 7
        %v7211 = vsub.s32 0, %v7210
        %v7212 = vrot.slane %v7105, %v7211
        %v7214 = vadd.f32 %v7200, %v7212
        %v7215 = vadd.f32 %v7201, %v7212
        %v7216 = vadd.f32 %v7202, %v7212
        %v7217 = vadd.f32 %v7203, %v7212
        %v7218 = vadd.f32 %v7204, %v7212
        %v7219 = vadd.f32 %v7205, %v7212
        %v7220 = vadd.f32 %v7206, %v7212
        %v7221 = vadd.f32 %v7207, %v7212
        %7222 = vst [vmem:[#allocation2] sm:$0xff] %v7214
        %7223 = vst [vmem:[#allocation2 + $0x8] sm:$0xff] %v7215
        %7224 = vst [vmem:[#allocation2 + $0x10] sm:$0xff] %v7216
        %7225 = vst [vmem:[#allocation2 + $0x18] sm:$0xff] %v7217
        %7226 = vst [vmem:[#allocation2 + $0x20] sm:$0xff] %v7218
        %7227 = vst [vmem:[#allocation2 + $0x28] sm:$0xff] %v7219
        %7228 = vst [vmem:[#allocation2 + $0x30] sm:$0xff] %v7220
        %7229 = vst [vmem:[#allocation2 + $0x38] sm:$0xff] %v7221
        %p7230 = scmp.eq.s32.totalorder %s118, 1
        // Predicated region
        $region241: #{conformer_detector_forward.1} parent=163 // pred_check
          %p7231 = pneg %p7230
        $region242: #{conformer_detector_forward.1} parent=163 // pred_check_branch
          %7233 = sbr.rel (%p7231) target = $region244
        $region243: #{conformer_detector_forward.1} parent=163 // pred_region
          %v7234 = vadd.f32 %v7214, %v7215
          %v7235 = vadd.f32 %v7234, %v7216
          %v7236 = vadd.f32 %v7235, %v7217
          %v7237 = vrot.slane %v7236, 4
          %v7238 = vadd.f32 %v7236, %v7237
          %v7239 = vrot.slane %v7238, 2
          %v7240 = vadd.f32 %v7238, %v7239
          %v7241 = vrot.slane %v7240, 1
          %v7242 = vadd.f32 %v7240, %v7241
          %v7243 = vadd.f32 %v7218, %v7219
          %v7244 = vadd.f32 %v7243, %v7220
          %v7245 = vadd.f32 %v7244, %v7221
          %v7246 = vrot.slane %v7245, 4
          %v7247 = vadd.f32 %v7245, %v7246
          %v7248 = vrot.slane %v7247, 2
          %v7249 = vadd.f32 %v7247, %v7248
          %v7250 = vrot.slane %v7249, 1
          %v7251 = vadd.f32 %v7249, %v7250
          %v7252 = vrcp.pop 32.0
          %v7253 = vmul.f32 %v7242, %v7252
          %v7254 = vmul.f32 %v7251, %v7252
          %v7255 = vld [vmem:[#allocation28] sm:$0xf]
          %v7256 = vld [vmem:[#allocation28 + $0x4] sm:$0xf]
          %v7257 = vld [vmem:[#allocation28 + $0x8] sm:$0xf]
          %v7258 = vld [vmem:[#allocation28 + $0xc] sm:$0xf]
          %v7259 = vld [vmem:[#allocation28 + $0x10] sm:$0xf]
          %v7260 = vld [vmem:[#allocation28 + $0x14] sm:$0xf]
          %v7261 = vld [vmem:[#allocation28 + $0x18] sm:$0xf]
          %v7262 = vld [vmem:[#allocation28 + $0x1c] sm:$0xf]
          %v7263 = vld [vmem:[#allocation28 + $0x20] sm:$0xf]
          %v7264 = vld [vmem:[#allocation28 + $0x24] sm:$0xf]
          %v7265 = vld [vmem:[#allocation28 + $0x28] sm:$0xf]
          %v7266 = vld [vmem:[#allocation28 + $0x2c] sm:$0xf]
          %v7267 = vld [vmem:[#allocation28 + $0x30] sm:$0xf]
          %v7268 = vld [vmem:[#allocation28 + $0x34] sm:$0xf]
          %v7269 = vld [vmem:[#allocation28 + $0x38] sm:$0xf]
          %v7270 = vld [vmem:[#allocation28 + $0x3c] sm:$0xf]
          %v7271 = vpack.c.bf16 %v7253, %v7253
          %v7272 = vpack.c.bf16 %v7254, %v7254
          %v7273 = vld [vmem:[#allocation30] sm:$0x1]
          %v7275 = vlaneseq
          %v7276 = vshrl.u32 %v7275, 7
          %v7277 = vsub.s32 0, %v7276
          %v7278 = vrot.slane %v7273, %v7277
          %v7282 = vunpack.c.l.b16 %v7271
          %v7283 = vunpack.c.l.b16 %v7272
          %vm7284 = vcmask 1041409
          %v7285 = vsel %vm7284, %v7283, %v7282
          %v7286 = vpack.c.b16 %v7285, %v7285
          %v7304 = vunpack.c.l.b16 %v7255
          %v7305 = vunpack.c.l.b16 %v7256
          %v7306 = vunpack.c.l.b16 %v7257
          %v7307 = vunpack.c.l.b16 %v7258
          %v7308 = vunpack.c.l.b16 %v7259
          %v7309 = vunpack.c.l.b16 %v7260
          %v7310 = vunpack.c.l.b16 %v7261
          %v7311 = vunpack.c.l.b16 %v7262
          %v7312 = vunpack.c.l.b16 %v7263
          %v7313 = vunpack.c.l.b16 %v7264
          %v7314 = vunpack.c.l.b16 %v7265
          %v7315 = vunpack.c.l.b16 %v7266
          %v7316 = vunpack.c.l.b16 %v7267
          %v7317 = vunpack.c.l.b16 %v7268
          %v7318 = vunpack.c.l.b16 %v7269
          %v7319 = vunpack.c.l.b16 %v7270
          %v7320 = vpack.c.b16 %v7305, %v7304
          %v7321 = vpack.c.b16 %v7307, %v7306
          %v7322 = vpack.c.b16 %v7309, %v7308
          %v7323 = vpack.c.b16 %v7311, %v7310
          %v7324 = vpack.c.b16 %v7313, %v7312
          %v7325 = vpack.c.b16 %v7315, %v7314
          %v7326 = vpack.c.b16 %v7317, %v7316
          %v7327 = vpack.c.b16 %v7319, %v7318
          %7336 = vmatprep.subr.bf16.mxu0 0
          %7337 = vmatpush1.bf16.msra.mxu0 %v7320
          %7338 = vmatprep.subr.bf16.mxu0 0
          %7339 = vmatpush1.bf16.msra.mxu0 %v7321
          %7340 = vmatprep.subr.bf16.mxu0 0
          %7341 = vmatpush1.bf16.msra.mxu0 %v7322
          %7342 = vmatprep.subr.bf16.mxu0 0
          %7343 = vmatpush1.bf16.msra.mxu0 %v7323
          %7344 = vmatprep.subr.bf16.mxu0 0
          %7345 = vmatpush1.bf16.msra.mxu0 %v7324
          %7346 = vmatprep.subr.bf16.mxu0 0
          %7347 = vmatpush1.bf16.msra.mxu0 %v7325
          %7348 = vmatprep.subr.bf16.mxu0 0
          %7349 = vmatpush1.bf16.msra.mxu0 %v7326
          %7350 = vmatprep.subr.bf16.mxu0 0
          %7351 = vmatpush1.bf16.msra.mxu0 %v7327
          %7352 = vmatprep.subr.bf16.mxu0 0
          %7353 = vmatpush1.bf16.msra.mxu0 0
          %7354 = vmatprep.subr.bf16.mxu0 0
          %7355 = vmatpush1.bf16.msra.mxu0 0
          %7356 = vmatprep.subr.bf16.mxu0 0
          %7357 = vmatpush1.bf16.msra.mxu0 0
          %7358 = vmatprep.subr.bf16.mxu0 0
          %7359 = vmatpush1.bf16.msra.mxu0 0
          %7360 = vmatprep.subr.bf16.mxu0 0
          %7361 = vmatpush1.bf16.msra.mxu0 0
          %7362 = vmatprep.subr.bf16.mxu0 0
          %7363 = vmatpush1.bf16.msra.mxu0 0
          %7364 = vmatprep.subr.bf16.mxu0 0
          %7365 = vmatpush1.bf16.msra.mxu0 0
          %7366 = vmatprep.subr.bf16.mxu0 0
          %7367 = vmatpush1.bf16.msra.mxu0 0
          %7368 = vmatprep.mubr.bf16.mxu0 0
          %7369 = vmatmul.mubr.bf16.gmra.mrb[0].mxu0 %v7286
          %v7370 = vpop.f32.mrb[0].mxu0
          %v7371 = vadd.f32 %v7278, %v7370
          %v7372 = vpop.f32.mrb[0].mxu0
          %v7373 = vpop.f32.mrb[0].mxu0
          %v7374 = vpop.f32.mrb[0].mxu0
          %7375 = vdwg.mxu0
          %s7376 = sld [smem:[#allocation4]]
          %vm7377 = vcmp.ge.f32.partialorder %v7371, 0.0
          %v7378 = vstv %s7376
          %v7379 = vmul.f32 %v7378, %v7371
          %v7380 = vsel %vm7377, %v7371, %v7379
          %v7381 = vld [vmem:[#allocation31] sm:$0x1]
          %v7383 = vlaneseq
          %v7384 = vshrl.u32 %v7383, 7
          %v7385 = vsub.s32 0, %v7384
          %v7386 = vrot.slane %v7381, %v7385
          %v7388 = vmul.f32 %v7380, %v7386
          %vm7389 = vcmask 1041408
          %v7390 = vsel %vm7389, %v7388, 0.0
          %7391 = vadd.xlane.f32.xlu0 %v7390
          %v7392 = vpop.xlane.xlu0 %7391
          %v7393 = vld [vmem:[#allocation3] sm:$0x1]
          %v7395 = vlaneseq
          %v7396 = vshrl.u32 %v7395, 7
          %v7397 = vsub.s32 0, %v7396
          %v7398 = vrot.slane %v7393, %v7397
          %v7400 = vadd.f32 %v7392, %v7398
          %vm7401 = vcmask 1024
          %7402 = vst.msk [vmem:[%s1919] sm:$0x3] %vm7401, %v7400
        $region244: #{conformer_detector_forward.1} parent=163 // pred_fallthru
          _
        %p7403 = scmp.lt.s32.totalorder %s117, 0
        %s7404 = scalar_select %p7403, %s117, 0
        %s7405 = smul.addr %s7404, 2
        %s7406 = scalar_lea.vmem %s73, %s7405
        // Predicated region
        $region245: #{conformer_detector_forward.1} parent=163 // pred_check
          %p7407 = pneg %p1054
        $region246: #{conformer_detector_forward.1} parent=163 // pred_check_branch
          %7409 = sbr.rel (%p7407) target = $region248
        $region247: #{conformer_detector_forward.1} parent=163 // pred_region
          _
        $region248: #{conformer_detector_forward.1} parent=163 // pred_fallthru
          _
        // Predicated region
        $region249: #{conformer_detector_forward.1} parent=163 // pred_check
          %p7410 = pneg %p1054
        $region250: #{conformer_detector_forward.1} parent=163 // pred_check_branch
          %7412 = sbr.rel (%p7410) target = $region252
        $region251: #{conformer_detector_forward.1} parent=163 // pred_region
          %p7413 = scmp.lt.s32.totalorder %s117, 0
          %s7414 = scalar_select %p7413, %s117, 0
          %s7415 = smul.addr %s7414, 2
          %s7416 = scalar_lea.vmem %s73, %s7415
        $region252: #{conformer_detector_forward.1} parent=163 // pred_fallthru
          _
      $region164: #{conformer_detector_forward.1} parent=5 // pred_fallthru
        _
      %p7417 = scmp.le.s32.totalorder 2, %s108
      // Predicated region
      $region253: #{conformer_detector_forward.1} parent=5 // pred_check
        %p7418 = pneg %p7417
      $region254: #{conformer_detector_forward.1} parent=5 // pred_check_branch
        %7420 = sbr.rel (%p7418) target = $region256
      $region255: #{conformer_detector_forward.1} parent=5 // pred_region
        %s7421 = ssub.s32 %s108, 2
      $region256: #{conformer_detector_forward.1} parent=5 // pred_fallthru
        _
    $region6: #{conformer_detector_forward.1} parent=1 // loop_footer
      %s112 = sadd.s32 1, %s108
    $region7: #{conformer_detector_forward.1} parent=1 // loop_footer_branch
      %107 = sbr.rel target = $region3
    $region8: #{conformer_detector_forward.1} parent=1 // loop_exit
      _
    %7422 = vsyncpa [#allocation6], 1
    %s7423 = scalar_lea.sflag [#allocation6], 1
    %7424 = vsyncpa %s7423, 1
    %7425 = vsyncpa [#allocation8], 1
    %s7426 = scalar_lea.sflag [#allocation8], 1
    %7427 = vsyncpa %s7426, 1
    %7428 = vsyncpa [#allocation11], 1
    %s7429 = scalar_lea.sflag [#allocation11], 1
    %7430 = vsyncpa %s7429, 1
    %7431 = vsyncpa [#allocation14], 1
    %s7432 = scalar_lea.sflag [#allocation14], 1
    %7433 = vsyncpa %s7432, 1
    %7434 = vsyncpa [#allocation17], 1
    %s7435 = scalar_lea.sflag [#allocation17], 1
    %7436 = vsyncpa %s7435, 1
    %7437 = vsyncpa [#allocation20], 1
    %s7438 = scalar_lea.sflag [#allocation20], 1
    %7439 = vsyncpa %s7438, 1
    %7440 = vsyncpa [#allocation23], 1
    %s7441 = scalar_lea.sflag [#allocation23], 1
    %7442 = vsyncpa %s7441, 1
    %7443 = vsyncpa [#allocation26], 1
    %s7444 = scalar_lea.sflag [#allocation26], 1
    %7445 = vsyncpa %s7444, 1
    %7446 = vsyncpa [#allocation29], 1
    %7447 = vsyncpa [#allocation32], 1

</llo_original>
